<compile_context>
chip_gen: v7x
topology: tpu7x:2x2x1
jax: 0.10.0
libtpu: 0.0.40
codegen_flags: <defaults>
</compile_context>

<pallas_src>
import functools

import jax
import jax.numpy as jnp
from jax.experimental import pallas as pl
from jax.experimental.pallas import tpu as pltpu


def _bilstm_chunk_kernel(xpf_ref, xpb_ref, whh_hbm, outf_ref, outb_ref,
                         whh_scr, whh_sem, hf_scr, cf_scr, hb_scr, cb_scr,
                         *, time_chunk, hidden):
    """Run `time_chunk` LSTM steps of BOTH directions, interleaved.

    Grid: (time_chunk_index,).
      xpf_ref / xpb_ref : (Tc, B, 4H) bf16 precomputed input projection (+bias)
                          for this chunk (forward / backward direction; the
                          backward chunk order is reversed via its index_map).
      whh_hbm           : (2, H, 4H) bf16 W_hh^T in HBM (manual one-time DMA).
      outf_ref/outb_ref : (Tc, B, H) output slabs for this chunk.
    """
    tci = pl.program_id(0)

    @pl.when(tci == 0)
    def _():
        # One-time copy of both directions' W_hh^T into VMEM; the block never
        # changes, so BlockSpec auto-pipelining (2 buffers) would be wasteful.
        cp = pltpu.make_async_copy(whh_hbm, whh_scr, whh_sem)
        cp.start()
        cp.wait()
        hf_scr[...] = jnp.zeros_like(hf_scr)
        cf_scr[...] = jnp.zeros_like(cf_scr)
        hb_scr[...] = jnp.zeros_like(hb_scr)
        cb_scr[...] = jnp.zeros_like(cb_scr)

    H = hidden

    def sig(v):
        # sigmoid(x) = 0.5*tanh(0.5*x) + 0.5 : single EUP op instead of
        # exp + reciprocal on the serial per-step chain.
        return 0.5 * jnp.tanh(0.5 * v) + 0.5

    def cell(gates, c):
        i_g = sig(gates[:, 0 * H:1 * H])
        f_g = sig(gates[:, 1 * H:2 * H])
        g_g = jnp.tanh(gates[:, 2 * H:3 * H])
        o_g = sig(gates[:, 3 * H:4 * H])
        c_new = f_g * c + i_g * g_g
        h_new = o_g * jnp.tanh(c_new)
        return h_new, c_new

    h_f, c_f = hf_scr[...], cf_scr[...]
    h_b, c_b = hb_scr[...], cb_scr[...]

    # Fully unrolled: static row indices (forward ascending, backward
    # descending); two independent recurrences interleaved for ILP.
    for s in range(time_chunk):
        rf = s
        rb = time_chunk - 1 - s
        # Only the recurrent matmul sits on the critical path; bf16 operands,
        # f32 accumulation.  W_hh is read from VMEM scratch inside the loop to
        # keep vreg live ranges short.
        g_f = xpf_ref[rf].astype(jnp.float32) + jnp.dot(
            h_f.astype(jnp.bfloat16), whh_scr[0],
            preferred_element_type=jnp.float32)
        g_b = xpb_ref[rb].astype(jnp.float32) + jnp.dot(
            h_b.astype(jnp.bfloat16), whh_scr[1],
            preferred_element_type=jnp.float32)
        h_f, c_f = cell(g_f, c_f)
        h_b, c_b = cell(g_b, c_b)
        outf_ref[rf] = h_f.astype(outf_ref.dtype)
        outb_ref[rb] = h_b.astype(outb_ref.dtype)

    hf_scr[...] = h_f
    cf_scr[...] = c_f
    hb_scr[...] = h_b
    cb_scr[...] = c_b


def bidirectional_lstm(x, params, *, time_chunk=16):
    """x: (T, B, I) f32 -> (T, B, 2H); last axis = [forward | backward]."""
    T, B, _ = x.shape
    w_ih_t = params["w_ih_t"]          # (2, I, 4H) f32
    w_hh_t = params["w_hh_t"]          # (2, H, 4H) f32
    bias = params["bias"]              # (2, 4H)   f32
    H = w_hh_t.shape[1]
    four_h = 4 * H
    assert B % 8 == 0 and H % 128 == 0, "expect sublane/lane-dense B and H"

    tc = max(1, min(time_chunk, T))
    nc = pl.cdiv(T, tc)
    t_pad = nc * tc
    pad = t_pad - T

    # Hoisted input projection (one big MXU-friendly matmul), stored bf16.
    xproj = (jnp.einsum("tbi,dif->dtbf", x, w_ih_t,
                        preferred_element_type=jnp.float32)
             + bias[:, None, None, :]).astype(jnp.bfloat16)   # (2, T, B, 4H)

    # Zero-pad so padded steps are always processed AFTER the real steps of
    # their direction: end-pad forward, front-pad backward.
    xp_f = jnp.pad(xproj[0], ((0, pad), (0, 0), (0, 0)))
    xp_b = jnp.pad(xproj[1], ((pad, 0), (0, 0), (0, 0)))
    whh_bf16 = w_hh_t.astype(jnp.bfloat16)                     # (2, H, 4H)

    out_f, out_b = pl.pallas_call(
        functools.partial(_bilstm_chunk_kernel, time_chunk=tc, hidden=H),
        out_shape=(jax.ShapeDtypeStruct((t_pad, B, H), x.dtype),
                   jax.ShapeDtypeStruct((t_pad, B, H), x.dtype)),
        grid_spec=pltpu.PrefetchScalarGridSpec(
            num_scalar_prefetch=0,
            grid=(nc,),
            in_specs=[
                pl.BlockSpec((tc, B, four_h), lambda t: (t, 0, 0)),
                pl.BlockSpec((tc, B, four_h), lambda t: (nc - 1 - t, 0, 0)),
                pl.BlockSpec(memory_space=pl.ANY),   # W_hh^T (bf16), manual DMA
            ],
            out_specs=[
                pl.BlockSpec((tc, B, H), lambda t: (t, 0, 0)),
                pl.BlockSpec((tc, B, H), lambda t: (nc - 1 - t, 0, 0)),
            ],
            scratch_shapes=[
                pltpu.VMEM((2, H, four_h), jnp.bfloat16),  # W_hh^T, both dirs
                pltpu.SemaphoreType.DMA(()),               # W_hh copy sem
                pltpu.VMEM((B, H), jnp.float32),           # h fwd carry
                pltpu.VMEM((B, H), jnp.float32),           # c fwd carry
                pltpu.VMEM((B, H), jnp.float32),           # h bwd carry
                pltpu.VMEM((B, H), jnp.float32),           # c bwd carry
            ],
        ),
        compiler_params=pltpu.CompilerParams(
            # Single sequential (recurrent) grid axis; blocks are small, so the
            # default scoped-VMEM limit is sufficient on all generations.
            dimension_semantics=("arbitrary",),
        ),
    )(xp_f, xp_b, whh_bf16)

    # TODO(synk): on v7x the two directions could instead be sharded across the
    # two TensorCores (direction grid axis + CORE_PARALLEL) rather than
    # interleaved in one body.
    return jnp.concatenate([out_f[:T], out_b[pad:]], axis=-1)


def init_params(key, input_size, hidden_size):
    """nn.LSTM-shaped params, uniform(-k, k), k = 1/sqrt(H); both directions."""
    k = 1.0 / jnp.sqrt(jnp.float32(hidden_size))
    keys = jax.random.split(key, 8)
    four_h = 4 * hidden_size

    def u(kk, shape):
        return jax.random.uniform(kk, shape, jnp.float32, -k, k)

    w_ih = jnp.stack([u(keys[0], (four_h, input_size)),
                      u(keys[4], (four_h, input_size))])   # (2, 4H, I)
    w_hh = jnp.stack([u(keys[1], (four_h, hidden_size)),
                      u(keys[5], (four_h, hidden_size))])  # (2, 4H, H)
    b_ih = jnp.stack([u(keys[2], (four_h,)), u(keys[6], (four_h,))])
    b_hh = jnp.stack([u(keys[3], (four_h,)), u(keys[7], (four_h,))])

    return {
        "w_ih_t": jnp.transpose(w_ih, (0, 2, 1)),  # (2, I, 4H)
        "w_hh_t": jnp.transpose(w_hh, (0, 2, 1)),  # (2, H, 4H)
        "bias": b_ih + b_hh,                       # (2, 4H)
    }


def _matched_reference(x, params):
    """Pure-JAX reference using the SAME numerics as the kernel
    (bf16 xproj and bf16 recurrent-matmul operands, f32 elsewhere,
    sigmoid via tanh).  Used for the tight correctness assert."""
    T, B, _ = x.shape
    H = params["w_hh_t"].shape[1]
    xproj = (jnp.einsum("tbi,dif->dtbf", x, params["w_ih_t"],
                        preferred_element_type=jnp.float32)
             + params["bias"][:, None, None, :]).astype(jnp.bfloat16)
    whh = params["w_hh_t"].astype(jnp.bfloat16)

    def sig(v):
        return 0.5 * jnp.tanh(0.5 * v) + 0.5

    outs = []
    for d in range(2):
        xs = xproj[d] if d == 0 else jnp.flip(xproj[d], axis=0)
        w = whh[d]

        def step(carry, xp, w=w):
            h, c = carry
            g = xp.astype(jnp.float32) + jnp.dot(
                h.astype(jnp.bfloat16), w, preferred_element_type=jnp.float32)
            i = sig(g[:, :H])
            f = sig(g[:, H:2 * H])
            gg = jnp.tanh(g[:, 2 * H:3 * H])
            o = sig(g[:, 3 * H:4 * H])
            c = f * c + i * gg
            h = o * jnp.tanh(c)
            return (h, c), h

        init = (jnp.zeros((B, H), jnp.float32), jnp.zeros((B, H), jnp.float32))
        _, hs = jax.lax.scan(step, init, xs)
        if d == 1:
            hs = jnp.flip(hs, axis=0)
        outs.append(hs)
    return jnp.concatenate(outs, axis=-1)


def _reference_bilstm_f32(x, params):
    """Full-f32 PyTorch-semantics reference (loose sanity check only)."""
    T, B, _ = x.shape
    H = params["w_hh_t"].shape[1]
    outs = []
    for d in range(2):
        w_ih_t = params["w_ih_t"][d]
        w_hh_t = params["w_hh_t"][d]
        bias = params["bias"][d]
        xs = x if d == 0 else jnp.flip(x, axis=0)

        def step(carry, x_t, w_ih_t=w_ih_t, w_hh_t=w_hh_t, bias=bias):
            h, c = carry
            g = x_t @ w_ih_t + h @ w_hh_t + bias
            i = jax.nn.sigmoid(g[:, :H])
            f = jax.nn.sigmoid(g[:, H:2 * H])
            gg = jnp.tanh(g[:, 2 * H:3 * H])
            o = jax.nn.sigmoid(g[:, 3 * H:4 * H])
            c = f * c + i * gg
            h = o * jnp.tanh(c)
            return (h, c), h

        init = (jnp.zeros((B, H), jnp.float32), jnp.zeros((B, H), jnp.float32))
        _, hs = jax.lax.scan(step, init, xs)
        if d == 1:
            hs = jnp.flip(hs, axis=0)
        outs.append(hs)
    return jnp.concatenate(outs, axis=-1)


if __name__ == "__main__":
    # Lane/sublane-dense small sizes: B multiple of 8, H multiple of 128.
    SEQ, BATCH, INPUT_SIZE, HIDDEN = 32, 8, 64, 128

    key = jax.random.PRNGKey(0)
    k_x, k_p, k_x2 = jax.random.split(key, 3)
    x = jax.random.normal(k_x, (SEQ, BATCH, INPUT_SIZE), jnp.float32)
    params = init_params(k_p, INPUT_SIZE, HIDDEN)

    out = jax.block_until_ready(bidirectional_lstm(x, params, time_chunk=16))
    assert out.shape == (SEQ, BATCH, 2 * HIDDEN), out.shape

    # Tight check against a pure-JAX reference with identical numerics.
    ref_m = _matched_reference(x, params)
    err_m = float(jnp.max(jnp.abs(out - ref_m)))
    assert jnp.allclose(out, ref_m, atol=2e-3, rtol=2e-3), err_m

    # Coarse sanity bound against the full-f32 reference (differs only by the
    # intentional bf16 casts on the input projection / recurrent matmul).
    ref_f = _reference_bilstm_f32(x, params)
    err_f = float(jnp.max(jnp.abs(out - ref_f)))
    assert err_f < 0.1, err_f

    # Second shape: T=13 with time_chunk=8 exercises the zero-padding path
    # (previously a prime T silently collapsed to 1 step per grid iteration).
    x2 = jax.random.normal(k_x2, (13, BATCH, INPUT_SIZE), jnp.float32)
    out2 = jax.block_until_ready(bidirectional_lstm(x2, params, time_chunk=8))
    assert out2.shape == (13, BATCH, 2 * HIDDEN), out2.shape
    ref2 = _matched_reference(x2, params)
    err2 = float(jnp.max(jnp.abs(out2 - ref2)))
    assert jnp.allclose(out2, ref2, atol=2e-3, rtol=2e-3), err2

    print("KERNEL_OK")
</pallas_src>

<mosaic_0001>
module attributes {stable_mosaic.version = 11 : i64} {
  func.func @_bilstm_chunk_kernel(%arg0: i32, %arg1: memref<16x8x512xbf16, #tpu.memory_space<vmem>>, %arg2: memref<16x8x512xbf16, #tpu.memory_space<vmem>>, %arg3: memref<2x128x512xbf16, #tpu.memory_space<any>>, %arg4: memref<16x8x128xf32, #tpu.memory_space<vmem>>, %arg5: memref<16x8x128xf32, #tpu.memory_space<vmem>>, %arg6: memref<2x128x512xbf16, #tpu.memory_space<vmem>>, %arg7: memref<!tpu.dma_semaphore, #tpu.memory_space<semaphore_mem>>, %arg8: memref<8x128xf32, #tpu.memory_space<vmem>>, %arg9: memref<8x128xf32, #tpu.memory_space<vmem>>, %arg10: memref<8x128xf32, #tpu.memory_space<vmem>>, %arg11: memref<8x128xf32, #tpu.memory_space<vmem>>) attributes {dimension_semantics = [#tpu.dimension_semantics<arbitrary>], iteration_bounds = array<i64: 2>, scalar_prefetch = 0 : i64, scratch_operands = 6 : i64, tpu.core_type = #tpu.core_type<tc>, window_params = [{transform_indices = @transform_0, window_bounds = array<i64: 16, 8, 512>}, {transform_indices = @transform_1, window_bounds = array<i64: 16, 8, 512>}, {}, {transform_indices = @transform_3, window_bounds = array<i64: 16, 8, 128>}, {transform_indices = @transform_4, window_bounds = array<i64: 16, 8, 128>}]} {
    %c0_i32 = arith.constant 0 : i32
    %0 = arith.cmpi eq, %arg0, %c0_i32 : i32
    %1 = arith.extui %0 : i1 to i32
    %c0_i32_0 = arith.constant 0 : i32
    %2 = arith.cmpi ne, %1, %c0_i32_0 : i32
    scf.if %2 {
      tpu.enqueue_dma source(%arg3 : memref<2x128x512xbf16, #tpu.memory_space<any>>) target(%arg6 : memref<2x128x512xbf16, #tpu.memory_space<vmem>>) target_semaphore(%arg7 : memref<!tpu.dma_semaphore, #tpu.memory_space<semaphore_mem>>)
      tpu.wait_dma2 semaphore(%arg7 : memref<!tpu.dma_semaphore, #tpu.memory_space<semaphore_mem>>) src(%arg3 : memref<2x128x512xbf16, #tpu.memory_space<any>>) dst(%arg6 : memref<2x128x512xbf16, #tpu.memory_space<vmem>>)
      %cst_608 = arith.constant 0.000000e+00 : f32
      %1355 = vector.broadcast %cst_608 : f32 to vector<8x128xf32>
      %c0_609 = arith.constant 0 : index
      %c0_610 = arith.constant 0 : index
      %1356 = vector.load %arg8[%c0_609, %c0_610] : memref<8x128xf32, #tpu.memory_space<vmem>>, vector<8x128xf32>
      tpu.vector_store %arg8[%c0_609, %c0_610], %1355 {strides = array<i32>} : memref<8x128xf32, #tpu.memory_space<vmem>>, vector<8x128xf32>,
      %cst_611 = arith.constant 0.000000e+00 : f32
      %1357 = vector.broadcast %cst_611 : f32 to vector<8x128xf32>
      %c0_612 = arith.constant 0 : index
      %c0_613 = arith.constant 0 : index
      %1358 = vector.load %arg9[%c0_612, %c0_613] : memref<8x128xf32, #tpu.memory_space<vmem>>, vector<8x128xf32>
      tpu.vector_store %arg9[%c0_612, %c0_613], %1357 {strides = array<i32>} : memref<8x128xf32, #tpu.memory_space<vmem>>, vector<8x128xf32>,
      %cst_614 = arith.constant 0.000000e+00 : f32
      %1359 = vector.broadcast %cst_614 : f32 to vector<8x128xf32>
      %c0_615 = arith.constant 0 : index
      %c0_616 = arith.constant 0 : index
      %1360 = vector.load %arg10[%c0_615, %c0_616] : memref<8x128xf32, #tpu.memory_space<vmem>>, vector<8x128xf32>
      tpu.vector_store %arg10[%c0_615, %c0_616], %1359 {strides = array<i32>} : memref<8x128xf32, #tpu.memory_space<vmem>>, vector<8x128xf32>,
      %cst_617 = arith.constant 0.000000e+00 : f32
      %1361 = vector.broadcast %cst_617 : f32 to vector<8x128xf32>
      %c0_618 = arith.constant 0 : index
      %c0_619 = arith.constant 0 : index
      %1362 = vector.load %arg11[%c0_618, %c0_619] : memref<8x128xf32, #tpu.memory_space<vmem>>, vector<8x128xf32>
      tpu.vector_store %arg11[%c0_618, %c0_619], %1361 {strides = array<i32>} : memref<8x128xf32, #tpu.memory_space<vmem>>, vector<8x128xf32>,
    } else {
    }
    %c0 = arith.constant 0 : index
    %c0_1 = arith.constant 0 : index
    %3 = vector.load %arg8[%c0, %c0_1] : memref<8x128xf32, #tpu.memory_space<vmem>>, vector<8x128xf32>
    %c0_2 = arith.constant 0 : index
    %c0_3 = arith.constant 0 : index
    %4 = vector.load %arg9[%c0_2, %c0_3] : memref<8x128xf32, #tpu.memory_space<vmem>>, vector<8x128xf32>
    %c0_4 = arith.constant 0 : index
    %c0_5 = arith.constant 0 : index
    %5 = vector.load %arg10[%c0_4, %c0_5] : memref<8x128xf32, #tpu.memory_space<vmem>>, vector<8x128xf32>
    %c0_6 = arith.constant 0 : index
    %c0_7 = arith.constant 0 : index
    %6 = vector.load %arg11[%c0_6, %c0_7] : memref<8x128xf32, #tpu.memory_space<vmem>>, vector<8x128xf32>
    %c0_8 = arith.constant 0 : index
    %c0_9 = arith.constant 0 : index
    %c0_10 = arith.constant 0 : index
    %7 = vector.load %arg1[%c0_8, %c0_9, %c0_10] : memref<16x8x512xbf16, #tpu.memory_space<vmem>>, vector<1x8x512xbf16>
    %8 = vector.shape_cast %7 : vector<1x8x512xbf16> to vector<8x512xbf16>
    %9 = arith.extf %8 : vector<8x512xbf16> to vector<8x512xf32>
    %10 = arith.truncf %3 : vector<8x128xf32> to vector<8x128xbf16>
    %c0_11 = arith.constant 0 : index
    %c0_12 = arith.constant 0 : index
    %c0_13 = arith.constant 0 : index
    %11 = vector.load %arg6[%c0_11, %c0_12, %c0_13] : memref<2x128x512xbf16, #tpu.memory_space<vmem>>, vector<1x128x512xbf16>
    %12 = vector.shape_cast %11 : vector<1x128x512xbf16> to vector<128x512xbf16>
    %cst = arith.constant dense<0.000000e+00> : vector<8x512xf32>
    %13 = tpu.matmul %10, %12, %cst {dimension_numbers = #tpu.dot_dimension_numbers<[1], [0], [0], [1], [0, 0, 1, 1], [], []>} : vector<8x128xbf16>, vector<128x512xbf16>, vector<8x512xf32> -> vector<8x512xf32>
    %14 = arith.addf %9, %13 : vector<8x512xf32>
    %c15 = arith.constant 15 : index
    %c0_14 = arith.constant 0 : index
    %c0_15 = arith.constant 0 : index
    %15 = vector.load %arg2[%c15, %c0_14, %c0_15] : memref<16x8x512xbf16, #tpu.memory_space<vmem>>, vector<1x8x512xbf16>
    %16 = vector.shape_cast %15 : vector<1x8x512xbf16> to vector<8x512xbf16>
    %17 = arith.extf %16 : vector<8x512xbf16> to vector<8x512xf32>
    %18 = arith.truncf %5 : vector<8x128xf32> to vector<8x128xbf16>
    %c1 = arith.constant 1 : index
    %c0_16 = arith.constant 0 : index
    %c0_17 = arith.constant 0 : index
    %19 = vector.load %arg6[%c1, %c0_16, %c0_17] : memref<2x128x512xbf16, #tpu.memory_space<vmem>>, vector<1x128x512xbf16>
    %20 = vector.shape_cast %19 : vector<1x128x512xbf16> to vector<128x512xbf16>
    %cst_18 = arith.constant dense<0.000000e+00> : vector<8x512xf32>
    %21 = tpu.matmul %18, %20, %cst_18 {dimension_numbers = #tpu.dot_dimension_numbers<[1], [0], [0], [1], [0, 0, 1, 1], [], []>} : vector<8x128xbf16>, vector<128x512xbf16>, vector<8x512xf32> -> vector<8x512xf32>
    %22 = arith.addf %17, %21 : vector<8x512xf32>
    %23 = vector.extract_strided_slice %14 {offsets = [0, 0], sizes = [8, 128], strides = [1, 1]} : vector<8x512xf32> to vector<8x128xf32>
    %cst_19 = arith.constant 5.000000e-01 : f32
    %24 = vector.broadcast %cst_19 : f32 to vector<8x128xf32>
    %25 = arith.mulf %24, %23 : vector<8x128xf32>
    %26 = math.tanh %25 : vector<8x128xf32>
    %cst_20 = arith.constant 5.000000e-01 : f32
    %27 = vector.broadcast %cst_20 : f32 to vector<8x128xf32>
    %28 = arith.mulf %27, %26 : vector<8x128xf32>
    %cst_21 = arith.constant 5.000000e-01 : f32
    %29 = vector.broadcast %cst_21 : f32 to vector<8x128xf32>
    %30 = arith.addf %28, %29 : vector<8x128xf32>
    %31 = vector.extract_strided_slice %14 {offsets = [0, 128], sizes = [8, 128], strides = [1, 1]} : vector<8x512xf32> to vector<8x128xf32>
    %cst_22 = arith.constant 5.000000e-01 : f32
    %32 = vector.broadcast %cst_22 : f32 to vector<8x128xf32>
    %33 = arith.mulf %32, %31 : vector<8x128xf32>
    %34 = math.tanh %33 : vector<8x128xf32>
    %cst_23 = arith.constant 5.000000e-01 : f32
    %35 = vector.broadcast %cst_23 : f32 to vector<8x128xf32>
    %36 = arith.mulf %35, %34 : vector<8x128xf32>
    %cst_24 = arith.constant 5.000000e-01 : f32
    %37 = vector.broadcast %cst_24 : f32 to vector<8x128xf32>
    %38 = arith.addf %36, %37 : vector<8x128xf32>
    %39 = vector.extract_strided_slice %14 {offsets = [0, 256], sizes = [8, 128], strides = [1, 1]} : vector<8x512xf32> to vector<8x128xf32>
    %40 = math.tanh %39 : vector<8x128xf32>
    %41 = vector.extract_strided_slice %14 {offsets = [0, 384], sizes = [8, 128], strides = [1, 1]} : vector<8x512xf32> to vector<8x128xf32>
    %cst_25 = arith.constant 5.000000e-01 : f32
    %42 = vector.broadcast %cst_25 : f32 to vector<8x128xf32>
    %43 = arith.mulf %42, %41 : vector<8x128xf32>
    %44 = math.tanh %43 : vector<8x128xf32>
    %cst_26 = arith.constant 5.000000e-01 : f32
    %45 = vector.broadcast %cst_26 : f32 to vector<8x128xf32>
    %46 = arith.mulf %45, %44 : vector<8x128xf32>
    %cst_27 = arith.constant 5.000000e-01 : f32
    %47 = vector.broadcast %cst_27 : f32 to vector<8x128xf32>
    %48 = arith.addf %46, %47 : vector<8x128xf32>
    %49 = arith.mulf %38, %4 : vector<8x128xf32>
    %50 = arith.mulf %30, %40 : vector<8x128xf32>
    %51 = arith.addf %49, %50 : vector<8x128xf32>
    %52 = math.tanh %51 : vector<8x128xf32>
    %53 = arith.mulf %48, %52 : vector<8x128xf32>
    %54 = vector.extract_strided_slice %22 {offsets = [0, 0], sizes = [8, 128], strides = [1, 1]} : vector<8x512xf32> to vector<8x128xf32>
    %cst_28 = arith.constant 5.000000e-01 : f32
    %55 = vector.broadcast %cst_28 : f32 to vector<8x128xf32>
    %56 = arith.mulf %55, %54 : vector<8x128xf32>
    %57 = math.tanh %56 : vector<8x128xf32>
    %cst_29 = arith.constant 5.000000e-01 : f32
    %58 = vector.broadcast %cst_29 : f32 to vector<8x128xf32>
    %59 = arith.mulf %58, %57 : vector<8x128xf32>
    %cst_30 = arith.constant 5.000000e-01 : f32
    %60 = vector.broadcast %cst_30 : f32 to vector<8x128xf32>
    %61 = arith.addf %59, %60 : vector<8x128xf32>
    %62 = vector.extract_strided_slice %22 {offsets = [0, 128], sizes = [8, 128], strides = [1, 1]} : vector<8x512xf32> to vector<8x128xf32>
    %cst_31 = arith.constant 5.000000e-01 : f32
    %63 = vector.broadcast %cst_31 : f32 to vector<8x128xf32>
    %64 = arith.mulf %63, %62 : vector<8x128xf32>
    %65 = math.tanh %64 : vector<8x128xf32>
    %cst_32 = arith.constant 5.000000e-01 : f32
    %66 = vector.broadcast %cst_32 : f32 to vector<8x128xf32>
    %67 = arith.mulf %66, %65 : vector<8x128xf32>
    %cst_33 = arith.constant 5.000000e-01 : f32
    %68 = vector.broadcast %cst_33 : f32 to vector<8x128xf32>
    %69 = arith.addf %67, %68 : vector<8x128xf32>
    %70 = vector.extract_strided_slice %22 {offsets = [0, 256], sizes = [8, 128], strides = [1, 1]} : vector<8x512xf32> to vector<8x128xf32>
    %71 = math.tanh %70 : vector<8x128xf32>
    %72 = vector.extract_strided_slice %22 {offsets = [0, 384], sizes = [8, 128], strides = [1, 1]} : vector<8x512xf32> to vector<8x128xf32>
    %cst_34 = arith.constant 5.000000e-01 : f32
    %73 = vector.broadcast %cst_34 : f32 to vector<8x128xf32>
    %74 = arith.mulf %73, %72 : vector<8x128xf32>
    %75 = math.tanh %74 : vector<8x128xf32>
    %cst_35 = arith.constant 5.000000e-01 : f32
    %76 = vector.broadcast %cst_35 : f32 to vector<8x128xf32>
    %77 = arith.mulf %76, %75 : vector<8x128xf32>
    %cst_36 = arith.constant 5.000000e-01 : f32
    %78 = vector.broadcast %cst_36 : f32 to vector<8x128xf32>
    %79 = arith.addf %77, %78 : vector<8x128xf32>
    %80 = arith.mulf %69, %6 : vector<8x128xf32>
    %81 = arith.mulf %61, %71 : vector<8x128xf32>
    %82 = arith.addf %80, %81 : vector<8x128xf32>
    %83 = math.tanh %82 : vector<8x128xf32>
    %84 = arith.mulf %79, %83 : vector<8x128xf32>
    %c0_37 = arith.constant 0 : index
    %c0_38 = arith.constant 0 : index
    %c0_39 = arith.constant 0 : index
    %85 = vector.load %arg4[%c0_37, %c0_38, %c0_39] : memref<16x8x128xf32, #tpu.memory_space<vmem>>, vector<1x8x128xf32>
    %86 = vector.shape_cast %85 : vector<1x8x128xf32> to vector<8x128xf32>
    %87 = vector.shape_cast %53 : vector<8x128xf32> to vector<1x8x128xf32>
    tpu.vector_store %arg4[%c0_37, %c0_38, %c0_39], %87 {strides = array<i32>} : memref<16x8x128xf32, #tpu.memory_space<vmem>>, vector<1x8x128xf32>,
    %c15_40 = arith.constant 15 : index
    %c0_41 = arith.constant 0 : index
    %c0_42 = arith.constant 0 : index
    %88 = vector.load %arg5[%c15_40, %c0_41, %c0_42] : memref<16x8x128xf32, #tpu.memory_space<vmem>>, vector<1x8x128xf32>
    %89 = vector.shape_cast %88 : vector<1x8x128xf32> to vector<8x128xf32>
    %90 = vector.shape_cast %84 : vector<8x128xf32> to vector<1x8x128xf32>
    tpu.vector_store %arg5[%c15_40, %c0_41, %c0_42], %90 {strides = array<i32>} : memref<16x8x128xf32, #tpu.memory_space<vmem>>, vector<1x8x128xf32>,
    %c1_43 = arith.constant 1 : index
    %c0_44 = arith.constant 0 : index
    %c0_45 = arith.constant 0 : index
    %91 = vector.load %arg1[%c1_43, %c0_44, %c0_45] : memref<16x8x512xbf16, #tpu.memory_space<vmem>>, vector<1x8x512xbf16>
    %92 = vector.shape_cast %91 : vector<1x8x512xbf16> to vector<8x512xbf16>
    %93 = arith.extf %92 : vector<8x512xbf16> to vector<8x512xf32>
    %94 = arith.truncf %53 : vector<8x128xf32> to vector<8x128xbf16>
    %c0_46 = arith.constant 0 : index
    %c0_47 = arith.constant 0 : index
    %c0_48 = arith.constant 0 : index
    %95 = vector.load %arg6[%c0_46, %c0_47, %c0_48] : memref<2x128x512xbf16, #tpu.memory_space<vmem>>, vector<1x128x512xbf16>
    %96 = vector.shape_cast %95 : vector<1x128x512xbf16> to vector<128x512xbf16>
    %cst_49 = arith.constant dense<0.000000e+00> : vector<8x512xf32>
    %97 = tpu.matmul %94, %96, %cst_49 {dimension_numbers = #tpu.dot_dimension_numbers<[1], [0], [0], [1], [0, 0, 1, 1], [], []>} : vector<8x128xbf16>, vector<128x512xbf16>, vector<8x512xf32> -> vector<8x512xf32>
    %98 = arith.addf %93, %97 : vector<8x512xf32>
    %c14 = arith.constant 14 : index
    %c0_50 = arith.constant 0 : index
    %c0_51 = arith.constant 0 : index
    %99 = vector.load %arg2[%c14, %c0_50, %c0_51] : memref<16x8x512xbf16, #tpu.memory_space<vmem>>, vector<1x8x512xbf16>
    %100 = vector.shape_cast %99 : vector<1x8x512xbf16> to vector<8x512xbf16>
    %101 = arith.extf %100 : vector<8x512xbf16> to vector<8x512xf32>
    %102 = arith.truncf %84 : vector<8x128xf32> to vector<8x128xbf16>
    %c1_52 = arith.constant 1 : index
    %c0_53 = arith.constant 0 : index
    %c0_54 = arith.constant 0 : index
    %103 = vector.load %arg6[%c1_52, %c0_53, %c0_54] : memref<2x128x512xbf16, #tpu.memory_space<vmem>>, vector<1x128x512xbf16>
    %104 = vector.shape_cast %103 : vector<1x128x512xbf16> to vector<128x512xbf16>
    %cst_55 = arith.constant dense<0.000000e+00> : vector<8x512xf32>
    %105 = tpu.matmul %102, %104, %cst_55 {dimension_numbers = #tpu.dot_dimension_numbers<[1], [0], [0], [1], [0, 0, 1, 1], [], []>} : vector<8x128xbf16>, vector<128x512xbf16>, vector<8x512xf32> -> vector<8x512xf32>
    %106 = arith.addf %101, %105 : vector<8x512xf32>
    %107 = vector.extract_strided_slice %98 {offsets = [0, 0], sizes = [8, 128], strides = [1, 1]} : vector<8x512xf32> to vector<8x128xf32>
    %cst_56 = arith.constant 5.000000e-01 : f32
    %108 = vector.broadcast %cst_56 : f32 to vector<8x128xf32>
    %109 = arith.mulf %108, %107 : vector<8x128xf32>
    %110 = math.tanh %109 : vector<8x128xf32>
    %cst_57 = arith.constant 5.000000e-01 : f32
    %111 = vector.broadcast %cst_57 : f32 to vector<8x128xf32>
    %112 = arith.mulf %111, %110 : vector<8x128xf32>
    %cst_58 = arith.constant 5.000000e-01 : f32
    %113 = vector.broadcast %cst_58 : f32 to vector<8x128xf32>
    %114 = arith.addf %112, %113 : vector<8x128xf32>
    %115 = vector.extract_strided_slice %98 {offsets = [0, 128], sizes = [8, 128], strides = [1, 1]} : vector<8x512xf32> to vector<8x128xf32>
    %cst_59 = arith.constant 5.000000e-01 : f32
    %116 = vector.broadcast %cst_59 : f32 to vector<8x128xf32>
    %117 = arith.mulf %116, %115 : vector<8x128xf32>
    %118 = math.tanh %117 : vector<8x128xf32>
    %cst_60 = arith.constant 5.000000e-01 : f32
    %119 = vector.broadcast %cst_60 : f32 to vector<8x128xf32>
    %120 = arith.mulf %119, %118 : vector<8x128xf32>
    %cst_61 = arith.constant 5.000000e-01 : f32
    %121 = vector.broadcast %cst_61 : f32 to vector<8x128xf32>
    %122 = arith.addf %120, %121 : vector<8x128xf32>
    %123 = vector.extract_strided_slice %98 {offsets = [0, 256], sizes = [8, 128], strides = [1, 1]} : vector<8x512xf32> to vector<8x128xf32>
    %124 = math.tanh %123 : vector<8x128xf32>
    %125 = vector.extract_strided_slice %98 {offsets = [0, 384], sizes = [8, 128], strides = [1, 1]} : vector<8x512xf32> to vector<8x128xf32>
    %cst_62 = arith.constant 5.000000e-01 : f32
    %126 = vector.broadcast %cst_62 : f32 to vector<8x128xf32>
    %127 = arith.mulf %126, %125 : vector<8x128xf32>
    %128 = math.tanh %127 : vector<8x128xf32>
    %cst_63 = arith.constant 5.000000e-01 : f32
    %129 = vector.broadcast %cst_63 : f32 to vector<8x128xf32>
    %130 = arith.mulf %129, %128 : vector<8x128xf32>
    %cst_64 = arith.constant 5.000000e-01 : f32
    %131 = vector.broadcast %cst_64 : f32 to vector<8x128xf32>
    %132 = arith.addf %130, %131 : vector<8x128xf32>
    %133 = arith.mulf %122, %51 : vector<8x128xf32>
    %134 = arith.mulf %114, %124 : vector<8x128xf32>
    %135 = arith.addf %133, %134 : vector<8x128xf32>
    %136 = math.tanh %135 : vector<8x128xf32>
    %137 = arith.mulf %132, %136 : vector<8x128xf32>
    %138 = vector.extract_strided_slice %106 {offsets = [0, 0], sizes = [8, 128], strides = [1, 1]} : vector<8x512xf32> to vector<8x128xf32>
    %cst_65 = arith.constant 5.000000e-01 : f32
    %139 = vector.broadcast %cst_65 : f32 to vector<8x128xf32>
    %140 = arith.mulf %139, %138 : vector<8x128xf32>
    %141 = math.tanh %140 : vector<8x128xf32>
    %cst_66 = arith.constant 5.000000e-01 : f32
    %142 = vector.broadcast %cst_66 : f32 to vector<8x128xf32>
    %143 = arith.mulf %142, %141 : vector<8x128xf32>
    %cst_67 = arith.constant 5.000000e-01 : f32
    %144 = vector.broadcast %cst_67 : f32 to vector<8x128xf32>
    %145 = arith.addf %143, %144 : vector<8x128xf32>
    %146 = vector.extract_strided_slice %106 {offsets = [0, 128], sizes = [8, 128], strides = [1, 1]} : vector<8x512xf32> to vector<8x128xf32>
    %cst_68 = arith.constant 5.000000e-01 : f32
    %147 = vector.broadcast %cst_68 : f32 to vector<8x128xf32>
    %148 = arith.mulf %147, %146 : vector<8x128xf32>
    %149 = math.tanh %148 : vector<8x128xf32>
    %cst_69 = arith.constant 5.000000e-01 : f32
    %150 = vector.broadcast %cst_69 : f32 to vector<8x128xf32>
    %151 = arith.mulf %150, %149 : vector<8x128xf32>
    %cst_70 = arith.constant 5.000000e-01 : f32
    %152 = vector.broadcast %cst_70 : f32 to vector<8x128xf32>
    %153 = arith.addf %151, %152 : vector<8x128xf32>
    %154 = vector.extract_strided_slice %106 {offsets = [0, 256], sizes = [8, 128], strides = [1, 1]} : vector<8x512xf32> to vector<8x128xf32>
    %155 = math.tanh %154 : vector<8x128xf32>
    %156 = vector.extract_strided_slice %106 {offsets = [0, 384], sizes = [8, 128], strides = [1, 1]} : vector<8x512xf32> to vector<8x128xf32>
    %cst_71 = arith.constant 5.000000e-01 : f32
    %157 = vector.broadcast %cst_71 : f32 to vector<8x128xf32>
    %158 = arith.mulf %157, %156 : vector<8x128xf32>
    %159 = math.tanh %158 : vector<8x128xf32>
    %cst_72 = arith.constant 5.000000e-01 : f32
    %160 = vector.broadcast %cst_72 : f32 to vector<8x128xf32>
    %161 = arith.mulf %160, %159 : vector<8x128xf32>
    %cst_73 = arith.constant 5.000000e-01 : f32
    %162 = vector.broadcast %cst_73 : f32 to vector<8x128xf32>
    %163 = arith.addf %161, %162 : vector<8x128xf32>
    %164 = arith.mulf %153, %82 : vector<8x128xf32>
    %165 = arith.mulf %145, %155 : vector<8x128xf32>
    %166 = arith.addf %164, %165 : vector<8x128xf32>
    %167 = math.tanh %166 : vector<8x128xf32>
    %168 = arith.mulf %163, %167 : vector<8x128xf32>
    %c1_74 = arith.constant 1 : index
    %c0_75 = arith.constant 0 : index
    %c0_76 = arith.constant 0 : index
    %169 = vector.load %arg4[%c1_74, %c0_75, %c0_76] : memref<16x8x128xf32, #tpu.memory_space<vmem>>, vector<1x8x128xf32>
    %170 = vector.shape_cast %169 : vector<1x8x128xf32> to vector<8x128xf32>
    %171 = vector.shape_cast %137 : vector<8x128xf32> to vector<1x8x128xf32>
    tpu.vector_store %arg4[%c1_74, %c0_75, %c0_76], %171 {strides = array<i32>} : memref<16x8x128xf32, #tpu.memory_space<vmem>>, vector<1x8x128xf32>,
    %c14_77 = arith.constant 14 : index
    %c0_78 = arith.constant 0 : index
    %c0_79 = arith.constant 0 : index
    %172 = vector.load %arg5[%c14_77, %c0_78, %c0_79] : memref<16x8x128xf32, #tpu.memory_space<vmem>>, vector<1x8x128xf32>
    %173 = vector.shape_cast %172 : vector<1x8x128xf32> to vector<8x128xf32>
    %174 = vector.shape_cast %168 : vector<8x128xf32> to vector<1x8x128xf32>
    tpu.vector_store %arg5[%c14_77, %c0_78, %c0_79], %174 {strides = array<i32>} : memref<16x8x128xf32, #tpu.memory_space<vmem>>, vector<1x8x128xf32>,
    %c2 = arith.constant 2 : index
    %c0_80 = arith.constant 0 : index
    %c0_81 = arith.constant 0 : index
    %175 = vector.load %arg1[%c2, %c0_80, %c0_81] : memref<16x8x512xbf16, #tpu.memory_space<vmem>>, vector<1x8x512xbf16>
    %176 = vector.shape_cast %175 : vector<1x8x512xbf16> to vector<8x512xbf16>
    %177 = arith.extf %176 : vector<8x512xbf16> to vector<8x512xf32>
    %178 = arith.truncf %137 : vector<8x128xf32> to vector<8x128xbf16>
    %c0_82 = arith.constant 0 : index
    %c0_83 = arith.constant 0 : index
    %c0_84 = arith.constant 0 : index
    %179 = vector.load %arg6[%c0_82, %c0_83, %c0_84] : memref<2x128x512xbf16, #tpu.memory_space<vmem>>, vector<1x128x512xbf16>
    %180 = vector.shape_cast %179 : vector<1x128x512xbf16> to vector<128x512xbf16>
    %cst_85 = arith.constant dense<0.000000e+00> : vector<8x512xf32>
    %181 = tpu.matmul %178, %180, %cst_85 {dimension_numbers = #tpu.dot_dimension_numbers<[1], [0], [0], [1], [0, 0, 1, 1], [], []>} : vector<8x128xbf16>, vector<128x512xbf16>, vector<8x512xf32> -> vector<8x512xf32>
    %182 = arith.addf %177, %181 : vector<8x512xf32>
    %c13 = arith.constant 13 : index
    %c0_86 = arith.constant 0 : index
    %c0_87 = arith.constant 0 : index
    %183 = vector.load %arg2[%c13, %c0_86, %c0_87] : memref<16x8x512xbf16, #tpu.memory_space<vmem>>, vector<1x8x512xbf16>
    %184 = vector.shape_cast %183 : vector<1x8x512xbf16> to vector<8x512xbf16>
    %185 = arith.extf %184 : vector<8x512xbf16> to vector<8x512xf32>
    %186 = arith.truncf %168 : vector<8x128xf32> to vector<8x128xbf16>
    %c1_88 = arith.constant 1 : index
    %c0_89 = arith.constant 0 : index
    %c0_90 = arith.constant 0 : index
    %187 = vector.load %arg6[%c1_88, %c0_89, %c0_90] : memref<2x128x512xbf16, #tpu.memory_space<vmem>>, vector<1x128x512xbf16>
    %188 = vector.shape_cast %187 : vector<1x128x512xbf16> to vector<128x512xbf16>
    %cst_91 = arith.constant dense<0.000000e+00> : vector<8x512xf32>
    %189 = tpu.matmul %186, %188, %cst_91 {dimension_numbers = #tpu.dot_dimension_numbers<[1], [0], [0], [1], [0, 0, 1, 1], [], []>} : vector<8x128xbf16>, vector<128x512xbf16>, vector<8x512xf32> -> vector<8x512xf32>
    %190 = arith.addf %185, %189 : vector<8x512xf32>
    %191 = vector.extract_strided_slice %182 {offsets = [0, 0], sizes = [8, 128], strides = [1, 1]} : vector<8x512xf32> to vector<8x128xf32>
    %cst_92 = arith.constant 5.000000e-01 : f32
    %192 = vector.broadcast %cst_92 : f32 to vector<8x128xf32>
    %193 = arith.mulf %192, %191 : vector<8x128xf32>
    %194 = math.tanh %193 : vector<8x128xf32>
    %cst_93 = arith.constant 5.000000e-01 : f32
    %195 = vector.broadcast %cst_93 : f32 to vector<8x128xf32>
    %196 = arith.mulf %195, %194 : vector<8x128xf32>
    %cst_94 = arith.constant 5.000000e-01 : f32
    %197 = vector.broadcast %cst_94 : f32 to vector<8x128xf32>
    %198 = arith.addf %196, %197 : vector<8x128xf32>
    %199 = vector.extract_strided_slice %182 {offsets = [0, 128], sizes = [8, 128], strides = [1, 1]} : vector<8x512xf32> to vector<8x128xf32>
    %cst_95 = arith.constant 5.000000e-01 : f32
    %200 = vector.broadcast %cst_95 : f32 to vector<8x128xf32>
    %201 = arith.mulf %200, %199 : vector<8x128xf32>
    %202 = math.tanh %201 : vector<8x128xf32>
    %cst_96 = arith.constant 5.000000e-01 : f32
    %203 = vector.broadcast %cst_96 : f32 to vector<8x128xf32>
    %204 = arith.mulf %203, %202 : vector<8x128xf32>
    %cst_97 = arith.constant 5.000000e-01 : f32
    %205 = vector.broadcast %cst_97 : f32 to vector<8x128xf32>
    %206 = arith.addf %204, %205 : vector<8x128xf32>
    %207 = vector.extract_strided_slice %182 {offsets = [0, 256], sizes = [8, 128], strides = [1, 1]} : vector<8x512xf32> to vector<8x128xf32>
    %208 = math.tanh %207 : vector<8x128xf32>
    %209 = vector.extract_strided_slice %182 {offsets = [0, 384], sizes = [8, 128], strides = [1, 1]} : vector<8x512xf32> to vector<8x128xf32>
    %cst_98 = arith.constant 5.000000e-01 : f32
    %210 = vector.broadcast %cst_98 : f32 to vector<8x128xf32>
    %211 = arith.mulf %210, %209 : vector<8x128xf32>
    %212 = math.tanh %211 : vector<8x128xf32>
    %cst_99 = arith.constant 5.000000e-01 : f32
    %213 = vector.broadcast %cst_99 : f32 to vector<8x128xf32>
    %214 = arith.mulf %213, %212 : vector<8x128xf32>
    %cst_100 = arith.constant 5.000000e-01 : f32
    %215 = vector.broadcast %cst_100 : f32 to vector<8x128xf32>
    %216 = arith.addf %214, %215 : vector<8x128xf32>
    %217 = arith.mulf %206, %135 : vector<8x128xf32>
    %218 = arith.mulf %198, %208 : vector<8x128xf32>
    %219 = arith.addf %217, %218 : vector<8x128xf32>
    %220 = math.tanh %219 : vector<8x128xf32>
    %221 = arith.mulf %216, %220 : vector<8x128xf32>
    %222 = vector.extract_strided_slice %190 {offsets = [0, 0], sizes = [8, 128], strides = [1, 1]} : vector<8x512xf32> to vector<8x128xf32>
    %cst_101 = arith.constant 5.000000e-01 : f32
    %223 = vector.broadcast %cst_101 : f32 to vector<8x128xf32>
    %224 = arith.mulf %223, %222 : vector<8x128xf32>
    %225 = math.tanh %224 : vector<8x128xf32>
    %cst_102 = arith.constant 5.000000e-01 : f32
    %226 = vector.broadcast %cst_102 : f32 to vector<8x128xf32>
    %227 = arith.mulf %226, %225 : vector<8x128xf32>
    %cst_103 = arith.constant 5.000000e-01 : f32
    %228 = vector.broadcast %cst_103 : f32 to vector<8x128xf32>
    %229 = arith.addf %227, %228 : vector<8x128xf32>
    %230 = vector.extract_strided_slice %190 {offsets = [0, 128], sizes = [8, 128], strides = [1, 1]} : vector<8x512xf32> to vector<8x128xf32>
    %cst_104 = arith.constant 5.000000e-01 : f32
    %231 = vector.broadcast %cst_104 : f32 to vector<8x128xf32>
    %232 = arith.mulf %231, %230 : vector<8x128xf32>
    %233 = math.tanh %232 : vector<8x128xf32>
    %cst_105 = arith.constant 5.000000e-01 : f32
    %234 = vector.broadcast %cst_105 : f32 to vector<8x128xf32>
    %235 = arith.mulf %234, %233 : vector<8x128xf32>
    %cst_106 = arith.constant 5.000000e-01 : f32
    %236 = vector.broadcast %cst_106 : f32 to vector<8x128xf32>
    %237 = arith.addf %235, %236 : vector<8x128xf32>
    %238 = vector.extract_strided_slice %190 {offsets = [0, 256], sizes = [8, 128], strides = [1, 1]} : vector<8x512xf32> to vector<8x128xf32>
    %239 = math.tanh %238 : vector<8x128xf32>
    %240 = vector.extract_strided_slice %190 {offsets = [0, 384], sizes = [8, 128], strides = [1, 1]} : vector<8x512xf32> to vector<8x128xf32>
    %cst_107 = arith.constant 5.000000e-01 : f32
    %241 = vector.broadcast %cst_107 : f32 to vector<8x128xf32>
    %242 = arith.mulf %241, %240 : vector<8x128xf32>
    %243 = math.tanh %242 : vector<8x128xf32>
    %cst_108 = arith.constant 5.000000e-01 : f32
    %244 = vector.broadcast %cst_108 : f32 to vector<8x128xf32>
    %245 = arith.mulf %244, %243 : vector<8x128xf32>
    %cst_109 = arith.constant 5.000000e-01 : f32
    %246 = vector.broadcast %cst_109 : f32 to vector<8x128xf32>
    %247 = arith.addf %245, %246 : vector<8x128xf32>
    %248 = arith.mulf %237, %166 : vector<8x128xf32>
    %249 = arith.mulf %229, %239 : vector<8x128xf32>
    %250 = arith.addf %248, %249 : vector<8x128xf32>
    %251 = math.tanh %250 : vector<8x128xf32>
    %252 = arith.mulf %247, %251 : vector<8x128xf32>
    %c2_110 = arith.constant 2 : index
    %c0_111 = arith.constant 0 : index
    %c0_112 = arith.constant 0 : index
    %253 = vector.load %arg4[%c2_110, %c0_111, %c0_112] : memref<16x8x128xf32, #tpu.memory_space<vmem>>, vector<1x8x128xf32>
    %254 = vector.shape_cast %253 : vector<1x8x128xf32> to vector<8x128xf32>
    %255 = vector.shape_cast %221 : vector<8x128xf32> to vector<1x8x128xf32>
    tpu.vector_store %arg4[%c2_110, %c0_111, %c0_112], %255 {strides = array<i32>} : memref<16x8x128xf32, #tpu.memory_space<vmem>>, vector<1x8x128xf32>,
    %c13_113 = arith.constant 13 : index
    %c0_114 = arith.constant 0 : index
    %c0_115 = arith.constant 0 : index
    %256 = vector.load %arg5[%c13_113, %c0_114, %c0_115] : memref<16x8x128xf32, #tpu.memory_space<vmem>>, vector<1x8x128xf32>
    %257 = vector.shape_cast %256 : vector<1x8x128xf32> to vector<8x128xf32>
    %258 = vector.shape_cast %252 : vector<8x128xf32> to vector<1x8x128xf32>
    tpu.vector_store %arg5[%c13_113, %c0_114, %c0_115], %258 {strides = array<i32>} : memref<16x8x128xf32, #tpu.memory_space<vmem>>, vector<1x8x128xf32>,
    %c3 = arith.constant 3 : index
    %c0_116 = arith.constant 0 : index
    %c0_117 = arith.constant 0 : index
    %259 = vector.load %arg1[%c3, %c0_116, %c0_117] : memref<16x8x512xbf16, #tpu.memory_space<vmem>>, vector<1x8x512xbf16>
    %260 = vector.shape_cast %259 : vector<1x8x512xbf16> to vector<8x512xbf16>
    %261 = arith.extf %260 : vector<8x512xbf16> to vector<8x512xf32>
    %262 = arith.truncf %221 : vector<8x128xf32> to vector<8x128xbf16>
    %c0_118 = arith.constant 0 : index
    %c0_119 = arith.constant 0 : index
    %c0_120 = arith.constant 0 : index
    %263 = vector.load %arg6[%c0_118, %c0_119, %c0_120] : memref<2x128x512xbf16, #tpu.memory_space<vmem>>, vector<1x128x512xbf16>
    %264 = vector.shape_cast %263 : vector<1x128x512xbf16> to vector<128x512xbf16>
    %cst_121 = arith.constant dense<0.000000e+00> : vector<8x512xf32>
    %265 = tpu.matmul %262, %264, %cst_121 {dimension_numbers = #tpu.dot_dimension_numbers<[1], [0], [0], [1], [0, 0, 1, 1], [], []>} : vector<8x128xbf16>, vector<128x512xbf16>, vector<8x512xf32> -> vector<8x512xf32>
    %266 = arith.addf %261, %265 : vector<8x512xf32>
    %c12 = arith.constant 12 : index
    %c0_122 = arith.constant 0 : index
    %c0_123 = arith.constant 0 : index
    %267 = vector.load %arg2[%c12, %c0_122, %c0_123] : memref<16x8x512xbf16, #tpu.memory_space<vmem>>, vector<1x8x512xbf16>
    %268 = vector.shape_cast %267 : vector<1x8x512xbf16> to vector<8x512xbf16>
    %269 = arith.extf %268 : vector<8x512xbf16> to vector<8x512xf32>
    %270 = arith.truncf %252 : vector<8x128xf32> to vector<8x128xbf16>
    %c1_124 = arith.constant 1 : index
    %c0_125 = arith.constant 0 : index
    %c0_126 = arith.constant 0 : index
    %271 = vector.load %arg6[%c1_124, %c0_125, %c0_126] : memref<2x128x512xbf16, #tpu.memory_space<vmem>>, vector<1x128x512xbf16>
    %272 = vector.shape_cast %271 : vector<1x128x512xbf16> to vector<128x512xbf16>
    %cst_127 = arith.constant dense<0.000000e+00> : vector<8x512xf32>
    %273 = tpu.matmul %270, %272, %cst_127 {dimension_numbers = #tpu.dot_dimension_numbers<[1], [0], [0], [1], [0, 0, 1, 1], [], []>} : vector<8x128xbf16>, vector<128x512xbf16>, vector<8x512xf32> -> vector<8x512xf32>
    %274 = arith.addf %269, %273 : vector<8x512xf32>
    %275 = vector.extract_strided_slice %266 {offsets = [0, 0], sizes = [8, 128], strides = [1, 1]} : vector<8x512xf32> to vector<8x128xf32>
    %cst_128 = arith.constant 5.000000e-01 : f32
    %276 = vector.broadcast %cst_128 : f32 to vector<8x128xf32>
    %277 = arith.mulf %276, %275 : vector<8x128xf32>
    %278 = math.tanh %277 : vector<8x128xf32>
    %cst_129 = arith.constant 5.000000e-01 : f32
    %279 = vector.broadcast %cst_129 : f32 to vector<8x128xf32>
    %280 = arith.mulf %279, %278 : vector<8x128xf32>
    %cst_130 = arith.constant 5.000000e-01 : f32
    %281 = vector.broadcast %cst_130 : f32 to vector<8x128xf32>
    %282 = arith.addf %280, %281 : vector<8x128xf32>
    %283 = vector.extract_strided_slice %266 {offsets = [0, 128], sizes = [8, 128], strides = [1, 1]} : vector<8x512xf32> to vector<8x128xf32>
    %cst_131 = arith.constant 5.000000e-01 : f32
    %284 = vector.broadcast %cst_131 : f32 to vector<8x128xf32>
    %285 = arith.mulf %284, %283 : vector<8x128xf32>
    %286 = math.tanh %285 : vector<8x128xf32>
    %cst_132 = arith.constant 5.000000e-01 : f32
    %287 = vector.broadcast %cst_132 : f32 to vector<8x128xf32>
    %288 = arith.mulf %287, %286 : vector<8x128xf32>
    %cst_133 = arith.constant 5.000000e-01 : f32
    %289 = vector.broadcast %cst_133 : f32 to vector<8x128xf32>
    %290 = arith.addf %288, %289 : vector<8x128xf32>
    %291 = vector.extract_strided_slice %266 {offsets = [0, 256], sizes = [8, 128], strides = [1, 1]} : vector<8x512xf32> to vector<8x128xf32>
    %292 = math.tanh %291 : vector<8x128xf32>
    %293 = vector.extract_strided_slice %266 {offsets = [0, 384], sizes = [8, 128], strides = [1, 1]} : vector<8x512xf32> to vector<8x128xf32>
    %cst_134 = arith.constant 5.000000e-01 : f32
    %294 = vector.broadcast %cst_134 : f32 to vector<8x128xf32>
    %295 = arith.mulf %294, %293 : vector<8x128xf32>
    %296 = math.tanh %295 : vector<8x128xf32>
    %cst_135 = arith.constant 5.000000e-01 : f32
    %297 = vector.broadcast %cst_135 : f32 to vector<8x128xf32>
    %298 = arith.mulf %297, %296 : vector<8x128xf32>
    %cst_136 = arith.constant 5.000000e-01 : f32
    %299 = vector.broadcast %cst_136 : f32 to vector<8x128xf32>
    %300 = arith.addf %298, %299 : vector<8x128xf32>
    %301 = arith.mulf %290, %219 : vector<8x128xf32>
    %302 = arith.mulf %282, %292 : vector<8x128xf32>
    %303 = arith.addf %301, %302 : vector<8x128xf32>
    %304 = math.tanh %303 : vector<8x128xf32>
    %305 = arith.mulf %300, %304 : vector<8x128xf32>
    %306 = vector.extract_strided_slice %274 {offsets = [0, 0], sizes = [8, 128], strides = [1, 1]} : vector<8x512xf32> to vector<8x128xf32>
    %cst_137 = arith.constant 5.000000e-01 : f32
    %307 = vector.broadcast %cst_137 : f32 to vector<8x128xf32>
    %308 = arith.mulf %307, %306 : vector<8x128xf32>
    %309 = math.tanh %308 : vector<8x128xf32>
    %cst_138 = arith.constant 5.000000e-01 : f32
    %310 = vector.broadcast %cst_138 : f32 to vector<8x128xf32>
    %311 = arith.mulf %310, %309 : vector<8x128xf32>
    %cst_139 = arith.constant 5.000000e-01 : f32
    %312 = vector.broadcast %cst_139 : f32 to vector<8x128xf32>
    %313 = arith.addf %311, %312 : vector<8x128xf32>
    %314 = vector.extract_strided_slice %274 {offsets = [0, 128], sizes = [8, 128], strides = [1, 1]} : vector<8x512xf32> to vector<8x128xf32>
    %cst_140 = arith.constant 5.000000e-01 : f32
    %315 = vector.broadcast %cst_140 : f32 to vector<8x128xf32>
    %316 = arith.mulf %315, %314 : vector<8x128xf32>
    %317 = math.tanh %316 : vector<8x128xf32>
    %cst_141 = arith.constant 5.000000e-01 : f32
    %318 = vector.broadcast %cst_141 : f32 to vector<8x128xf32>
    %319 = arith.mulf %318, %317 : vector<8x128xf32>
    %cst_142 = arith.constant 5.000000e-01 : f32
    %320 = vector.broadcast %cst_142 : f32 to vector<8x128xf32>
    %321 = arith.addf %319, %320 : vector<8x128xf32>
    %322 = vector.extract_strided_slice %274 {offsets = [0, 256], sizes = [8, 128], strides = [1, 1]} : vector<8x512xf32> to vector<8x128xf32>
    %323 = math.tanh %322 : vector<8x128xf32>
    %324 = vector.extract_strided_slice %274 {offsets = [0, 384], sizes = [8, 128], strides = [1, 1]} : vector<8x512xf32> to vector<8x128xf32>
    %cst_143 = arith.constant 5.000000e-01 : f32
    %325 = vector.broadcast %cst_143 : f32 to vector<8x128xf32>
    %326 = arith.mulf %325, %324 : vector<8x128xf32>
    %327 = math.tanh %326 : vector<8x128xf32>
    %cst_144 = arith.constant 5.000000e-01 : f32
    %328 = vector.broadcast %cst_144 : f32 to vector<8x128xf32>
    %329 = arith.mulf %328, %327 : vector<8x128xf32>
    %cst_145 = arith.constant 5.000000e-01 : f32
    %330 = vector.broadcast %cst_145 : f32 to vector<8x128xf32>
    %331 = arith.addf %329, %330 : vector<8x128xf32>
    %332 = arith.mulf %321, %250 : vector<8x128xf32>
    %333 = arith.mulf %313, %323 : vector<8x128xf32>
    %334 = arith.addf %332, %333 : vector<8x128xf32>
    %335 = math.tanh %334 : vector<8x128xf32>
    %336 = arith.mulf %331, %335 : vector<8x128xf32>
    %c3_146 = arith.constant 3 : index
    %c0_147 = arith.constant 0 : index
    %c0_148 = arith.constant 0 : index
    %337 = vector.load %arg4[%c3_146, %c0_147, %c0_148] : memref<16x8x128xf32, #tpu.memory_space<vmem>>, vector<1x8x128xf32>
    %338 = vector.shape_cast %337 : vector<1x8x128xf32> to vector<8x128xf32>
    %339 = vector.shape_cast %305 : vector<8x128xf32> to vector<1x8x128xf32>
    tpu.vector_store %arg4[%c3_146, %c0_147, %c0_148], %339 {strides = array<i32>} : memref<16x8x128xf32, #tpu.memory_space<vmem>>, vector<1x8x128xf32>,
    %c12_149 = arith.constant 12 : index
    %c0_150 = arith.constant 0 : index
    %c0_151 = arith.constant 0 : index
    %340 = vector.load %arg5[%c12_149, %c0_150, %c0_151] : memref<16x8x128xf32, #tpu.memory_space<vmem>>, vector<1x8x128xf32>
    %341 = vector.shape_cast %340 : vector<1x8x128xf32> to vector<8x128xf32>
    %342 = vector.shape_cast %336 : vector<8x128xf32> to vector<1x8x128xf32>
    tpu.vector_store %arg5[%c12_149, %c0_150, %c0_151], %342 {strides = array<i32>} : memref<16x8x128xf32, #tpu.memory_space<vmem>>, vector<1x8x128xf32>,
    %c4 = arith.constant 4 : index
    %c0_152 = arith.constant 0 : index
    %c0_153 = arith.constant 0 : index
    %343 = vector.load %arg1[%c4, %c0_152, %c0_153] : memref<16x8x512xbf16, #tpu.memory_space<vmem>>, vector<1x8x512xbf16>
    %344 = vector.shape_cast %343 : vector<1x8x512xbf16> to vector<8x512xbf16>
    %345 = arith.extf %344 : vector<8x512xbf16> to vector<8x512xf32>
    %346 = arith.truncf %305 : vector<8x128xf32> to vector<8x128xbf16>
    %c0_154 = arith.constant 0 : index
    %c0_155 = arith.constant 0 : index
    %c0_156 = arith.constant 0 : index
    %347 = vector.load %arg6[%c0_154, %c0_155, %c0_156] : memref<2x128x512xbf16, #tpu.memory_space<vmem>>, vector<1x128x512xbf16>
    %348 = vector.shape_cast %347 : vector<1x128x512xbf16> to vector<128x512xbf16>
    %cst_157 = arith.constant dense<0.000000e+00> : vector<8x512xf32>
    %349 = tpu.matmul %346, %348, %cst_157 {dimension_numbers = #tpu.dot_dimension_numbers<[1], [0], [0], [1], [0, 0, 1, 1], [], []>} : vector<8x128xbf16>, vector<128x512xbf16>, vector<8x512xf32> -> vector<8x512xf32>
    %350 = arith.addf %345, %349 : vector<8x512xf32>
    %c11 = arith.constant 11 : index
    %c0_158 = arith.constant 0 : index
    %c0_159 = arith.constant 0 : index
    %351 = vector.load %arg2[%c11, %c0_158, %c0_159] : memref<16x8x512xbf16, #tpu.memory_space<vmem>>, vector<1x8x512xbf16>
    %352 = vector.shape_cast %351 : vector<1x8x512xbf16> to vector<8x512xbf16>
    %353 = arith.extf %352 : vector<8x512xbf16> to vector<8x512xf32>
    %354 = arith.truncf %336 : vector<8x128xf32> to vector<8x128xbf16>
    %c1_160 = arith.constant 1 : index
    %c0_161 = arith.constant 0 : index
    %c0_162 = arith.constant 0 : index
    %355 = vector.load %arg6[%c1_160, %c0_161, %c0_162] : memref<2x128x512xbf16, #tpu.memory_space<vmem>>, vector<1x128x512xbf16>
    %356 = vector.shape_cast %355 : vector<1x128x512xbf16> to vector<128x512xbf16>
    %cst_163 = arith.constant dense<0.000000e+00> : vector<8x512xf32>
    %357 = tpu.matmul %354, %356, %cst_163 {dimension_numbers = #tpu.dot_dimension_numbers<[1], [0], [0], [1], [0, 0, 1, 1], [], []>} : vector<8x128xbf16>, vector<128x512xbf16>, vector<8x512xf32> -> vector<8x512xf32>
    %358 = arith.addf %353, %357 : vector<8x512xf32>
    %359 = vector.extract_strided_slice %350 {offsets = [0, 0], sizes = [8, 128], strides = [1, 1]} : vector<8x512xf32> to vector<8x128xf32>
    %cst_164 = arith.constant 5.000000e-01 : f32
    %360 = vector.broadcast %cst_164 : f32 to vector<8x128xf32>
    %361 = arith.mulf %360, %359 : vector<8x128xf32>
    %362 = math.tanh %361 : vector<8x128xf32>
    %cst_165 = arith.constant 5.000000e-01 : f32
    %363 = vector.broadcast %cst_165 : f32 to vector<8x128xf32>
    %364 = arith.mulf %363, %362 : vector<8x128xf32>
    %cst_166 = arith.constant 5.000000e-01 : f32
    %365 = vector.broadcast %cst_166 : f32 to vector<8x128xf32>
    %366 = arith.addf %364, %365 : vector<8x128xf32>
    %367 = vector.extract_strided_slice %350 {offsets = [0, 128], sizes = [8, 128], strides = [1, 1]} : vector<8x512xf32> to vector<8x128xf32>
    %cst_167 = arith.constant 5.000000e-01 : f32
    %368 = vector.broadcast %cst_167 : f32 to vector<8x128xf32>
    %369 = arith.mulf %368, %367 : vector<8x128xf32>
    %370 = math.tanh %369 : vector<8x128xf32>
    %cst_168 = arith.constant 5.000000e-01 : f32
    %371 = vector.broadcast %cst_168 : f32 to vector<8x128xf32>
    %372 = arith.mulf %371, %370 : vector<8x128xf32>
    %cst_169 = arith.constant 5.000000e-01 : f32
    %373 = vector.broadcast %cst_169 : f32 to vector<8x128xf32>
    %374 = arith.addf %372, %373 : vector<8x128xf32>
    %375 = vector.extract_strided_slice %350 {offsets = [0, 256], sizes = [8, 128], strides = [1, 1]} : vector<8x512xf32> to vector<8x128xf32>
    %376 = math.tanh %375 : vector<8x128xf32>
    %377 = vector.extract_strided_slice %350 {offsets = [0, 384], sizes = [8, 128], strides = [1, 1]} : vector<8x512xf32> to vector<8x128xf32>
    %cst_170 = arith.constant 5.000000e-01 : f32
    %378 = vector.broadcast %cst_170 : f32 to vector<8x128xf32>
    %379 = arith.mulf %378, %377 : vector<8x128xf32>
    %380 = math.tanh %379 : vector<8x128xf32>
    %cst_171 = arith.constant 5.000000e-01 : f32
    %381 = vector.broadcast %cst_171 : f32 to vector<8x128xf32>
    %382 = arith.mulf %381, %380 : vector<8x128xf32>
    %cst_172 = arith.constant 5.000000e-01 : f32
    %383 = vector.broadcast %cst_172 : f32 to vector<8x128xf32>
    %384 = arith.addf %382, %383 : vector<8x128xf32>
    %385 = arith.mulf %374, %303 : vector<8x128xf32>
    %386 = arith.mulf %366, %376 : vector<8x128xf32>
    %387 = arith.addf %385, %386 : vector<8x128xf32>
    %388 = math.tanh %387 : vector<8x128xf32>
    %389 = arith.mulf %384, %388 : vector<8x128xf32>
    %390 = vector.extract_strided_slice %358 {offsets = [0, 0], sizes = [8, 128], strides = [1, 1]} : vector<8x512xf32> to vector<8x128xf32>
    %cst_173 = arith.constant 5.000000e-01 : f32
    %391 = vector.broadcast %cst_173 : f32 to vector<8x128xf32>
    %392 = arith.mulf %391, %390 : vector<8x128xf32>
    %393 = math.tanh %392 : vector<8x128xf32>
    %cst_174 = arith.constant 5.000000e-01 : f32
    %394 = vector.broadcast %cst_174 : f32 to vector<8x128xf32>
    %395 = arith.mulf %394, %393 : vector<8x128xf32>
    %cst_175 = arith.constant 5.000000e-01 : f32
    %396 = vector.broadcast %cst_175 : f32 to vector<8x128xf32>
    %397 = arith.addf %395, %396 : vector<8x128xf32>
    %398 = vector.extract_strided_slice %358 {offsets = [0, 128], sizes = [8, 128], strides = [1, 1]} : vector<8x512xf32> to vector<8x128xf32>
    %cst_176 = arith.constant 5.000000e-01 : f32
    %399 = vector.broadcast %cst_176 : f32 to vector<8x128xf32>
    %400 = arith.mulf %399, %398 : vector<8x128xf32>
    %401 = math.tanh %400 : vector<8x128xf32>
    %cst_177 = arith.constant 5.000000e-01 : f32
    %402 = vector.broadcast %cst_177 : f32 to vector<8x128xf32>
    %403 = arith.mulf %402, %401 : vector<8x128xf32>
    %cst_178 = arith.constant 5.000000e-01 : f32
    %404 = vector.broadcast %cst_178 : f32 to vector<8x128xf32>
    %405 = arith.addf %403, %404 : vector<8x128xf32>
    %406 = vector.extract_strided_slice %358 {offsets = [0, 256], sizes = [8, 128], strides = [1, 1]} : vector<8x512xf32> to vector<8x128xf32>
    %407 = math.tanh %406 : vector<8x128xf32>
    %408 = vector.extract_strided_slice %358 {offsets = [0, 384], sizes = [8, 128], strides = [1, 1]} : vector<8x512xf32> to vector<8x128xf32>
    %cst_179 = arith.constant 5.000000e-01 : f32
    %409 = vector.broadcast %cst_179 : f32 to vector<8x128xf32>
    %410 = arith.mulf %409, %408 : vector<8x128xf32>
    %411 = math.tanh %410 : vector<8x128xf32>
    %cst_180 = arith.constant 5.000000e-01 : f32
    %412 = vector.broadcast %cst_180 : f32 to vector<8x128xf32>
    %413 = arith.mulf %412, %411 : vector<8x128xf32>
    %cst_181 = arith.constant 5.000000e-01 : f32
    %414 = vector.broadcast %cst_181 : f32 to vector<8x128xf32>
    %415 = arith.addf %413, %414 : vector<8x128xf32>
    %416 = arith.mulf %405, %334 : vector<8x128xf32>
    %417 = arith.mulf %397, %407 : vector<8x128xf32>
    %418 = arith.addf %416, %417 : vector<8x128xf32>
    %419 = math.tanh %418 : vector<8x128xf32>
    %420 = arith.mulf %415, %419 : vector<8x128xf32>
    %c4_182 = arith.constant 4 : index
    %c0_183 = arith.constant 0 : index
    %c0_184 = arith.constant 0 : index
    %421 = vector.load %arg4[%c4_182, %c0_183, %c0_184] : memref<16x8x128xf32, #tpu.memory_space<vmem>>, vector<1x8x128xf32>
    %422 = vector.shape_cast %421 : vector<1x8x128xf32> to vector<8x128xf32>
    %423 = vector.shape_cast %389 : vector<8x128xf32> to vector<1x8x128xf32>
    tpu.vector_store %arg4[%c4_182, %c0_183, %c0_184], %423 {strides = array<i32>} : memref<16x8x128xf32, #tpu.memory_space<vmem>>, vector<1x8x128xf32>,
    %c11_185 = arith.constant 11 : index
    %c0_186 = arith.constant 0 : index
    %c0_187 = arith.constant 0 : index
    %424 = vector.load %arg5[%c11_185, %c0_186, %c0_187] : memref<16x8x128xf32, #tpu.memory_space<vmem>>, vector<1x8x128xf32>
    %425 = vector.shape_cast %424 : vector<1x8x128xf32> to vector<8x128xf32>
    %426 = vector.shape_cast %420 : vector<8x128xf32> to vector<1x8x128xf32>
    tpu.vector_store %arg5[%c11_185, %c0_186, %c0_187], %426 {strides = array<i32>} : memref<16x8x128xf32, #tpu.memory_space<vmem>>, vector<1x8x128xf32>,
    %c5 = arith.constant 5 : index
    %c0_188 = arith.constant 0 : index
    %c0_189 = arith.constant 0 : index
    %427 = vector.load %arg1[%c5, %c0_188, %c0_189] : memref<16x8x512xbf16, #tpu.memory_space<vmem>>, vector<1x8x512xbf16>
    %428 = vector.shape_cast %427 : vector<1x8x512xbf16> to vector<8x512xbf16>
    %429 = arith.extf %428 : vector<8x512xbf16> to vector<8x512xf32>
    %430 = arith.truncf %389 : vector<8x128xf32> to vector<8x128xbf16>
    %c0_190 = arith.constant 0 : index
    %c0_191 = arith.constant 0 : index
    %c0_192 = arith.constant 0 : index
    %431 = vector.load %arg6[%c0_190, %c0_191, %c0_192] : memref<2x128x512xbf16, #tpu.memory_space<vmem>>, vector<1x128x512xbf16>
    %432 = vector.shape_cast %431 : vector<1x128x512xbf16> to vector<128x512xbf16>
    %cst_193 = arith.constant dense<0.000000e+00> : vector<8x512xf32>
    %433 = tpu.matmul %430, %432, %cst_193 {dimension_numbers = #tpu.dot_dimension_numbers<[1], [0], [0], [1], [0, 0, 1, 1], [], []>} : vector<8x128xbf16>, vector<128x512xbf16>, vector<8x512xf32> -> vector<8x512xf32>
    %434 = arith.addf %429, %433 : vector<8x512xf32>
    %c10 = arith.constant 10 : index
    %c0_194 = arith.constant 0 : index
    %c0_195 = arith.constant 0 : index
    %435 = vector.load %arg2[%c10, %c0_194, %c0_195] : memref<16x8x512xbf16, #tpu.memory_space<vmem>>, vector<1x8x512xbf16>
    %436 = vector.shape_cast %435 : vector<1x8x512xbf16> to vector<8x512xbf16>
    %437 = arith.extf %436 : vector<8x512xbf16> to vector<8x512xf32>
    %438 = arith.truncf %420 : vector<8x128xf32> to vector<8x128xbf16>
    %c1_196 = arith.constant 1 : index
    %c0_197 = arith.constant 0 : index
    %c0_198 = arith.constant 0 : index
    %439 = vector.load %arg6[%c1_196, %c0_197, %c0_198] : memref<2x128x512xbf16, #tpu.memory_space<vmem>>, vector<1x128x512xbf16>
    %440 = vector.shape_cast %439 : vector<1x128x512xbf16> to vector<128x512xbf16>
    %cst_199 = arith.constant dense<0.000000e+00> : vector<8x512xf32>
    %441 = tpu.matmul %438, %440, %cst_199 {dimension_numbers = #tpu.dot_dimension_numbers<[1], [0], [0], [1], [0, 0, 1, 1], [], []>} : vector<8x128xbf16>, vector<128x512xbf16>, vector<8x512xf32> -> vector<8x512xf32>
    %442 = arith.addf %437, %441 : vector<8x512xf32>
    %443 = vector.extract_strided_slice %434 {offsets = [0, 0], sizes = [8, 128], strides = [1, 1]} : vector<8x512xf32> to vector<8x128xf32>
    %cst_200 = arith.constant 5.000000e-01 : f32
    %444 = vector.broadcast %cst_200 : f32 to vector<8x128xf32>
    %445 = arith.mulf %444, %443 : vector<8x128xf32>
    %446 = math.tanh %445 : vector<8x128xf32>
    %cst_201 = arith.constant 5.000000e-01 : f32
    %447 = vector.broadcast %cst_201 : f32 to vector<8x128xf32>
    %448 = arith.mulf %447, %446 : vector<8x128xf32>
    %cst_202 = arith.constant 5.000000e-01 : f32
    %449 = vector.broadcast %cst_202 : f32 to vector<8x128xf32>
    %450 = arith.addf %448, %449 : vector<8x128xf32>
    %451 = vector.extract_strided_slice %434 {offsets = [0, 128], sizes = [8, 128], strides = [1, 1]} : vector<8x512xf32> to vector<8x128xf32>
    %cst_203 = arith.constant 5.000000e-01 : f32
    %452 = vector.broadcast %cst_203 : f32 to vector<8x128xf32>
    %453 = arith.mulf %452, %451 : vector<8x128xf32>
    %454 = math.tanh %453 : vector<8x128xf32>
    %cst_204 = arith.constant 5.000000e-01 : f32
    %455 = vector.broadcast %cst_204 : f32 to vector<8x128xf32>
    %456 = arith.mulf %455, %454 : vector<8x128xf32>
    %cst_205 = arith.constant 5.000000e-01 : f32
    %457 = vector.broadcast %cst_205 : f32 to vector<8x128xf32>
    %458 = arith.addf %456, %457 : vector<8x128xf32>
    %459 = vector.extract_strided_slice %434 {offsets = [0, 256], sizes = [8, 128], strides = [1, 1]} : vector<8x512xf32> to vector<8x128xf32>
    %460 = math.tanh %459 : vector<8x128xf32>
    %461 = vector.extract_strided_slice %434 {offsets = [0, 384], sizes = [8, 128], strides = [1, 1]} : vector<8x512xf32> to vector<8x128xf32>
    %cst_206 = arith.constant 5.000000e-01 : f32
    %462 = vector.broadcast %cst_206 : f32 to vector<8x128xf32>
    %463 = arith.mulf %462, %461 : vector<8x128xf32>
    %464 = math.tanh %463 : vector<8x128xf32>
    %cst_207 = arith.constant 5.000000e-01 : f32
    %465 = vector.broadcast %cst_207 : f32 to vector<8x128xf32>
    %466 = arith.mulf %465, %464 : vector<8x128xf32>
    %cst_208 = arith.constant 5.000000e-01 : f32
    %467 = vector.broadcast %cst_208 : f32 to vector<8x128xf32>
    %468 = arith.addf %466, %467 : vector<8x128xf32>
    %469 = arith.mulf %458, %387 : vector<8x128xf32>
    %470 = arith.mulf %450, %460 : vector<8x128xf32>
    %471 = arith.addf %469, %470 : vector<8x128xf32>
    %472 = math.tanh %471 : vector<8x128xf32>
    %473 = arith.mulf %468, %472 : vector<8x128xf32>
    %474 = vector.extract_strided_slice %442 {offsets = [0, 0], sizes = [8, 128], strides = [1, 1]} : vector<8x512xf32> to vector<8x128xf32>
    %cst_209 = arith.constant 5.000000e-01 : f32
    %475 = vector.broadcast %cst_209 : f32 to vector<8x128xf32>
    %476 = arith.mulf %475, %474 : vector<8x128xf32>
    %477 = math.tanh %476 : vector<8x128xf32>
    %cst_210 = arith.constant 5.000000e-01 : f32
    %478 = vector.broadcast %cst_210 : f32 to vector<8x128xf32>
    %479 = arith.mulf %478, %477 : vector<8x128xf32>
    %cst_211 = arith.constant 5.000000e-01 : f32
    %480 = vector.broadcast %cst_211 : f32 to vector<8x128xf32>
    %481 = arith.addf %479, %480 : vector<8x128xf32>
    %482 = vector.extract_strided_slice %442 {offsets = [0, 128], sizes = [8, 128], strides = [1, 1]} : vector<8x512xf32> to vector<8x128xf32>
    %cst_212 = arith.constant 5.000000e-01 : f32
    %483 = vector.broadcast %cst_212 : f32 to vector<8x128xf32>
    %484 = arith.mulf %483, %482 : vector<8x128xf32>
    %485 = math.tanh %484 : vector<8x128xf32>
    %cst_213 = arith.constant 5.000000e-01 : f32
    %486 = vector.broadcast %cst_213 : f32 to vector<8x128xf32>
    %487 = arith.mulf %486, %485 : vector<8x128xf32>
    %cst_214 = arith.constant 5.000000e-01 : f32
    %488 = vector.broadcast %cst_214 : f32 to vector<8x128xf32>
    %489 = arith.addf %487, %488 : vector<8x128xf32>
    %490 = vector.extract_strided_slice %442 {offsets = [0, 256], sizes = [8, 128], strides = [1, 1]} : vector<8x512xf32> to vector<8x128xf32>
    %491 = math.tanh %490 : vector<8x128xf32>
    %492 = vector.extract_strided_slice %442 {offsets = [0, 384], sizes = [8, 128], strides = [1, 1]} : vector<8x512xf32> to vector<8x128xf32>
    %cst_215 = arith.constant 5.000000e-01 : f32
    %493 = vector.broadcast %cst_215 : f32 to vector<8x128xf32>
    %494 = arith.mulf %493, %492 : vector<8x128xf32>
    %495 = math.tanh %494 : vector<8x128xf32>
    %cst_216 = arith.constant 5.000000e-01 : f32
    %496 = vector.broadcast %cst_216 : f32 to vector<8x128xf32>
    %497 = arith.mulf %496, %495 : vector<8x128xf32>
    %cst_217 = arith.constant 5.000000e-01 : f32
    %498 = vector.broadcast %cst_217 : f32 to vector<8x128xf32>
    %499 = arith.addf %497, %498 : vector<8x128xf32>
    %500 = arith.mulf %489, %418 : vector<8x128xf32>
    %501 = arith.mulf %481, %491 : vector<8x128xf32>
    %502 = arith.addf %500, %501 : vector<8x128xf32>
    %503 = math.tanh %502 : vector<8x128xf32>
    %504 = arith.mulf %499, %503 : vector<8x128xf32>
    %c5_218 = arith.constant 5 : index
    %c0_219 = arith.constant 0 : index
    %c0_220 = arith.constant 0 : index
    %505 = vector.load %arg4[%c5_218, %c0_219, %c0_220] : memref<16x8x128xf32, #tpu.memory_space<vmem>>, vector<1x8x128xf32>
    %506 = vector.shape_cast %505 : vector<1x8x128xf32> to vector<8x128xf32>
    %507 = vector.shape_cast %473 : vector<8x128xf32> to vector<1x8x128xf32>
    tpu.vector_store %arg4[%c5_218, %c0_219, %c0_220], %507 {strides = array<i32>} : memref<16x8x128xf32, #tpu.memory_space<vmem>>, vector<1x8x128xf32>,
    %c10_221 = arith.constant 10 : index
    %c0_222 = arith.constant 0 : index
    %c0_223 = arith.constant 0 : index
    %508 = vector.load %arg5[%c10_221, %c0_222, %c0_223] : memref<16x8x128xf32, #tpu.memory_space<vmem>>, vector<1x8x128xf32>
    %509 = vector.shape_cast %508 : vector<1x8x128xf32> to vector<8x128xf32>
    %510 = vector.shape_cast %504 : vector<8x128xf32> to vector<1x8x128xf32>
    tpu.vector_store %arg5[%c10_221, %c0_222, %c0_223], %510 {strides = array<i32>} : memref<16x8x128xf32, #tpu.memory_space<vmem>>, vector<1x8x128xf32>,
    %c6 = arith.constant 6 : index
    %c0_224 = arith.constant 0 : index
    %c0_225 = arith.constant 0 : index
    %511 = vector.load %arg1[%c6, %c0_224, %c0_225] : memref<16x8x512xbf16, #tpu.memory_space<vmem>>, vector<1x8x512xbf16>
    %512 = vector.shape_cast %511 : vector<1x8x512xbf16> to vector<8x512xbf16>
    %513 = arith.extf %512 : vector<8x512xbf16> to vector<8x512xf32>
    %514 = arith.truncf %473 : vector<8x128xf32> to vector<8x128xbf16>
    %c0_226 = arith.constant 0 : index
    %c0_227 = arith.constant 0 : index
    %c0_228 = arith.constant 0 : index
    %515 = vector.load %arg6[%c0_226, %c0_227, %c0_228] : memref<2x128x512xbf16, #tpu.memory_space<vmem>>, vector<1x128x512xbf16>
    %516 = vector.shape_cast %515 : vector<1x128x512xbf16> to vector<128x512xbf16>
    %cst_229 = arith.constant dense<0.000000e+00> : vector<8x512xf32>
    %517 = tpu.matmul %514, %516, %cst_229 {dimension_numbers = #tpu.dot_dimension_numbers<[1], [0], [0], [1], [0, 0, 1, 1], [], []>} : vector<8x128xbf16>, vector<128x512xbf16>, vector<8x512xf32> -> vector<8x512xf32>
    %518 = arith.addf %513, %517 : vector<8x512xf32>
    %c9 = arith.constant 9 : index
    %c0_230 = arith.constant 0 : index
    %c0_231 = arith.constant 0 : index
    %519 = vector.load %arg2[%c9, %c0_230, %c0_231] : memref<16x8x512xbf16, #tpu.memory_space<vmem>>, vector<1x8x512xbf16>
    %520 = vector.shape_cast %519 : vector<1x8x512xbf16> to vector<8x512xbf16>
    %521 = arith.extf %520 : vector<8x512xbf16> to vector<8x512xf32>
    %522 = arith.truncf %504 : vector<8x128xf32> to vector<8x128xbf16>
    %c1_232 = arith.constant 1 : index
    %c0_233 = arith.constant 0 : index
    %c0_234 = arith.constant 0 : index
    %523 = vector.load %arg6[%c1_232, %c0_233, %c0_234] : memref<2x128x512xbf16, #tpu.memory_space<vmem>>, vector<1x128x512xbf16>
    %524 = vector.shape_cast %523 : vector<1x128x512xbf16> to vector<128x512xbf16>
    %cst_235 = arith.constant dense<0.000000e+00> : vector<8x512xf32>
    %525 = tpu.matmul %522, %524, %cst_235 {dimension_numbers = #tpu.dot_dimension_numbers<[1], [0], [0], [1], [0, 0, 1, 1], [], []>} : vector<8x128xbf16>, vector<128x512xbf16>, vector<8x512xf32> -> vector<8x512xf32>
    %526 = arith.addf %521, %525 : vector<8x512xf32>
    %527 = vector.extract_strided_slice %518 {offsets = [0, 0], sizes = [8, 128], strides = [1, 1]} : vector<8x512xf32> to vector<8x128xf32>
    %cst_236 = arith.constant 5.000000e-01 : f32
    %528 = vector.broadcast %cst_236 : f32 to vector<8x128xf32>
    %529 = arith.mulf %528, %527 : vector<8x128xf32>
    %530 = math.tanh %529 : vector<8x128xf32>
    %cst_237 = arith.constant 5.000000e-01 : f32
    %531 = vector.broadcast %cst_237 : f32 to vector<8x128xf32>
    %532 = arith.mulf %531, %530 : vector<8x128xf32>
    %cst_238 = arith.constant 5.000000e-01 : f32
    %533 = vector.broadcast %cst_238 : f32 to vector<8x128xf32>
    %534 = arith.addf %532, %533 : vector<8x128xf32>
    %535 = vector.extract_strided_slice %518 {offsets = [0, 128], sizes = [8, 128], strides = [1, 1]} : vector<8x512xf32> to vector<8x128xf32>
    %cst_239 = arith.constant 5.000000e-01 : f32
    %536 = vector.broadcast %cst_239 : f32 to vector<8x128xf32>
    %537 = arith.mulf %536, %535 : vector<8x128xf32>
    %538 = math.tanh %537 : vector<8x128xf32>
    %cst_240 = arith.constant 5.000000e-01 : f32
    %539 = vector.broadcast %cst_240 : f32 to vector<8x128xf32>
    %540 = arith.mulf %539, %538 : vector<8x128xf32>
    %cst_241 = arith.constant 5.000000e-01 : f32
    %541 = vector.broadcast %cst_241 : f32 to vector<8x128xf32>
    %542 = arith.addf %540, %541 : vector<8x128xf32>
    %543 = vector.extract_strided_slice %518 {offsets = [0, 256], sizes = [8, 128], strides = [1, 1]} : vector<8x512xf32> to vector<8x128xf32>
    %544 = math.tanh %543 : vector<8x128xf32>
    %545 = vector.extract_strided_slice %518 {offsets = [0, 384], sizes = [8, 128], strides = [1, 1]} : vector<8x512xf32> to vector<8x128xf32>
    %cst_242 = arith.constant 5.000000e-01 : f32
    %546 = vector.broadcast %cst_242 : f32 to vector<8x128xf32>
    %547 = arith.mulf %546, %545 : vector<8x128xf32>
    %548 = math.tanh %547 : vector<8x128xf32>
    %cst_243 = arith.constant 5.000000e-01 : f32
    %549 = vector.broadcast %cst_243 : f32 to vector<8x128xf32>
    %550 = arith.mulf %549, %548 : vector<8x128xf32>
    %cst_244 = arith.constant 5.000000e-01 : f32
    %551 = vector.broadcast %cst_244 : f32 to vector<8x128xf32>
    %552 = arith.addf %550, %551 : vector<8x128xf32>
    %553 = arith.mulf %542, %471 : vector<8x128xf32>
    %554 = arith.mulf %534, %544 : vector<8x128xf32>
    %555 = arith.addf %553, %554 : vector<8x128xf32>
    %556 = math.tanh %555 : vector<8x128xf32>
    %557 = arith.mulf %552, %556 : vector<8x128xf32>
    %558 = vector.extract_strided_slice %526 {offsets = [0, 0], sizes = [8, 128], strides = [1, 1]} : vector<8x512xf32> to vector<8x128xf32>
    %cst_245 = arith.constant 5.000000e-01 : f32
    %559 = vector.broadcast %cst_245 : f32 to vector<8x128xf32>
    %560 = arith.mulf %559, %558 : vector<8x128xf32>
    %561 = math.tanh %560 : vector<8x128xf32>
    %cst_246 = arith.constant 5.000000e-01 : f32
    %562 = vector.broadcast %cst_246 : f32 to vector<8x128xf32>
    %563 = arith.mulf %562, %561 : vector<8x128xf32>
    %cst_247 = arith.constant 5.000000e-01 : f32
    %564 = vector.broadcast %cst_247 : f32 to vector<8x128xf32>
    %565 = arith.addf %563, %564 : vector<8x128xf32>
    %566 = vector.extract_strided_slice %526 {offsets = [0, 128], sizes = [8, 128], strides = [1, 1]} : vector<8x512xf32> to vector<8x128xf32>
    %cst_248 = arith.constant 5.000000e-01 : f32
    %567 = vector.broadcast %cst_248 : f32 to vector<8x128xf32>
    %568 = arith.mulf %567, %566 : vector<8x128xf32>
    %569 = math.tanh %568 : vector<8x128xf32>
    %cst_249 = arith.constant 5.000000e-01 : f32
    %570 = vector.broadcast %cst_249 : f32 to vector<8x128xf32>
    %571 = arith.mulf %570, %569 : vector<8x128xf32>
    %cst_250 = arith.constant 5.000000e-01 : f32
    %572 = vector.broadcast %cst_250 : f32 to vector<8x128xf32>
    %573 = arith.addf %571, %572 : vector<8x128xf32>
    %574 = vector.extract_strided_slice %526 {offsets = [0, 256], sizes = [8, 128], strides = [1, 1]} : vector<8x512xf32> to vector<8x128xf32>
    %575 = math.tanh %574 : vector<8x128xf32>
    %576 = vector.extract_strided_slice %526 {offsets = [0, 384], sizes = [8, 128], strides = [1, 1]} : vector<8x512xf32> to vector<8x128xf32>
    %cst_251 = arith.constant 5.000000e-01 : f32
    %577 = vector.broadcast %cst_251 : f32 to vector<8x128xf32>
    %578 = arith.mulf %577, %576 : vector<8x128xf32>
    %579 = math.tanh %578 : vector<8x128xf32>
    %cst_252 = arith.constant 5.000000e-01 : f32
    %580 = vector.broadcast %cst_252 : f32 to vector<8x128xf32>
    %581 = arith.mulf %580, %579 : vector<8x128xf32>
    %cst_253 = arith.constant 5.000000e-01 : f32
    %582 = vector.broadcast %cst_253 : f32 to vector<8x128xf32>
    %583 = arith.addf %581, %582 : vector<8x128xf32>
    %584 = arith.mulf %573, %502 : vector<8x128xf32>
    %585 = arith.mulf %565, %575 : vector<8x128xf32>
    %586 = arith.addf %584, %585 : vector<8x128xf32>
    %587 = math.tanh %586 : vector<8x128xf32>
    %588 = arith.mulf %583, %587 : vector<8x128xf32>
    %c6_254 = arith.constant 6 : index
    %c0_255 = arith.constant 0 : index
    %c0_256 = arith.constant 0 : index
    %589 = vector.load %arg4[%c6_254, %c0_255, %c0_256] : memref<16x8x128xf32, #tpu.memory_space<vmem>>, vector<1x8x128xf32>
    %590 = vector.shape_cast %589 : vector<1x8x128xf32> to vector<8x128xf32>
    %591 = vector.shape_cast %557 : vector<8x128xf32> to vector<1x8x128xf32>
    tpu.vector_store %arg4[%c6_254, %c0_255, %c0_256], %591 {strides = array<i32>} : memref<16x8x128xf32, #tpu.memory_space<vmem>>, vector<1x8x128xf32>,
    %c9_257 = arith.constant 9 : index
    %c0_258 = arith.constant 0 : index
    %c0_259 = arith.constant 0 : index
    %592 = vector.load %arg5[%c9_257, %c0_258, %c0_259] : memref<16x8x128xf32, #tpu.memory_space<vmem>>, vector<1x8x128xf32>
    %593 = vector.shape_cast %592 : vector<1x8x128xf32> to vector<8x128xf32>
    %594 = vector.shape_cast %588 : vector<8x128xf32> to vector<1x8x128xf32>
    tpu.vector_store %arg5[%c9_257, %c0_258, %c0_259], %594 {strides = array<i32>} : memref<16x8x128xf32, #tpu.memory_space<vmem>>, vector<1x8x128xf32>,
    %c7 = arith.constant 7 : index
    %c0_260 = arith.constant 0 : index
    %c0_261 = arith.constant 0 : index
    %595 = vector.load %arg1[%c7, %c0_260, %c0_261] : memref<16x8x512xbf16, #tpu.memory_space<vmem>>, vector<1x8x512xbf16>
    %596 = vector.shape_cast %595 : vector<1x8x512xbf16> to vector<8x512xbf16>
    %597 = arith.extf %596 : vector<8x512xbf16> to vector<8x512xf32>
    %598 = arith.truncf %557 : vector<8x128xf32> to vector<8x128xbf16>
    %c0_262 = arith.constant 0 : index
    %c0_263 = arith.constant 0 : index
    %c0_264 = arith.constant 0 : index
    %599 = vector.load %arg6[%c0_262, %c0_263, %c0_264] : memref<2x128x512xbf16, #tpu.memory_space<vmem>>, vector<1x128x512xbf16>
    %600 = vector.shape_cast %599 : vector<1x128x512xbf16> to vector<128x512xbf16>
    %cst_265 = arith.constant dense<0.000000e+00> : vector<8x512xf32>
    %601 = tpu.matmul %598, %600, %cst_265 {dimension_numbers = #tpu.dot_dimension_numbers<[1], [0], [0], [1], [0, 0, 1, 1], [], []>} : vector<8x128xbf16>, vector<128x512xbf16>, vector<8x512xf32> -> vector<8x512xf32>
    %602 = arith.addf %597, %601 : vector<8x512xf32>
    %c8 = arith.constant 8 : index
    %c0_266 = arith.constant 0 : index
    %c0_267 = arith.constant 0 : index
    %603 = vector.load %arg2[%c8, %c0_266, %c0_267] : memref<16x8x512xbf16, #tpu.memory_space<vmem>>, vector<1x8x512xbf16>
    %604 = vector.shape_cast %603 : vector<1x8x512xbf16> to vector<8x512xbf16>
    %605 = arith.extf %604 : vector<8x512xbf16> to vector<8x512xf32>
    %606 = arith.truncf %588 : vector<8x128xf32> to vector<8x128xbf16>
    %c1_268 = arith.constant 1 : index
    %c0_269 = arith.constant 0 : index
    %c0_270 = arith.constant 0 : index
    %607 = vector.load %arg6[%c1_268, %c0_269, %c0_270] : memref<2x128x512xbf16, #tpu.memory_space<vmem>>, vector<1x128x512xbf16>
    %608 = vector.shape_cast %607 : vector<1x128x512xbf16> to vector<128x512xbf16>
    %cst_271 = arith.constant dense<0.000000e+00> : vector<8x512xf32>
    %609 = tpu.matmul %606, %608, %cst_271 {dimension_numbers = #tpu.dot_dimension_numbers<[1], [0], [0], [1], [0, 0, 1, 1], [], []>} : vector<8x128xbf16>, vector<128x512xbf16>, vector<8x512xf32> -> vector<8x512xf32>
    %610 = arith.addf %605, %609 : vector<8x512xf32>
    %611 = vector.extract_strided_slice %602 {offsets = [0, 0], sizes = [8, 128], strides = [1, 1]} : vector<8x512xf32> to vector<8x128xf32>
    %cst_272 = arith.constant 5.000000e-01 : f32
    %612 = vector.broadcast %cst_272 : f32 to vector<8x128xf32>
    %613 = arith.mulf %612, %611 : vector<8x128xf32>
    %614 = math.tanh %613 : vector<8x128xf32>
    %cst_273 = arith.constant 5.000000e-01 : f32
    %615 = vector.broadcast %cst_273 : f32 to vector<8x128xf32>
    %616 = arith.mulf %615, %614 : vector<8x128xf32>
    %cst_274 = arith.constant 5.000000e-01 : f32
    %617 = vector.broadcast %cst_274 : f32 to vector<8x128xf32>
    %618 = arith.addf %616, %617 : vector<8x128xf32>
    %619 = vector.extract_strided_slice %602 {offsets = [0, 128], sizes = [8, 128], strides = [1, 1]} : vector<8x512xf32> to vector<8x128xf32>
    %cst_275 = arith.constant 5.000000e-01 : f32
    %620 = vector.broadcast %cst_275 : f32 to vector<8x128xf32>
    %621 = arith.mulf %620, %619 : vector<8x128xf32>
    %622 = math.tanh %621 : vector<8x128xf32>
    %cst_276 = arith.constant 5.000000e-01 : f32
    %623 = vector.broadcast %cst_276 : f32 to vector<8x128xf32>
    %624 = arith.mulf %623, %622 : vector<8x128xf32>
    %cst_277 = arith.constant 5.000000e-01 : f32
    %625 = vector.broadcast %cst_277 : f32 to vector<8x128xf32>
    %626 = arith.addf %624, %625 : vector<8x128xf32>
    %627 = vector.extract_strided_slice %602 {offsets = [0, 256], sizes = [8, 128], strides = [1, 1]} : vector<8x512xf32> to vector<8x128xf32>
    %628 = math.tanh %627 : vector<8x128xf32>
    %629 = vector.extract_strided_slice %602 {offsets = [0, 384], sizes = [8, 128], strides = [1, 1]} : vector<8x512xf32> to vector<8x128xf32>
    %cst_278 = arith.constant 5.000000e-01 : f32
    %630 = vector.broadcast %cst_278 : f32 to vector<8x128xf32>
    %631 = arith.mulf %630, %629 : vector<8x128xf32>
    %632 = math.tanh %631 : vector<8x128xf32>
    %cst_279 = arith.constant 5.000000e-01 : f32
    %633 = vector.broadcast %cst_279 : f32 to vector<8x128xf32>
    %634 = arith.mulf %633, %632 : vector<8x128xf32>
    %cst_280 = arith.constant 5.000000e-01 : f32
    %635 = vector.broadcast %cst_280 : f32 to vector<8x128xf32>
    %636 = arith.addf %634, %635 : vector<8x128xf32>
    %637 = arith.mulf %626, %555 : vector<8x128xf32>
    %638 = arith.mulf %618, %628 : vector<8x128xf32>
    %639 = arith.addf %637, %638 : vector<8x128xf32>
    %640 = math.tanh %639 : vector<8x128xf32>
    %641 = arith.mulf %636, %640 : vector<8x128xf32>
    %642 = vector.extract_strided_slice %610 {offsets = [0, 0], sizes = [8, 128], strides = [1, 1]} : vector<8x512xf32> to vector<8x128xf32>
    %cst_281 = arith.constant 5.000000e-01 : f32
    %643 = vector.broadcast %cst_281 : f32 to vector<8x128xf32>
    %644 = arith.mulf %643, %642 : vector<8x128xf32>
    %645 = math.tanh %644 : vector<8x128xf32>
    %cst_282 = arith.constant 5.000000e-01 : f32
    %646 = vector.broadcast %cst_282 : f32 to vector<8x128xf32>
    %647 = arith.mulf %646, %645 : vector<8x128xf32>
    %cst_283 = arith.constant 5.000000e-01 : f32
    %648 = vector.broadcast %cst_283 : f32 to vector<8x128xf32>
    %649 = arith.addf %647, %648 : vector<8x128xf32>
    %650 = vector.extract_strided_slice %610 {offsets = [0, 128], sizes = [8, 128], strides = [1, 1]} : vector<8x512xf32> to vector<8x128xf32>
    %cst_284 = arith.constant 5.000000e-01 : f32
    %651 = vector.broadcast %cst_284 : f32 to vector<8x128xf32>
    %652 = arith.mulf %651, %650 : vector<8x128xf32>
    %653 = math.tanh %652 : vector<8x128xf32>
    %cst_285 = arith.constant 5.000000e-01 : f32
    %654 = vector.broadcast %cst_285 : f32 to vector<8x128xf32>
    %655 = arith.mulf %654, %653 : vector<8x128xf32>
    %cst_286 = arith.constant 5.000000e-01 : f32
    %656 = vector.broadcast %cst_286 : f32 to vector<8x128xf32>
    %657 = arith.addf %655, %656 : vector<8x128xf32>
    %658 = vector.extract_strided_slice %610 {offsets = [0, 256], sizes = [8, 128], strides = [1, 1]} : vector<8x512xf32> to vector<8x128xf32>
    %659 = math.tanh %658 : vector<8x128xf32>
    %660 = vector.extract_strided_slice %610 {offsets = [0, 384], sizes = [8, 128], strides = [1, 1]} : vector<8x512xf32> to vector<8x128xf32>
    %cst_287 = arith.constant 5.000000e-01 : f32
    %661 = vector.broadcast %cst_287 : f32 to vector<8x128xf32>
    %662 = arith.mulf %661, %660 : vector<8x128xf32>
    %663 = math.tanh %662 : vector<8x128xf32>
    %cst_288 = arith.constant 5.000000e-01 : f32
    %664 = vector.broadcast %cst_288 : f32 to vector<8x128xf32>
    %665 = arith.mulf %664, %663 : vector<8x128xf32>
    %cst_289 = arith.constant 5.000000e-01 : f32
    %666 = vector.broadcast %cst_289 : f32 to vector<8x128xf32>
    %667 = arith.addf %665, %666 : vector<8x128xf32>
    %668 = arith.mulf %657, %586 : vector<8x128xf32>
    %669 = arith.mulf %649, %659 : vector<8x128xf32>
    %670 = arith.addf %668, %669 : vector<8x128xf32>
    %671 = math.tanh %670 : vector<8x128xf32>
    %672 = arith.mulf %667, %671 : vector<8x128xf32>
    %c7_290 = arith.constant 7 : index
    %c0_291 = arith.constant 0 : index
    %c0_292 = arith.constant 0 : index
    %673 = vector.load %arg4[%c7_290, %c0_291, %c0_292] : memref<16x8x128xf32, #tpu.memory_space<vmem>>, vector<1x8x128xf32>
    %674 = vector.shape_cast %673 : vector<1x8x128xf32> to vector<8x128xf32>
    %675 = vector.shape_cast %641 : vector<8x128xf32> to vector<1x8x128xf32>
    tpu.vector_store %arg4[%c7_290, %c0_291, %c0_292], %675 {strides = array<i32>} : memref<16x8x128xf32, #tpu.memory_space<vmem>>, vector<1x8x128xf32>,
    %c8_293 = arith.constant 8 : index
    %c0_294 = arith.constant 0 : index
    %c0_295 = arith.constant 0 : index
    %676 = vector.load %arg5[%c8_293, %c0_294, %c0_295] : memref<16x8x128xf32, #tpu.memory_space<vmem>>, vector<1x8x128xf32>
    %677 = vector.shape_cast %676 : vector<1x8x128xf32> to vector<8x128xf32>
    %678 = vector.shape_cast %672 : vector<8x128xf32> to vector<1x8x128xf32>
    tpu.vector_store %arg5[%c8_293, %c0_294, %c0_295], %678 {strides = array<i32>} : memref<16x8x128xf32, #tpu.memory_space<vmem>>, vector<1x8x128xf32>,
    %c8_296 = arith.constant 8 : index
    %c0_297 = arith.constant 0 : index
    %c0_298 = arith.constant 0 : index
    %679 = vector.load %arg1[%c8_296, %c0_297, %c0_298] : memref<16x8x512xbf16, #tpu.memory_space<vmem>>, vector<1x8x512xbf16>
    %680 = vector.shape_cast %679 : vector<1x8x512xbf16> to vector<8x512xbf16>
    %681 = arith.extf %680 : vector<8x512xbf16> to vector<8x512xf32>
    %682 = arith.truncf %641 : vector<8x128xf32> to vector<8x128xbf16>
    %c0_299 = arith.constant 0 : index
    %c0_300 = arith.constant 0 : index
    %c0_301 = arith.constant 0 : index
    %683 = vector.load %arg6[%c0_299, %c0_300, %c0_301] : memref<2x128x512xbf16, #tpu.memory_space<vmem>>, vector<1x128x512xbf16>
    %684 = vector.shape_cast %683 : vector<1x128x512xbf16> to vector<128x512xbf16>
    %cst_302 = arith.constant dense<0.000000e+00> : vector<8x512xf32>
    %685 = tpu.matmul %682, %684, %cst_302 {dimension_numbers = #tpu.dot_dimension_numbers<[1], [0], [0], [1], [0, 0, 1, 1], [], []>} : vector<8x128xbf16>, vector<128x512xbf16>, vector<8x512xf32> -> vector<8x512xf32>
    %686 = arith.addf %681, %685 : vector<8x512xf32>
    %c7_303 = arith.constant 7 : index
    %c0_304 = arith.constant 0 : index
    %c0_305 = arith.constant 0 : index
    %687 = vector.load %arg2[%c7_303, %c0_304, %c0_305] : memref<16x8x512xbf16, #tpu.memory_space<vmem>>, vector<1x8x512xbf16>
    %688 = vector.shape_cast %687 : vector<1x8x512xbf16> to vector<8x512xbf16>
    %689 = arith.extf %688 : vector<8x512xbf16> to vector<8x512xf32>
    %690 = arith.truncf %672 : vector<8x128xf32> to vector<8x128xbf16>
    %c1_306 = arith.constant 1 : index
    %c0_307 = arith.constant 0 : index
    %c0_308 = arith.constant 0 : index
    %691 = vector.load %arg6[%c1_306, %c0_307, %c0_308] : memref<2x128x512xbf16, #tpu.memory_space<vmem>>, vector<1x128x512xbf16>
    %692 = vector.shape_cast %691 : vector<1x128x512xbf16> to vector<128x512xbf16>
    %cst_309 = arith.constant dense<0.000000e+00> : vector<8x512xf32>
    %693 = tpu.matmul %690, %692, %cst_309 {dimension_numbers = #tpu.dot_dimension_numbers<[1], [0], [0], [1], [0, 0, 1, 1], [], []>} : vector<8x128xbf16>, vector<128x512xbf16>, vector<8x512xf32> -> vector<8x512xf32>
    %694 = arith.addf %689, %693 : vector<8x512xf32>
    %695 = vector.extract_strided_slice %686 {offsets = [0, 0], sizes = [8, 128], strides = [1, 1]} : vector<8x512xf32> to vector<8x128xf32>
    %cst_310 = arith.constant 5.000000e-01 : f32
    %696 = vector.broadcast %cst_310 : f32 to vector<8x128xf32>
    %697 = arith.mulf %696, %695 : vector<8x128xf32>
    %698 = math.tanh %697 : vector<8x128xf32>
    %cst_311 = arith.constant 5.000000e-01 : f32
    %699 = vector.broadcast %cst_311 : f32 to vector<8x128xf32>
    %700 = arith.mulf %699, %698 : vector<8x128xf32>
    %cst_312 = arith.constant 5.000000e-01 : f32
    %701 = vector.broadcast %cst_312 : f32 to vector<8x128xf32>
    %702 = arith.addf %700, %701 : vector<8x128xf32>
    %703 = vector.extract_strided_slice %686 {offsets = [0, 128], sizes = [8, 128], strides = [1, 1]} : vector<8x512xf32> to vector<8x128xf32>
    %cst_313 = arith.constant 5.000000e-01 : f32
    %704 = vector.broadcast %cst_313 : f32 to vector<8x128xf32>
    %705 = arith.mulf %704, %703 : vector<8x128xf32>
    %706 = math.tanh %705 : vector<8x128xf32>
    %cst_314 = arith.constant 5.000000e-01 : f32
    %707 = vector.broadcast %cst_314 : f32 to vector<8x128xf32>
    %708 = arith.mulf %707, %706 : vector<8x128xf32>
    %cst_315 = arith.constant 5.000000e-01 : f32
    %709 = vector.broadcast %cst_315 : f32 to vector<8x128xf32>
    %710 = arith.addf %708, %709 : vector<8x128xf32>
    %711 = vector.extract_strided_slice %686 {offsets = [0, 256], sizes = [8, 128], strides = [1, 1]} : vector<8x512xf32> to vector<8x128xf32>
    %712 = math.tanh %711 : vector<8x128xf32>
    %713 = vector.extract_strided_slice %686 {offsets = [0, 384], sizes = [8, 128], strides = [1, 1]} : vector<8x512xf32> to vector<8x128xf32>
    %cst_316 = arith.constant 5.000000e-01 : f32
    %714 = vector.broadcast %cst_316 : f32 to vector<8x128xf32>
    %715 = arith.mulf %714, %713 : vector<8x128xf32>
    %716 = math.tanh %715 : vector<8x128xf32>
    %cst_317 = arith.constant 5.000000e-01 : f32
    %717 = vector.broadcast %cst_317 : f32 to vector<8x128xf32>
    %718 = arith.mulf %717, %716 : vector<8x128xf32>
    %cst_318 = arith.constant 5.000000e-01 : f32
    %719 = vector.broadcast %cst_318 : f32 to vector<8x128xf32>
    %720 = arith.addf %718, %719 : vector<8x128xf32>
    %721 = arith.mulf %710, %639 : vector<8x128xf32>
    %722 = arith.mulf %702, %712 : vector<8x128xf32>
    %723 = arith.addf %721, %722 : vector<8x128xf32>
    %724 = math.tanh %723 : vector<8x128xf32>
    %725 = arith.mulf %720, %724 : vector<8x128xf32>
    %726 = vector.extract_strided_slice %694 {offsets = [0, 0], sizes = [8, 128], strides = [1, 1]} : vector<8x512xf32> to vector<8x128xf32>
    %cst_319 = arith.constant 5.000000e-01 : f32
    %727 = vector.broadcast %cst_319 : f32 to vector<8x128xf32>
    %728 = arith.mulf %727, %726 : vector<8x128xf32>
    %729 = math.tanh %728 : vector<8x128xf32>
    %cst_320 = arith.constant 5.000000e-01 : f32
    %730 = vector.broadcast %cst_320 : f32 to vector<8x128xf32>
    %731 = arith.mulf %730, %729 : vector<8x128xf32>
    %cst_321 = arith.constant 5.000000e-01 : f32
    %732 = vector.broadcast %cst_321 : f32 to vector<8x128xf32>
    %733 = arith.addf %731, %732 : vector<8x128xf32>
    %734 = vector.extract_strided_slice %694 {offsets = [0, 128], sizes = [8, 128], strides = [1, 1]} : vector<8x512xf32> to vector<8x128xf32>
    %cst_322 = arith.constant 5.000000e-01 : f32
    %735 = vector.broadcast %cst_322 : f32 to vector<8x128xf32>
    %736 = arith.mulf %735, %734 : vector<8x128xf32>
    %737 = math.tanh %736 : vector<8x128xf32>
    %cst_323 = arith.constant 5.000000e-01 : f32
    %738 = vector.broadcast %cst_323 : f32 to vector<8x128xf32>
    %739 = arith.mulf %738, %737 : vector<8x128xf32>
    %cst_324 = arith.constant 5.000000e-01 : f32
    %740 = vector.broadcast %cst_324 : f32 to vector<8x128xf32>
    %741 = arith.addf %739, %740 : vector<8x128xf32>
    %742 = vector.extract_strided_slice %694 {offsets = [0, 256], sizes = [8, 128], strides = [1, 1]} : vector<8x512xf32> to vector<8x128xf32>
    %743 = math.tanh %742 : vector<8x128xf32>
    %744 = vector.extract_strided_slice %694 {offsets = [0, 384], sizes = [8, 128], strides = [1, 1]} : vector<8x512xf32> to vector<8x128xf32>
    %cst_325 = arith.constant 5.000000e-01 : f32
    %745 = vector.broadcast %cst_325 : f32 to vector<8x128xf32>
    %746 = arith.mulf %745, %744 : vector<8x128xf32>
    %747 = math.tanh %746 : vector<8x128xf32>
    %cst_326 = arith.constant 5.000000e-01 : f32
    %748 = vector.broadcast %cst_326 : f32 to vector<8x128xf32>
    %749 = arith.mulf %748, %747 : vector<8x128xf32>
    %cst_327 = arith.constant 5.000000e-01 : f32
    %750 = vector.broadcast %cst_327 : f32 to vector<8x128xf32>
    %751 = arith.addf %749, %750 : vector<8x128xf32>
    %752 = arith.mulf %741, %670 : vector<8x128xf32>
    %753 = arith.mulf %733, %743 : vector<8x128xf32>
    %754 = arith.addf %752, %753 : vector<8x128xf32>
    %755 = math.tanh %754 : vector<8x128xf32>
    %756 = arith.mulf %751, %755 : vector<8x128xf32>
    %c8_328 = arith.constant 8 : index
    %c0_329 = arith.constant 0 : index
    %c0_330 = arith.constant 0 : index
    %757 = vector.load %arg4[%c8_328, %c0_329, %c0_330] : memref<16x8x128xf32, #tpu.memory_space<vmem>>, vector<1x8x128xf32>
    %758 = vector.shape_cast %757 : vector<1x8x128xf32> to vector<8x128xf32>
    %759 = vector.shape_cast %725 : vector<8x128xf32> to vector<1x8x128xf32>
    tpu.vector_store %arg4[%c8_328, %c0_329, %c0_330], %759 {strides = array<i32>} : memref<16x8x128xf32, #tpu.memory_space<vmem>>, vector<1x8x128xf32>,
    %c7_331 = arith.constant 7 : index
    %c0_332 = arith.constant 0 : index
    %c0_333 = arith.constant 0 : index
    %760 = vector.load %arg5[%c7_331, %c0_332, %c0_333] : memref<16x8x128xf32, #tpu.memory_space<vmem>>, vector<1x8x128xf32>
    %761 = vector.shape_cast %760 : vector<1x8x128xf32> to vector<8x128xf32>
    %762 = vector.shape_cast %756 : vector<8x128xf32> to vector<1x8x128xf32>
    tpu.vector_store %arg5[%c7_331, %c0_332, %c0_333], %762 {strides = array<i32>} : memref<16x8x128xf32, #tpu.memory_space<vmem>>, vector<1x8x128xf32>,
    %c9_334 = arith.constant 9 : index
    %c0_335 = arith.constant 0 : index
    %c0_336 = arith.constant 0 : index
    %763 = vector.load %arg1[%c9_334, %c0_335, %c0_336] : memref<16x8x512xbf16, #tpu.memory_space<vmem>>, vector<1x8x512xbf16>
    %764 = vector.shape_cast %763 : vector<1x8x512xbf16> to vector<8x512xbf16>
    %765 = arith.extf %764 : vector<8x512xbf16> to vector<8x512xf32>
    %766 = arith.truncf %725 : vector<8x128xf32> to vector<8x128xbf16>
    %c0_337 = arith.constant 0 : index
    %c0_338 = arith.constant 0 : index
    %c0_339 = arith.constant 0 : index
    %767 = vector.load %arg6[%c0_337, %c0_338, %c0_339] : memref<2x128x512xbf16, #tpu.memory_space<vmem>>, vector<1x128x512xbf16>
    %768 = vector.shape_cast %767 : vector<1x128x512xbf16> to vector<128x512xbf16>
    %cst_340 = arith.constant dense<0.000000e+00> : vector<8x512xf32>
    %769 = tpu.matmul %766, %768, %cst_340 {dimension_numbers = #tpu.dot_dimension_numbers<[1], [0], [0], [1], [0, 0, 1, 1], [], []>} : vector<8x128xbf16>, vector<128x512xbf16>, vector<8x512xf32> -> vector<8x512xf32>
    %770 = arith.addf %765, %769 : vector<8x512xf32>
    %c6_341 = arith.constant 6 : index
    %c0_342 = arith.constant 0 : index
    %c0_343 = arith.constant 0 : index
    %771 = vector.load %arg2[%c6_341, %c0_342, %c0_343] : memref<16x8x512xbf16, #tpu.memory_space<vmem>>, vector<1x8x512xbf16>
    %772 = vector.shape_cast %771 : vector<1x8x512xbf16> to vector<8x512xbf16>
    %773 = arith.extf %772 : vector<8x512xbf16> to vector<8x512xf32>
    %774 = arith.truncf %756 : vector<8x128xf32> to vector<8x128xbf16>
    %c1_344 = arith.constant 1 : index
    %c0_345 = arith.constant 0 : index
    %c0_346 = arith.constant 0 : index
    %775 = vector.load %arg6[%c1_344, %c0_345, %c0_346] : memref<2x128x512xbf16, #tpu.memory_space<vmem>>, vector<1x128x512xbf16>
    %776 = vector.shape_cast %775 : vector<1x128x512xbf16> to vector<128x512xbf16>
    %cst_347 = arith.constant dense<0.000000e+00> : vector<8x512xf32>
    %777 = tpu.matmul %774, %776, %cst_347 {dimension_numbers = #tpu.dot_dimension_numbers<[1], [0], [0], [1], [0, 0, 1, 1], [], []>} : vector<8x128xbf16>, vector<128x512xbf16>, vector<8x512xf32> -> vector<8x512xf32>
    %778 = arith.addf %773, %777 : vector<8x512xf32>
    %779 = vector.extract_strided_slice %770 {offsets = [0, 0], sizes = [8, 128], strides = [1, 1]} : vector<8x512xf32> to vector<8x128xf32>
    %cst_348 = arith.constant 5.000000e-01 : f32
    %780 = vector.broadcast %cst_348 : f32 to vector<8x128xf32>
    %781 = arith.mulf %780, %779 : vector<8x128xf32>
    %782 = math.tanh %781 : vector<8x128xf32>
    %cst_349 = arith.constant 5.000000e-01 : f32
    %783 = vector.broadcast %cst_349 : f32 to vector<8x128xf32>
    %784 = arith.mulf %783, %782 : vector<8x128xf32>
    %cst_350 = arith.constant 5.000000e-01 : f32
    %785 = vector.broadcast %cst_350 : f32 to vector<8x128xf32>
    %786 = arith.addf %784, %785 : vector<8x128xf32>
    %787 = vector.extract_strided_slice %770 {offsets = [0, 128], sizes = [8, 128], strides = [1, 1]} : vector<8x512xf32> to vector<8x128xf32>
    %cst_351 = arith.constant 5.000000e-01 : f32
    %788 = vector.broadcast %cst_351 : f32 to vector<8x128xf32>
    %789 = arith.mulf %788, %787 : vector<8x128xf32>
    %790 = math.tanh %789 : vector<8x128xf32>
    %cst_352 = arith.constant 5.000000e-01 : f32
    %791 = vector.broadcast %cst_352 : f32 to vector<8x128xf32>
    %792 = arith.mulf %791, %790 : vector<8x128xf32>
    %cst_353 = arith.constant 5.000000e-01 : f32
    %793 = vector.broadcast %cst_353 : f32 to vector<8x128xf32>
    %794 = arith.addf %792, %793 : vector<8x128xf32>
    %795 = vector.extract_strided_slice %770 {offsets = [0, 256], sizes = [8, 128], strides = [1, 1]} : vector<8x512xf32> to vector<8x128xf32>
    %796 = math.tanh %795 : vector<8x128xf32>
    %797 = vector.extract_strided_slice %770 {offsets = [0, 384], sizes = [8, 128], strides = [1, 1]} : vector<8x512xf32> to vector<8x128xf32>
    %cst_354 = arith.constant 5.000000e-01 : f32
    %798 = vector.broadcast %cst_354 : f32 to vector<8x128xf32>
    %799 = arith.mulf %798, %797 : vector<8x128xf32>
    %800 = math.tanh %799 : vector<8x128xf32>
    %cst_355 = arith.constant 5.000000e-01 : f32
    %801 = vector.broadcast %cst_355 : f32 to vector<8x128xf32>
    %802 = arith.mulf %801, %800 : vector<8x128xf32>
    %cst_356 = arith.constant 5.000000e-01 : f32
    %803 = vector.broadcast %cst_356 : f32 to vector<8x128xf32>
    %804 = arith.addf %802, %803 : vector<8x128xf32>
    %805 = arith.mulf %794, %723 : vector<8x128xf32>
    %806 = arith.mulf %786, %796 : vector<8x128xf32>
    %807 = arith.addf %805, %806 : vector<8x128xf32>
    %808 = math.tanh %807 : vector<8x128xf32>
    %809 = arith.mulf %804, %808 : vector<8x128xf32>
    %810 = vector.extract_strided_slice %778 {offsets = [0, 0], sizes = [8, 128], strides = [1, 1]} : vector<8x512xf32> to vector<8x128xf32>
    %cst_357 = arith.constant 5.000000e-01 : f32
    %811 = vector.broadcast %cst_357 : f32 to vector<8x128xf32>
    %812 = arith.mulf %811, %810 : vector<8x128xf32>
    %813 = math.tanh %812 : vector<8x128xf32>
    %cst_358 = arith.constant 5.000000e-01 : f32
    %814 = vector.broadcast %cst_358 : f32 to vector<8x128xf32>
    %815 = arith.mulf %814, %813 : vector<8x128xf32>
    %cst_359 = arith.constant 5.000000e-01 : f32
    %816 = vector.broadcast %cst_359 : f32 to vector<8x128xf32>
    %817 = arith.addf %815, %816 : vector<8x128xf32>
    %818 = vector.extract_strided_slice %778 {offsets = [0, 128], sizes = [8, 128], strides = [1, 1]} : vector<8x512xf32> to vector<8x128xf32>
    %cst_360 = arith.constant 5.000000e-01 : f32
    %819 = vector.broadcast %cst_360 : f32 to vector<8x128xf32>
    %820 = arith.mulf %819, %818 : vector<8x128xf32>
    %821 = math.tanh %820 : vector<8x128xf32>
    %cst_361 = arith.constant 5.000000e-01 : f32
    %822 = vector.broadcast %cst_361 : f32 to vector<8x128xf32>
    %823 = arith.mulf %822, %821 : vector<8x128xf32>
    %cst_362 = arith.constant 5.000000e-01 : f32
    %824 = vector.broadcast %cst_362 : f32 to vector<8x128xf32>
    %825 = arith.addf %823, %824 : vector<8x128xf32>
    %826 = vector.extract_strided_slice %778 {offsets = [0, 256], sizes = [8, 128], strides = [1, 1]} : vector<8x512xf32> to vector<8x128xf32>
    %827 = math.tanh %826 : vector<8x128xf32>
    %828 = vector.extract_strided_slice %778 {offsets = [0, 384], sizes = [8, 128], strides = [1, 1]} : vector<8x512xf32> to vector<8x128xf32>
    %cst_363 = arith.constant 5.000000e-01 : f32
    %829 = vector.broadcast %cst_363 : f32 to vector<8x128xf32>
    %830 = arith.mulf %829, %828 : vector<8x128xf32>
    %831 = math.tanh %830 : vector<8x128xf32>
    %cst_364 = arith.constant 5.000000e-01 : f32
    %832 = vector.broadcast %cst_364 : f32 to vector<8x128xf32>
    %833 = arith.mulf %832, %831 : vector<8x128xf32>
    %cst_365 = arith.constant 5.000000e-01 : f32
    %834 = vector.broadcast %cst_365 : f32 to vector<8x128xf32>
    %835 = arith.addf %833, %834 : vector<8x128xf32>
    %836 = arith.mulf %825, %754 : vector<8x128xf32>
    %837 = arith.mulf %817, %827 : vector<8x128xf32>
    %838 = arith.addf %836, %837 : vector<8x128xf32>
    %839 = math.tanh %838 : vector<8x128xf32>
    %840 = arith.mulf %835, %839 : vector<8x128xf32>
    %c9_366 = arith.constant 9 : index
    %c0_367 = arith.constant 0 : index
    %c0_368 = arith.constant 0 : index
    %841 = vector.load %arg4[%c9_366, %c0_367, %c0_368] : memref<16x8x128xf32, #tpu.memory_space<vmem>>, vector<1x8x128xf32>
    %842 = vector.shape_cast %841 : vector<1x8x128xf32> to vector<8x128xf32>
    %843 = vector.shape_cast %809 : vector<8x128xf32> to vector<1x8x128xf32>
    tpu.vector_store %arg4[%c9_366, %c0_367, %c0_368], %843 {strides = array<i32>} : memref<16x8x128xf32, #tpu.memory_space<vmem>>, vector<1x8x128xf32>,
    %c6_369 = arith.constant 6 : index
    %c0_370 = arith.constant 0 : index
    %c0_371 = arith.constant 0 : index
    %844 = vector.load %arg5[%c6_369, %c0_370, %c0_371] : memref<16x8x128xf32, #tpu.memory_space<vmem>>, vector<1x8x128xf32>
    %845 = vector.shape_cast %844 : vector<1x8x128xf32> to vector<8x128xf32>
    %846 = vector.shape_cast %840 : vector<8x128xf32> to vector<1x8x128xf32>
    tpu.vector_store %arg5[%c6_369, %c0_370, %c0_371], %846 {strides = array<i32>} : memref<16x8x128xf32, #tpu.memory_space<vmem>>, vector<1x8x128xf32>,
    %c10_372 = arith.constant 10 : index
    %c0_373 = arith.constant 0 : index
    %c0_374 = arith.constant 0 : index
    %847 = vector.load %arg1[%c10_372, %c0_373, %c0_374] : memref<16x8x512xbf16, #tpu.memory_space<vmem>>, vector<1x8x512xbf16>
    %848 = vector.shape_cast %847 : vector<1x8x512xbf16> to vector<8x512xbf16>
    %849 = arith.extf %848 : vector<8x512xbf16> to vector<8x512xf32>
    %850 = arith.truncf %809 : vector<8x128xf32> to vector<8x128xbf16>
    %c0_375 = arith.constant 0 : index
    %c0_376 = arith.constant 0 : index
    %c0_377 = arith.constant 0 : index
    %851 = vector.load %arg6[%c0_375, %c0_376, %c0_377] : memref<2x128x512xbf16, #tpu.memory_space<vmem>>, vector<1x128x512xbf16>
    %852 = vector.shape_cast %851 : vector<1x128x512xbf16> to vector<128x512xbf16>
    %cst_378 = arith.constant dense<0.000000e+00> : vector<8x512xf32>
    %853 = tpu.matmul %850, %852, %cst_378 {dimension_numbers = #tpu.dot_dimension_numbers<[1], [0], [0], [1], [0, 0, 1, 1], [], []>} : vector<8x128xbf16>, vector<128x512xbf16>, vector<8x512xf32> -> vector<8x512xf32>
    %854 = arith.addf %849, %853 : vector<8x512xf32>
    %c5_379 = arith.constant 5 : index
    %c0_380 = arith.constant 0 : index
    %c0_381 = arith.constant 0 : index
    %855 = vector.load %arg2[%c5_379, %c0_380, %c0_381] : memref<16x8x512xbf16, #tpu.memory_space<vmem>>, vector<1x8x512xbf16>
    %856 = vector.shape_cast %855 : vector<1x8x512xbf16> to vector<8x512xbf16>
    %857 = arith.extf %856 : vector<8x512xbf16> to vector<8x512xf32>
    %858 = arith.truncf %840 : vector<8x128xf32> to vector<8x128xbf16>
    %c1_382 = arith.constant 1 : index
    %c0_383 = arith.constant 0 : index
    %c0_384 = arith.constant 0 : index
    %859 = vector.load %arg6[%c1_382, %c0_383, %c0_384] : memref<2x128x512xbf16, #tpu.memory_space<vmem>>, vector<1x128x512xbf16>
    %860 = vector.shape_cast %859 : vector<1x128x512xbf16> to vector<128x512xbf16>
    %cst_385 = arith.constant dense<0.000000e+00> : vector<8x512xf32>
    %861 = tpu.matmul %858, %860, %cst_385 {dimension_numbers = #tpu.dot_dimension_numbers<[1], [0], [0], [1], [0, 0, 1, 1], [], []>} : vector<8x128xbf16>, vector<128x512xbf16>, vector<8x512xf32> -> vector<8x512xf32>
    %862 = arith.addf %857, %861 : vector<8x512xf32>
    %863 = vector.extract_strided_slice %854 {offsets = [0, 0], sizes = [8, 128], strides = [1, 1]} : vector<8x512xf32> to vector<8x128xf32>
    %cst_386 = arith.constant 5.000000e-01 : f32
    %864 = vector.broadcast %cst_386 : f32 to vector<8x128xf32>
    %865 = arith.mulf %864, %863 : vector<8x128xf32>
    %866 = math.tanh %865 : vector<8x128xf32>
    %cst_387 = arith.constant 5.000000e-01 : f32
    %867 = vector.broadcast %cst_387 : f32 to vector<8x128xf32>
    %868 = arith.mulf %867, %866 : vector<8x128xf32>
    %cst_388 = arith.constant 5.000000e-01 : f32
    %869 = vector.broadcast %cst_388 : f32 to vector<8x128xf32>
    %870 = arith.addf %868, %869 : vector<8x128xf32>
    %871 = vector.extract_strided_slice %854 {offsets = [0, 128], sizes = [8, 128], strides = [1, 1]} : vector<8x512xf32> to vector<8x128xf32>
    %cst_389 = arith.constant 5.000000e-01 : f32
    %872 = vector.broadcast %cst_389 : f32 to vector<8x128xf32>
    %873 = arith.mulf %872, %871 : vector<8x128xf32>
    %874 = math.tanh %873 : vector<8x128xf32>
    %cst_390 = arith.constant 5.000000e-01 : f32
    %875 = vector.broadcast %cst_390 : f32 to vector<8x128xf32>
    %876 = arith.mulf %875, %874 : vector<8x128xf32>
    %cst_391 = arith.constant 5.000000e-01 : f32
    %877 = vector.broadcast %cst_391 : f32 to vector<8x128xf32>
    %878 = arith.addf %876, %877 : vector<8x128xf32>
    %879 = vector.extract_strided_slice %854 {offsets = [0, 256], sizes = [8, 128], strides = [1, 1]} : vector<8x512xf32> to vector<8x128xf32>
    %880 = math.tanh %879 : vector<8x128xf32>
    %881 = vector.extract_strided_slice %854 {offsets = [0, 384], sizes = [8, 128], strides = [1, 1]} : vector<8x512xf32> to vector<8x128xf32>
    %cst_392 = arith.constant 5.000000e-01 : f32
    %882 = vector.broadcast %cst_392 : f32 to vector<8x128xf32>
    %883 = arith.mulf %882, %881 : vector<8x128xf32>
    %884 = math.tanh %883 : vector<8x128xf32>
    %cst_393 = arith.constant 5.000000e-01 : f32
    %885 = vector.broadcast %cst_393 : f32 to vector<8x128xf32>
    %886 = arith.mulf %885, %884 : vector<8x128xf32>
    %cst_394 = arith.constant 5.000000e-01 : f32
    %887 = vector.broadcast %cst_394 : f32 to vector<8x128xf32>
    %888 = arith.addf %886, %887 : vector<8x128xf32>
    %889 = arith.mulf %878, %807 : vector<8x128xf32>
    %890 = arith.mulf %870, %880 : vector<8x128xf32>
    %891 = arith.addf %889, %890 : vector<8x128xf32>
    %892 = math.tanh %891 : vector<8x128xf32>
    %893 = arith.mulf %888, %892 : vector<8x128xf32>
    %894 = vector.extract_strided_slice %862 {offsets = [0, 0], sizes = [8, 128], strides = [1, 1]} : vector<8x512xf32> to vector<8x128xf32>
    %cst_395 = arith.constant 5.000000e-01 : f32
    %895 = vector.broadcast %cst_395 : f32 to vector<8x128xf32>
    %896 = arith.mulf %895, %894 : vector<8x128xf32>
    %897 = math.tanh %896 : vector<8x128xf32>
    %cst_396 = arith.constant 5.000000e-01 : f32
    %898 = vector.broadcast %cst_396 : f32 to vector<8x128xf32>
    %899 = arith.mulf %898, %897 : vector<8x128xf32>
    %cst_397 = arith.constant 5.000000e-01 : f32
    %900 = vector.broadcast %cst_397 : f32 to vector<8x128xf32>
    %901 = arith.addf %899, %900 : vector<8x128xf32>
    %902 = vector.extract_strided_slice %862 {offsets = [0, 128], sizes = [8, 128], strides = [1, 1]} : vector<8x512xf32> to vector<8x128xf32>
    %cst_398 = arith.constant 5.000000e-01 : f32
    %903 = vector.broadcast %cst_398 : f32 to vector<8x128xf32>
    %904 = arith.mulf %903, %902 : vector<8x128xf32>
    %905 = math.tanh %904 : vector<8x128xf32>
    %cst_399 = arith.constant 5.000000e-01 : f32
    %906 = vector.broadcast %cst_399 : f32 to vector<8x128xf32>
    %907 = arith.mulf %906, %905 : vector<8x128xf32>
    %cst_400 = arith.constant 5.000000e-01 : f32
    %908 = vector.broadcast %cst_400 : f32 to vector<8x128xf32>
    %909 = arith.addf %907, %908 : vector<8x128xf32>
    %910 = vector.extract_strided_slice %862 {offsets = [0, 256], sizes = [8, 128], strides = [1, 1]} : vector<8x512xf32> to vector<8x128xf32>
    %911 = math.tanh %910 : vector<8x128xf32>
    %912 = vector.extract_strided_slice %862 {offsets = [0, 384], sizes = [8, 128], strides = [1, 1]} : vector<8x512xf32> to vector<8x128xf32>
    %cst_401 = arith.constant 5.000000e-01 : f32
    %913 = vector.broadcast %cst_401 : f32 to vector<8x128xf32>
    %914 = arith.mulf %913, %912 : vector<8x128xf32>
    %915 = math.tanh %914 : vector<8x128xf32>
    %cst_402 = arith.constant 5.000000e-01 : f32
    %916 = vector.broadcast %cst_402 : f32 to vector<8x128xf32>
    %917 = arith.mulf %916, %915 : vector<8x128xf32>
    %cst_403 = arith.constant 5.000000e-01 : f32
    %918 = vector.broadcast %cst_403 : f32 to vector<8x128xf32>
    %919 = arith.addf %917, %918 : vector<8x128xf32>
    %920 = arith.mulf %909, %838 : vector<8x128xf32>
    %921 = arith.mulf %901, %911 : vector<8x128xf32>
    %922 = arith.addf %920, %921 : vector<8x128xf32>
    %923 = math.tanh %922 : vector<8x128xf32>
    %924 = arith.mulf %919, %923 : vector<8x128xf32>
    %c10_404 = arith.constant 10 : index
    %c0_405 = arith.constant 0 : index
    %c0_406 = arith.constant 0 : index
    %925 = vector.load %arg4[%c10_404, %c0_405, %c0_406] : memref<16x8x128xf32, #tpu.memory_space<vmem>>, vector<1x8x128xf32>
    %926 = vector.shape_cast %925 : vector<1x8x128xf32> to vector<8x128xf32>
    %927 = vector.shape_cast %893 : vector<8x128xf32> to vector<1x8x128xf32>
    tpu.vector_store %arg4[%c10_404, %c0_405, %c0_406], %927 {strides = array<i32>} : memref<16x8x128xf32, #tpu.memory_space<vmem>>, vector<1x8x128xf32>,
    %c5_407 = arith.constant 5 : index
    %c0_408 = arith.constant 0 : index
    %c0_409 = arith.constant 0 : index
    %928 = vector.load %arg5[%c5_407, %c0_408, %c0_409] : memref<16x8x128xf32, #tpu.memory_space<vmem>>, vector<1x8x128xf32>
    %929 = vector.shape_cast %928 : vector<1x8x128xf32> to vector<8x128xf32>
    %930 = vector.shape_cast %924 : vector<8x128xf32> to vector<1x8x128xf32>
    tpu.vector_store %arg5[%c5_407, %c0_408, %c0_409], %930 {strides = array<i32>} : memref<16x8x128xf32, #tpu.memory_space<vmem>>, vector<1x8x128xf32>,
    %c11_410 = arith.constant 11 : index
    %c0_411 = arith.constant 0 : index
    %c0_412 = arith.constant 0 : index
    %931 = vector.load %arg1[%c11_410, %c0_411, %c0_412] : memref<16x8x512xbf16, #tpu.memory_space<vmem>>, vector<1x8x512xbf16>
    %932 = vector.shape_cast %931 : vector<1x8x512xbf16> to vector<8x512xbf16>
    %933 = arith.extf %932 : vector<8x512xbf16> to vector<8x512xf32>
    %934 = arith.truncf %893 : vector<8x128xf32> to vector<8x128xbf16>
    %c0_413 = arith.constant 0 : index
    %c0_414 = arith.constant 0 : index
    %c0_415 = arith.constant 0 : index
    %935 = vector.load %arg6[%c0_413, %c0_414, %c0_415] : memref<2x128x512xbf16, #tpu.memory_space<vmem>>, vector<1x128x512xbf16>
    %936 = vector.shape_cast %935 : vector<1x128x512xbf16> to vector<128x512xbf16>
    %cst_416 = arith.constant dense<0.000000e+00> : vector<8x512xf32>
    %937 = tpu.matmul %934, %936, %cst_416 {dimension_numbers = #tpu.dot_dimension_numbers<[1], [0], [0], [1], [0, 0, 1, 1], [], []>} : vector<8x128xbf16>, vector<128x512xbf16>, vector<8x512xf32> -> vector<8x512xf32>
    %938 = arith.addf %933, %937 : vector<8x512xf32>
    %c4_417 = arith.constant 4 : index
    %c0_418 = arith.constant 0 : index
    %c0_419 = arith.constant 0 : index
    %939 = vector.load %arg2[%c4_417, %c0_418, %c0_419] : memref<16x8x512xbf16, #tpu.memory_space<vmem>>, vector<1x8x512xbf16>
    %940 = vector.shape_cast %939 : vector<1x8x512xbf16> to vector<8x512xbf16>
    %941 = arith.extf %940 : vector<8x512xbf16> to vector<8x512xf32>
    %942 = arith.truncf %924 : vector<8x128xf32> to vector<8x128xbf16>
    %c1_420 = arith.constant 1 : index
    %c0_421 = arith.constant 0 : index
    %c0_422 = arith.constant 0 : index
    %943 = vector.load %arg6[%c1_420, %c0_421, %c0_422] : memref<2x128x512xbf16, #tpu.memory_space<vmem>>, vector<1x128x512xbf16>
    %944 = vector.shape_cast %943 : vector<1x128x512xbf16> to vector<128x512xbf16>
    %cst_423 = arith.constant dense<0.000000e+00> : vector<8x512xf32>
    %945 = tpu.matmul %942, %944, %cst_423 {dimension_numbers = #tpu.dot_dimension_numbers<[1], [0], [0], [1], [0, 0, 1, 1], [], []>} : vector<8x128xbf16>, vector<128x512xbf16>, vector<8x512xf32> -> vector<8x512xf32>
    %946 = arith.addf %941, %945 : vector<8x512xf32>
    %947 = vector.extract_strided_slice %938 {offsets = [0, 0], sizes = [8, 128], strides = [1, 1]} : vector<8x512xf32> to vector<8x128xf32>
    %cst_424 = arith.constant 5.000000e-01 : f32
    %948 = vector.broadcast %cst_424 : f32 to vector<8x128xf32>
    %949 = arith.mulf %948, %947 : vector<8x128xf32>
    %950 = math.tanh %949 : vector<8x128xf32>
    %cst_425 = arith.constant 5.000000e-01 : f32
    %951 = vector.broadcast %cst_425 : f32 to vector<8x128xf32>
    %952 = arith.mulf %951, %950 : vector<8x128xf32>
    %cst_426 = arith.constant 5.000000e-01 : f32
    %953 = vector.broadcast %cst_426 : f32 to vector<8x128xf32>
    %954 = arith.addf %952, %953 : vector<8x128xf32>
    %955 = vector.extract_strided_slice %938 {offsets = [0, 128], sizes = [8, 128], strides = [1, 1]} : vector<8x512xf32> to vector<8x128xf32>
    %cst_427 = arith.constant 5.000000e-01 : f32
    %956 = vector.broadcast %cst_427 : f32 to vector<8x128xf32>
    %957 = arith.mulf %956, %955 : vector<8x128xf32>
    %958 = math.tanh %957 : vector<8x128xf32>
    %cst_428 = arith.constant 5.000000e-01 : f32
    %959 = vector.broadcast %cst_428 : f32 to vector<8x128xf32>
    %960 = arith.mulf %959, %958 : vector<8x128xf32>
    %cst_429 = arith.constant 5.000000e-01 : f32
    %961 = vector.broadcast %cst_429 : f32 to vector<8x128xf32>
    %962 = arith.addf %960, %961 : vector<8x128xf32>
    %963 = vector.extract_strided_slice %938 {offsets = [0, 256], sizes = [8, 128], strides = [1, 1]} : vector<8x512xf32> to vector<8x128xf32>
    %964 = math.tanh %963 : vector<8x128xf32>
    %965 = vector.extract_strided_slice %938 {offsets = [0, 384], sizes = [8, 128], strides = [1, 1]} : vector<8x512xf32> to vector<8x128xf32>
    %cst_430 = arith.constant 5.000000e-01 : f32
    %966 = vector.broadcast %cst_430 : f32 to vector<8x128xf32>
    %967 = arith.mulf %966, %965 : vector<8x128xf32>
    %968 = math.tanh %967 : vector<8x128xf32>
    %cst_431 = arith.constant 5.000000e-01 : f32
    %969 = vector.broadcast %cst_431 : f32 to vector<8x128xf32>
    %970 = arith.mulf %969, %968 : vector<8x128xf32>
    %cst_432 = arith.constant 5.000000e-01 : f32
    %971 = vector.broadcast %cst_432 : f32 to vector<8x128xf32>
    %972 = arith.addf %970, %971 : vector<8x128xf32>
    %973 = arith.mulf %962, %891 : vector<8x128xf32>
    %974 = arith.mulf %954, %964 : vector<8x128xf32>
    %975 = arith.addf %973, %974 : vector<8x128xf32>
    %976 = math.tanh %975 : vector<8x128xf32>
    %977 = arith.mulf %972, %976 : vector<8x128xf32>
    %978 = vector.extract_strided_slice %946 {offsets = [0, 0], sizes = [8, 128], strides = [1, 1]} : vector<8x512xf32> to vector<8x128xf32>
    %cst_433 = arith.constant 5.000000e-01 : f32
    %979 = vector.broadcast %cst_433 : f32 to vector<8x128xf32>
    %980 = arith.mulf %979, %978 : vector<8x128xf32>
    %981 = math.tanh %980 : vector<8x128xf32>
    %cst_434 = arith.constant 5.000000e-01 : f32
    %982 = vector.broadcast %cst_434 : f32 to vector<8x128xf32>
    %983 = arith.mulf %982, %981 : vector<8x128xf32>
    %cst_435 = arith.constant 5.000000e-01 : f32
    %984 = vector.broadcast %cst_435 : f32 to vector<8x128xf32>
    %985 = arith.addf %983, %984 : vector<8x128xf32>
    %986 = vector.extract_strided_slice %946 {offsets = [0, 128], sizes = [8, 128], strides = [1, 1]} : vector<8x512xf32> to vector<8x128xf32>
    %cst_436 = arith.constant 5.000000e-01 : f32
    %987 = vector.broadcast %cst_436 : f32 to vector<8x128xf32>
    %988 = arith.mulf %987, %986 : vector<8x128xf32>
    %989 = math.tanh %988 : vector<8x128xf32>
    %cst_437 = arith.constant 5.000000e-01 : f32
    %990 = vector.broadcast %cst_437 : f32 to vector<8x128xf32>
    %991 = arith.mulf %990, %989 : vector<8x128xf32>
    %cst_438 = arith.constant 5.000000e-01 : f32
    %992 = vector.broadcast %cst_438 : f32 to vector<8x128xf32>
    %993 = arith.addf %991, %992 : vector<8x128xf32>
    %994 = vector.extract_strided_slice %946 {offsets = [0, 256], sizes = [8, 128], strides = [1, 1]} : vector<8x512xf32> to vector<8x128xf32>
    %995 = math.tanh %994 : vector<8x128xf32>
    %996 = vector.extract_strided_slice %946 {offsets = [0, 384], sizes = [8, 128], strides = [1, 1]} : vector<8x512xf32> to vector<8x128xf32>
    %cst_439 = arith.constant 5.000000e-01 : f32
    %997 = vector.broadcast %cst_439 : f32 to vector<8x128xf32>
    %998 = arith.mulf %997, %996 : vector<8x128xf32>
    %999 = math.tanh %998 : vector<8x128xf32>
    %cst_440 = arith.constant 5.000000e-01 : f32
    %1000 = vector.broadcast %cst_440 : f32 to vector<8x128xf32>
    %1001 = arith.mulf %1000, %999 : vector<8x128xf32>
    %cst_441 = arith.constant 5.000000e-01 : f32
    %1002 = vector.broadcast %cst_441 : f32 to vector<8x128xf32>
    %1003 = arith.addf %1001, %1002 : vector<8x128xf32>
    %1004 = arith.mulf %993, %922 : vector<8x128xf32>
    %1005 = arith.mulf %985, %995 : vector<8x128xf32>
    %1006 = arith.addf %1004, %1005 : vector<8x128xf32>
    %1007 = math.tanh %1006 : vector<8x128xf32>
    %1008 = arith.mulf %1003, %1007 : vector<8x128xf32>
    %c11_442 = arith.constant 11 : index
    %c0_443 = arith.constant 0 : index
    %c0_444 = arith.constant 0 : index
    %1009 = vector.load %arg4[%c11_442, %c0_443, %c0_444] : memref<16x8x128xf32, #tpu.memory_space<vmem>>, vector<1x8x128xf32>
    %1010 = vector.shape_cast %1009 : vector<1x8x128xf32> to vector<8x128xf32>
    %1011 = vector.shape_cast %977 : vector<8x128xf32> to vector<1x8x128xf32>
    tpu.vector_store %arg4[%c11_442, %c0_443, %c0_444], %1011 {strides = array<i32>} : memref<16x8x128xf32, #tpu.memory_space<vmem>>, vector<1x8x128xf32>,
    %c4_445 = arith.constant 4 : index
    %c0_446 = arith.constant 0 : index
    %c0_447 = arith.constant 0 : index
    %1012 = vector.load %arg5[%c4_445, %c0_446, %c0_447] : memref<16x8x128xf32, #tpu.memory_space<vmem>>, vector<1x8x128xf32>
    %1013 = vector.shape_cast %1012 : vector<1x8x128xf32> to vector<8x128xf32>
    %1014 = vector.shape_cast %1008 : vector<8x128xf32> to vector<1x8x128xf32>
    tpu.vector_store %arg5[%c4_445, %c0_446, %c0_447], %1014 {strides = array<i32>} : memref<16x8x128xf32, #tpu.memory_space<vmem>>, vector<1x8x128xf32>,
    %c12_448 = arith.constant 12 : index
    %c0_449 = arith.constant 0 : index
    %c0_450 = arith.constant 0 : index
    %1015 = vector.load %arg1[%c12_448, %c0_449, %c0_450] : memref<16x8x512xbf16, #tpu.memory_space<vmem>>, vector<1x8x512xbf16>
    %1016 = vector.shape_cast %1015 : vector<1x8x512xbf16> to vector<8x512xbf16>
    %1017 = arith.extf %1016 : vector<8x512xbf16> to vector<8x512xf32>
    %1018 = arith.truncf %977 : vector<8x128xf32> to vector<8x128xbf16>
    %c0_451 = arith.constant 0 : index
    %c0_452 = arith.constant 0 : index
    %c0_453 = arith.constant 0 : index
    %1019 = vector.load %arg6[%c0_451, %c0_452, %c0_453] : memref<2x128x512xbf16, #tpu.memory_space<vmem>>, vector<1x128x512xbf16>
    %1020 = vector.shape_cast %1019 : vector<1x128x512xbf16> to vector<128x512xbf16>
    %cst_454 = arith.constant dense<0.000000e+00> : vector<8x512xf32>
    %1021 = tpu.matmul %1018, %1020, %cst_454 {dimension_numbers = #tpu.dot_dimension_numbers<[1], [0], [0], [1], [0, 0, 1, 1], [], []>} : vector<8x128xbf16>, vector<128x512xbf16>, vector<8x512xf32> -> vector<8x512xf32>
    %1022 = arith.addf %1017, %1021 : vector<8x512xf32>
    %c3_455 = arith.constant 3 : index
    %c0_456 = arith.constant 0 : index
    %c0_457 = arith.constant 0 : index
    %1023 = vector.load %arg2[%c3_455, %c0_456, %c0_457] : memref<16x8x512xbf16, #tpu.memory_space<vmem>>, vector<1x8x512xbf16>
    %1024 = vector.shape_cast %1023 : vector<1x8x512xbf16> to vector<8x512xbf16>
    %1025 = arith.extf %1024 : vector<8x512xbf16> to vector<8x512xf32>
    %1026 = arith.truncf %1008 : vector<8x128xf32> to vector<8x128xbf16>
    %c1_458 = arith.constant 1 : index
    %c0_459 = arith.constant 0 : index
    %c0_460 = arith.constant 0 : index
    %1027 = vector.load %arg6[%c1_458, %c0_459, %c0_460] : memref<2x128x512xbf16, #tpu.memory_space<vmem>>, vector<1x128x512xbf16>
    %1028 = vector.shape_cast %1027 : vector<1x128x512xbf16> to vector<128x512xbf16>
    %cst_461 = arith.constant dense<0.000000e+00> : vector<8x512xf32>
    %1029 = tpu.matmul %1026, %1028, %cst_461 {dimension_numbers = #tpu.dot_dimension_numbers<[1], [0], [0], [1], [0, 0, 1, 1], [], []>} : vector<8x128xbf16>, vector<128x512xbf16>, vector<8x512xf32> -> vector<8x512xf32>
    %1030 = arith.addf %1025, %1029 : vector<8x512xf32>
    %1031 = vector.extract_strided_slice %1022 {offsets = [0, 0], sizes = [8, 128], strides = [1, 1]} : vector<8x512xf32> to vector<8x128xf32>
    %cst_462 = arith.constant 5.000000e-01 : f32
    %1032 = vector.broadcast %cst_462 : f32 to vector<8x128xf32>
    %1033 = arith.mulf %1032, %1031 : vector<8x128xf32>
    %1034 = math.tanh %1033 : vector<8x128xf32>
    %cst_463 = arith.constant 5.000000e-01 : f32
    %1035 = vector.broadcast %cst_463 : f32 to vector<8x128xf32>
    %1036 = arith.mulf %1035, %1034 : vector<8x128xf32>
    %cst_464 = arith.constant 5.000000e-01 : f32
    %1037 = vector.broadcast %cst_464 : f32 to vector<8x128xf32>
    %1038 = arith.addf %1036, %1037 : vector<8x128xf32>
    %1039 = vector.extract_strided_slice %1022 {offsets = [0, 128], sizes = [8, 128], strides = [1, 1]} : vector<8x512xf32> to vector<8x128xf32>
    %cst_465 = arith.constant 5.000000e-01 : f32
    %1040 = vector.broadcast %cst_465 : f32 to vector<8x128xf32>
    %1041 = arith.mulf %1040, %1039 : vector<8x128xf32>
    %1042 = math.tanh %1041 : vector<8x128xf32>
    %cst_466 = arith.constant 5.000000e-01 : f32
    %1043 = vector.broadcast %cst_466 : f32 to vector<8x128xf32>
    %1044 = arith.mulf %1043, %1042 : vector<8x128xf32>
    %cst_467 = arith.constant 5.000000e-01 : f32
    %1045 = vector.broadcast %cst_467 : f32 to vector<8x128xf32>
    %1046 = arith.addf %1044, %1045 : vector<8x128xf32>
    %1047 = vector.extract_strided_slice %1022 {offsets = [0, 256], sizes = [8, 128], strides = [1, 1]} : vector<8x512xf32> to vector<8x128xf32>
    %1048 = math.tanh %1047 : vector<8x128xf32>
    %1049 = vector.extract_strided_slice %1022 {offsets = [0, 384], sizes = [8, 128], strides = [1, 1]} : vector<8x512xf32> to vector<8x128xf32>
    %cst_468 = arith.constant 5.000000e-01 : f32
    %1050 = vector.broadcast %cst_468 : f32 to vector<8x128xf32>
    %1051 = arith.mulf %1050, %1049 : vector<8x128xf32>
    %1052 = math.tanh %1051 : vector<8x128xf32>
    %cst_469 = arith.constant 5.000000e-01 : f32
    %1053 = vector.broadcast %cst_469 : f32 to vector<8x128xf32>
    %1054 = arith.mulf %1053, %1052 : vector<8x128xf32>
    %cst_470 = arith.constant 5.000000e-01 : f32
    %1055 = vector.broadcast %cst_470 : f32 to vector<8x128xf32>
    %1056 = arith.addf %1054, %1055 : vector<8x128xf32>
    %1057 = arith.mulf %1046, %975 : vector<8x128xf32>
    %1058 = arith.mulf %1038, %1048 : vector<8x128xf32>
    %1059 = arith.addf %1057, %1058 : vector<8x128xf32>
    %1060 = math.tanh %1059 : vector<8x128xf32>
    %1061 = arith.mulf %1056, %1060 : vector<8x128xf32>
    %1062 = vector.extract_strided_slice %1030 {offsets = [0, 0], sizes = [8, 128], strides = [1, 1]} : vector<8x512xf32> to vector<8x128xf32>
    %cst_471 = arith.constant 5.000000e-01 : f32
    %1063 = vector.broadcast %cst_471 : f32 to vector<8x128xf32>
    %1064 = arith.mulf %1063, %1062 : vector<8x128xf32>
    %1065 = math.tanh %1064 : vector<8x128xf32>
    %cst_472 = arith.constant 5.000000e-01 : f32
    %1066 = vector.broadcast %cst_472 : f32 to vector<8x128xf32>
    %1067 = arith.mulf %1066, %1065 : vector<8x128xf32>
    %cst_473 = arith.constant 5.000000e-01 : f32
    %1068 = vector.broadcast %cst_473 : f32 to vector<8x128xf32>
    %1069 = arith.addf %1067, %1068 : vector<8x128xf32>
    %1070 = vector.extract_strided_slice %1030 {offsets = [0, 128], sizes = [8, 128], strides = [1, 1]} : vector<8x512xf32> to vector<8x128xf32>
    %cst_474 = arith.constant 5.000000e-01 : f32
    %1071 = vector.broadcast %cst_474 : f32 to vector<8x128xf32>
    %1072 = arith.mulf %1071, %1070 : vector<8x128xf32>
    %1073 = math.tanh %1072 : vector<8x128xf32>
    %cst_475 = arith.constant 5.000000e-01 : f32
    %1074 = vector.broadcast %cst_475 : f32 to vector<8x128xf32>
    %1075 = arith.mulf %1074, %1073 : vector<8x128xf32>
    %cst_476 = arith.constant 5.000000e-01 : f32
    %1076 = vector.broadcast %cst_476 : f32 to vector<8x128xf32>
    %1077 = arith.addf %1075, %1076 : vector<8x128xf32>
    %1078 = vector.extract_strided_slice %1030 {offsets = [0, 256], sizes = [8, 128], strides = [1, 1]} : vector<8x512xf32> to vector<8x128xf32>
    %1079 = math.tanh %1078 : vector<8x128xf32>
    %1080 = vector.extract_strided_slice %1030 {offsets = [0, 384], sizes = [8, 128], strides = [1, 1]} : vector<8x512xf32> to vector<8x128xf32>
    %cst_477 = arith.constant 5.000000e-01 : f32
    %1081 = vector.broadcast %cst_477 : f32 to vector<8x128xf32>
    %1082 = arith.mulf %1081, %1080 : vector<8x128xf32>
    %1083 = math.tanh %1082 : vector<8x128xf32>
    %cst_478 = arith.constant 5.000000e-01 : f32
    %1084 = vector.broadcast %cst_478 : f32 to vector<8x128xf32>
    %1085 = arith.mulf %1084, %1083 : vector<8x128xf32>
    %cst_479 = arith.constant 5.000000e-01 : f32
    %1086 = vector.broadcast %cst_479 : f32 to vector<8x128xf32>
    %1087 = arith.addf %1085, %1086 : vector<8x128xf32>
    %1088 = arith.mulf %1077, %1006 : vector<8x128xf32>
    %1089 = arith.mulf %1069, %1079 : vector<8x128xf32>
    %1090 = arith.addf %1088, %1089 : vector<8x128xf32>
    %1091 = math.tanh %1090 : vector<8x128xf32>
    %1092 = arith.mulf %1087, %1091 : vector<8x128xf32>
    %c12_480 = arith.constant 12 : index
    %c0_481 = arith.constant 0 : index
    %c0_482 = arith.constant 0 : index
    %1093 = vector.load %arg4[%c12_480, %c0_481, %c0_482] : memref<16x8x128xf32, #tpu.memory_space<vmem>>, vector<1x8x128xf32>
    %1094 = vector.shape_cast %1093 : vector<1x8x128xf32> to vector<8x128xf32>
    %1095 = vector.shape_cast %1061 : vector<8x128xf32> to vector<1x8x128xf32>
    tpu.vector_store %arg4[%c12_480, %c0_481, %c0_482], %1095 {strides = array<i32>} : memref<16x8x128xf32, #tpu.memory_space<vmem>>, vector<1x8x128xf32>,
    %c3_483 = arith.constant 3 : index
    %c0_484 = arith.constant 0 : index
    %c0_485 = arith.constant 0 : index
    %1096 = vector.load %arg5[%c3_483, %c0_484, %c0_485] : memref<16x8x128xf32, #tpu.memory_space<vmem>>, vector<1x8x128xf32>
    %1097 = vector.shape_cast %1096 : vector<1x8x128xf32> to vector<8x128xf32>
    %1098 = vector.shape_cast %1092 : vector<8x128xf32> to vector<1x8x128xf32>
    tpu.vector_store %arg5[%c3_483, %c0_484, %c0_485], %1098 {strides = array<i32>} : memref<16x8x128xf32, #tpu.memory_space<vmem>>, vector<1x8x128xf32>,
    %c13_486 = arith.constant 13 : index
    %c0_487 = arith.constant 0 : index
    %c0_488 = arith.constant 0 : index
    %1099 = vector.load %arg1[%c13_486, %c0_487, %c0_488] : memref<16x8x512xbf16, #tpu.memory_space<vmem>>, vector<1x8x512xbf16>
    %1100 = vector.shape_cast %1099 : vector<1x8x512xbf16> to vector<8x512xbf16>
    %1101 = arith.extf %1100 : vector<8x512xbf16> to vector<8x512xf32>
    %1102 = arith.truncf %1061 : vector<8x128xf32> to vector<8x128xbf16>
    %c0_489 = arith.constant 0 : index
    %c0_490 = arith.constant 0 : index
    %c0_491 = arith.constant 0 : index
    %1103 = vector.load %arg6[%c0_489, %c0_490, %c0_491] : memref<2x128x512xbf16, #tpu.memory_space<vmem>>, vector<1x128x512xbf16>
    %1104 = vector.shape_cast %1103 : vector<1x128x512xbf16> to vector<128x512xbf16>
    %cst_492 = arith.constant dense<0.000000e+00> : vector<8x512xf32>
    %1105 = tpu.matmul %1102, %1104, %cst_492 {dimension_numbers = #tpu.dot_dimension_numbers<[1], [0], [0], [1], [0, 0, 1, 1], [], []>} : vector<8x128xbf16>, vector<128x512xbf16>, vector<8x512xf32> -> vector<8x512xf32>
    %1106 = arith.addf %1101, %1105 : vector<8x512xf32>
    %c2_493 = arith.constant 2 : index
    %c0_494 = arith.constant 0 : index
    %c0_495 = arith.constant 0 : index
    %1107 = vector.load %arg2[%c2_493, %c0_494, %c0_495] : memref<16x8x512xbf16, #tpu.memory_space<vmem>>, vector<1x8x512xbf16>
    %1108 = vector.shape_cast %1107 : vector<1x8x512xbf16> to vector<8x512xbf16>
    %1109 = arith.extf %1108 : vector<8x512xbf16> to vector<8x512xf32>
    %1110 = arith.truncf %1092 : vector<8x128xf32> to vector<8x128xbf16>
    %c1_496 = arith.constant 1 : index
    %c0_497 = arith.constant 0 : index
    %c0_498 = arith.constant 0 : index
    %1111 = vector.load %arg6[%c1_496, %c0_497, %c0_498] : memref<2x128x512xbf16, #tpu.memory_space<vmem>>, vector<1x128x512xbf16>
    %1112 = vector.shape_cast %1111 : vector<1x128x512xbf16> to vector<128x512xbf16>
    %cst_499 = arith.constant dense<0.000000e+00> : vector<8x512xf32>
    %1113 = tpu.matmul %1110, %1112, %cst_499 {dimension_numbers = #tpu.dot_dimension_numbers<[1], [0], [0], [1], [0, 0, 1, 1], [], []>} : vector<8x128xbf16>, vector<128x512xbf16>, vector<8x512xf32> -> vector<8x512xf32>
    %1114 = arith.addf %1109, %1113 : vector<8x512xf32>
    %1115 = vector.extract_strided_slice %1106 {offsets = [0, 0], sizes = [8, 128], strides = [1, 1]} : vector<8x512xf32> to vector<8x128xf32>
    %cst_500 = arith.constant 5.000000e-01 : f32
    %1116 = vector.broadcast %cst_500 : f32 to vector<8x128xf32>
    %1117 = arith.mulf %1116, %1115 : vector<8x128xf32>
    %1118 = math.tanh %1117 : vector<8x128xf32>
    %cst_501 = arith.constant 5.000000e-01 : f32
    %1119 = vector.broadcast %cst_501 : f32 to vector<8x128xf32>
    %1120 = arith.mulf %1119, %1118 : vector<8x128xf32>
    %cst_502 = arith.constant 5.000000e-01 : f32
    %1121 = vector.broadcast %cst_502 : f32 to vector<8x128xf32>
    %1122 = arith.addf %1120, %1121 : vector<8x128xf32>
    %1123 = vector.extract_strided_slice %1106 {offsets = [0, 128], sizes = [8, 128], strides = [1, 1]} : vector<8x512xf32> to vector<8x128xf32>
    %cst_503 = arith.constant 5.000000e-01 : f32
    %1124 = vector.broadcast %cst_503 : f32 to vector<8x128xf32>
    %1125 = arith.mulf %1124, %1123 : vector<8x128xf32>
    %1126 = math.tanh %1125 : vector<8x128xf32>
    %cst_504 = arith.constant 5.000000e-01 : f32
    %1127 = vector.broadcast %cst_504 : f32 to vector<8x128xf32>
    %1128 = arith.mulf %1127, %1126 : vector<8x128xf32>
    %cst_505 = arith.constant 5.000000e-01 : f32
    %1129 = vector.broadcast %cst_505 : f32 to vector<8x128xf32>
    %1130 = arith.addf %1128, %1129 : vector<8x128xf32>
    %1131 = vector.extract_strided_slice %1106 {offsets = [0, 256], sizes = [8, 128], strides = [1, 1]} : vector<8x512xf32> to vector<8x128xf32>
    %1132 = math.tanh %1131 : vector<8x128xf32>
    %1133 = vector.extract_strided_slice %1106 {offsets = [0, 384], sizes = [8, 128], strides = [1, 1]} : vector<8x512xf32> to vector<8x128xf32>
    %cst_506 = arith.constant 5.000000e-01 : f32
    %1134 = vector.broadcast %cst_506 : f32 to vector<8x128xf32>
    %1135 = arith.mulf %1134, %1133 : vector<8x128xf32>
    %1136 = math.tanh %1135 : vector<8x128xf32>
    %cst_507 = arith.constant 5.000000e-01 : f32
    %1137 = vector.broadcast %cst_507 : f32 to vector<8x128xf32>
    %1138 = arith.mulf %1137, %1136 : vector<8x128xf32>
    %cst_508 = arith.constant 5.000000e-01 : f32
    %1139 = vector.broadcast %cst_508 : f32 to vector<8x128xf32>
    %1140 = arith.addf %1138, %1139 : vector<8x128xf32>
    %1141 = arith.mulf %1130, %1059 : vector<8x128xf32>
    %1142 = arith.mulf %1122, %1132 : vector<8x128xf32>
    %1143 = arith.addf %1141, %1142 : vector<8x128xf32>
    %1144 = math.tanh %1143 : vector<8x128xf32>
    %1145 = arith.mulf %1140, %1144 : vector<8x128xf32>
    %1146 = vector.extract_strided_slice %1114 {offsets = [0, 0], sizes = [8, 128], strides = [1, 1]} : vector<8x512xf32> to vector<8x128xf32>
    %cst_509 = arith.constant 5.000000e-01 : f32
    %1147 = vector.broadcast %cst_509 : f32 to vector<8x128xf32>
    %1148 = arith.mulf %1147, %1146 : vector<8x128xf32>
    %1149 = math.tanh %1148 : vector<8x128xf32>
    %cst_510 = arith.constant 5.000000e-01 : f32
    %1150 = vector.broadcast %cst_510 : f32 to vector<8x128xf32>
    %1151 = arith.mulf %1150, %1149 : vector<8x128xf32>
    %cst_511 = arith.constant 5.000000e-01 : f32
    %1152 = vector.broadcast %cst_511 : f32 to vector<8x128xf32>
    %1153 = arith.addf %1151, %1152 : vector<8x128xf32>
    %1154 = vector.extract_strided_slice %1114 {offsets = [0, 128], sizes = [8, 128], strides = [1, 1]} : vector<8x512xf32> to vector<8x128xf32>
    %cst_512 = arith.constant 5.000000e-01 : f32
    %1155 = vector.broadcast %cst_512 : f32 to vector<8x128xf32>
    %1156 = arith.mulf %1155, %1154 : vector<8x128xf32>
    %1157 = math.tanh %1156 : vector<8x128xf32>
    %cst_513 = arith.constant 5.000000e-01 : f32
    %1158 = vector.broadcast %cst_513 : f32 to vector<8x128xf32>
    %1159 = arith.mulf %1158, %1157 : vector<8x128xf32>
    %cst_514 = arith.constant 5.000000e-01 : f32
    %1160 = vector.broadcast %cst_514 : f32 to vector<8x128xf32>
    %1161 = arith.addf %1159, %1160 : vector<8x128xf32>
    %1162 = vector.extract_strided_slice %1114 {offsets = [0, 256], sizes = [8, 128], strides = [1, 1]} : vector<8x512xf32> to vector<8x128xf32>
    %1163 = math.tanh %1162 : vector<8x128xf32>
    %1164 = vector.extract_strided_slice %1114 {offsets = [0, 384], sizes = [8, 128], strides = [1, 1]} : vector<8x512xf32> to vector<8x128xf32>
    %cst_515 = arith.constant 5.000000e-01 : f32
    %1165 = vector.broadcast %cst_515 : f32 to vector<8x128xf32>
    %1166 = arith.mulf %1165, %1164 : vector<8x128xf32>
    %1167 = math.tanh %1166 : vector<8x128xf32>
    %cst_516 = arith.constant 5.000000e-01 : f32
    %1168 = vector.broadcast %cst_516 : f32 to vector<8x128xf32>
    %1169 = arith.mulf %1168, %1167 : vector<8x128xf32>
    %cst_517 = arith.constant 5.000000e-01 : f32
    %1170 = vector.broadcast %cst_517 : f32 to vector<8x128xf32>
    %1171 = arith.addf %1169, %1170 : vector<8x128xf32>
    %1172 = arith.mulf %1161, %1090 : vector<8x128xf32>
    %1173 = arith.mulf %1153, %1163 : vector<8x128xf32>
    %1174 = arith.addf %1172, %1173 : vector<8x128xf32>
    %1175 = math.tanh %1174 : vector<8x128xf32>
    %1176 = arith.mulf %1171, %1175 : vector<8x128xf32>
    %c13_518 = arith.constant 13 : index
    %c0_519 = arith.constant 0 : index
    %c0_520 = arith.constant 0 : index
    %1177 = vector.load %arg4[%c13_518, %c0_519, %c0_520] : memref<16x8x128xf32, #tpu.memory_space<vmem>>, vector<1x8x128xf32>
    %1178 = vector.shape_cast %1177 : vector<1x8x128xf32> to vector<8x128xf32>
    %1179 = vector.shape_cast %1145 : vector<8x128xf32> to vector<1x8x128xf32>
    tpu.vector_store %arg4[%c13_518, %c0_519, %c0_520], %1179 {strides = array<i32>} : memref<16x8x128xf32, #tpu.memory_space<vmem>>, vector<1x8x128xf32>,
    %c2_521 = arith.constant 2 : index
    %c0_522 = arith.constant 0 : index
    %c0_523 = arith.constant 0 : index
    %1180 = vector.load %arg5[%c2_521, %c0_522, %c0_523] : memref<16x8x128xf32, #tpu.memory_space<vmem>>, vector<1x8x128xf32>
    %1181 = vector.shape_cast %1180 : vector<1x8x128xf32> to vector<8x128xf32>
    %1182 = vector.shape_cast %1176 : vector<8x128xf32> to vector<1x8x128xf32>
    tpu.vector_store %arg5[%c2_521, %c0_522, %c0_523], %1182 {strides = array<i32>} : memref<16x8x128xf32, #tpu.memory_space<vmem>>, vector<1x8x128xf32>,
    %c14_524 = arith.constant 14 : index
    %c0_525 = arith.constant 0 : index
    %c0_526 = arith.constant 0 : index
    %1183 = vector.load %arg1[%c14_524, %c0_525, %c0_526] : memref<16x8x512xbf16, #tpu.memory_space<vmem>>, vector<1x8x512xbf16>
    %1184 = vector.shape_cast %1183 : vector<1x8x512xbf16> to vector<8x512xbf16>
    %1185 = arith.extf %1184 : vector<8x512xbf16> to vector<8x512xf32>
    %1186 = arith.truncf %1145 : vector<8x128xf32> to vector<8x128xbf16>
    %c0_527 = arith.constant 0 : index
    %c0_528 = arith.constant 0 : index
    %c0_529 = arith.constant 0 : index
    %1187 = vector.load %arg6[%c0_527, %c0_528, %c0_529] : memref<2x128x512xbf16, #tpu.memory_space<vmem>>, vector<1x128x512xbf16>
    %1188 = vector.shape_cast %1187 : vector<1x128x512xbf16> to vector<128x512xbf16>
    %cst_530 = arith.constant dense<0.000000e+00> : vector<8x512xf32>
    %1189 = tpu.matmul %1186, %1188, %cst_530 {dimension_numbers = #tpu.dot_dimension_numbers<[1], [0], [0], [1], [0, 0, 1, 1], [], []>} : vector<8x128xbf16>, vector<128x512xbf16>, vector<8x512xf32> -> vector<8x512xf32>
    %1190 = arith.addf %1185, %1189 : vector<8x512xf32>
    %c1_531 = arith.constant 1 : index
    %c0_532 = arith.constant 0 : index
    %c0_533 = arith.constant 0 : index
    %1191 = vector.load %arg2[%c1_531, %c0_532, %c0_533] : memref<16x8x512xbf16, #tpu.memory_space<vmem>>, vector<1x8x512xbf16>
    %1192 = vector.shape_cast %1191 : vector<1x8x512xbf16> to vector<8x512xbf16>
    %1193 = arith.extf %1192 : vector<8x512xbf16> to vector<8x512xf32>
    %1194 = arith.truncf %1176 : vector<8x128xf32> to vector<8x128xbf16>
    %c1_534 = arith.constant 1 : index
    %c0_535 = arith.constant 0 : index
    %c0_536 = arith.constant 0 : index
    %1195 = vector.load %arg6[%c1_534, %c0_535, %c0_536] : memref<2x128x512xbf16, #tpu.memory_space<vmem>>, vector<1x128x512xbf16>
    %1196 = vector.shape_cast %1195 : vector<1x128x512xbf16> to vector<128x512xbf16>
    %cst_537 = arith.constant dense<0.000000e+00> : vector<8x512xf32>
    %1197 = tpu.matmul %1194, %1196, %cst_537 {dimension_numbers = #tpu.dot_dimension_numbers<[1], [0], [0], [1], [0, 0, 1, 1], [], []>} : vector<8x128xbf16>, vector<128x512xbf16>, vector<8x512xf32> -> vector<8x512xf32>
    %1198 = arith.addf %1193, %1197 : vector<8x512xf32>
    %1199 = vector.extract_strided_slice %1190 {offsets = [0, 0], sizes = [8, 128], strides = [1, 1]} : vector<8x512xf32> to vector<8x128xf32>
    %cst_538 = arith.constant 5.000000e-01 : f32
    %1200 = vector.broadcast %cst_538 : f32 to vector<8x128xf32>
    %1201 = arith.mulf %1200, %1199 : vector<8x128xf32>
    %1202 = math.tanh %1201 : vector<8x128xf32>
    %cst_539 = arith.constant 5.000000e-01 : f32
    %1203 = vector.broadcast %cst_539 : f32 to vector<8x128xf32>
    %1204 = arith.mulf %1203, %1202 : vector<8x128xf32>
    %cst_540 = arith.constant 5.000000e-01 : f32
    %1205 = vector.broadcast %cst_540 : f32 to vector<8x128xf32>
    %1206 = arith.addf %1204, %1205 : vector<8x128xf32>
    %1207 = vector.extract_strided_slice %1190 {offsets = [0, 128], sizes = [8, 128], strides = [1, 1]} : vector<8x512xf32> to vector<8x128xf32>
    %cst_541 = arith.constant 5.000000e-01 : f32
    %1208 = vector.broadcast %cst_541 : f32 to vector<8x128xf32>
    %1209 = arith.mulf %1208, %1207 : vector<8x128xf32>
    %1210 = math.tanh %1209 : vector<8x128xf32>
    %cst_542 = arith.constant 5.000000e-01 : f32
    %1211 = vector.broadcast %cst_542 : f32 to vector<8x128xf32>
    %1212 = arith.mulf %1211, %1210 : vector<8x128xf32>
    %cst_543 = arith.constant 5.000000e-01 : f32
    %1213 = vector.broadcast %cst_543 : f32 to vector<8x128xf32>
    %1214 = arith.addf %1212, %1213 : vector<8x128xf32>
    %1215 = vector.extract_strided_slice %1190 {offsets = [0, 256], sizes = [8, 128], strides = [1, 1]} : vector<8x512xf32> to vector<8x128xf32>
    %1216 = math.tanh %1215 : vector<8x128xf32>
    %1217 = vector.extract_strided_slice %1190 {offsets = [0, 384], sizes = [8, 128], strides = [1, 1]} : vector<8x512xf32> to vector<8x128xf32>
    %cst_544 = arith.constant 5.000000e-01 : f32
    %1218 = vector.broadcast %cst_544 : f32 to vector<8x128xf32>
    %1219 = arith.mulf %1218, %1217 : vector<8x128xf32>
    %1220 = math.tanh %1219 : vector<8x128xf32>
    %cst_545 = arith.constant 5.000000e-01 : f32
    %1221 = vector.broadcast %cst_545 : f32 to vector<8x128xf32>
    %1222 = arith.mulf %1221, %1220 : vector<8x128xf32>
    %cst_546 = arith.constant 5.000000e-01 : f32
    %1223 = vector.broadcast %cst_546 : f32 to vector<8x128xf32>
    %1224 = arith.addf %1222, %1223 : vector<8x128xf32>
    %1225 = arith.mulf %1214, %1143 : vector<8x128xf32>
    %1226 = arith.mulf %1206, %1216 : vector<8x128xf32>
    %1227 = arith.addf %1225, %1226 : vector<8x128xf32>
    %1228 = math.tanh %1227 : vector<8x128xf32>
    %1229 = arith.mulf %1224, %1228 : vector<8x128xf32>
    %1230 = vector.extract_strided_slice %1198 {offsets = [0, 0], sizes = [8, 128], strides = [1, 1]} : vector<8x512xf32> to vector<8x128xf32>
    %cst_547 = arith.constant 5.000000e-01 : f32
    %1231 = vector.broadcast %cst_547 : f32 to vector<8x128xf32>
    %1232 = arith.mulf %1231, %1230 : vector<8x128xf32>
    %1233 = math.tanh %1232 : vector<8x128xf32>
    %cst_548 = arith.constant 5.000000e-01 : f32
    %1234 = vector.broadcast %cst_548 : f32 to vector<8x128xf32>
    %1235 = arith.mulf %1234, %1233 : vector<8x128xf32>
    %cst_549 = arith.constant 5.000000e-01 : f32
    %1236 = vector.broadcast %cst_549 : f32 to vector<8x128xf32>
    %1237 = arith.addf %1235, %1236 : vector<8x128xf32>
    %1238 = vector.extract_strided_slice %1198 {offsets = [0, 128], sizes = [8, 128], strides = [1, 1]} : vector<8x512xf32> to vector<8x128xf32>
    %cst_550 = arith.constant 5.000000e-01 : f32
    %1239 = vector.broadcast %cst_550 : f32 to vector<8x128xf32>
    %1240 = arith.mulf %1239, %1238 : vector<8x128xf32>
    %1241 = math.tanh %1240 : vector<8x128xf32>
    %cst_551 = arith.constant 5.000000e-01 : f32
    %1242 = vector.broadcast %cst_551 : f32 to vector<8x128xf32>
    %1243 = arith.mulf %1242, %1241 : vector<8x128xf32>
    %cst_552 = arith.constant 5.000000e-01 : f32
    %1244 = vector.broadcast %cst_552 : f32 to vector<8x128xf32>
    %1245 = arith.addf %1243, %1244 : vector<8x128xf32>
    %1246 = vector.extract_strided_slice %1198 {offsets = [0, 256], sizes = [8, 128], strides = [1, 1]} : vector<8x512xf32> to vector<8x128xf32>
    %1247 = math.tanh %1246 : vector<8x128xf32>
    %1248 = vector.extract_strided_slice %1198 {offsets = [0, 384], sizes = [8, 128], strides = [1, 1]} : vector<8x512xf32> to vector<8x128xf32>
    %cst_553 = arith.constant 5.000000e-01 : f32
    %1249 = vector.broadcast %cst_553 : f32 to vector<8x128xf32>
    %1250 = arith.mulf %1249, %1248 : vector<8x128xf32>
    %1251 = math.tanh %1250 : vector<8x128xf32>
    %cst_554 = arith.constant 5.000000e-01 : f32
    %1252 = vector.broadcast %cst_554 : f32 to vector<8x128xf32>
    %1253 = arith.mulf %1252, %1251 : vector<8x128xf32>
    %cst_555 = arith.constant 5.000000e-01 : f32
    %1254 = vector.broadcast %cst_555 : f32 to vector<8x128xf32>
    %1255 = arith.addf %1253, %1254 : vector<8x128xf32>
    %1256 = arith.mulf %1245, %1174 : vector<8x128xf32>
    %1257 = arith.mulf %1237, %1247 : vector<8x128xf32>
    %1258 = arith.addf %1256, %1257 : vector<8x128xf32>
    %1259 = math.tanh %1258 : vector<8x128xf32>
    %1260 = arith.mulf %1255, %1259 : vector<8x128xf32>
    %c14_556 = arith.constant 14 : index
    %c0_557 = arith.constant 0 : index
    %c0_558 = arith.constant 0 : index
    %1261 = vector.load %arg4[%c14_556, %c0_557, %c0_558] : memref<16x8x128xf32, #tpu.memory_space<vmem>>, vector<1x8x128xf32>
    %1262 = vector.shape_cast %1261 : vector<1x8x128xf32> to vector<8x128xf32>
    %1263 = vector.shape_cast %1229 : vector<8x128xf32> to vector<1x8x128xf32>
    tpu.vector_store %arg4[%c14_556, %c0_557, %c0_558], %1263 {strides = array<i32>} : memref<16x8x128xf32, #tpu.memory_space<vmem>>, vector<1x8x128xf32>,
    %c1_559 = arith.constant 1 : index
    %c0_560 = arith.constant 0 : index
    %c0_561 = arith.constant 0 : index
    %1264 = vector.load %arg5[%c1_559, %c0_560, %c0_561] : memref<16x8x128xf32, #tpu.memory_space<vmem>>, vector<1x8x128xf32>
    %1265 = vector.shape_cast %1264 : vector<1x8x128xf32> to vector<8x128xf32>
    %1266 = vector.shape_cast %1260 : vector<8x128xf32> to vector<1x8x128xf32>
    tpu.vector_store %arg5[%c1_559, %c0_560, %c0_561], %1266 {strides = array<i32>} : memref<16x8x128xf32, #tpu.memory_space<vmem>>, vector<1x8x128xf32>,
    %c15_562 = arith.constant 15 : index
    %c0_563 = arith.constant 0 : index
    %c0_564 = arith.constant 0 : index
    %1267 = vector.load %arg1[%c15_562, %c0_563, %c0_564] : memref<16x8x512xbf16, #tpu.memory_space<vmem>>, vector<1x8x512xbf16>
    %1268 = vector.shape_cast %1267 : vector<1x8x512xbf16> to vector<8x512xbf16>
    %1269 = arith.extf %1268 : vector<8x512xbf16> to vector<8x512xf32>
    %1270 = arith.truncf %1229 : vector<8x128xf32> to vector<8x128xbf16>
    %c0_565 = arith.constant 0 : index
    %c0_566 = arith.constant 0 : index
    %c0_567 = arith.constant 0 : index
    %1271 = vector.load %arg6[%c0_565, %c0_566, %c0_567] : memref<2x128x512xbf16, #tpu.memory_space<vmem>>, vector<1x128x512xbf16>
    %1272 = vector.shape_cast %1271 : vector<1x128x512xbf16> to vector<128x512xbf16>
    %cst_568 = arith.constant dense<0.000000e+00> : vector<8x512xf32>
    %1273 = tpu.matmul %1270, %1272, %cst_568 {dimension_numbers = #tpu.dot_dimension_numbers<[1], [0], [0], [1], [0, 0, 1, 1], [], []>} : vector<8x128xbf16>, vector<128x512xbf16>, vector<8x512xf32> -> vector<8x512xf32>
    %1274 = arith.addf %1269, %1273 : vector<8x512xf32>
    %c0_569 = arith.constant 0 : index
    %c0_570 = arith.constant 0 : index
    %c0_571 = arith.constant 0 : index
    %1275 = vector.load %arg2[%c0_569, %c0_570, %c0_571] : memref<16x8x512xbf16, #tpu.memory_space<vmem>>, vector<1x8x512xbf16>
    %1276 = vector.shape_cast %1275 : vector<1x8x512xbf16> to vector<8x512xbf16>
    %1277 = arith.extf %1276 : vector<8x512xbf16> to vector<8x512xf32>
    %1278 = arith.truncf %1260 : vector<8x128xf32> to vector<8x128xbf16>
    %c1_572 = arith.constant 1 : index
    %c0_573 = arith.constant 0 : index
    %c0_574 = arith.constant 0 : index
    %1279 = vector.load %arg6[%c1_572, %c0_573, %c0_574] : memref<2x128x512xbf16, #tpu.memory_space<vmem>>, vector<1x128x512xbf16>
    %1280 = vector.shape_cast %1279 : vector<1x128x512xbf16> to vector<128x512xbf16>
    %cst_575 = arith.constant dense<0.000000e+00> : vector<8x512xf32>
    %1281 = tpu.matmul %1278, %1280, %cst_575 {dimension_numbers = #tpu.dot_dimension_numbers<[1], [0], [0], [1], [0, 0, 1, 1], [], []>} : vector<8x128xbf16>, vector<128x512xbf16>, vector<8x512xf32> -> vector<8x512xf32>
    %1282 = arith.addf %1277, %1281 : vector<8x512xf32>
    %1283 = vector.extract_strided_slice %1274 {offsets = [0, 0], sizes = [8, 128], strides = [1, 1]} : vector<8x512xf32> to vector<8x128xf32>
    %cst_576 = arith.constant 5.000000e-01 : f32
    %1284 = vector.broadcast %cst_576 : f32 to vector<8x128xf32>
    %1285 = arith.mulf %1284, %1283 : vector<8x128xf32>
    %1286 = math.tanh %1285 : vector<8x128xf32>
    %cst_577 = arith.constant 5.000000e-01 : f32
    %1287 = vector.broadcast %cst_577 : f32 to vector<8x128xf32>
    %1288 = arith.mulf %1287, %1286 : vector<8x128xf32>
    %cst_578 = arith.constant 5.000000e-01 : f32
    %1289 = vector.broadcast %cst_578 : f32 to vector<8x128xf32>
    %1290 = arith.addf %1288, %1289 : vector<8x128xf32>
    %1291 = vector.extract_strided_slice %1274 {offsets = [0, 128], sizes = [8, 128], strides = [1, 1]} : vector<8x512xf32> to vector<8x128xf32>
    %cst_579 = arith.constant 5.000000e-01 : f32
    %1292 = vector.broadcast %cst_579 : f32 to vector<8x128xf32>
    %1293 = arith.mulf %1292, %1291 : vector<8x128xf32>
    %1294 = math.tanh %1293 : vector<8x128xf32>
    %cst_580 = arith.constant 5.000000e-01 : f32
    %1295 = vector.broadcast %cst_580 : f32 to vector<8x128xf32>
    %1296 = arith.mulf %1295, %1294 : vector<8x128xf32>
    %cst_581 = arith.constant 5.000000e-01 : f32
    %1297 = vector.broadcast %cst_581 : f32 to vector<8x128xf32>
    %1298 = arith.addf %1296, %1297 : vector<8x128xf32>
    %1299 = vector.extract_strided_slice %1274 {offsets = [0, 256], sizes = [8, 128], strides = [1, 1]} : vector<8x512xf32> to vector<8x128xf32>
    %1300 = math.tanh %1299 : vector<8x128xf32>
    %1301 = vector.extract_strided_slice %1274 {offsets = [0, 384], sizes = [8, 128], strides = [1, 1]} : vector<8x512xf32> to vector<8x128xf32>
    %cst_582 = arith.constant 5.000000e-01 : f32
    %1302 = vector.broadcast %cst_582 : f32 to vector<8x128xf32>
    %1303 = arith.mulf %1302, %1301 : vector<8x128xf32>
    %1304 = math.tanh %1303 : vector<8x128xf32>
    %cst_583 = arith.constant 5.000000e-01 : f32
    %1305 = vector.broadcast %cst_583 : f32 to vector<8x128xf32>
    %1306 = arith.mulf %1305, %1304 : vector<8x128xf32>
    %cst_584 = arith.constant 5.000000e-01 : f32
    %1307 = vector.broadcast %cst_584 : f32 to vector<8x128xf32>
    %1308 = arith.addf %1306, %1307 : vector<8x128xf32>
    %1309 = arith.mulf %1298, %1227 : vector<8x128xf32>
    %1310 = arith.mulf %1290, %1300 : vector<8x128xf32>
    %1311 = arith.addf %1309, %1310 : vector<8x128xf32>
    %1312 = math.tanh %1311 : vector<8x128xf32>
    %1313 = arith.mulf %1308, %1312 : vector<8x128xf32>
    %1314 = vector.extract_strided_slice %1282 {offsets = [0, 0], sizes = [8, 128], strides = [1, 1]} : vector<8x512xf32> to vector<8x128xf32>
    %cst_585 = arith.constant 5.000000e-01 : f32
    %1315 = vector.broadcast %cst_585 : f32 to vector<8x128xf32>
    %1316 = arith.mulf %1315, %1314 : vector<8x128xf32>
    %1317 = math.tanh %1316 : vector<8x128xf32>
    %cst_586 = arith.constant 5.000000e-01 : f32
    %1318 = vector.broadcast %cst_586 : f32 to vector<8x128xf32>
    %1319 = arith.mulf %1318, %1317 : vector<8x128xf32>
    %cst_587 = arith.constant 5.000000e-01 : f32
    %1320 = vector.broadcast %cst_587 : f32 to vector<8x128xf32>
    %1321 = arith.addf %1319, %1320 : vector<8x128xf32>
    %1322 = vector.extract_strided_slice %1282 {offsets = [0, 128], sizes = [8, 128], strides = [1, 1]} : vector<8x512xf32> to vector<8x128xf32>
    %cst_588 = arith.constant 5.000000e-01 : f32
    %1323 = vector.broadcast %cst_588 : f32 to vector<8x128xf32>
    %1324 = arith.mulf %1323, %1322 : vector<8x128xf32>
    %1325 = math.tanh %1324 : vector<8x128xf32>
    %cst_589 = arith.constant 5.000000e-01 : f32
    %1326 = vector.broadcast %cst_589 : f32 to vector<8x128xf32>
    %1327 = arith.mulf %1326, %1325 : vector<8x128xf32>
    %cst_590 = arith.constant 5.000000e-01 : f32
    %1328 = vector.broadcast %cst_590 : f32 to vector<8x128xf32>
    %1329 = arith.addf %1327, %1328 : vector<8x128xf32>
    %1330 = vector.extract_strided_slice %1282 {offsets = [0, 256], sizes = [8, 128], strides = [1, 1]} : vector<8x512xf32> to vector<8x128xf32>
    %1331 = math.tanh %1330 : vector<8x128xf32>
    %1332 = vector.extract_strided_slice %1282 {offsets = [0, 384], sizes = [8, 128], strides = [1, 1]} : vector<8x512xf32> to vector<8x128xf32>
    %cst_591 = arith.constant 5.000000e-01 : f32
    %1333 = vector.broadcast %cst_591 : f32 to vector<8x128xf32>
    %1334 = arith.mulf %1333, %1332 : vector<8x128xf32>
    %1335 = math.tanh %1334 : vector<8x128xf32>
    %cst_592 = arith.constant 5.000000e-01 : f32
    %1336 = vector.broadcast %cst_592 : f32 to vector<8x128xf32>
    %1337 = arith.mulf %1336, %1335 : vector<8x128xf32>
    %cst_593 = arith.constant 5.000000e-01 : f32
    %1338 = vector.broadcast %cst_593 : f32 to vector<8x128xf32>
    %1339 = arith.addf %1337, %1338 : vector<8x128xf32>
    %1340 = arith.mulf %1329, %1258 : vector<8x128xf32>
    %1341 = arith.mulf %1321, %1331 : vector<8x128xf32>
    %1342 = arith.addf %1340, %1341 : vector<8x128xf32>
    %1343 = math.tanh %1342 : vector<8x128xf32>
    %1344 = arith.mulf %1339, %1343 : vector<8x128xf32>
    %c15_594 = arith.constant 15 : index
    %c0_595 = arith.constant 0 : index
    %c0_596 = arith.constant 0 : index
    %1345 = vector.load %arg4[%c15_594, %c0_595, %c0_596] : memref<16x8x128xf32, #tpu.memory_space<vmem>>, vector<1x8x128xf32>
    %1346 = vector.shape_cast %1345 : vector<1x8x128xf32> to vector<8x128xf32>
    %1347 = vector.shape_cast %1313 : vector<8x128xf32> to vector<1x8x128xf32>
    tpu.vector_store %arg4[%c15_594, %c0_595, %c0_596], %1347 {strides = array<i32>} : memref<16x8x128xf32, #tpu.memory_space<vmem>>, vector<1x8x128xf32>,
    %c0_597 = arith.constant 0 : index
    %c0_598 = arith.constant 0 : index
    %c0_599 = arith.constant 0 : index
    %1348 = vector.load %arg5[%c0_597, %c0_598, %c0_599] : memref<16x8x128xf32, #tpu.memory_space<vmem>>, vector<1x8x128xf32>
    %1349 = vector.shape_cast %1348 : vector<1x8x128xf32> to vector<8x128xf32>
    %1350 = vector.shape_cast %1344 : vector<8x128xf32> to vector<1x8x128xf32>
    tpu.vector_store %arg5[%c0_597, %c0_598, %c0_599], %1350 {strides = array<i32>} : memref<16x8x128xf32, #tpu.memory_space<vmem>>, vector<1x8x128xf32>,
    %c0_600 = arith.constant 0 : index
    %c0_601 = arith.constant 0 : index
    %1351 = vector.load %arg8[%c0_600, %c0_601] : memref<8x128xf32, #tpu.memory_space<vmem>>, vector<8x128xf32>
    tpu.vector_store %arg8[%c0_600, %c0_601], %1313 {strides = array<i32>} : memref<8x128xf32, #tpu.memory_space<vmem>>, vector<8x128xf32>,
    %c0_602 = arith.constant 0 : index
    %c0_603 = arith.constant 0 : index
    %1352 = vector.load %arg9[%c0_602, %c0_603] : memref<8x128xf32, #tpu.memory_space<vmem>>, vector<8x128xf32>
    tpu.vector_store %arg9[%c0_602, %c0_603], %1311 {strides = array<i32>} : memref<8x128xf32, #tpu.memory_space<vmem>>, vector<8x128xf32>,
    %c0_604 = arith.constant 0 : index
    %c0_605 = arith.constant 0 : index
    %1353 = vector.load %arg10[%c0_604, %c0_605] : memref<8x128xf32, #tpu.memory_space<vmem>>, vector<8x128xf32>
    tpu.vector_store %arg10[%c0_604, %c0_605], %1344 {strides = array<i32>} : memref<8x128xf32, #tpu.memory_space<vmem>>, vector<8x128xf32>,
    %c0_606 = arith.constant 0 : index
    %c0_607 = arith.constant 0 : index
    %1354 = vector.load %arg11[%c0_606, %c0_607] : memref<8x128xf32, #tpu.memory_space<vmem>>, vector<8x128xf32>
    tpu.vector_store %arg11[%c0_606, %c0_607], %1342 {strides = array<i32>} : memref<8x128xf32, #tpu.memory_space<vmem>>, vector<8x128xf32>,
    return
  }
  func.func @transform_0(%arg0: i32) -> (i32, i32, i32) {
    %c0_i32 = arith.constant 0 : i32
    %c0_i32_0 = arith.constant 0 : i32
    %c0_i32_1 = arith.constant 0 : i32
    return %arg0, %c0_i32, %c0_i32_0 : i32, i32, i32
  }
  func.func @transform_1(%arg0: i32) -> (i32, i32, i32) {
    %c1_i32 = arith.constant 1 : i32
    %0 = arith.subi %c1_i32, %arg0 : i32
    %c0_i32 = arith.constant 0 : i32
    %c0_i32_0 = arith.constant 0 : i32
    %c0_i32_1 = arith.constant 0 : i32
    return %0, %c0_i32, %c0_i32_0 : i32, i32, i32
  }
  func.func @transform_3(%arg0: i32) -> (i32, i32, i32) {
    %c0_i32 = arith.constant 0 : i32
    %c0_i32_0 = arith.constant 0 : i32
    %c0_i32_1 = arith.constant 0 : i32
    return %arg0, %c0_i32, %c0_i32_0 : i32, i32, i32
  }
  func.func @transform_4(%arg0: i32) -> (i32, i32, i32) {
    %c1_i32 = arith.constant 1 : i32
    %0 = arith.subi %c1_i32, %arg0 : i32
    %c0_i32 = arith.constant 0 : i32
    %c0_i32_0 = arith.constant 0 : i32
    %c0_i32_1 = arith.constant 0 : i32
    return %0, %c0_i32, %c0_i32_0 : i32, i32, i32
  }
}

</mosaic_0001>

<llo_original>
// kernel: tpu_custom_call.1
$region0: #{tpu_custom_call.1}
  #allocation0 [shape = 'u32[]', space=smem, size = 0x4, offset = 0x4, fixed_abs, tag = 'smem constant byte address 0x4 - core index']
  #allocation1 [shape = 'u32[144,128]{1,0:T(1,128)}', space=vmem, size = 0x12000, scoped, tag = 'internal scratch']
  #allocation2 [shape = 'bf16[2,128,512]{2,1,0:T(16,128)(2,1)}', space=vmem, size = 0x40000, scoped, tag = 'scratch operand']
  #allocation3 [shape = 's32[1]{0}', space=sflag, size = 0x4, scoped, tag = 'scratch operand']
  #allocation4 [shape = 'f32[8,128]{1,0:T(8,128)}', space=vmem, size = 0x1000, scoped, tag = 'scratch operand']
  #allocation5 [shape = 'f32[8,128]{1,0:T(8,128)}', space=vmem, size = 0x1000, scoped, tag = 'scratch operand']
  #allocation6 [shape = 'f32[8,128]{1,0:T(8,128)}', space=vmem, size = 0x1000, scoped, tag = 'scratch operand']
  #allocation7 [shape = 'f32[8,128]{1,0:T(8,128)}', space=vmem, size = 0x1000, scoped, tag = 'scratch operand']
  #allocation16 [shape = 's32[]', space=sflag, size = 0x4, offset = 0, fixed_abs, tag = 'sflag constant byte address 0x0 - dummy sync flag']
  %s0 = inlined_call_operand.hbm [shape: bf16[32,8,512], index: 0, kind: input, shape index: {}]
  %s1 = inlined_call_operand.hbm [shape: bf16[32,8,512], index: 1, kind: input, shape index: {}]
  %s2 = inlined_call_operand.hbm [shape: bf16[2,128,512], index: 2, kind: input, shape index: {}]
  %s3 = inlined_call_operand.hbm [shape: f32[32,8,128], index: 3, kind: output, shape index: {0}]
  %s4 = inlined_call_operand.hbm [shape: f32[32,8,128], index: 4, kind: output, shape index: {1}]
  %5 = xla_tuple %s3, %s4
  %s6 = sld [smem:[#allocation0]]
  $region61: #{tpu_custom_call.1} parent=0
    _
  %s8 = ssub.s32 1, %s6
  %s9 = scalar_select 0, %s8, %s6
  $region1: #{tpu_custom_call.1} parent=0
    #allocation8 [shape = 'u8[262144]{0}', space=vmem, size = 0x40000, scoped, tag = 'input window, operand 0']
    #allocation9 [shape = 's32[2]{0}', space=sflag, size = 0x8, scoped, tag = 'scoped memory for tpu_custom_call.1']
    #allocation10 [shape = 's32[2]{0}', space=sflag, size = 0x8, scoped, tag = 'scoped memory for tpu_custom_call.1']
    #allocation11 [shape = 'u8[262144]{0}', space=vmem, size = 0x40000, scoped, tag = 'input window, operand 1']
    #allocation12 [shape = 's32[2]{0}', space=sflag, size = 0x8, scoped, tag = 'scoped memory for tpu_custom_call.1']
    #allocation13 [shape = 'u8[131072]{0}', space=vmem, size = 0x20000, scoped, tag = 'output window, operand 0']
    #allocation14 [shape = 'u8[131072]{0}', space=vmem, size = 0x20000, scoped, tag = 'output window, operand 1']
    #allocation15 [shape = 's32[2]{0}', space=sflag, size = 0x8, scoped, tag = 'scoped memory for tpu_custom_call.1']
    %10 = vsyncpa [#allocation9], 0
    %s11 = scalar_lea.sflag [#allocation9], 1
    %12 = vsyncpa %s11, 0
    %13 = vsyncpa [#allocation12], 0
    %s14 = scalar_lea.sflag [#allocation12], 1
    %15 = vsyncpa %s14, 0
    %16 = vsyncpa [#allocation10], 0
    %s17 = scalar_lea.sflag [#allocation10], 1
    %18 = vsyncpa %s17, 0
    %19 = vsyncpa [#allocation15], 0
    %s20 = scalar_lea.sflag [#allocation15], 1
    %21 = vsyncpa %s20, 0
    loop: start=0, step=1, limit=4
    $region2: #{tpu_custom_call.1} parent=1 // loop_pre_header
      _
    $region3: #{tpu_custom_call.1} parent=1 // loop_header
      %s23 = sphi 0, %s27
      %p24 = scmp.ge.s32.totalorder %s23, 4
      %s33 = sphi 0, %s35
      %s36 = sphi 0, %s33
      %s37 = sphi 0, %s36
      %s53 = sphi 0, %s37
      %s61 = sphi 0, %s63
      %s64 = sphi 0, %s61
      %s65 = sphi 0, %s64
      %s81 = sphi 0, %s65
      %s87 = sphi 0, %s89
      %s90 = sphi 0, %s87
      %s91 = sphi 0, %s90
      %s107 = sphi 0, %s91
      %s115 = sphi 0, %s117
      %s118 = sphi 0, %s115
      %s119 = sphi 0, %s118
      %s135 = sphi 0, %s119
    $region4: #{tpu_custom_call.1} parent=1 // loop_header_branch
      %26 = sbr.rel (%p24) target = $region8
    $region5: #{tpu_custom_call.1} parent=1 // loop_body
      %s28 = ssub.s32 %s23, 1
      %s29 = ssub.s32 %s23, 2
      %s30 = sadd.s32 %s23, 1
      %s31 = ssub.s32 %s23, %s30
      %p32 = scmp.eq.s32.totalorder %s31, 0
      %s34 = sadd.s32 %s33, 1
      %s35 = scalar_select %p32, %s33, %s34
      %p38 = pneg %p32
      %p39 = scmp.eq.s32.totalorder %s23, 1
      %p40 = por %p38, %p39
      %p41 = scmp.ne.s32.totalorder %s33, %s36
      %p42 = scmp.eq.s32.totalorder %s23, 0
      %p43 = por %p41, %p42
      %p44 = scmp.ne.s32.totalorder %s33, %s36
      %p45 = scmp.eq.s32.totalorder %s28, 1
      %p46 = por %p44, %p45
      %p47 = scmp.ne.s32.totalorder %s36, %s37
      %p48 = scmp.eq.s32.totalorder %s28, 0
      %p49 = por %p47, %p48
      %p50 = scmp.ne.s32.totalorder %s36, %s37
      %p51 = scmp.eq.s32.totalorder %s29, 1
      %p52 = por %p50, %p51
      %p54 = scmp.ne.s32.totalorder %s37, %s53
      %p55 = scmp.eq.s32.totalorder %s29, 0
      %p56 = por %p54, %p55
      %s57 = ssub.s32 1, %s23
      %s58 = ssub.s32 1, %s30
      %s59 = ssub.s32 %s57, %s58
      %p60 = scmp.eq.s32.totalorder %s59, 0
      %s62 = sadd.s32 %s61, 1
      %s63 = scalar_select %p60, %s61, %s62
      %p66 = pneg %p60
      %p67 = scmp.eq.s32.totalorder %s23, 1
      %p68 = por %p66, %p67
      %p69 = scmp.ne.s32.totalorder %s61, %s64
      %p70 = scmp.eq.s32.totalorder %s23, 0
      %p71 = por %p69, %p70
      %p72 = scmp.ne.s32.totalorder %s61, %s64
      %p73 = scmp.eq.s32.totalorder %s28, 1
      %p74 = por %p72, %p73
      %p75 = scmp.ne.s32.totalorder %s64, %s65
      %p76 = scmp.eq.s32.totalorder %s28, 0
      %p77 = por %p75, %p76
      %p78 = scmp.ne.s32.totalorder %s64, %s65
      %p79 = scmp.eq.s32.totalorder %s29, 1
      %p80 = por %p78, %p79
      %p82 = scmp.ne.s32.totalorder %s65, %s81
      %p83 = scmp.eq.s32.totalorder %s29, 0
      %p84 = por %p82, %p83
      %s85 = ssub.s32 %s23, %s30
      %p86 = scmp.eq.s32.totalorder %s85, 0
      %s88 = sadd.s32 %s87, 1
      %s89 = scalar_select %p86, %s87, %s88
      %p92 = pneg %p86
      %p93 = scmp.eq.s32.totalorder %s23, 1
      %p94 = por %p92, %p93
      %p95 = scmp.ne.s32.totalorder %s87, %s90
      %p96 = scmp.eq.s32.totalorder %s23, 0
      %p97 = por %p95, %p96
      %p98 = scmp.ne.s32.totalorder %s87, %s90
      %p99 = scmp.eq.s32.totalorder %s28, 1
      %p100 = por %p98, %p99
      %p101 = scmp.ne.s32.totalorder %s90, %s91
      %p102 = scmp.eq.s32.totalorder %s28, 0
      %p103 = por %p101, %p102
      %p104 = scmp.ne.s32.totalorder %s90, %s91
      %p105 = scmp.eq.s32.totalorder %s29, 1
      %p106 = por %p104, %p105
      %p108 = scmp.ne.s32.totalorder %s91, %s107
      %p109 = scmp.eq.s32.totalorder %s29, 0
      %p110 = por %p108, %p109
      %s111 = ssub.s32 1, %s23
      %s112 = ssub.s32 1, %s30
      %s113 = ssub.s32 %s111, %s112
      %p114 = scmp.eq.s32.totalorder %s113, 0
      %s116 = sadd.s32 %s115, 1
      %s117 = scalar_select %p114, %s115, %s116
      %p120 = pneg %p114
      %p121 = scmp.eq.s32.totalorder %s23, 1
      %p122 = por %p120, %p121
      %p123 = scmp.ne.s32.totalorder %s115, %s118
      %p124 = scmp.eq.s32.totalorder %s23, 0
      %p125 = por %p123, %p124
      %p126 = scmp.ne.s32.totalorder %s115, %s118
      %p127 = scmp.eq.s32.totalorder %s28, 1
      %p128 = por %p126, %p127
      %p129 = scmp.ne.s32.totalorder %s118, %s119
      %p130 = scmp.eq.s32.totalorder %s28, 0
      %p131 = por %p129, %p130
      %p132 = scmp.ne.s32.totalorder %s118, %s119
      %p133 = scmp.eq.s32.totalorder %s29, 1
      %p134 = por %p132, %p133
      %p136 = scmp.ne.s32.totalorder %s119, %s135
      %p137 = scmp.eq.s32.totalorder %s29, 0
      %p138 = por %p136, %p137
      %p139 = scmp.le.s32.totalorder 1, %s23
      %p140 = scmp.lt.s32.totalorder %s23, 3
      %p141 = pnand %p139, %p140
      %p142 = pneg %p141
      // Predicated region
      $region9: #{tpu_custom_call.1} parent=5 // pred_check
        _
      $region10: #{tpu_custom_call.1} parent=5 // pred_check_branch
        %144 = sbr.rel (%p141) target = $region12
      $region11: #{tpu_custom_call.1} parent=5 // pred_region
        %s145 = ssub.s32 %s23, 1
      $region12: #{tpu_custom_call.1} parent=5 // pred_fallthru
        _
      %p146 = scmp.lt.s32.totalorder %s23, 2
      // Predicated region
      $region13: #{tpu_custom_call.1} parent=5 // pred_check
        %p147 = pneg %p146
      $region14: #{tpu_custom_call.1} parent=5 // pred_check_branch
        %149 = sbr.rel (%p147) target = $region16
      $region15: #{tpu_custom_call.1} parent=5 // pred_region
        // Predicated region
        $region17: #{tpu_custom_call.1} parent=15 // pred_check
          %p150 = pneg %p43
        $region18: #{tpu_custom_call.1} parent=15 // pred_check_branch
          %152 = sbr.rel (%p150) target = $region20
        $region19: #{tpu_custom_call.1} parent=15 // pred_region
          %s153 = sand.u32 %s33, 1
          %s154 = scalar_lea.sflag [#allocation9], %s153
          %s155 = sand.u32 %s33, 1
          %s156 = smul.addr %s155, 256
          %s157 = scalar_lea.vmem [#allocation8], %s156
          %s158 = smul.u32 16, %s23
          %s160 = ssub.s32 4096, 4096
          %161 = vsyncadd %s154, %s160
          %s162 = smul.addr %s158, 4
          %s163 = smul.addr %s162, 64
          %s164 = scalar_lea.hbm %s0, %s163
          %s165 = sshll.u32 %s157, 4
          %s166 = int_to_ptr.vmem [resolvable:$true] %s165
          %171 = dma.hbm_to_vmem [thread:$0]  %s164, 4096, %s166, %s154, 256, 256, 16
        $region20: #{tpu_custom_call.1} parent=15 // pred_fallthru
          _
        // Predicated region
        $region21: #{tpu_custom_call.1} parent=15 // pred_check
          %p172 = pneg %p71
        $region22: #{tpu_custom_call.1} parent=15 // pred_check_branch
          %174 = sbr.rel (%p172) target = $region24
        $region23: #{tpu_custom_call.1} parent=15 // pred_region
          %s175 = sand.u32 %s61, 1
          %s176 = scalar_lea.sflag [#allocation12], %s175
          %s177 = sand.u32 %s61, 1
          %s178 = smul.addr %s177, 256
          %s179 = scalar_lea.vmem [#allocation11], %s178
          %s180 = ssub.s32 1, %s23
          %s181 = smul.u32 16, %s180
          %s183 = ssub.s32 4096, 4096
          %184 = vsyncadd %s176, %s183
          %s185 = smul.addr %s181, 4
          %s186 = smul.addr %s185, 64
          %s187 = scalar_lea.hbm %s1, %s186
          %s188 = sshll.u32 %s179, 4
          %s189 = int_to_ptr.vmem [resolvable:$true] %s188
          %194 = dma.hbm_to_vmem [thread:$0]  %s187, 4096, %s189, %s176, 256, 256, 16
        $region24: #{tpu_custom_call.1} parent=15 // pred_fallthru
          _
      $region16: #{tpu_custom_call.1} parent=5 // pred_fallthru
        _
      %p195 = scmp.le.s32.totalorder 1, %s23
      %p196 = scmp.lt.s32.totalorder %s23, 3
      %p197 = pnand %p195, %p196
      %p198 = pneg %p197
      // Predicated region
      $region25: #{tpu_custom_call.1} parent=5 // pred_check
        _
      $region26: #{tpu_custom_call.1} parent=5 // pred_check_branch
        %200 = sbr.rel (%p197) target = $region28
      $region27: #{tpu_custom_call.1} parent=5 // pred_region
        %s201 = ssub.s32 %s23, 1
        %s202 = sand.u32 %s36, 1
        %s203 = scalar_lea.sflag [#allocation9], %s202
        %s204 = sand.u32 %s36, 1
        %s205 = smul.addr %s204, 256
        %s206 = scalar_lea.vmem [#allocation8], %s205
        // Predicated region
        $region29: #{tpu_custom_call.1} parent=27 // pred_check
          %p207 = pneg %p49
        $region30: #{tpu_custom_call.1} parent=27 // pred_check_branch
          %209 = sbr.rel (%p207) target = $region32
        $region31: #{tpu_custom_call.1} parent=27 // pred_region
          %210 = dma.done %s203, 4096
        $region32: #{tpu_custom_call.1} parent=27 // pred_fallthru
          _
        %s211 = sand.u32 %s64, 1
        %s212 = scalar_lea.sflag [#allocation12], %s211
        %s213 = sand.u32 %s64, 1
        %s214 = smul.addr %s213, 256
        %s215 = scalar_lea.vmem [#allocation11], %s214
        // Predicated region
        $region33: #{tpu_custom_call.1} parent=27 // pred_check
          %p216 = pneg %p77
        $region34: #{tpu_custom_call.1} parent=27 // pred_check_branch
          %218 = sbr.rel (%p216) target = $region36
        $region35: #{tpu_custom_call.1} parent=27 // pred_region
          %219 = dma.done %s212, 4096
        $region36: #{tpu_custom_call.1} parent=27 // pred_fallthru
          _
        %s220 = sand.u32 %s36, 1
        %s221 = scalar_lea.sflag [#allocation9], %s220
        %s222 = sand.u32 %s36, 1
        %s223 = smul.addr %s222, 256
        %s224 = scalar_lea.vmem [#allocation8], %s223
        %p225 = pneg %p49
        %p226 = pneg %p46
        %s227 = sand.u32 %s64, 1
        %s228 = scalar_lea.sflag [#allocation12], %s227
        %s229 = sand.u32 %s64, 1
        %s230 = smul.addr %s229, 256
        %s231 = scalar_lea.vmem [#allocation11], %s230
        %p232 = pneg %p77
        %p233 = pneg %p74
        %p234 = pneg %p103
        %p235 = pneg %p100
        %s236 = sand.u32 %s90, 1
        %s237 = scalar_lea.sflag [#allocation10], %s236
        %s238 = sand.u32 %s90, 1
        %s239 = smul.addr %s238, 128
        %s240 = scalar_lea.vmem [#allocation13], %s239
        %p241 = pneg %p131
        %p242 = pneg %p128
        %s243 = sand.u32 %s118, 1
        %s244 = scalar_lea.sflag [#allocation15], %s243
        %s245 = sand.u32 %s118, 1
        %s246 = smul.addr %s245, 128
        %s247 = scalar_lea.vmem [#allocation14], %s246
        %s248 = smul.u32 16, %s28
        %s249 = ssub.s32 1, %s28
        %s250 = smul.u32 16, %s249
        %s251 = smul.u32 16, %s28
        %s252 = ssub.s32 1, %s28
        %s253 = smul.u32 16, %s252
        %p255 = scmp.eq.s32.totalorder %s28, 0
        // Predicated region
        $region37: #{tpu_custom_call.1} parent=27 // pred_check
          %p256 = pneg %p255
        $region38: #{tpu_custom_call.1} parent=27 // pred_check_branch
          %258 = sbr.rel (%p256) target = $region40
        $region39: #{tpu_custom_call.1} parent=27 // pred_region
          #allocation17 [shape = 'u32[9]{0}', space=smem, size = 0x24, scoped, tag = 'DMA stride descriptor']
          %s260 = sshll.u32 1, 14
          %s261 = sxor.u32 4294967295, %s260
          %s263 = sld [smem:[#allocation0]]
          %s264 = sadd.s32 2, %s263
          %s266 = sshll.u32 7, 26
          %s267 = sxor.u32 4294967295, %s266
          %s268 = sand.u32 0, %s267
          %s269 = sshll.u32 %s264, 26
          %s270 = sor.u32 %s268, %s269
          %s271 = sshll.u32 [#allocation2], 4
          %s272 = int_to_ptr.vmem [resolvable:$true] %s271
          %275 = sst [smem:[#allocation17]] 512
          %s276 = scalar_lea.smem [#allocation17], 1
          %277 = sst [smem:[%s276]] 512
          %s278 = scalar_lea.smem [#allocation17], 2
          %279 = sst [smem:[%s278]] 4
          %s280 = scalar_lea.smem [#allocation17], 3
          %281 = sst [smem:[%s280]] 64
          %s282 = scalar_lea.smem [#allocation17], 4
          %283 = sst [smem:[%s282]] 128
          %s284 = scalar_lea.smem [#allocation17], 5
          %285 = sst [smem:[%s284]] 2
          %s286 = scalar_lea.smem [#allocation17], 6
          %287 = sst [smem:[%s286]] 256
          %s288 = scalar_lea.smem [#allocation17], 7
          %289 = sst [smem:[%s288]] 64
          %s290 = scalar_lea.smem [#allocation17], 8
          %291 = sst [smem:[%s290]] 4
          %293 = dma.general %s2, 8192, %s272, [#allocation3], [#allocation16], [#allocation17], %s270, 0
          %s294 = smul.u32 4, 2
          %s295 = smul.u32 %s294, 16
          %s296 = smul.u32 %s295, 4
          %s297 = sshll.u32 %s296, 4
          %298 = dma.done [#allocation3], %s297
          %299 = vst [vmem:[#allocation4] sm:$0xff] 0.0
          %300 = vst [vmem:[#allocation5] sm:$0xff] 0.0
          %301 = vst [vmem:[#allocation6] sm:$0xff] 0.0
          %302 = vst [vmem:[#allocation7] sm:$0xff] 0.0
        $region40: #{tpu_custom_call.1} parent=27 // pred_fallthru
          _
        %v303 = vld [vmem:[#allocation4] sm:$0xff]
        %v304 = vld [vmem:[#allocation5] sm:$0xff]
        %v305 = vld [vmem:[#allocation6] sm:$0xff]
        %v306 = vld [vmem:[#allocation7] sm:$0xff]
        %v307 = vld [vmem:[%s206] sm:$0xff]
        %v308 = vld [vmem:[%s206 + $0x8] sm:$0xff]
        %v309 = vunpack.c.l.bf16 %v307
        %v310 = vunpack.c.h.bf16 %v307
        %v311 = vunpack.c.l.bf16 %v308
        %v312 = vunpack.c.h.bf16 %v308
        %v313 = vpack.c.bf16 %v303, %v303
        %v314 = vld [vmem:[#allocation2] sm:$0xff]
        %v315 = vld [vmem:[#allocation2 + $0x8] sm:$0xff]
        %v316 = vld [vmem:[#allocation2 + $0x10] sm:$0xff]
        %v317 = vld [vmem:[#allocation2 + $0x18] sm:$0xff]
        %v318 = vld [vmem:[#allocation2 + $0x20] sm:$0xff]
        %v319 = vld [vmem:[#allocation2 + $0x28] sm:$0xff]
        %v320 = vld [vmem:[#allocation2 + $0x30] sm:$0xff]
        %v321 = vld [vmem:[#allocation2 + $0x38] sm:$0xff]
        %v322 = vld [vmem:[#allocation2 + $0x40] sm:$0xff]
        %v323 = vld [vmem:[#allocation2 + $0x48] sm:$0xff]
        %v324 = vld [vmem:[#allocation2 + $0x50] sm:$0xff]
        %v325 = vld [vmem:[#allocation2 + $0x58] sm:$0xff]
        %v326 = vld [vmem:[#allocation2 + $0x60] sm:$0xff]
        %v327 = vld [vmem:[#allocation2 + $0x68] sm:$0xff]
        %v328 = vld [vmem:[#allocation2 + $0x70] sm:$0xff]
        %v329 = vld [vmem:[#allocation2 + $0x78] sm:$0xff]
        %v330 = vld [vmem:[#allocation2 + $0x80] sm:$0xff]
        %v331 = vld [vmem:[#allocation2 + $0x88] sm:$0xff]
        %v332 = vld [vmem:[#allocation2 + $0x90] sm:$0xff]
        %v333 = vld [vmem:[#allocation2 + $0x98] sm:$0xff]
        %v334 = vld [vmem:[#allocation2 + $0xa0] sm:$0xff]
        %v335 = vld [vmem:[#allocation2 + $0xa8] sm:$0xff]
        %v336 = vld [vmem:[#allocation2 + $0xb0] sm:$0xff]
        %v337 = vld [vmem:[#allocation2 + $0xb8] sm:$0xff]
        %v338 = vld [vmem:[#allocation2 + $0xc0] sm:$0xff]
        %v339 = vld [vmem:[#allocation2 + $0xc8] sm:$0xff]
        %v340 = vld [vmem:[#allocation2 + $0xd0] sm:$0xff]
        %v341 = vld [vmem:[#allocation2 + $0xd8] sm:$0xff]
        %v342 = vld [vmem:[#allocation2 + $0xe0] sm:$0xff]
        %v343 = vld [vmem:[#allocation2 + $0xe8] sm:$0xff]
        %v344 = vld [vmem:[#allocation2 + $0xf0] sm:$0xff]
        %v345 = vld [vmem:[#allocation2 + $0xf8] sm:$0xff]
        %346 = vmatprep.subr.bf16.mxu0 %v315
        %347 = vmatpush1.bf16.msra.mxu0 %v314
        %348 = vmatprep.subr.bf16.mxu0 %v319
        %349 = vmatpush1.bf16.msra.mxu0 %v318
        %350 = vmatprep.subr.bf16.mxu0 %v323
        %351 = vmatpush1.bf16.msra.mxu0 %v322
        %352 = vmatprep.subr.bf16.mxu0 %v327
        %353 = vmatpush1.bf16.msra.mxu0 %v326
        %354 = vmatprep.subr.bf16.mxu0 %v331
        %355 = vmatpush1.bf16.msra.mxu0 %v330
        %356 = vmatprep.subr.bf16.mxu0 %v335
        %357 = vmatpush1.bf16.msra.mxu0 %v334
        %358 = vmatprep.subr.bf16.mxu0 %v339
        %359 = vmatpush1.bf16.msra.mxu0 %v338
        %360 = vmatprep.subr.bf16.mxu0 %v343
        %361 = vmatpush1.bf16.msra.mxu0 %v342
        %362 = vmatprep.subr.bf16.mxu0 0
        %363 = vmatpush1.bf16.msra.mxu0 0
        %364 = vmatprep.subr.bf16.mxu0 0
        %365 = vmatpush1.bf16.msra.mxu0 0
        %366 = vmatprep.subr.bf16.mxu0 0
        %367 = vmatpush1.bf16.msra.mxu0 0
        %368 = vmatprep.subr.bf16.mxu0 0
        %369 = vmatpush1.bf16.msra.mxu0 0
        %370 = vmatprep.subr.bf16.mxu0 0
        %371 = vmatpush1.bf16.msra.mxu0 0
        %372 = vmatprep.subr.bf16.mxu0 0
        %373 = vmatpush1.bf16.msra.mxu0 0
        %374 = vmatprep.subr.bf16.mxu0 0
        %375 = vmatpush1.bf16.msra.mxu0 0
        %376 = vmatprep.subr.bf16.mxu0 0
        %377 = vmatpush1.bf16.msra.mxu0 0
        %378 = vmatprep.mubr.bf16.mxu0 0
        %379 = vmatmul.mubr.bf16.gmra.mrb[0].mxu0 %v313
        %v380 = vpop.f32.mrb[0].mxu0
        %v381 = vadd.f32 0.0, %v380
        %v382 = vpop.f32.mrb[0].mxu0
        %v383 = vadd.f32 0.0, %v382
        %v384 = vpop.f32.mrb[0].mxu0
        %v385 = vpop.f32.mrb[0].mxu0
        %386 = vdwg.mxu0
        %387 = vmatprep.subr.bf16.mxu0 %v317
        %388 = vmatpush1.bf16.msra.mxu0 %v316
        %389 = vmatprep.subr.bf16.mxu0 %v321
        %390 = vmatpush1.bf16.msra.mxu0 %v320
        %391 = vmatprep.subr.bf16.mxu0 %v325
        %392 = vmatpush1.bf16.msra.mxu0 %v324
        %393 = vmatprep.subr.bf16.mxu0 %v329
        %394 = vmatpush1.bf16.msra.mxu0 %v328
        %395 = vmatprep.subr.bf16.mxu0 %v333
        %396 = vmatpush1.bf16.msra.mxu0 %v332
        %397 = vmatprep.subr.bf16.mxu0 %v337
        %398 = vmatpush1.bf16.msra.mxu0 %v336
        %399 = vmatprep.subr.bf16.mxu0 %v341
        %400 = vmatpush1.bf16.msra.mxu0 %v340
        %401 = vmatprep.subr.bf16.mxu0 %v345
        %402 = vmatpush1.bf16.msra.mxu0 %v344
        %403 = vmatprep.subr.bf16.mxu0 0
        %404 = vmatpush1.bf16.msra.mxu0 0
        %405 = vmatprep.subr.bf16.mxu0 0
        %406 = vmatpush1.bf16.msra.mxu0 0
        %407 = vmatprep.subr.bf16.mxu0 0
        %408 = vmatpush1.bf16.msra.mxu0 0
        %409 = vmatprep.subr.bf16.mxu0 0
        %410 = vmatpush1.bf16.msra.mxu0 0
        %411 = vmatprep.subr.bf16.mxu0 0
        %412 = vmatpush1.bf16.msra.mxu0 0
        %413 = vmatprep.subr.bf16.mxu0 0
        %414 = vmatpush1.bf16.msra.mxu0 0
        %415 = vmatprep.subr.bf16.mxu0 0
        %416 = vmatpush1.bf16.msra.mxu0 0
        %417 = vmatprep.subr.bf16.mxu0 0
        %418 = vmatpush1.bf16.msra.mxu0 0
        %419 = vmatprep.mubr.bf16.mxu0 0
        %420 = vmatmul.mubr.bf16.gmra.mrb[0].mxu0 %v313
        %v421 = vpop.f32.mrb[0].mxu0
        %v422 = vadd.f32 0.0, %v421
        %v423 = vpop.f32.mrb[0].mxu0
        %v424 = vadd.f32 0.0, %v423
        %v425 = vpop.f32.mrb[0].mxu0
        %v426 = vpop.f32.mrb[0].mxu0
        %427 = vdwg.mxu0
        %v428 = vadd.f32 %v309, %v381
        %v429 = vadd.f32 %v310, %v383
        %v430 = vadd.f32 %v311, %v422
        %v431 = vadd.f32 %v312, %v424
        %s432 = scalar_lea.vmem %s215, 240 [#allocation11]
        %v433 = vld [vmem:[%s432] sm:$0xff]
        %v434 = vld [vmem:[%s432 + $0x8] sm:$0xff]
        %v435 = vunpack.c.l.bf16 %v433
        %v436 = vunpack.c.h.bf16 %v433
        %v437 = vunpack.c.l.bf16 %v434
        %v438 = vunpack.c.h.bf16 %v434
        %v439 = vpack.c.bf16 %v305, %v305
        %s440 = scalar_lea.vmem [#allocation2], 256
        %v441 = vld [vmem:[%s440] sm:$0xff]
        %v442 = vld [vmem:[%s440 + $0x8] sm:$0xff]
        %v443 = vld [vmem:[%s440 + $0x10] sm:$0xff]
        %v444 = vld [vmem:[%s440 + $0x18] sm:$0xff]
        %v445 = vld [vmem:[%s440 + $0x20] sm:$0xff]
        %v446 = vld [vmem:[%s440 + $0x28] sm:$0xff]
        %v447 = vld [vmem:[%s440 + $0x30] sm:$0xff]
        %v448 = vld [vmem:[%s440 + $0x38] sm:$0xff]
        %v449 = vld [vmem:[%s440 + $0x40] sm:$0xff]
        %v450 = vld [vmem:[%s440 + $0x48] sm:$0xff]
        %v451 = vld [vmem:[%s440 + $0x50] sm:$0xff]
        %v452 = vld [vmem:[%s440 + $0x58] sm:$0xff]
        %v453 = vld [vmem:[%s440 + $0x60] sm:$0xff]
        %v454 = vld [vmem:[%s440 + $0x68] sm:$0xff]
        %v455 = vld [vmem:[%s440 + $0x70] sm:$0xff]
        %v456 = vld [vmem:[%s440 + $0x78] sm:$0xff]
        %v457 = vld [vmem:[%s440 + $0x80] sm:$0xff]
        %v458 = vld [vmem:[%s440 + $0x88] sm:$0xff]
        %v459 = vld [vmem:[%s440 + $0x90] sm:$0xff]
        %v460 = vld [vmem:[%s440 + $0x98] sm:$0xff]
        %v461 = vld [vmem:[%s440 + $0xa0] sm:$0xff]
        %v462 = vld [vmem:[%s440 + $0xa8] sm:$0xff]
        %v463 = vld [vmem:[%s440 + $0xb0] sm:$0xff]
        %v464 = vld [vmem:[%s440 + $0xb8] sm:$0xff]
        %v465 = vld [vmem:[%s440 + $0xc0] sm:$0xff]
        %v466 = vld [vmem:[%s440 + $0xc8] sm:$0xff]
        %v467 = vld [vmem:[%s440 + $0xd0] sm:$0xff]
        %v468 = vld [vmem:[%s440 + $0xd8] sm:$0xff]
        %v469 = vld [vmem:[%s440 + $0xe0] sm:$0xff]
        %v470 = vld [vmem:[%s440 + $0xe8] sm:$0xff]
        %v471 = vld [vmem:[%s440 + $0xf0] sm:$0xff]
        %v472 = vld [vmem:[%s440 + $0xf8] sm:$0xff]
        %473 = vmatprep.subr.bf16.mxu0 %v442
        %474 = vmatpush1.bf16.msra.mxu0 %v441
        %475 = vmatprep.subr.bf16.mxu0 %v446
        %476 = vmatpush1.bf16.msra.mxu0 %v445
        %477 = vmatprep.subr.bf16.mxu0 %v450
        %478 = vmatpush1.bf16.msra.mxu0 %v449
        %479 = vmatprep.subr.bf16.mxu0 %v454
        %480 = vmatpush1.bf16.msra.mxu0 %v453
        %481 = vmatprep.subr.bf16.mxu0 %v458
        %482 = vmatpush1.bf16.msra.mxu0 %v457
        %483 = vmatprep.subr.bf16.mxu0 %v462
        %484 = vmatpush1.bf16.msra.mxu0 %v461
        %485 = vmatprep.subr.bf16.mxu0 %v466
        %486 = vmatpush1.bf16.msra.mxu0 %v465
        %487 = vmatprep.subr.bf16.mxu0 %v470
        %488 = vmatpush1.bf16.msra.mxu0 %v469
        %489 = vmatprep.subr.bf16.mxu0 0
        %490 = vmatpush1.bf16.msra.mxu0 0
        %491 = vmatprep.subr.bf16.mxu0 0
        %492 = vmatpush1.bf16.msra.mxu0 0
        %493 = vmatprep.subr.bf16.mxu0 0
        %494 = vmatpush1.bf16.msra.mxu0 0
        %495 = vmatprep.subr.bf16.mxu0 0
        %496 = vmatpush1.bf16.msra.mxu0 0
        %497 = vmatprep.subr.bf16.mxu0 0
        %498 = vmatpush1.bf16.msra.mxu0 0
        %499 = vmatprep.subr.bf16.mxu0 0
        %500 = vmatpush1.bf16.msra.mxu0 0
        %501 = vmatprep.subr.bf16.mxu0 0
        %502 = vmatpush1.bf16.msra.mxu0 0
        %503 = vmatprep.subr.bf16.mxu0 0
        %504 = vmatpush1.bf16.msra.mxu0 0
        %505 = vmatprep.mubr.bf16.mxu0 0
        %506 = vmatmul.mubr.bf16.gmra.mrb[0].mxu0 %v439
        %v507 = vpop.f32.mrb[0].mxu0
        %v508 = vadd.f32 0.0, %v507
        %v509 = vpop.f32.mrb[0].mxu0
        %v510 = vadd.f32 0.0, %v509
        %v511 = vpop.f32.mrb[0].mxu0
        %v512 = vpop.f32.mrb[0].mxu0
        %513 = vdwg.mxu0
        %514 = vmatprep.subr.bf16.mxu0 %v444
        %515 = vmatpush1.bf16.msra.mxu0 %v443
        %516 = vmatprep.subr.bf16.mxu0 %v448
        %517 = vmatpush1.bf16.msra.mxu0 %v447
        %518 = vmatprep.subr.bf16.mxu0 %v452
        %519 = vmatpush1.bf16.msra.mxu0 %v451
        %520 = vmatprep.subr.bf16.mxu0 %v456
        %521 = vmatpush1.bf16.msra.mxu0 %v455
        %522 = vmatprep.subr.bf16.mxu0 %v460
        %523 = vmatpush1.bf16.msra.mxu0 %v459
        %524 = vmatprep.subr.bf16.mxu0 %v464
        %525 = vmatpush1.bf16.msra.mxu0 %v463
        %526 = vmatprep.subr.bf16.mxu0 %v468
        %527 = vmatpush1.bf16.msra.mxu0 %v467
        %528 = vmatprep.subr.bf16.mxu0 %v472
        %529 = vmatpush1.bf16.msra.mxu0 %v471
        %530 = vmatprep.subr.bf16.mxu0 0
        %531 = vmatpush1.bf16.msra.mxu0 0
        %532 = vmatprep.subr.bf16.mxu0 0
        %533 = vmatpush1.bf16.msra.mxu0 0
        %534 = vmatprep.subr.bf16.mxu0 0
        %535 = vmatpush1.bf16.msra.mxu0 0
        %536 = vmatprep.subr.bf16.mxu0 0
        %537 = vmatpush1.bf16.msra.mxu0 0
        %538 = vmatprep.subr.bf16.mxu0 0
        %539 = vmatpush1.bf16.msra.mxu0 0
        %540 = vmatprep.subr.bf16.mxu0 0
        %541 = vmatpush1.bf16.msra.mxu0 0
        %542 = vmatprep.subr.bf16.mxu0 0
        %543 = vmatpush1.bf16.msra.mxu0 0
        %544 = vmatprep.subr.bf16.mxu0 0
        %545 = vmatpush1.bf16.msra.mxu0 0
        %546 = vmatprep.mubr.bf16.mxu0 0
        %547 = vmatmul.mubr.bf16.gmra.mrb[0].mxu0 %v439
        %v548 = vpop.f32.mrb[0].mxu0
        %v549 = vadd.f32 0.0, %v548
        %v550 = vpop.f32.mrb[0].mxu0
        %v551 = vadd.f32 0.0, %v550
        %v552 = vpop.f32.mrb[0].mxu0
        %v553 = vpop.f32.mrb[0].mxu0
        %554 = vdwg.mxu0
        %v555 = vadd.f32 %v435, %v508
        %v556 = vadd.f32 %v436, %v510
        %v557 = vadd.f32 %v437, %v549
        %v558 = vadd.f32 %v438, %v551
        %v559 = vmul.f32 %v428, 0.5
        %v560 = vtanh.pop %v559
        %v561 = vmul.f32 %v560, 0.5
        %v562 = vadd.f32 %v561, 0.5
        %v563 = vmul.f32 %v429, 0.5
        %v564 = vtanh.pop %v563
        %v565 = vmul.f32 %v564, 0.5
        %v566 = vadd.f32 %v565, 0.5
        %v567 = vtanh.pop %v430
        %v568 = vmul.f32 %v431, 0.5
        %v569 = vtanh.pop %v568
        %v570 = vmul.f32 %v569, 0.5
        %v571 = vadd.f32 %v570, 0.5
        %v572 = vmul.f32 %v566, %v304
        %v573 = vmul.f32 %v562, %v567
        %v574 = vadd.f32 %v572, %v573
        %v575 = vtanh.pop %v574
        %v576 = vmul.f32 %v571, %v575
        %v577 = vmul.f32 %v555, 0.5
        %v578 = vtanh.pop %v577
        %v579 = vmul.f32 %v578, 0.5
        %v580 = vadd.f32 %v579, 0.5
        %v581 = vmul.f32 %v556, 0.5
        %v582 = vtanh.pop %v581
        %v583 = vmul.f32 %v582, 0.5
        %v584 = vadd.f32 %v583, 0.5
        %v585 = vtanh.pop %v557
        %v586 = vmul.f32 %v558, 0.5
        %v587 = vtanh.pop %v586
        %v588 = vmul.f32 %v587, 0.5
        %v589 = vadd.f32 %v588, 0.5
        %v590 = vmul.f32 %v584, %v306
        %v591 = vmul.f32 %v580, %v585
        %v592 = vadd.f32 %v590, %v591
        %v593 = vtanh.pop %v592
        %v594 = vmul.f32 %v589, %v593
        %595 = vst [vmem:[%s240] sm:$0xff] %v576
        %s596 = scalar_lea.vmem %s247, 120 [#allocation14]
        %597 = vst [vmem:[%s596] sm:$0xff] %v594
        %s598 = scalar_lea.vmem %s206, 16 [#allocation8]
        %v599 = vld [vmem:[%s598] sm:$0xff]
        %v600 = vld [vmem:[%s598 + $0x8] sm:$0xff]
        %v601 = vunpack.c.l.bf16 %v599
        %v602 = vunpack.c.h.bf16 %v599
        %v603 = vunpack.c.l.bf16 %v600
        %v604 = vunpack.c.h.bf16 %v600
        %v605 = vpack.c.bf16 %v576, %v576
        %v606 = vld [vmem:[#allocation2] sm:$0xff]
        %v607 = vld [vmem:[#allocation2 + $0x8] sm:$0xff]
        %v608 = vld [vmem:[#allocation2 + $0x10] sm:$0xff]
        %v609 = vld [vmem:[#allocation2 + $0x18] sm:$0xff]
        %v610 = vld [vmem:[#allocation2 + $0x20] sm:$0xff]
        %v611 = vld [vmem:[#allocation2 + $0x28] sm:$0xff]
        %v612 = vld [vmem:[#allocation2 + $0x30] sm:$0xff]
        %v613 = vld [vmem:[#allocation2 + $0x38] sm:$0xff]
        %v614 = vld [vmem:[#allocation2 + $0x40] sm:$0xff]
        %v615 = vld [vmem:[#allocation2 + $0x48] sm:$0xff]
        %v616 = vld [vmem:[#allocation2 + $0x50] sm:$0xff]
        %v617 = vld [vmem:[#allocation2 + $0x58] sm:$0xff]
        %v618 = vld [vmem:[#allocation2 + $0x60] sm:$0xff]
        %v619 = vld [vmem:[#allocation2 + $0x68] sm:$0xff]
        %v620 = vld [vmem:[#allocation2 + $0x70] sm:$0xff]
        %v621 = vld [vmem:[#allocation2 + $0x78] sm:$0xff]
        %v622 = vld [vmem:[#allocation2 + $0x80] sm:$0xff]
        %v623 = vld [vmem:[#allocation2 + $0x88] sm:$0xff]
        %v624 = vld [vmem:[#allocation2 + $0x90] sm:$0xff]
        %v625 = vld [vmem:[#allocation2 + $0x98] sm:$0xff]
        %v626 = vld [vmem:[#allocation2 + $0xa0] sm:$0xff]
        %v627 = vld [vmem:[#allocation2 + $0xa8] sm:$0xff]
        %v628 = vld [vmem:[#allocation2 + $0xb0] sm:$0xff]
        %v629 = vld [vmem:[#allocation2 + $0xb8] sm:$0xff]
        %v630 = vld [vmem:[#allocation2 + $0xc0] sm:$0xff]
        %v631 = vld [vmem:[#allocation2 + $0xc8] sm:$0xff]
        %v632 = vld [vmem:[#allocation2 + $0xd0] sm:$0xff]
        %v633 = vld [vmem:[#allocation2 + $0xd8] sm:$0xff]
        %v634 = vld [vmem:[#allocation2 + $0xe0] sm:$0xff]
        %v635 = vld [vmem:[#allocation2 + $0xe8] sm:$0xff]
        %v636 = vld [vmem:[#allocation2 + $0xf0] sm:$0xff]
        %v637 = vld [vmem:[#allocation2 + $0xf8] sm:$0xff]
        %638 = vmatprep.subr.bf16.mxu0 %v607
        %639 = vmatpush1.bf16.msra.mxu0 %v606
        %640 = vmatprep.subr.bf16.mxu0 %v611
        %641 = vmatpush1.bf16.msra.mxu0 %v610
        %642 = vmatprep.subr.bf16.mxu0 %v615
        %643 = vmatpush1.bf16.msra.mxu0 %v614
        %644 = vmatprep.subr.bf16.mxu0 %v619
        %645 = vmatpush1.bf16.msra.mxu0 %v618
        %646 = vmatprep.subr.bf16.mxu0 %v623
        %647 = vmatpush1.bf16.msra.mxu0 %v622
        %648 = vmatprep.subr.bf16.mxu0 %v627
        %649 = vmatpush1.bf16.msra.mxu0 %v626
        %650 = vmatprep.subr.bf16.mxu0 %v631
        %651 = vmatpush1.bf16.msra.mxu0 %v630
        %652 = vmatprep.subr.bf16.mxu0 %v635
        %653 = vmatpush1.bf16.msra.mxu0 %v634
        %654 = vmatprep.subr.bf16.mxu0 0
        %655 = vmatpush1.bf16.msra.mxu0 0
        %656 = vmatprep.subr.bf16.mxu0 0
        %657 = vmatpush1.bf16.msra.mxu0 0
        %658 = vmatprep.subr.bf16.mxu0 0
        %659 = vmatpush1.bf16.msra.mxu0 0
        %660 = vmatprep.subr.bf16.mxu0 0
        %661 = vmatpush1.bf16.msra.mxu0 0
        %662 = vmatprep.subr.bf16.mxu0 0
        %663 = vmatpush1.bf16.msra.mxu0 0
        %664 = vmatprep.subr.bf16.mxu0 0
        %665 = vmatpush1.bf16.msra.mxu0 0
        %666 = vmatprep.subr.bf16.mxu0 0
        %667 = vmatpush1.bf16.msra.mxu0 0
        %668 = vmatprep.subr.bf16.mxu0 0
        %669 = vmatpush1.bf16.msra.mxu0 0
        %670 = vmatprep.mubr.bf16.mxu0 0
        %671 = vmatmul.mubr.bf16.gmra.mrb[0].mxu0 %v605
        %v672 = vpop.f32.mrb[0].mxu0
        %v673 = vadd.f32 0.0, %v672
        %v674 = vpop.f32.mrb[0].mxu0
        %v675 = vadd.f32 0.0, %v674
        %v676 = vpop.f32.mrb[0].mxu0
        %v677 = vpop.f32.mrb[0].mxu0
        %678 = vdwg.mxu0
        %679 = vmatprep.subr.bf16.mxu0 %v609
        %680 = vmatpush1.bf16.msra.mxu0 %v608
        %681 = vmatprep.subr.bf16.mxu0 %v613
        %682 = vmatpush1.bf16.msra.mxu0 %v612
        %683 = vmatprep.subr.bf16.mxu0 %v617
        %684 = vmatpush1.bf16.msra.mxu0 %v616
        %685 = vmatprep.subr.bf16.mxu0 %v621
        %686 = vmatpush1.bf16.msra.mxu0 %v620
        %687 = vmatprep.subr.bf16.mxu0 %v625
        %688 = vmatpush1.bf16.msra.mxu0 %v624
        %689 = vmatprep.subr.bf16.mxu0 %v629
        %690 = vmatpush1.bf16.msra.mxu0 %v628
        %691 = vmatprep.subr.bf16.mxu0 %v633
        %692 = vmatpush1.bf16.msra.mxu0 %v632
        %693 = vmatprep.subr.bf16.mxu0 %v637
        %694 = vmatpush1.bf16.msra.mxu0 %v636
        %695 = vmatprep.subr.bf16.mxu0 0
        %696 = vmatpush1.bf16.msra.mxu0 0
        %697 = vmatprep.subr.bf16.mxu0 0
        %698 = vmatpush1.bf16.msra.mxu0 0
        %699 = vmatprep.subr.bf16.mxu0 0
        %700 = vmatpush1.bf16.msra.mxu0 0
        %701 = vmatprep.subr.bf16.mxu0 0
        %702 = vmatpush1.bf16.msra.mxu0 0
        %703 = vmatprep.subr.bf16.mxu0 0
        %704 = vmatpush1.bf16.msra.mxu0 0
        %705 = vmatprep.subr.bf16.mxu0 0
        %706 = vmatpush1.bf16.msra.mxu0 0
        %707 = vmatprep.subr.bf16.mxu0 0
        %708 = vmatpush1.bf16.msra.mxu0 0
        %709 = vmatprep.subr.bf16.mxu0 0
        %710 = vmatpush1.bf16.msra.mxu0 0
        %711 = vmatprep.mubr.bf16.mxu0 0
        %712 = vmatmul.mubr.bf16.gmra.mrb[0].mxu0 %v605
        %v713 = vpop.f32.mrb[0].mxu0
        %v714 = vadd.f32 0.0, %v713
        %v715 = vpop.f32.mrb[0].mxu0
        %v716 = vadd.f32 0.0, %v715
        %v717 = vpop.f32.mrb[0].mxu0
        %v718 = vpop.f32.mrb[0].mxu0
        %719 = vdwg.mxu0
        %v720 = vadd.f32 %v601, %v673
        %v721 = vadd.f32 %v602, %v675
        %v722 = vadd.f32 %v603, %v714
        %v723 = vadd.f32 %v604, %v716
        %s724 = scalar_lea.vmem %s215, 224 [#allocation11]
        %v725 = vld [vmem:[%s724] sm:$0xff]
        %v726 = vld [vmem:[%s724 + $0x8] sm:$0xff]
        %v727 = vunpack.c.l.bf16 %v725
        %v728 = vunpack.c.h.bf16 %v725
        %v729 = vunpack.c.l.bf16 %v726
        %v730 = vunpack.c.h.bf16 %v726
        %v731 = vpack.c.bf16 %v594, %v594
        %v732 = vld [vmem:[%s440] sm:$0xff]
        %v733 = vld [vmem:[%s440 + $0x8] sm:$0xff]
        %v734 = vld [vmem:[%s440 + $0x10] sm:$0xff]
        %v735 = vld [vmem:[%s440 + $0x18] sm:$0xff]
        %v736 = vld [vmem:[%s440 + $0x20] sm:$0xff]
        %v737 = vld [vmem:[%s440 + $0x28] sm:$0xff]
        %v738 = vld [vmem:[%s440 + $0x30] sm:$0xff]
        %v739 = vld [vmem:[%s440 + $0x38] sm:$0xff]
        %v740 = vld [vmem:[%s440 + $0x40] sm:$0xff]
        %v741 = vld [vmem:[%s440 + $0x48] sm:$0xff]
        %v742 = vld [vmem:[%s440 + $0x50] sm:$0xff]
        %v743 = vld [vmem:[%s440 + $0x58] sm:$0xff]
        %v744 = vld [vmem:[%s440 + $0x60] sm:$0xff]
        %v745 = vld [vmem:[%s440 + $0x68] sm:$0xff]
        %v746 = vld [vmem:[%s440 + $0x70] sm:$0xff]
        %v747 = vld [vmem:[%s440 + $0x78] sm:$0xff]
        %v748 = vld [vmem:[%s440 + $0x80] sm:$0xff]
        %v749 = vld [vmem:[%s440 + $0x88] sm:$0xff]
        %v750 = vld [vmem:[%s440 + $0x90] sm:$0xff]
        %v751 = vld [vmem:[%s440 + $0x98] sm:$0xff]
        %v752 = vld [vmem:[%s440 + $0xa0] sm:$0xff]
        %v753 = vld [vmem:[%s440 + $0xa8] sm:$0xff]
        %v754 = vld [vmem:[%s440 + $0xb0] sm:$0xff]
        %v755 = vld [vmem:[%s440 + $0xb8] sm:$0xff]
        %v756 = vld [vmem:[%s440 + $0xc0] sm:$0xff]
        %v757 = vld [vmem:[%s440 + $0xc8] sm:$0xff]
        %v758 = vld [vmem:[%s440 + $0xd0] sm:$0xff]
        %v759 = vld [vmem:[%s440 + $0xd8] sm:$0xff]
        %v760 = vld [vmem:[%s440 + $0xe0] sm:$0xff]
        %v761 = vld [vmem:[%s440 + $0xe8] sm:$0xff]
        %v762 = vld [vmem:[%s440 + $0xf0] sm:$0xff]
        %v763 = vld [vmem:[%s440 + $0xf8] sm:$0xff]
        %764 = vmatprep.subr.bf16.mxu0 %v733
        %765 = vmatpush1.bf16.msra.mxu0 %v732
        %766 = vmatprep.subr.bf16.mxu0 %v737
        %767 = vmatpush1.bf16.msra.mxu0 %v736
        %768 = vmatprep.subr.bf16.mxu0 %v741
        %769 = vmatpush1.bf16.msra.mxu0 %v740
        %770 = vmatprep.subr.bf16.mxu0 %v745
        %771 = vmatpush1.bf16.msra.mxu0 %v744
        %772 = vmatprep.subr.bf16.mxu0 %v749
        %773 = vmatpush1.bf16.msra.mxu0 %v748
        %774 = vmatprep.subr.bf16.mxu0 %v753
        %775 = vmatpush1.bf16.msra.mxu0 %v752
        %776 = vmatprep.subr.bf16.mxu0 %v757
        %777 = vmatpush1.bf16.msra.mxu0 %v756
        %778 = vmatprep.subr.bf16.mxu0 %v761
        %779 = vmatpush1.bf16.msra.mxu0 %v760
        %780 = vmatprep.subr.bf16.mxu0 0
        %781 = vmatpush1.bf16.msra.mxu0 0
        %782 = vmatprep.subr.bf16.mxu0 0
        %783 = vmatpush1.bf16.msra.mxu0 0
        %784 = vmatprep.subr.bf16.mxu0 0
        %785 = vmatpush1.bf16.msra.mxu0 0
        %786 = vmatprep.subr.bf16.mxu0 0
        %787 = vmatpush1.bf16.msra.mxu0 0
        %788 = vmatprep.subr.bf16.mxu0 0
        %789 = vmatpush1.bf16.msra.mxu0 0
        %790 = vmatprep.subr.bf16.mxu0 0
        %791 = vmatpush1.bf16.msra.mxu0 0
        %792 = vmatprep.subr.bf16.mxu0 0
        %793 = vmatpush1.bf16.msra.mxu0 0
        %794 = vmatprep.subr.bf16.mxu0 0
        %795 = vmatpush1.bf16.msra.mxu0 0
        %796 = vmatprep.mubr.bf16.mxu0 0
        %797 = vmatmul.mubr.bf16.gmra.mrb[0].mxu0 %v731
        %v798 = vpop.f32.mrb[0].mxu0
        %v799 = vadd.f32 0.0, %v798
        %v800 = vpop.f32.mrb[0].mxu0
        %v801 = vadd.f32 0.0, %v800
        %v802 = vpop.f32.mrb[0].mxu0
        %v803 = vpop.f32.mrb[0].mxu0
        %804 = vdwg.mxu0
        %805 = vmatprep.subr.bf16.mxu0 %v735
        %806 = vmatpush1.bf16.msra.mxu0 %v734
        %807 = vmatprep.subr.bf16.mxu0 %v739
        %808 = vmatpush1.bf16.msra.mxu0 %v738
        %809 = vmatprep.subr.bf16.mxu0 %v743
        %810 = vmatpush1.bf16.msra.mxu0 %v742
        %811 = vmatprep.subr.bf16.mxu0 %v747
        %812 = vmatpush1.bf16.msra.mxu0 %v746
        %813 = vmatprep.subr.bf16.mxu0 %v751
        %814 = vmatpush1.bf16.msra.mxu0 %v750
        %815 = vmatprep.subr.bf16.mxu0 %v755
        %816 = vmatpush1.bf16.msra.mxu0 %v754
        %817 = vmatprep.subr.bf16.mxu0 %v759
        %818 = vmatpush1.bf16.msra.mxu0 %v758
        %819 = vmatprep.subr.bf16.mxu0 %v763
        %820 = vmatpush1.bf16.msra.mxu0 %v762
        %821 = vmatprep.subr.bf16.mxu0 0
        %822 = vmatpush1.bf16.msra.mxu0 0
        %823 = vmatprep.subr.bf16.mxu0 0
        %824 = vmatpush1.bf16.msra.mxu0 0
        %825 = vmatprep.subr.bf16.mxu0 0
        %826 = vmatpush1.bf16.msra.mxu0 0
        %827 = vmatprep.subr.bf16.mxu0 0
        %828 = vmatpush1.bf16.msra.mxu0 0
        %829 = vmatprep.subr.bf16.mxu0 0
        %830 = vmatpush1.bf16.msra.mxu0 0
        %831 = vmatprep.subr.bf16.mxu0 0
        %832 = vmatpush1.bf16.msra.mxu0 0
        %833 = vmatprep.subr.bf16.mxu0 0
        %834 = vmatpush1.bf16.msra.mxu0 0
        %835 = vmatprep.subr.bf16.mxu0 0
        %836 = vmatpush1.bf16.msra.mxu0 0
        %837 = vmatprep.mubr.bf16.mxu0 0
        %838 = vmatmul.mubr.bf16.gmra.mrb[0].mxu0 %v731
        %v839 = vpop.f32.mrb[0].mxu0
        %v840 = vadd.f32 0.0, %v839
        %v841 = vpop.f32.mrb[0].mxu0
        %v842 = vadd.f32 0.0, %v841
        %v843 = vpop.f32.mrb[0].mxu0
        %v844 = vpop.f32.mrb[0].mxu0
        %845 = vdwg.mxu0
        %v846 = vadd.f32 %v727, %v799
        %v847 = vadd.f32 %v728, %v801
        %v848 = vadd.f32 %v729, %v840
        %v849 = vadd.f32 %v730, %v842
        %v850 = vmul.f32 %v720, 0.5
        %v851 = vtanh.pop %v850
        %v852 = vmul.f32 %v851, 0.5
        %v853 = vadd.f32 %v852, 0.5
        %v854 = vmul.f32 %v721, 0.5
        %v855 = vtanh.pop %v854
        %v856 = vmul.f32 %v855, 0.5
        %v857 = vadd.f32 %v856, 0.5
        %v858 = vtanh.pop %v722
        %v859 = vmul.f32 %v723, 0.5
        %v860 = vtanh.pop %v859
        %v861 = vmul.f32 %v860, 0.5
        %v862 = vadd.f32 %v861, 0.5
        %v863 = vmul.f32 %v857, %v574
        %v864 = vmul.f32 %v853, %v858
        %v865 = vadd.f32 %v863, %v864
        %v866 = vtanh.pop %v865
        %v867 = vmul.f32 %v862, %v866
        %v868 = vmul.f32 %v846, 0.5
        %v869 = vtanh.pop %v868
        %v870 = vmul.f32 %v869, 0.5
        %v871 = vadd.f32 %v870, 0.5
        %v872 = vmul.f32 %v847, 0.5
        %v873 = vtanh.pop %v872
        %v874 = vmul.f32 %v873, 0.5
        %v875 = vadd.f32 %v874, 0.5
        %v876 = vtanh.pop %v848
        %v877 = vmul.f32 %v849, 0.5
        %v878 = vtanh.pop %v877
        %v879 = vmul.f32 %v878, 0.5
        %v880 = vadd.f32 %v879, 0.5
        %v881 = vmul.f32 %v875, %v592
        %v882 = vmul.f32 %v871, %v876
        %v883 = vadd.f32 %v881, %v882
        %v884 = vtanh.pop %v883
        %v885 = vmul.f32 %v880, %v884
        %s886 = scalar_lea.vmem %s240, 8 [#allocation13]
        %887 = vst [vmem:[%s886] sm:$0xff] %v867
        %s888 = scalar_lea.vmem %s247, 112 [#allocation14]
        %889 = vst [vmem:[%s888] sm:$0xff] %v885
        %s890 = scalar_lea.vmem %s206, 32 [#allocation8]
        %v891 = vld [vmem:[%s890] sm:$0xff]
        %v892 = vld [vmem:[%s890 + $0x8] sm:$0xff]
        %v893 = vunpack.c.l.bf16 %v891
        %v894 = vunpack.c.h.bf16 %v891
        %v895 = vunpack.c.l.bf16 %v892
        %v896 = vunpack.c.h.bf16 %v892
        %v897 = vpack.c.bf16 %v867, %v867
        %v898 = vld [vmem:[#allocation2] sm:$0xff]
        %v899 = vld [vmem:[#allocation2 + $0x8] sm:$0xff]
        %v900 = vld [vmem:[#allocation2 + $0x10] sm:$0xff]
        %v901 = vld [vmem:[#allocation2 + $0x18] sm:$0xff]
        %v902 = vld [vmem:[#allocation2 + $0x20] sm:$0xff]
        %v903 = vld [vmem:[#allocation2 + $0x28] sm:$0xff]
        %v904 = vld [vmem:[#allocation2 + $0x30] sm:$0xff]
        %v905 = vld [vmem:[#allocation2 + $0x38] sm:$0xff]
        %v906 = vld [vmem:[#allocation2 + $0x40] sm:$0xff]
        %v907 = vld [vmem:[#allocation2 + $0x48] sm:$0xff]
        %v908 = vld [vmem:[#allocation2 + $0x50] sm:$0xff]
        %v909 = vld [vmem:[#allocation2 + $0x58] sm:$0xff]
        %v910 = vld [vmem:[#allocation2 + $0x60] sm:$0xff]
        %v911 = vld [vmem:[#allocation2 + $0x68] sm:$0xff]
        %v912 = vld [vmem:[#allocation2 + $0x70] sm:$0xff]
        %v913 = vld [vmem:[#allocation2 + $0x78] sm:$0xff]
        %v914 = vld [vmem:[#allocation2 + $0x80] sm:$0xff]
        %v915 = vld [vmem:[#allocation2 + $0x88] sm:$0xff]
        %v916 = vld [vmem:[#allocation2 + $0x90] sm:$0xff]
        %v917 = vld [vmem:[#allocation2 + $0x98] sm:$0xff]
        %v918 = vld [vmem:[#allocation2 + $0xa0] sm:$0xff]
        %v919 = vld [vmem:[#allocation2 + $0xa8] sm:$0xff]
        %v920 = vld [vmem:[#allocation2 + $0xb0] sm:$0xff]
        %v921 = vld [vmem:[#allocation2 + $0xb8] sm:$0xff]
        %v922 = vld [vmem:[#allocation2 + $0xc0] sm:$0xff]
        %v923 = vld [vmem:[#allocation2 + $0xc8] sm:$0xff]
        %v924 = vld [vmem:[#allocation2 + $0xd0] sm:$0xff]
        %v925 = vld [vmem:[#allocation2 + $0xd8] sm:$0xff]
        %v926 = vld [vmem:[#allocation2 + $0xe0] sm:$0xff]
        %v927 = vld [vmem:[#allocation2 + $0xe8] sm:$0xff]
        %v928 = vld [vmem:[#allocation2 + $0xf0] sm:$0xff]
        %v929 = vld [vmem:[#allocation2 + $0xf8] sm:$0xff]
        %930 = vmatprep.subr.bf16.mxu0 %v899
        %931 = vmatpush1.bf16.msra.mxu0 %v898
        %932 = vmatprep.subr.bf16.mxu0 %v903
        %933 = vmatpush1.bf16.msra.mxu0 %v902
        %934 = vmatprep.subr.bf16.mxu0 %v907
        %935 = vmatpush1.bf16.msra.mxu0 %v906
        %936 = vmatprep.subr.bf16.mxu0 %v911
        %937 = vmatpush1.bf16.msra.mxu0 %v910
        %938 = vmatprep.subr.bf16.mxu0 %v915
        %939 = vmatpush1.bf16.msra.mxu0 %v914
        %940 = vmatprep.subr.bf16.mxu0 %v919
        %941 = vmatpush1.bf16.msra.mxu0 %v918
        %942 = vmatprep.subr.bf16.mxu0 %v923
        %943 = vmatpush1.bf16.msra.mxu0 %v922
        %944 = vmatprep.subr.bf16.mxu0 %v927
        %945 = vmatpush1.bf16.msra.mxu0 %v926
        %946 = vmatprep.subr.bf16.mxu0 0
        %947 = vmatpush1.bf16.msra.mxu0 0
        %948 = vmatprep.subr.bf16.mxu0 0
        %949 = vmatpush1.bf16.msra.mxu0 0
        %950 = vmatprep.subr.bf16.mxu0 0
        %951 = vmatpush1.bf16.msra.mxu0 0
        %952 = vmatprep.subr.bf16.mxu0 0
        %953 = vmatpush1.bf16.msra.mxu0 0
        %954 = vmatprep.subr.bf16.mxu0 0
        %955 = vmatpush1.bf16.msra.mxu0 0
        %956 = vmatprep.subr.bf16.mxu0 0
        %957 = vmatpush1.bf16.msra.mxu0 0
        %958 = vmatprep.subr.bf16.mxu0 0
        %959 = vmatpush1.bf16.msra.mxu0 0
        %960 = vmatprep.subr.bf16.mxu0 0
        %961 = vmatpush1.bf16.msra.mxu0 0
        %962 = vmatprep.mubr.bf16.mxu0 0
        %963 = vmatmul.mubr.bf16.gmra.mrb[0].mxu0 %v897
        %v964 = vpop.f32.mrb[0].mxu0
        %v965 = vadd.f32 0.0, %v964
        %v966 = vpop.f32.mrb[0].mxu0
        %v967 = vadd.f32 0.0, %v966
        %v968 = vpop.f32.mrb[0].mxu0
        %v969 = vpop.f32.mrb[0].mxu0
        %970 = vdwg.mxu0
        %971 = vmatprep.subr.bf16.mxu0 %v901
        %972 = vmatpush1.bf16.msra.mxu0 %v900
        %973 = vmatprep.subr.bf16.mxu0 %v905
        %974 = vmatpush1.bf16.msra.mxu0 %v904
        %975 = vmatprep.subr.bf16.mxu0 %v909
        %976 = vmatpush1.bf16.msra.mxu0 %v908
        %977 = vmatprep.subr.bf16.mxu0 %v913
        %978 = vmatpush1.bf16.msra.mxu0 %v912
        %979 = vmatprep.subr.bf16.mxu0 %v917
        %980 = vmatpush1.bf16.msra.mxu0 %v916
        %981 = vmatprep.subr.bf16.mxu0 %v921
        %982 = vmatpush1.bf16.msra.mxu0 %v920
        %983 = vmatprep.subr.bf16.mxu0 %v925
        %984 = vmatpush1.bf16.msra.mxu0 %v924
        %985 = vmatprep.subr.bf16.mxu0 %v929
        %986 = vmatpush1.bf16.msra.mxu0 %v928
        %987 = vmatprep.subr.bf16.mxu0 0
        %988 = vmatpush1.bf16.msra.mxu0 0
        %989 = vmatprep.subr.bf16.mxu0 0
        %990 = vmatpush1.bf16.msra.mxu0 0
        %991 = vmatprep.subr.bf16.mxu0 0
        %992 = vmatpush1.bf16.msra.mxu0 0
        %993 = vmatprep.subr.bf16.mxu0 0
        %994 = vmatpush1.bf16.msra.mxu0 0
        %995 = vmatprep.subr.bf16.mxu0 0
        %996 = vmatpush1.bf16.msra.mxu0 0
        %997 = vmatprep.subr.bf16.mxu0 0
        %998 = vmatpush1.bf16.msra.mxu0 0
        %999 = vmatprep.subr.bf16.mxu0 0
        %1000 = vmatpush1.bf16.msra.mxu0 0
        %1001 = vmatprep.subr.bf16.mxu0 0
        %1002 = vmatpush1.bf16.msra.mxu0 0
        %1003 = vmatprep.mubr.bf16.mxu0 0
        %1004 = vmatmul.mubr.bf16.gmra.mrb[0].mxu0 %v897
        %v1005 = vpop.f32.mrb[0].mxu0
        %v1006 = vadd.f32 0.0, %v1005
        %v1007 = vpop.f32.mrb[0].mxu0
        %v1008 = vadd.f32 0.0, %v1007
        %v1009 = vpop.f32.mrb[0].mxu0
        %v1010 = vpop.f32.mrb[0].mxu0
        %1011 = vdwg.mxu0
        %v1012 = vadd.f32 %v893, %v965
        %v1013 = vadd.f32 %v894, %v967
        %v1014 = vadd.f32 %v895, %v1006
        %v1015 = vadd.f32 %v896, %v1008
        %s1016 = scalar_lea.vmem %s215, 208 [#allocation11]
        %v1017 = vld [vmem:[%s1016] sm:$0xff]
        %v1018 = vld [vmem:[%s1016 + $0x8] sm:$0xff]
        %v1019 = vunpack.c.l.bf16 %v1017
        %v1020 = vunpack.c.h.bf16 %v1017
        %v1021 = vunpack.c.l.bf16 %v1018
        %v1022 = vunpack.c.h.bf16 %v1018
        %v1023 = vpack.c.bf16 %v885, %v885
        %v1024 = vld [vmem:[%s440] sm:$0xff]
        %v1025 = vld [vmem:[%s440 + $0x8] sm:$0xff]
        %v1026 = vld [vmem:[%s440 + $0x10] sm:$0xff]
        %v1027 = vld [vmem:[%s440 + $0x18] sm:$0xff]
        %v1028 = vld [vmem:[%s440 + $0x20] sm:$0xff]
        %v1029 = vld [vmem:[%s440 + $0x28] sm:$0xff]
        %v1030 = vld [vmem:[%s440 + $0x30] sm:$0xff]
        %v1031 = vld [vmem:[%s440 + $0x38] sm:$0xff]
        %v1032 = vld [vmem:[%s440 + $0x40] sm:$0xff]
        %v1033 = vld [vmem:[%s440 + $0x48] sm:$0xff]
        %v1034 = vld [vmem:[%s440 + $0x50] sm:$0xff]
        %v1035 = vld [vmem:[%s440 + $0x58] sm:$0xff]
        %v1036 = vld [vmem:[%s440 + $0x60] sm:$0xff]
        %v1037 = vld [vmem:[%s440 + $0x68] sm:$0xff]
        %v1038 = vld [vmem:[%s440 + $0x70] sm:$0xff]
        %v1039 = vld [vmem:[%s440 + $0x78] sm:$0xff]
        %v1040 = vld [vmem:[%s440 + $0x80] sm:$0xff]
        %v1041 = vld [vmem:[%s440 + $0x88] sm:$0xff]
        %v1042 = vld [vmem:[%s440 + $0x90] sm:$0xff]
        %v1043 = vld [vmem:[%s440 + $0x98] sm:$0xff]
        %v1044 = vld [vmem:[%s440 + $0xa0] sm:$0xff]
        %v1045 = vld [vmem:[%s440 + $0xa8] sm:$0xff]
        %v1046 = vld [vmem:[%s440 + $0xb0] sm:$0xff]
        %v1047 = vld [vmem:[%s440 + $0xb8] sm:$0xff]
        %v1048 = vld [vmem:[%s440 + $0xc0] sm:$0xff]
        %v1049 = vld [vmem:[%s440 + $0xc8] sm:$0xff]
        %v1050 = vld [vmem:[%s440 + $0xd0] sm:$0xff]
        %v1051 = vld [vmem:[%s440 + $0xd8] sm:$0xff]
        %v1052 = vld [vmem:[%s440 + $0xe0] sm:$0xff]
        %v1053 = vld [vmem:[%s440 + $0xe8] sm:$0xff]
        %v1054 = vld [vmem:[%s440 + $0xf0] sm:$0xff]
        %v1055 = vld [vmem:[%s440 + $0xf8] sm:$0xff]
        %1056 = vmatprep.subr.bf16.mxu0 %v1025
        %1057 = vmatpush1.bf16.msra.mxu0 %v1024
        %1058 = vmatprep.subr.bf16.mxu0 %v1029
        %1059 = vmatpush1.bf16.msra.mxu0 %v1028
        %1060 = vmatprep.subr.bf16.mxu0 %v1033
        %1061 = vmatpush1.bf16.msra.mxu0 %v1032
        %1062 = vmatprep.subr.bf16.mxu0 %v1037
        %1063 = vmatpush1.bf16.msra.mxu0 %v1036
        %1064 = vmatprep.subr.bf16.mxu0 %v1041
        %1065 = vmatpush1.bf16.msra.mxu0 %v1040
        %1066 = vmatprep.subr.bf16.mxu0 %v1045
        %1067 = vmatpush1.bf16.msra.mxu0 %v1044
        %1068 = vmatprep.subr.bf16.mxu0 %v1049
        %1069 = vmatpush1.bf16.msra.mxu0 %v1048
        %1070 = vmatprep.subr.bf16.mxu0 %v1053
        %1071 = vmatpush1.bf16.msra.mxu0 %v1052
        %1072 = vmatprep.subr.bf16.mxu0 0
        %1073 = vmatpush1.bf16.msra.mxu0 0
        %1074 = vmatprep.subr.bf16.mxu0 0
        %1075 = vmatpush1.bf16.msra.mxu0 0
        %1076 = vmatprep.subr.bf16.mxu0 0
        %1077 = vmatpush1.bf16.msra.mxu0 0
        %1078 = vmatprep.subr.bf16.mxu0 0
        %1079 = vmatpush1.bf16.msra.mxu0 0
        %1080 = vmatprep.subr.bf16.mxu0 0
        %1081 = vmatpush1.bf16.msra.mxu0 0
        %1082 = vmatprep.subr.bf16.mxu0 0
        %1083 = vmatpush1.bf16.msra.mxu0 0
        %1084 = vmatprep.subr.bf16.mxu0 0
        %1085 = vmatpush1.bf16.msra.mxu0 0
        %1086 = vmatprep.subr.bf16.mxu0 0
        %1087 = vmatpush1.bf16.msra.mxu0 0
        %1088 = vmatprep.mubr.bf16.mxu0 0
        %1089 = vmatmul.mubr.bf16.gmra.mrb[0].mxu0 %v1023
        %v1090 = vpop.f32.mrb[0].mxu0
        %v1091 = vadd.f32 0.0, %v1090
        %v1092 = vpop.f32.mrb[0].mxu0
        %v1093 = vadd.f32 0.0, %v1092
        %v1094 = vpop.f32.mrb[0].mxu0
        %v1095 = vpop.f32.mrb[0].mxu0
        %1096 = vdwg.mxu0
        %1097 = vmatprep.subr.bf16.mxu0 %v1027
        %1098 = vmatpush1.bf16.msra.mxu0 %v1026
        %1099 = vmatprep.subr.bf16.mxu0 %v1031
        %1100 = vmatpush1.bf16.msra.mxu0 %v1030
        %1101 = vmatprep.subr.bf16.mxu0 %v1035
        %1102 = vmatpush1.bf16.msra.mxu0 %v1034
        %1103 = vmatprep.subr.bf16.mxu0 %v1039
        %1104 = vmatpush1.bf16.msra.mxu0 %v1038
        %1105 = vmatprep.subr.bf16.mxu0 %v1043
        %1106 = vmatpush1.bf16.msra.mxu0 %v1042
        %1107 = vmatprep.subr.bf16.mxu0 %v1047
        %1108 = vmatpush1.bf16.msra.mxu0 %v1046
        %1109 = vmatprep.subr.bf16.mxu0 %v1051
        %1110 = vmatpush1.bf16.msra.mxu0 %v1050
        %1111 = vmatprep.subr.bf16.mxu0 %v1055
        %1112 = vmatpush1.bf16.msra.mxu0 %v1054
        %1113 = vmatprep.subr.bf16.mxu0 0
        %1114 = vmatpush1.bf16.msra.mxu0 0
        %1115 = vmatprep.subr.bf16.mxu0 0
        %1116 = vmatpush1.bf16.msra.mxu0 0
        %1117 = vmatprep.subr.bf16.mxu0 0
        %1118 = vmatpush1.bf16.msra.mxu0 0
        %1119 = vmatprep.subr.bf16.mxu0 0
        %1120 = vmatpush1.bf16.msra.mxu0 0
        %1121 = vmatprep.subr.bf16.mxu0 0
        %1122 = vmatpush1.bf16.msra.mxu0 0
        %1123 = vmatprep.subr.bf16.mxu0 0
        %1124 = vmatpush1.bf16.msra.mxu0 0
        %1125 = vmatprep.subr.bf16.mxu0 0
        %1126 = vmatpush1.bf16.msra.mxu0 0
        %1127 = vmatprep.subr.bf16.mxu0 0
        %1128 = vmatpush1.bf16.msra.mxu0 0
        %1129 = vmatprep.mubr.bf16.mxu0 0
        %1130 = vmatmul.mubr.bf16.gmra.mrb[0].mxu0 %v1023
        %v1131 = vpop.f32.mrb[0].mxu0
        %v1132 = vadd.f32 0.0, %v1131
        %v1133 = vpop.f32.mrb[0].mxu0
        %v1134 = vadd.f32 0.0, %v1133
        %v1135 = vpop.f32.mrb[0].mxu0
        %v1136 = vpop.f32.mrb[0].mxu0
        %1137 = vdwg.mxu0
        %v1138 = vadd.f32 %v1019, %v1091
        %v1139 = vadd.f32 %v1020, %v1093
        %v1140 = vadd.f32 %v1021, %v1132
        %v1141 = vadd.f32 %v1022, %v1134
        %v1142 = vmul.f32 %v1012, 0.5
        %v1143 = vtanh.pop %v1142
        %v1144 = vmul.f32 %v1143, 0.5
        %v1145 = vadd.f32 %v1144, 0.5
        %v1146 = vmul.f32 %v1013, 0.5
        %v1147 = vtanh.pop %v1146
        %v1148 = vmul.f32 %v1147, 0.5
        %v1149 = vadd.f32 %v1148, 0.5
        %v1150 = vtanh.pop %v1014
        %v1151 = vmul.f32 %v1015, 0.5
        %v1152 = vtanh.pop %v1151
        %v1153 = vmul.f32 %v1152, 0.5
        %v1154 = vadd.f32 %v1153, 0.5
        %v1155 = vmul.f32 %v1149, %v865
        %v1156 = vmul.f32 %v1145, %v1150
        %v1157 = vadd.f32 %v1155, %v1156
        %v1158 = vtanh.pop %v1157
        %v1159 = vmul.f32 %v1154, %v1158
        %v1160 = vmul.f32 %v1138, 0.5
        %v1161 = vtanh.pop %v1160
        %v1162 = vmul.f32 %v1161, 0.5
        %v1163 = vadd.f32 %v1162, 0.5
        %v1164 = vmul.f32 %v1139, 0.5
        %v1165 = vtanh.pop %v1164
        %v1166 = vmul.f32 %v1165, 0.5
        %v1167 = vadd.f32 %v1166, 0.5
        %v1168 = vtanh.pop %v1140
        %v1169 = vmul.f32 %v1141, 0.5
        %v1170 = vtanh.pop %v1169
        %v1171 = vmul.f32 %v1170, 0.5
        %v1172 = vadd.f32 %v1171, 0.5
        %v1173 = vmul.f32 %v1167, %v883
        %v1174 = vmul.f32 %v1163, %v1168
        %v1175 = vadd.f32 %v1173, %v1174
        %v1176 = vtanh.pop %v1175
        %v1177 = vmul.f32 %v1172, %v1176
        %s1178 = scalar_lea.vmem %s240, 16 [#allocation13]
        %1179 = vst [vmem:[%s1178] sm:$0xff] %v1159
        %s1180 = scalar_lea.vmem %s247, 104 [#allocation14]
        %1181 = vst [vmem:[%s1180] sm:$0xff] %v1177
        %s1182 = scalar_lea.vmem %s206, 48 [#allocation8]
        %v1183 = vld [vmem:[%s1182] sm:$0xff]
        %v1184 = vld [vmem:[%s1182 + $0x8] sm:$0xff]
        %v1185 = vunpack.c.l.bf16 %v1183
        %v1186 = vunpack.c.h.bf16 %v1183
        %v1187 = vunpack.c.l.bf16 %v1184
        %v1188 = vunpack.c.h.bf16 %v1184
        %v1189 = vpack.c.bf16 %v1159, %v1159
        %v1190 = vld [vmem:[#allocation2] sm:$0xff]
        %v1191 = vld [vmem:[#allocation2 + $0x8] sm:$0xff]
        %v1192 = vld [vmem:[#allocation2 + $0x10] sm:$0xff]
        %v1193 = vld [vmem:[#allocation2 + $0x18] sm:$0xff]
        %v1194 = vld [vmem:[#allocation2 + $0x20] sm:$0xff]
        %v1195 = vld [vmem:[#allocation2 + $0x28] sm:$0xff]
        %v1196 = vld [vmem:[#allocation2 + $0x30] sm:$0xff]
        %v1197 = vld [vmem:[#allocation2 + $0x38] sm:$0xff]
        %v1198 = vld [vmem:[#allocation2 + $0x40] sm:$0xff]
        %v1199 = vld [vmem:[#allocation2 + $0x48] sm:$0xff]
        %v1200 = vld [vmem:[#allocation2 + $0x50] sm:$0xff]
        %v1201 = vld [vmem:[#allocation2 + $0x58] sm:$0xff]
        %v1202 = vld [vmem:[#allocation2 + $0x60] sm:$0xff]
        %v1203 = vld [vmem:[#allocation2 + $0x68] sm:$0xff]
        %v1204 = vld [vmem:[#allocation2 + $0x70] sm:$0xff]
        %v1205 = vld [vmem:[#allocation2 + $0x78] sm:$0xff]
        %v1206 = vld [vmem:[#allocation2 + $0x80] sm:$0xff]
        %v1207 = vld [vmem:[#allocation2 + $0x88] sm:$0xff]
        %v1208 = vld [vmem:[#allocation2 + $0x90] sm:$0xff]
        %v1209 = vld [vmem:[#allocation2 + $0x98] sm:$0xff]
        %v1210 = vld [vmem:[#allocation2 + $0xa0] sm:$0xff]
        %v1211 = vld [vmem:[#allocation2 + $0xa8] sm:$0xff]
        %v1212 = vld [vmem:[#allocation2 + $0xb0] sm:$0xff]
        %v1213 = vld [vmem:[#allocation2 + $0xb8] sm:$0xff]
        %v1214 = vld [vmem:[#allocation2 + $0xc0] sm:$0xff]
        %v1215 = vld [vmem:[#allocation2 + $0xc8] sm:$0xff]
        %v1216 = vld [vmem:[#allocation2 + $0xd0] sm:$0xff]
        %v1217 = vld [vmem:[#allocation2 + $0xd8] sm:$0xff]
        %v1218 = vld [vmem:[#allocation2 + $0xe0] sm:$0xff]
        %v1219 = vld [vmem:[#allocation2 + $0xe8] sm:$0xff]
        %v1220 = vld [vmem:[#allocation2 + $0xf0] sm:$0xff]
        %v1221 = vld [vmem:[#allocation2 + $0xf8] sm:$0xff]
        %1222 = vmatprep.subr.bf16.mxu0 %v1191
        %1223 = vmatpush1.bf16.msra.mxu0 %v1190
        %1224 = vmatprep.subr.bf16.mxu0 %v1195
        %1225 = vmatpush1.bf16.msra.mxu0 %v1194
        %1226 = vmatprep.subr.bf16.mxu0 %v1199
        %1227 = vmatpush1.bf16.msra.mxu0 %v1198
        %1228 = vmatprep.subr.bf16.mxu0 %v1203
        %1229 = vmatpush1.bf16.msra.mxu0 %v1202
        %1230 = vmatprep.subr.bf16.mxu0 %v1207
        %1231 = vmatpush1.bf16.msra.mxu0 %v1206
        %1232 = vmatprep.subr.bf16.mxu0 %v1211
        %1233 = vmatpush1.bf16.msra.mxu0 %v1210
        %1234 = vmatprep.subr.bf16.mxu0 %v1215
        %1235 = vmatpush1.bf16.msra.mxu0 %v1214
        %1236 = vmatprep.subr.bf16.mxu0 %v1219
        %1237 = vmatpush1.bf16.msra.mxu0 %v1218
        %1238 = vmatprep.subr.bf16.mxu0 0
        %1239 = vmatpush1.bf16.msra.mxu0 0
        %1240 = vmatprep.subr.bf16.mxu0 0
        %1241 = vmatpush1.bf16.msra.mxu0 0
        %1242 = vmatprep.subr.bf16.mxu0 0
        %1243 = vmatpush1.bf16.msra.mxu0 0
        %1244 = vmatprep.subr.bf16.mxu0 0
        %1245 = vmatpush1.bf16.msra.mxu0 0
        %1246 = vmatprep.subr.bf16.mxu0 0
        %1247 = vmatpush1.bf16.msra.mxu0 0
        %1248 = vmatprep.subr.bf16.mxu0 0
        %1249 = vmatpush1.bf16.msra.mxu0 0
        %1250 = vmatprep.subr.bf16.mxu0 0
        %1251 = vmatpush1.bf16.msra.mxu0 0
        %1252 = vmatprep.subr.bf16.mxu0 0
        %1253 = vmatpush1.bf16.msra.mxu0 0
        %1254 = vmatprep.mubr.bf16.mxu0 0
        %1255 = vmatmul.mubr.bf16.gmra.mrb[0].mxu0 %v1189
        %v1256 = vpop.f32.mrb[0].mxu0
        %v1257 = vadd.f32 0.0, %v1256
        %v1258 = vpop.f32.mrb[0].mxu0
        %v1259 = vadd.f32 0.0, %v1258
        %v1260 = vpop.f32.mrb[0].mxu0
        %v1261 = vpop.f32.mrb[0].mxu0
        %1262 = vdwg.mxu0
        %1263 = vmatprep.subr.bf16.mxu0 %v1193
        %1264 = vmatpush1.bf16.msra.mxu0 %v1192
        %1265 = vmatprep.subr.bf16.mxu0 %v1197
        %1266 = vmatpush1.bf16.msra.mxu0 %v1196
        %1267 = vmatprep.subr.bf16.mxu0 %v1201
        %1268 = vmatpush1.bf16.msra.mxu0 %v1200
        %1269 = vmatprep.subr.bf16.mxu0 %v1205
        %1270 = vmatpush1.bf16.msra.mxu0 %v1204
        %1271 = vmatprep.subr.bf16.mxu0 %v1209
        %1272 = vmatpush1.bf16.msra.mxu0 %v1208
        %1273 = vmatprep.subr.bf16.mxu0 %v1213
        %1274 = vmatpush1.bf16.msra.mxu0 %v1212
        %1275 = vmatprep.subr.bf16.mxu0 %v1217
        %1276 = vmatpush1.bf16.msra.mxu0 %v1216
        %1277 = vmatprep.subr.bf16.mxu0 %v1221
        %1278 = vmatpush1.bf16.msra.mxu0 %v1220
        %1279 = vmatprep.subr.bf16.mxu0 0
        %1280 = vmatpush1.bf16.msra.mxu0 0
        %1281 = vmatprep.subr.bf16.mxu0 0
        %1282 = vmatpush1.bf16.msra.mxu0 0
        %1283 = vmatprep.subr.bf16.mxu0 0
        %1284 = vmatpush1.bf16.msra.mxu0 0
        %1285 = vmatprep.subr.bf16.mxu0 0
        %1286 = vmatpush1.bf16.msra.mxu0 0
        %1287 = vmatprep.subr.bf16.mxu0 0
        %1288 = vmatpush1.bf16.msra.mxu0 0
        %1289 = vmatprep.subr.bf16.mxu0 0
        %1290 = vmatpush1.bf16.msra.mxu0 0
        %1291 = vmatprep.subr.bf16.mxu0 0
        %1292 = vmatpush1.bf16.msra.mxu0 0
        %1293 = vmatprep.subr.bf16.mxu0 0
        %1294 = vmatpush1.bf16.msra.mxu0 0
        %1295 = vmatprep.mubr.bf16.mxu0 0
        %1296 = vmatmul.mubr.bf16.gmra.mrb[0].mxu0 %v1189
        %v1297 = vpop.f32.mrb[0].mxu0
        %v1298 = vadd.f32 0.0, %v1297
        %v1299 = vpop.f32.mrb[0].mxu0
        %v1300 = vadd.f32 0.0, %v1299
        %v1301 = vpop.f32.mrb[0].mxu0
        %v1302 = vpop.f32.mrb[0].mxu0
        %1303 = vdwg.mxu0
        %v1304 = vadd.f32 %v1185, %v1257
        %v1305 = vadd.f32 %v1186, %v1259
        %v1306 = vadd.f32 %v1187, %v1298
        %v1307 = vadd.f32 %v1188, %v1300
        %s1308 = scalar_lea.vmem %s215, 192 [#allocation11]
        %v1309 = vld [vmem:[%s1308] sm:$0xff]
        %v1310 = vld [vmem:[%s1308 + $0x8] sm:$0xff]
        %v1311 = vunpack.c.l.bf16 %v1309
        %v1312 = vunpack.c.h.bf16 %v1309
        %v1313 = vunpack.c.l.bf16 %v1310
        %v1314 = vunpack.c.h.bf16 %v1310
        %v1315 = vpack.c.bf16 %v1177, %v1177
        %v1316 = vld [vmem:[%s440] sm:$0xff]
        %v1317 = vld [vmem:[%s440 + $0x8] sm:$0xff]
        %v1318 = vld [vmem:[%s440 + $0x10] sm:$0xff]
        %v1319 = vld [vmem:[%s440 + $0x18] sm:$0xff]
        %v1320 = vld [vmem:[%s440 + $0x20] sm:$0xff]
        %v1321 = vld [vmem:[%s440 + $0x28] sm:$0xff]
        %v1322 = vld [vmem:[%s440 + $0x30] sm:$0xff]
        %v1323 = vld [vmem:[%s440 + $0x38] sm:$0xff]
        %v1324 = vld [vmem:[%s440 + $0x40] sm:$0xff]
        %v1325 = vld [vmem:[%s440 + $0x48] sm:$0xff]
        %v1326 = vld [vmem:[%s440 + $0x50] sm:$0xff]
        %v1327 = vld [vmem:[%s440 + $0x58] sm:$0xff]
        %v1328 = vld [vmem:[%s440 + $0x60] sm:$0xff]
        %v1329 = vld [vmem:[%s440 + $0x68] sm:$0xff]
        %v1330 = vld [vmem:[%s440 + $0x70] sm:$0xff]
        %v1331 = vld [vmem:[%s440 + $0x78] sm:$0xff]
        %v1332 = vld [vmem:[%s440 + $0x80] sm:$0xff]
        %v1333 = vld [vmem:[%s440 + $0x88] sm:$0xff]
        %v1334 = vld [vmem:[%s440 + $0x90] sm:$0xff]
        %v1335 = vld [vmem:[%s440 + $0x98] sm:$0xff]
        %v1336 = vld [vmem:[%s440 + $0xa0] sm:$0xff]
        %v1337 = vld [vmem:[%s440 + $0xa8] sm:$0xff]
        %v1338 = vld [vmem:[%s440 + $0xb0] sm:$0xff]
        %v1339 = vld [vmem:[%s440 + $0xb8] sm:$0xff]
        %v1340 = vld [vmem:[%s440 + $0xc0] sm:$0xff]
        %v1341 = vld [vmem:[%s440 + $0xc8] sm:$0xff]
        %v1342 = vld [vmem:[%s440 + $0xd0] sm:$0xff]
        %v1343 = vld [vmem:[%s440 + $0xd8] sm:$0xff]
        %v1344 = vld [vmem:[%s440 + $0xe0] sm:$0xff]
        %v1345 = vld [vmem:[%s440 + $0xe8] sm:$0xff]
        %v1346 = vld [vmem:[%s440 + $0xf0] sm:$0xff]
        %v1347 = vld [vmem:[%s440 + $0xf8] sm:$0xff]
        %1348 = vmatprep.subr.bf16.mxu0 %v1317
        %1349 = vmatpush1.bf16.msra.mxu0 %v1316
        %1350 = vmatprep.subr.bf16.mxu0 %v1321
        %1351 = vmatpush1.bf16.msra.mxu0 %v1320
        %1352 = vmatprep.subr.bf16.mxu0 %v1325
        %1353 = vmatpush1.bf16.msra.mxu0 %v1324
        %1354 = vmatprep.subr.bf16.mxu0 %v1329
        %1355 = vmatpush1.bf16.msra.mxu0 %v1328
        %1356 = vmatprep.subr.bf16.mxu0 %v1333
        %1357 = vmatpush1.bf16.msra.mxu0 %v1332
        %1358 = vmatprep.subr.bf16.mxu0 %v1337
        %1359 = vmatpush1.bf16.msra.mxu0 %v1336
        %1360 = vmatprep.subr.bf16.mxu0 %v1341
        %1361 = vmatpush1.bf16.msra.mxu0 %v1340
        %1362 = vmatprep.subr.bf16.mxu0 %v1345
        %1363 = vmatpush1.bf16.msra.mxu0 %v1344
        %1364 = vmatprep.subr.bf16.mxu0 0
        %1365 = vmatpush1.bf16.msra.mxu0 0
        %1366 = vmatprep.subr.bf16.mxu0 0
        %1367 = vmatpush1.bf16.msra.mxu0 0
        %1368 = vmatprep.subr.bf16.mxu0 0
        %1369 = vmatpush1.bf16.msra.mxu0 0
        %1370 = vmatprep.subr.bf16.mxu0 0
        %1371 = vmatpush1.bf16.msra.mxu0 0
        %1372 = vmatprep.subr.bf16.mxu0 0
        %1373 = vmatpush1.bf16.msra.mxu0 0
        %1374 = vmatprep.subr.bf16.mxu0 0
        %1375 = vmatpush1.bf16.msra.mxu0 0
        %1376 = vmatprep.subr.bf16.mxu0 0
        %1377 = vmatpush1.bf16.msra.mxu0 0
        %1378 = vmatprep.subr.bf16.mxu0 0
        %1379 = vmatpush1.bf16.msra.mxu0 0
        %1380 = vmatprep.mubr.bf16.mxu0 0
        %1381 = vmatmul.mubr.bf16.gmra.mrb[0].mxu0 %v1315
        %v1382 = vpop.f32.mrb[0].mxu0
        %v1383 = vadd.f32 0.0, %v1382
        %v1384 = vpop.f32.mrb[0].mxu0
        %v1385 = vadd.f32 0.0, %v1384
        %v1386 = vpop.f32.mrb[0].mxu0
        %v1387 = vpop.f32.mrb[0].mxu0
        %1388 = vdwg.mxu0
        %1389 = vmatprep.subr.bf16.mxu0 %v1319
        %1390 = vmatpush1.bf16.msra.mxu0 %v1318
        %1391 = vmatprep.subr.bf16.mxu0 %v1323
        %1392 = vmatpush1.bf16.msra.mxu0 %v1322
        %1393 = vmatprep.subr.bf16.mxu0 %v1327
        %1394 = vmatpush1.bf16.msra.mxu0 %v1326
        %1395 = vmatprep.subr.bf16.mxu0 %v1331
        %1396 = vmatpush1.bf16.msra.mxu0 %v1330
        %1397 = vmatprep.subr.bf16.mxu0 %v1335
        %1398 = vmatpush1.bf16.msra.mxu0 %v1334
        %1399 = vmatprep.subr.bf16.mxu0 %v1339
        %1400 = vmatpush1.bf16.msra.mxu0 %v1338
        %1401 = vmatprep.subr.bf16.mxu0 %v1343
        %1402 = vmatpush1.bf16.msra.mxu0 %v1342
        %1403 = vmatprep.subr.bf16.mxu0 %v1347
        %1404 = vmatpush1.bf16.msra.mxu0 %v1346
        %1405 = vmatprep.subr.bf16.mxu0 0
        %1406 = vmatpush1.bf16.msra.mxu0 0
        %1407 = vmatprep.subr.bf16.mxu0 0
        %1408 = vmatpush1.bf16.msra.mxu0 0
        %1409 = vmatprep.subr.bf16.mxu0 0
        %1410 = vmatpush1.bf16.msra.mxu0 0
        %1411 = vmatprep.subr.bf16.mxu0 0
        %1412 = vmatpush1.bf16.msra.mxu0 0
        %1413 = vmatprep.subr.bf16.mxu0 0
        %1414 = vmatpush1.bf16.msra.mxu0 0
        %1415 = vmatprep.subr.bf16.mxu0 0
        %1416 = vmatpush1.bf16.msra.mxu0 0
        %1417 = vmatprep.subr.bf16.mxu0 0
        %1418 = vmatpush1.bf16.msra.mxu0 0
        %1419 = vmatprep.subr.bf16.mxu0 0
        %1420 = vmatpush1.bf16.msra.mxu0 0
        %1421 = vmatprep.mubr.bf16.mxu0 0
        %1422 = vmatmul.mubr.bf16.gmra.mrb[0].mxu0 %v1315
        %v1423 = vpop.f32.mrb[0].mxu0
        %v1424 = vadd.f32 0.0, %v1423
        %v1425 = vpop.f32.mrb[0].mxu0
        %v1426 = vadd.f32 0.0, %v1425
        %v1427 = vpop.f32.mrb[0].mxu0
        %v1428 = vpop.f32.mrb[0].mxu0
        %1429 = vdwg.mxu0
        %v1430 = vadd.f32 %v1311, %v1383
        %v1431 = vadd.f32 %v1312, %v1385
        %v1432 = vadd.f32 %v1313, %v1424
        %v1433 = vadd.f32 %v1314, %v1426
        %v1434 = vmul.f32 %v1304, 0.5
        %v1435 = vtanh.pop %v1434
        %v1436 = vmul.f32 %v1435, 0.5
        %v1437 = vadd.f32 %v1436, 0.5
        %v1438 = vmul.f32 %v1305, 0.5
        %v1439 = vtanh.pop %v1438
        %v1440 = vmul.f32 %v1439, 0.5
        %v1441 = vadd.f32 %v1440, 0.5
        %v1442 = vtanh.pop %v1306
        %v1443 = vmul.f32 %v1307, 0.5
        %v1444 = vtanh.pop %v1443
        %v1445 = vmul.f32 %v1444, 0.5
        %v1446 = vadd.f32 %v1445, 0.5
        %v1447 = vmul.f32 %v1441, %v1157
        %v1448 = vmul.f32 %v1437, %v1442
        %v1449 = vadd.f32 %v1447, %v1448
        %v1450 = vtanh.pop %v1449
        %v1451 = vmul.f32 %v1446, %v1450
        %v1452 = vmul.f32 %v1430, 0.5
        %v1453 = vtanh.pop %v1452
        %v1454 = vmul.f32 %v1453, 0.5
        %v1455 = vadd.f32 %v1454, 0.5
        %v1456 = vmul.f32 %v1431, 0.5
        %v1457 = vtanh.pop %v1456
        %v1458 = vmul.f32 %v1457, 0.5
        %v1459 = vadd.f32 %v1458, 0.5
        %v1460 = vtanh.pop %v1432
        %v1461 = vmul.f32 %v1433, 0.5
        %v1462 = vtanh.pop %v1461
        %v1463 = vmul.f32 %v1462, 0.5
        %v1464 = vadd.f32 %v1463, 0.5
        %v1465 = vmul.f32 %v1459, %v1175
        %v1466 = vmul.f32 %v1455, %v1460
        %v1467 = vadd.f32 %v1465, %v1466
        %v1468 = vtanh.pop %v1467
        %v1469 = vmul.f32 %v1464, %v1468
        %s1470 = scalar_lea.vmem %s240, 24 [#allocation13]
        %1471 = vst [vmem:[%s1470] sm:$0xff] %v1451
        %s1472 = scalar_lea.vmem %s247, 96 [#allocation14]
        %1473 = vst [vmem:[%s1472] sm:$0xff] %v1469
        %s1474 = scalar_lea.vmem %s206, 64 [#allocation8]
        %v1475 = vld [vmem:[%s1474] sm:$0xff]
        %v1476 = vld [vmem:[%s1474 + $0x8] sm:$0xff]
        %v1477 = vunpack.c.l.bf16 %v1475
        %v1478 = vunpack.c.h.bf16 %v1475
        %v1479 = vunpack.c.l.bf16 %v1476
        %v1480 = vunpack.c.h.bf16 %v1476
        %v1481 = vpack.c.bf16 %v1451, %v1451
        %v1482 = vld [vmem:[#allocation2] sm:$0xff]
        %v1483 = vld [vmem:[#allocation2 + $0x8] sm:$0xff]
        %v1484 = vld [vmem:[#allocation2 + $0x10] sm:$0xff]
        %v1485 = vld [vmem:[#allocation2 + $0x18] sm:$0xff]
        %v1486 = vld [vmem:[#allocation2 + $0x20] sm:$0xff]
        %v1487 = vld [vmem:[#allocation2 + $0x28] sm:$0xff]
        %v1488 = vld [vmem:[#allocation2 + $0x30] sm:$0xff]
        %v1489 = vld [vmem:[#allocation2 + $0x38] sm:$0xff]
        %v1490 = vld [vmem:[#allocation2 + $0x40] sm:$0xff]
        %v1491 = vld [vmem:[#allocation2 + $0x48] sm:$0xff]
        %v1492 = vld [vmem:[#allocation2 + $0x50] sm:$0xff]
        %v1493 = vld [vmem:[#allocation2 + $0x58] sm:$0xff]
        %v1494 = vld [vmem:[#allocation2 + $0x60] sm:$0xff]
        %v1495 = vld [vmem:[#allocation2 + $0x68] sm:$0xff]
        %v1496 = vld [vmem:[#allocation2 + $0x70] sm:$0xff]
        %v1497 = vld [vmem:[#allocation2 + $0x78] sm:$0xff]
        %v1498 = vld [vmem:[#allocation2 + $0x80] sm:$0xff]
        %v1499 = vld [vmem:[#allocation2 + $0x88] sm:$0xff]
        %v1500 = vld [vmem:[#allocation2 + $0x90] sm:$0xff]
        %v1501 = vld [vmem:[#allocation2 + $0x98] sm:$0xff]
        %v1502 = vld [vmem:[#allocation2 + $0xa0] sm:$0xff]
        %v1503 = vld [vmem:[#allocation2 + $0xa8] sm:$0xff]
        %v1504 = vld [vmem:[#allocation2 + $0xb0] sm:$0xff]
        %v1505 = vld [vmem:[#allocation2 + $0xb8] sm:$0xff]
        %v1506 = vld [vmem:[#allocation2 + $0xc0] sm:$0xff]
        %v1507 = vld [vmem:[#allocation2 + $0xc8] sm:$0xff]
        %v1508 = vld [vmem:[#allocation2 + $0xd0] sm:$0xff]
        %v1509 = vld [vmem:[#allocation2 + $0xd8] sm:$0xff]
        %v1510 = vld [vmem:[#allocation2 + $0xe0] sm:$0xff]
        %v1511 = vld [vmem:[#allocation2 + $0xe8] sm:$0xff]
        %v1512 = vld [vmem:[#allocation2 + $0xf0] sm:$0xff]
        %v1513 = vld [vmem:[#allocation2 + $0xf8] sm:$0xff]
        %1514 = vmatprep.subr.bf16.mxu0 %v1483
        %1515 = vmatpush1.bf16.msra.mxu0 %v1482
        %1516 = vmatprep.subr.bf16.mxu0 %v1487
        %1517 = vmatpush1.bf16.msra.mxu0 %v1486
        %1518 = vmatprep.subr.bf16.mxu0 %v1491
        %1519 = vmatpush1.bf16.msra.mxu0 %v1490
        %1520 = vmatprep.subr.bf16.mxu0 %v1495
        %1521 = vmatpush1.bf16.msra.mxu0 %v1494
        %1522 = vmatprep.subr.bf16.mxu0 %v1499
        %1523 = vmatpush1.bf16.msra.mxu0 %v1498
        %1524 = vmatprep.subr.bf16.mxu0 %v1503
        %1525 = vmatpush1.bf16.msra.mxu0 %v1502
        %1526 = vmatprep.subr.bf16.mxu0 %v1507
        %1527 = vmatpush1.bf16.msra.mxu0 %v1506
        %1528 = vmatprep.subr.bf16.mxu0 %v1511
        %1529 = vmatpush1.bf16.msra.mxu0 %v1510
        %1530 = vmatprep.subr.bf16.mxu0 0
        %1531 = vmatpush1.bf16.msra.mxu0 0
        %1532 = vmatprep.subr.bf16.mxu0 0
        %1533 = vmatpush1.bf16.msra.mxu0 0
        %1534 = vmatprep.subr.bf16.mxu0 0
        %1535 = vmatpush1.bf16.msra.mxu0 0
        %1536 = vmatprep.subr.bf16.mxu0 0
        %1537 = vmatpush1.bf16.msra.mxu0 0
        %1538 = vmatprep.subr.bf16.mxu0 0
        %1539 = vmatpush1.bf16.msra.mxu0 0
        %1540 = vmatprep.subr.bf16.mxu0 0
        %1541 = vmatpush1.bf16.msra.mxu0 0
        %1542 = vmatprep.subr.bf16.mxu0 0
        %1543 = vmatpush1.bf16.msra.mxu0 0
        %1544 = vmatprep.subr.bf16.mxu0 0
        %1545 = vmatpush1.bf16.msra.mxu0 0
        %1546 = vmatprep.mubr.bf16.mxu0 0
        %1547 = vmatmul.mubr.bf16.gmra.mrb[0].mxu0 %v1481
        %v1548 = vpop.f32.mrb[0].mxu0
        %v1549 = vadd.f32 0.0, %v1548
        %v1550 = vpop.f32.mrb[0].mxu0
        %v1551 = vadd.f32 0.0, %v1550
        %v1552 = vpop.f32.mrb[0].mxu0
        %v1553 = vpop.f32.mrb[0].mxu0
        %1554 = vdwg.mxu0
        %1555 = vmatprep.subr.bf16.mxu0 %v1485
        %1556 = vmatpush1.bf16.msra.mxu0 %v1484
        %1557 = vmatprep.subr.bf16.mxu0 %v1489
        %1558 = vmatpush1.bf16.msra.mxu0 %v1488
        %1559 = vmatprep.subr.bf16.mxu0 %v1493
        %1560 = vmatpush1.bf16.msra.mxu0 %v1492
        %1561 = vmatprep.subr.bf16.mxu0 %v1497
        %1562 = vmatpush1.bf16.msra.mxu0 %v1496
        %1563 = vmatprep.subr.bf16.mxu0 %v1501
        %1564 = vmatpush1.bf16.msra.mxu0 %v1500
        %1565 = vmatprep.subr.bf16.mxu0 %v1505
        %1566 = vmatpush1.bf16.msra.mxu0 %v1504
        %1567 = vmatprep.subr.bf16.mxu0 %v1509
        %1568 = vmatpush1.bf16.msra.mxu0 %v1508
        %1569 = vmatprep.subr.bf16.mxu0 %v1513
        %1570 = vmatpush1.bf16.msra.mxu0 %v1512
        %1571 = vmatprep.subr.bf16.mxu0 0
        %1572 = vmatpush1.bf16.msra.mxu0 0
        %1573 = vmatprep.subr.bf16.mxu0 0
        %1574 = vmatpush1.bf16.msra.mxu0 0
        %1575 = vmatprep.subr.bf16.mxu0 0
        %1576 = vmatpush1.bf16.msra.mxu0 0
        %1577 = vmatprep.subr.bf16.mxu0 0
        %1578 = vmatpush1.bf16.msra.mxu0 0
        %1579 = vmatprep.subr.bf16.mxu0 0
        %1580 = vmatpush1.bf16.msra.mxu0 0
        %1581 = vmatprep.subr.bf16.mxu0 0
        %1582 = vmatpush1.bf16.msra.mxu0 0
        %1583 = vmatprep.subr.bf16.mxu0 0
        %1584 = vmatpush1.bf16.msra.mxu0 0
        %1585 = vmatprep.subr.bf16.mxu0 0
        %1586 = vmatpush1.bf16.msra.mxu0 0
        %1587 = vmatprep.mubr.bf16.mxu0 0
        %1588 = vmatmul.mubr.bf16.gmra.mrb[0].mxu0 %v1481
        %v1589 = vpop.f32.mrb[0].mxu0
        %v1590 = vadd.f32 0.0, %v1589
        %v1591 = vpop.f32.mrb[0].mxu0
        %v1592 = vadd.f32 0.0, %v1591
        %v1593 = vpop.f32.mrb[0].mxu0
        %v1594 = vpop.f32.mrb[0].mxu0
        %1595 = vdwg.mxu0
        %v1596 = vadd.f32 %v1477, %v1549
        %v1597 = vadd.f32 %v1478, %v1551
        %v1598 = vadd.f32 %v1479, %v1590
        %v1599 = vadd.f32 %v1480, %v1592
        %s1600 = scalar_lea.vmem %s215, 176 [#allocation11]
        %v1601 = vld [vmem:[%s1600] sm:$0xff]
        %v1602 = vld [vmem:[%s1600 + $0x8] sm:$0xff]
        %v1603 = vunpack.c.l.bf16 %v1601
        %v1604 = vunpack.c.h.bf16 %v1601
        %v1605 = vunpack.c.l.bf16 %v1602
        %v1606 = vunpack.c.h.bf16 %v1602
        %v1607 = vpack.c.bf16 %v1469, %v1469
        %v1608 = vld [vmem:[%s440] sm:$0xff]
        %v1609 = vld [vmem:[%s440 + $0x8] sm:$0xff]
        %v1610 = vld [vmem:[%s440 + $0x10] sm:$0xff]
        %v1611 = vld [vmem:[%s440 + $0x18] sm:$0xff]
        %v1612 = vld [vmem:[%s440 + $0x20] sm:$0xff]
        %v1613 = vld [vmem:[%s440 + $0x28] sm:$0xff]
        %v1614 = vld [vmem:[%s440 + $0x30] sm:$0xff]
        %v1615 = vld [vmem:[%s440 + $0x38] sm:$0xff]
        %v1616 = vld [vmem:[%s440 + $0x40] sm:$0xff]
        %v1617 = vld [vmem:[%s440 + $0x48] sm:$0xff]
        %v1618 = vld [vmem:[%s440 + $0x50] sm:$0xff]
        %v1619 = vld [vmem:[%s440 + $0x58] sm:$0xff]
        %v1620 = vld [vmem:[%s440 + $0x60] sm:$0xff]
        %v1621 = vld [vmem:[%s440 + $0x68] sm:$0xff]
        %v1622 = vld [vmem:[%s440 + $0x70] sm:$0xff]
        %v1623 = vld [vmem:[%s440 + $0x78] sm:$0xff]
        %v1624 = vld [vmem:[%s440 + $0x80] sm:$0xff]
        %v1625 = vld [vmem:[%s440 + $0x88] sm:$0xff]
        %v1626 = vld [vmem:[%s440 + $0x90] sm:$0xff]
        %v1627 = vld [vmem:[%s440 + $0x98] sm:$0xff]
        %v1628 = vld [vmem:[%s440 + $0xa0] sm:$0xff]
        %v1629 = vld [vmem:[%s440 + $0xa8] sm:$0xff]
        %v1630 = vld [vmem:[%s440 + $0xb0] sm:$0xff]
        %v1631 = vld [vmem:[%s440 + $0xb8] sm:$0xff]
        %v1632 = vld [vmem:[%s440 + $0xc0] sm:$0xff]
        %v1633 = vld [vmem:[%s440 + $0xc8] sm:$0xff]
        %v1634 = vld [vmem:[%s440 + $0xd0] sm:$0xff]
        %v1635 = vld [vmem:[%s440 + $0xd8] sm:$0xff]
        %v1636 = vld [vmem:[%s440 + $0xe0] sm:$0xff]
        %v1637 = vld [vmem:[%s440 + $0xe8] sm:$0xff]
        %v1638 = vld [vmem:[%s440 + $0xf0] sm:$0xff]
        %v1639 = vld [vmem:[%s440 + $0xf8] sm:$0xff]
        %1640 = vmatprep.subr.bf16.mxu0 %v1609
        %1641 = vmatpush1.bf16.msra.mxu0 %v1608
        %1642 = vmatprep.subr.bf16.mxu0 %v1613
        %1643 = vmatpush1.bf16.msra.mxu0 %v1612
        %1644 = vmatprep.subr.bf16.mxu0 %v1617
        %1645 = vmatpush1.bf16.msra.mxu0 %v1616
        %1646 = vmatprep.subr.bf16.mxu0 %v1621
        %1647 = vmatpush1.bf16.msra.mxu0 %v1620
        %1648 = vmatprep.subr.bf16.mxu0 %v1625
        %1649 = vmatpush1.bf16.msra.mxu0 %v1624
        %1650 = vmatprep.subr.bf16.mxu0 %v1629
        %1651 = vmatpush1.bf16.msra.mxu0 %v1628
        %1652 = vmatprep.subr.bf16.mxu0 %v1633
        %1653 = vmatpush1.bf16.msra.mxu0 %v1632
        %1654 = vmatprep.subr.bf16.mxu0 %v1637
        %1655 = vmatpush1.bf16.msra.mxu0 %v1636
        %1656 = vmatprep.subr.bf16.mxu0 0
        %1657 = vmatpush1.bf16.msra.mxu0 0
        %1658 = vmatprep.subr.bf16.mxu0 0
        %1659 = vmatpush1.bf16.msra.mxu0 0
        %1660 = vmatprep.subr.bf16.mxu0 0
        %1661 = vmatpush1.bf16.msra.mxu0 0
        %1662 = vmatprep.subr.bf16.mxu0 0
        %1663 = vmatpush1.bf16.msra.mxu0 0
        %1664 = vmatprep.subr.bf16.mxu0 0
        %1665 = vmatpush1.bf16.msra.mxu0 0
        %1666 = vmatprep.subr.bf16.mxu0 0
        %1667 = vmatpush1.bf16.msra.mxu0 0
        %1668 = vmatprep.subr.bf16.mxu0 0
        %1669 = vmatpush1.bf16.msra.mxu0 0
        %1670 = vmatprep.subr.bf16.mxu0 0
        %1671 = vmatpush1.bf16.msra.mxu0 0
        %1672 = vmatprep.mubr.bf16.mxu0 0
        %1673 = vmatmul.mubr.bf16.gmra.mrb[0].mxu0 %v1607
        %v1674 = vpop.f32.mrb[0].mxu0
        %v1675 = vadd.f32 0.0, %v1674
        %v1676 = vpop.f32.mrb[0].mxu0
        %v1677 = vadd.f32 0.0, %v1676
        %v1678 = vpop.f32.mrb[0].mxu0
        %v1679 = vpop.f32.mrb[0].mxu0
        %1680 = vdwg.mxu0
        %1681 = vmatprep.subr.bf16.mxu0 %v1611
        %1682 = vmatpush1.bf16.msra.mxu0 %v1610
        %1683 = vmatprep.subr.bf16.mxu0 %v1615
        %1684 = vmatpush1.bf16.msra.mxu0 %v1614
        %1685 = vmatprep.subr.bf16.mxu0 %v1619
        %1686 = vmatpush1.bf16.msra.mxu0 %v1618
        %1687 = vmatprep.subr.bf16.mxu0 %v1623
        %1688 = vmatpush1.bf16.msra.mxu0 %v1622
        %1689 = vmatprep.subr.bf16.mxu0 %v1627
        %1690 = vmatpush1.bf16.msra.mxu0 %v1626
        %1691 = vmatprep.subr.bf16.mxu0 %v1631
        %1692 = vmatpush1.bf16.msra.mxu0 %v1630
        %1693 = vmatprep.subr.bf16.mxu0 %v1635
        %1694 = vmatpush1.bf16.msra.mxu0 %v1634
        %1695 = vmatprep.subr.bf16.mxu0 %v1639
        %1696 = vmatpush1.bf16.msra.mxu0 %v1638
        %1697 = vmatprep.subr.bf16.mxu0 0
        %1698 = vmatpush1.bf16.msra.mxu0 0
        %1699 = vmatprep.subr.bf16.mxu0 0
        %1700 = vmatpush1.bf16.msra.mxu0 0
        %1701 = vmatprep.subr.bf16.mxu0 0
        %1702 = vmatpush1.bf16.msra.mxu0 0
        %1703 = vmatprep.subr.bf16.mxu0 0
        %1704 = vmatpush1.bf16.msra.mxu0 0
        %1705 = vmatprep.subr.bf16.mxu0 0
        %1706 = vmatpush1.bf16.msra.mxu0 0
        %1707 = vmatprep.subr.bf16.mxu0 0
        %1708 = vmatpush1.bf16.msra.mxu0 0
        %1709 = vmatprep.subr.bf16.mxu0 0
        %1710 = vmatpush1.bf16.msra.mxu0 0
        %1711 = vmatprep.subr.bf16.mxu0 0
        %1712 = vmatpush1.bf16.msra.mxu0 0
        %1713 = vmatprep.mubr.bf16.mxu0 0
        %1714 = vmatmul.mubr.bf16.gmra.mrb[0].mxu0 %v1607
        %v1715 = vpop.f32.mrb[0].mxu0
        %v1716 = vadd.f32 0.0, %v1715
        %v1717 = vpop.f32.mrb[0].mxu0
        %v1718 = vadd.f32 0.0, %v1717
        %v1719 = vpop.f32.mrb[0].mxu0
        %v1720 = vpop.f32.mrb[0].mxu0
        %1721 = vdwg.mxu0
        %v1722 = vadd.f32 %v1603, %v1675
        %v1723 = vadd.f32 %v1604, %v1677
        %v1724 = vadd.f32 %v1605, %v1716
        %v1725 = vadd.f32 %v1606, %v1718
        %v1726 = vmul.f32 %v1596, 0.5
        %v1727 = vtanh.pop %v1726
        %v1728 = vmul.f32 %v1727, 0.5
        %v1729 = vadd.f32 %v1728, 0.5
        %v1730 = vmul.f32 %v1597, 0.5
        %v1731 = vtanh.pop %v1730
        %v1732 = vmul.f32 %v1731, 0.5
        %v1733 = vadd.f32 %v1732, 0.5
        %v1734 = vtanh.pop %v1598
        %v1735 = vmul.f32 %v1599, 0.5
        %v1736 = vtanh.pop %v1735
        %v1737 = vmul.f32 %v1736, 0.5
        %v1738 = vadd.f32 %v1737, 0.5
        %v1739 = vmul.f32 %v1733, %v1449
        %v1740 = vmul.f32 %v1729, %v1734
        %v1741 = vadd.f32 %v1739, %v1740
        %v1742 = vtanh.pop %v1741
        %v1743 = vmul.f32 %v1738, %v1742
        %v1744 = vmul.f32 %v1722, 0.5
        %v1745 = vtanh.pop %v1744
        %v1746 = vmul.f32 %v1745, 0.5
        %v1747 = vadd.f32 %v1746, 0.5
        %v1748 = vmul.f32 %v1723, 0.5
        %v1749 = vtanh.pop %v1748
        %v1750 = vmul.f32 %v1749, 0.5
        %v1751 = vadd.f32 %v1750, 0.5
        %v1752 = vtanh.pop %v1724
        %v1753 = vmul.f32 %v1725, 0.5
        %v1754 = vtanh.pop %v1753
        %v1755 = vmul.f32 %v1754, 0.5
        %v1756 = vadd.f32 %v1755, 0.5
        %v1757 = vmul.f32 %v1751, %v1467
        %v1758 = vmul.f32 %v1747, %v1752
        %v1759 = vadd.f32 %v1757, %v1758
        %v1760 = vtanh.pop %v1759
        %v1761 = vmul.f32 %v1756, %v1760
        %s1762 = scalar_lea.vmem %s240, 32 [#allocation13]
        %1763 = vst [vmem:[%s1762] sm:$0xff] %v1743
        %s1764 = scalar_lea.vmem %s247, 88 [#allocation14]
        %1765 = vst [vmem:[%s1764] sm:$0xff] %v1761
        %s1766 = scalar_lea.vmem %s206, 80 [#allocation8]
        %v1767 = vld [vmem:[%s1766] sm:$0xff]
        %v1768 = vld [vmem:[%s1766 + $0x8] sm:$0xff]
        %v1769 = vunpack.c.l.bf16 %v1767
        %v1770 = vunpack.c.h.bf16 %v1767
        %v1771 = vunpack.c.l.bf16 %v1768
        %v1772 = vunpack.c.h.bf16 %v1768
        %v1773 = vpack.c.bf16 %v1743, %v1743
        %v1774 = vld [vmem:[#allocation2] sm:$0xff]
        %v1775 = vld [vmem:[#allocation2 + $0x8] sm:$0xff]
        %v1776 = vld [vmem:[#allocation2 + $0x10] sm:$0xff]
        %v1777 = vld [vmem:[#allocation2 + $0x18] sm:$0xff]
        %v1778 = vld [vmem:[#allocation2 + $0x20] sm:$0xff]
        %v1779 = vld [vmem:[#allocation2 + $0x28] sm:$0xff]
        %v1780 = vld [vmem:[#allocation2 + $0x30] sm:$0xff]
        %v1781 = vld [vmem:[#allocation2 + $0x38] sm:$0xff]
        %v1782 = vld [vmem:[#allocation2 + $0x40] sm:$0xff]
        %v1783 = vld [vmem:[#allocation2 + $0x48] sm:$0xff]
        %v1784 = vld [vmem:[#allocation2 + $0x50] sm:$0xff]
        %v1785 = vld [vmem:[#allocation2 + $0x58] sm:$0xff]
        %v1786 = vld [vmem:[#allocation2 + $0x60] sm:$0xff]
        %v1787 = vld [vmem:[#allocation2 + $0x68] sm:$0xff]
        %v1788 = vld [vmem:[#allocation2 + $0x70] sm:$0xff]
        %v1789 = vld [vmem:[#allocation2 + $0x78] sm:$0xff]
        %v1790 = vld [vmem:[#allocation2 + $0x80] sm:$0xff]
        %v1791 = vld [vmem:[#allocation2 + $0x88] sm:$0xff]
        %v1792 = vld [vmem:[#allocation2 + $0x90] sm:$0xff]
        %v1793 = vld [vmem:[#allocation2 + $0x98] sm:$0xff]
        %v1794 = vld [vmem:[#allocation2 + $0xa0] sm:$0xff]
        %v1795 = vld [vmem:[#allocation2 + $0xa8] sm:$0xff]
        %v1796 = vld [vmem:[#allocation2 + $0xb0] sm:$0xff]
        %v1797 = vld [vmem:[#allocation2 + $0xb8] sm:$0xff]
        %v1798 = vld [vmem:[#allocation2 + $0xc0] sm:$0xff]
        %v1799 = vld [vmem:[#allocation2 + $0xc8] sm:$0xff]
        %v1800 = vld [vmem:[#allocation2 + $0xd0] sm:$0xff]
        %v1801 = vld [vmem:[#allocation2 + $0xd8] sm:$0xff]
        %v1802 = vld [vmem:[#allocation2 + $0xe0] sm:$0xff]
        %v1803 = vld [vmem:[#allocation2 + $0xe8] sm:$0xff]
        %v1804 = vld [vmem:[#allocation2 + $0xf0] sm:$0xff]
        %v1805 = vld [vmem:[#allocation2 + $0xf8] sm:$0xff]
        %1806 = vmatprep.subr.bf16.mxu0 %v1775
        %1807 = vmatpush1.bf16.msra.mxu0 %v1774
        %1808 = vmatprep.subr.bf16.mxu0 %v1779
        %1809 = vmatpush1.bf16.msra.mxu0 %v1778
        %1810 = vmatprep.subr.bf16.mxu0 %v1783
        %1811 = vmatpush1.bf16.msra.mxu0 %v1782
        %1812 = vmatprep.subr.bf16.mxu0 %v1787
        %1813 = vmatpush1.bf16.msra.mxu0 %v1786
        %1814 = vmatprep.subr.bf16.mxu0 %v1791
        %1815 = vmatpush1.bf16.msra.mxu0 %v1790
        %1816 = vmatprep.subr.bf16.mxu0 %v1795
        %1817 = vmatpush1.bf16.msra.mxu0 %v1794
        %1818 = vmatprep.subr.bf16.mxu0 %v1799
        %1819 = vmatpush1.bf16.msra.mxu0 %v1798
        %1820 = vmatprep.subr.bf16.mxu0 %v1803
        %1821 = vmatpush1.bf16.msra.mxu0 %v1802
        %1822 = vmatprep.subr.bf16.mxu0 0
        %1823 = vmatpush1.bf16.msra.mxu0 0
        %1824 = vmatprep.subr.bf16.mxu0 0
        %1825 = vmatpush1.bf16.msra.mxu0 0
        %1826 = vmatprep.subr.bf16.mxu0 0
        %1827 = vmatpush1.bf16.msra.mxu0 0
        %1828 = vmatprep.subr.bf16.mxu0 0
        %1829 = vmatpush1.bf16.msra.mxu0 0
        %1830 = vmatprep.subr.bf16.mxu0 0
        %1831 = vmatpush1.bf16.msra.mxu0 0
        %1832 = vmatprep.subr.bf16.mxu0 0
        %1833 = vmatpush1.bf16.msra.mxu0 0
        %1834 = vmatprep.subr.bf16.mxu0 0
        %1835 = vmatpush1.bf16.msra.mxu0 0
        %1836 = vmatprep.subr.bf16.mxu0 0
        %1837 = vmatpush1.bf16.msra.mxu0 0
        %1838 = vmatprep.mubr.bf16.mxu0 0
        %1839 = vmatmul.mubr.bf16.gmra.mrb[0].mxu0 %v1773
        %v1840 = vpop.f32.mrb[0].mxu0
        %v1841 = vadd.f32 0.0, %v1840
        %v1842 = vpop.f32.mrb[0].mxu0
        %v1843 = vadd.f32 0.0, %v1842
        %v1844 = vpop.f32.mrb[0].mxu0
        %v1845 = vpop.f32.mrb[0].mxu0
        %1846 = vdwg.mxu0
        %1847 = vmatprep.subr.bf16.mxu0 %v1777
        %1848 = vmatpush1.bf16.msra.mxu0 %v1776
        %1849 = vmatprep.subr.bf16.mxu0 %v1781
        %1850 = vmatpush1.bf16.msra.mxu0 %v1780
        %1851 = vmatprep.subr.bf16.mxu0 %v1785
        %1852 = vmatpush1.bf16.msra.mxu0 %v1784
        %1853 = vmatprep.subr.bf16.mxu0 %v1789
        %1854 = vmatpush1.bf16.msra.mxu0 %v1788
        %1855 = vmatprep.subr.bf16.mxu0 %v1793
        %1856 = vmatpush1.bf16.msra.mxu0 %v1792
        %1857 = vmatprep.subr.bf16.mxu0 %v1797
        %1858 = vmatpush1.bf16.msra.mxu0 %v1796
        %1859 = vmatprep.subr.bf16.mxu0 %v1801
        %1860 = vmatpush1.bf16.msra.mxu0 %v1800
        %1861 = vmatprep.subr.bf16.mxu0 %v1805
        %1862 = vmatpush1.bf16.msra.mxu0 %v1804
        %1863 = vmatprep.subr.bf16.mxu0 0
        %1864 = vmatpush1.bf16.msra.mxu0 0
        %1865 = vmatprep.subr.bf16.mxu0 0
        %1866 = vmatpush1.bf16.msra.mxu0 0
        %1867 = vmatprep.subr.bf16.mxu0 0
        %1868 = vmatpush1.bf16.msra.mxu0 0
        %1869 = vmatprep.subr.bf16.mxu0 0
        %1870 = vmatpush1.bf16.msra.mxu0 0
        %1871 = vmatprep.subr.bf16.mxu0 0
        %1872 = vmatpush1.bf16.msra.mxu0 0
        %1873 = vmatprep.subr.bf16.mxu0 0
        %1874 = vmatpush1.bf16.msra.mxu0 0
        %1875 = vmatprep.subr.bf16.mxu0 0
        %1876 = vmatpush1.bf16.msra.mxu0 0
        %1877 = vmatprep.subr.bf16.mxu0 0
        %1878 = vmatpush1.bf16.msra.mxu0 0
        %1879 = vmatprep.mubr.bf16.mxu0 0
        %1880 = vmatmul.mubr.bf16.gmra.mrb[0].mxu0 %v1773
        %v1881 = vpop.f32.mrb[0].mxu0
        %v1882 = vadd.f32 0.0, %v1881
        %v1883 = vpop.f32.mrb[0].mxu0
        %v1884 = vadd.f32 0.0, %v1883
        %v1885 = vpop.f32.mrb[0].mxu0
        %v1886 = vpop.f32.mrb[0].mxu0
        %1887 = vdwg.mxu0
        %v1888 = vadd.f32 %v1769, %v1841
        %v1889 = vadd.f32 %v1770, %v1843
        %v1890 = vadd.f32 %v1771, %v1882
        %v1891 = vadd.f32 %v1772, %v1884
        %s1892 = scalar_lea.vmem %s215, 160 [#allocation11]
        %v1893 = vld [vmem:[%s1892] sm:$0xff]
        %v1894 = vld [vmem:[%s1892 + $0x8] sm:$0xff]
        %v1895 = vunpack.c.l.bf16 %v1893
        %v1896 = vunpack.c.h.bf16 %v1893
        %v1897 = vunpack.c.l.bf16 %v1894
        %v1898 = vunpack.c.h.bf16 %v1894
        %v1899 = vpack.c.bf16 %v1761, %v1761
        %v1900 = vld [vmem:[%s440] sm:$0xff]
        %v1901 = vld [vmem:[%s440 + $0x8] sm:$0xff]
        %v1902 = vld [vmem:[%s440 + $0x10] sm:$0xff]
        %v1903 = vld [vmem:[%s440 + $0x18] sm:$0xff]
        %v1904 = vld [vmem:[%s440 + $0x20] sm:$0xff]
        %v1905 = vld [vmem:[%s440 + $0x28] sm:$0xff]
        %v1906 = vld [vmem:[%s440 + $0x30] sm:$0xff]
        %v1907 = vld [vmem:[%s440 + $0x38] sm:$0xff]
        %v1908 = vld [vmem:[%s440 + $0x40] sm:$0xff]
        %v1909 = vld [vmem:[%s440 + $0x48] sm:$0xff]
        %v1910 = vld [vmem:[%s440 + $0x50] sm:$0xff]
        %v1911 = vld [vmem:[%s440 + $0x58] sm:$0xff]
        %v1912 = vld [vmem:[%s440 + $0x60] sm:$0xff]
        %v1913 = vld [vmem:[%s440 + $0x68] sm:$0xff]
        %v1914 = vld [vmem:[%s440 + $0x70] sm:$0xff]
        %v1915 = vld [vmem:[%s440 + $0x78] sm:$0xff]
        %v1916 = vld [vmem:[%s440 + $0x80] sm:$0xff]
        %v1917 = vld [vmem:[%s440 + $0x88] sm:$0xff]
        %v1918 = vld [vmem:[%s440 + $0x90] sm:$0xff]
        %v1919 = vld [vmem:[%s440 + $0x98] sm:$0xff]
        %v1920 = vld [vmem:[%s440 + $0xa0] sm:$0xff]
        %v1921 = vld [vmem:[%s440 + $0xa8] sm:$0xff]
        %v1922 = vld [vmem:[%s440 + $0xb0] sm:$0xff]
        %v1923 = vld [vmem:[%s440 + $0xb8] sm:$0xff]
        %v1924 = vld [vmem:[%s440 + $0xc0] sm:$0xff]
        %v1925 = vld [vmem:[%s440 + $0xc8] sm:$0xff]
        %v1926 = vld [vmem:[%s440 + $0xd0] sm:$0xff]
        %v1927 = vld [vmem:[%s440 + $0xd8] sm:$0xff]
        %v1928 = vld [vmem:[%s440 + $0xe0] sm:$0xff]
        %v1929 = vld [vmem:[%s440 + $0xe8] sm:$0xff]
        %v1930 = vld [vmem:[%s440 + $0xf0] sm:$0xff]
        %v1931 = vld [vmem:[%s440 + $0xf8] sm:$0xff]
        %1932 = vmatprep.subr.bf16.mxu0 %v1901
        %1933 = vmatpush1.bf16.msra.mxu0 %v1900
        %1934 = vmatprep.subr.bf16.mxu0 %v1905
        %1935 = vmatpush1.bf16.msra.mxu0 %v1904
        %1936 = vmatprep.subr.bf16.mxu0 %v1909
        %1937 = vmatpush1.bf16.msra.mxu0 %v1908
        %1938 = vmatprep.subr.bf16.mxu0 %v1913
        %1939 = vmatpush1.bf16.msra.mxu0 %v1912
        %1940 = vmatprep.subr.bf16.mxu0 %v1917
        %1941 = vmatpush1.bf16.msra.mxu0 %v1916
        %1942 = vmatprep.subr.bf16.mxu0 %v1921
        %1943 = vmatpush1.bf16.msra.mxu0 %v1920
        %1944 = vmatprep.subr.bf16.mxu0 %v1925
        %1945 = vmatpush1.bf16.msra.mxu0 %v1924
        %1946 = vmatprep.subr.bf16.mxu0 %v1929
        %1947 = vmatpush1.bf16.msra.mxu0 %v1928
        %1948 = vmatprep.subr.bf16.mxu0 0
        %1949 = vmatpush1.bf16.msra.mxu0 0
        %1950 = vmatprep.subr.bf16.mxu0 0
        %1951 = vmatpush1.bf16.msra.mxu0 0
        %1952 = vmatprep.subr.bf16.mxu0 0
        %1953 = vmatpush1.bf16.msra.mxu0 0
        %1954 = vmatprep.subr.bf16.mxu0 0
        %1955 = vmatpush1.bf16.msra.mxu0 0
        %1956 = vmatprep.subr.bf16.mxu0 0
        %1957 = vmatpush1.bf16.msra.mxu0 0
        %1958 = vmatprep.subr.bf16.mxu0 0
        %1959 = vmatpush1.bf16.msra.mxu0 0
        %1960 = vmatprep.subr.bf16.mxu0 0
        %1961 = vmatpush1.bf16.msra.mxu0 0
        %1962 = vmatprep.subr.bf16.mxu0 0
        %1963 = vmatpush1.bf16.msra.mxu0 0
        %1964 = vmatprep.mubr.bf16.mxu0 0
        %1965 = vmatmul.mubr.bf16.gmra.mrb[0].mxu0 %v1899
        %v1966 = vpop.f32.mrb[0].mxu0
        %v1967 = vadd.f32 0.0, %v1966
        %v1968 = vpop.f32.mrb[0].mxu0
        %v1969 = vadd.f32 0.0, %v1968
        %v1970 = vpop.f32.mrb[0].mxu0
        %v1971 = vpop.f32.mrb[0].mxu0
        %1972 = vdwg.mxu0
        %1973 = vmatprep.subr.bf16.mxu0 %v1903
        %1974 = vmatpush1.bf16.msra.mxu0 %v1902
        %1975 = vmatprep.subr.bf16.mxu0 %v1907
        %1976 = vmatpush1.bf16.msra.mxu0 %v1906
        %1977 = vmatprep.subr.bf16.mxu0 %v1911
        %1978 = vmatpush1.bf16.msra.mxu0 %v1910
        %1979 = vmatprep.subr.bf16.mxu0 %v1915
        %1980 = vmatpush1.bf16.msra.mxu0 %v1914
        %1981 = vmatprep.subr.bf16.mxu0 %v1919
        %1982 = vmatpush1.bf16.msra.mxu0 %v1918
        %1983 = vmatprep.subr.bf16.mxu0 %v1923
        %1984 = vmatpush1.bf16.msra.mxu0 %v1922
        %1985 = vmatprep.subr.bf16.mxu0 %v1927
        %1986 = vmatpush1.bf16.msra.mxu0 %v1926
        %1987 = vmatprep.subr.bf16.mxu0 %v1931
        %1988 = vmatpush1.bf16.msra.mxu0 %v1930
        %1989 = vmatprep.subr.bf16.mxu0 0
        %1990 = vmatpush1.bf16.msra.mxu0 0
        %1991 = vmatprep.subr.bf16.mxu0 0
        %1992 = vmatpush1.bf16.msra.mxu0 0
        %1993 = vmatprep.subr.bf16.mxu0 0
        %1994 = vmatpush1.bf16.msra.mxu0 0
        %1995 = vmatprep.subr.bf16.mxu0 0
        %1996 = vmatpush1.bf16.msra.mxu0 0
        %1997 = vmatprep.subr.bf16.mxu0 0
        %1998 = vmatpush1.bf16.msra.mxu0 0
        %1999 = vmatprep.subr.bf16.mxu0 0
        %2000 = vmatpush1.bf16.msra.mxu0 0
        %2001 = vmatprep.subr.bf16.mxu0 0
        %2002 = vmatpush1.bf16.msra.mxu0 0
        %2003 = vmatprep.subr.bf16.mxu0 0
        %2004 = vmatpush1.bf16.msra.mxu0 0
        %2005 = vmatprep.mubr.bf16.mxu0 0
        %2006 = vmatmul.mubr.bf16.gmra.mrb[0].mxu0 %v1899
        %v2007 = vpop.f32.mrb[0].mxu0
        %v2008 = vadd.f32 0.0, %v2007
        %v2009 = vpop.f32.mrb[0].mxu0
        %v2010 = vadd.f32 0.0, %v2009
        %v2011 = vpop.f32.mrb[0].mxu0
        %v2012 = vpop.f32.mrb[0].mxu0
        %2013 = vdwg.mxu0
        %v2014 = vadd.f32 %v1895, %v1967
        %v2015 = vadd.f32 %v1896, %v1969
        %v2016 = vadd.f32 %v1897, %v2008
        %v2017 = vadd.f32 %v1898, %v2010
        %v2018 = vmul.f32 %v1888, 0.5
        %v2019 = vtanh.pop %v2018
        %v2020 = vmul.f32 %v2019, 0.5
        %v2021 = vadd.f32 %v2020, 0.5
        %v2022 = vmul.f32 %v1889, 0.5
        %v2023 = vtanh.pop %v2022
        %v2024 = vmul.f32 %v2023, 0.5
        %v2025 = vadd.f32 %v2024, 0.5
        %v2026 = vtanh.pop %v1890
        %v2027 = vmul.f32 %v1891, 0.5
        %v2028 = vtanh.pop %v2027
        %v2029 = vmul.f32 %v2028, 0.5
        %v2030 = vadd.f32 %v2029, 0.5
        %v2031 = vmul.f32 %v2025, %v1741
        %v2032 = vmul.f32 %v2021, %v2026
        %v2033 = vadd.f32 %v2031, %v2032
        %v2034 = vtanh.pop %v2033
        %v2035 = vmul.f32 %v2030, %v2034
        %v2036 = vmul.f32 %v2014, 0.5
        %v2037 = vtanh.pop %v2036
        %v2038 = vmul.f32 %v2037, 0.5
        %v2039 = vadd.f32 %v2038, 0.5
        %v2040 = vmul.f32 %v2015, 0.5
        %v2041 = vtanh.pop %v2040
        %v2042 = vmul.f32 %v2041, 0.5
        %v2043 = vadd.f32 %v2042, 0.5
        %v2044 = vtanh.pop %v2016
        %v2045 = vmul.f32 %v2017, 0.5
        %v2046 = vtanh.pop %v2045
        %v2047 = vmul.f32 %v2046, 0.5
        %v2048 = vadd.f32 %v2047, 0.5
        %v2049 = vmul.f32 %v2043, %v1759
        %v2050 = vmul.f32 %v2039, %v2044
        %v2051 = vadd.f32 %v2049, %v2050
        %v2052 = vtanh.pop %v2051
        %v2053 = vmul.f32 %v2048, %v2052
        %s2054 = scalar_lea.vmem %s240, 40 [#allocation13]
        %2055 = vst [vmem:[%s2054] sm:$0xff] %v2035
        %s2056 = scalar_lea.vmem %s247, 80 [#allocation14]
        %2057 = vst [vmem:[%s2056] sm:$0xff] %v2053
        %s2058 = scalar_lea.vmem %s206, 96 [#allocation8]
        %v2059 = vld [vmem:[%s2058] sm:$0xff]
        %v2060 = vld [vmem:[%s2058 + $0x8] sm:$0xff]
        %v2061 = vunpack.c.l.bf16 %v2059
        %v2062 = vunpack.c.h.bf16 %v2059
        %v2063 = vunpack.c.l.bf16 %v2060
        %v2064 = vunpack.c.h.bf16 %v2060
        %v2065 = vpack.c.bf16 %v2035, %v2035
        %v2066 = vld [vmem:[#allocation2] sm:$0xff]
        %v2067 = vld [vmem:[#allocation2 + $0x8] sm:$0xff]
        %v2068 = vld [vmem:[#allocation2 + $0x10] sm:$0xff]
        %v2069 = vld [vmem:[#allocation2 + $0x18] sm:$0xff]
        %v2070 = vld [vmem:[#allocation2 + $0x20] sm:$0xff]
        %v2071 = vld [vmem:[#allocation2 + $0x28] sm:$0xff]
        %v2072 = vld [vmem:[#allocation2 + $0x30] sm:$0xff]
        %v2073 = vld [vmem:[#allocation2 + $0x38] sm:$0xff]
        %v2074 = vld [vmem:[#allocation2 + $0x40] sm:$0xff]
        %v2075 = vld [vmem:[#allocation2 + $0x48] sm:$0xff]
        %v2076 = vld [vmem:[#allocation2 + $0x50] sm:$0xff]
        %v2077 = vld [vmem:[#allocation2 + $0x58] sm:$0xff]
        %v2078 = vld [vmem:[#allocation2 + $0x60] sm:$0xff]
        %v2079 = vld [vmem:[#allocation2 + $0x68] sm:$0xff]
        %v2080 = vld [vmem:[#allocation2 + $0x70] sm:$0xff]
        %v2081 = vld [vmem:[#allocation2 + $0x78] sm:$0xff]
        %v2082 = vld [vmem:[#allocation2 + $0x80] sm:$0xff]
        %v2083 = vld [vmem:[#allocation2 + $0x88] sm:$0xff]
        %v2084 = vld [vmem:[#allocation2 + $0x90] sm:$0xff]
        %v2085 = vld [vmem:[#allocation2 + $0x98] sm:$0xff]
        %v2086 = vld [vmem:[#allocation2 + $0xa0] sm:$0xff]
        %v2087 = vld [vmem:[#allocation2 + $0xa8] sm:$0xff]
        %v2088 = vld [vmem:[#allocation2 + $0xb0] sm:$0xff]
        %v2089 = vld [vmem:[#allocation2 + $0xb8] sm:$0xff]
        %v2090 = vld [vmem:[#allocation2 + $0xc0] sm:$0xff]
        %v2091 = vld [vmem:[#allocation2 + $0xc8] sm:$0xff]
        %v2092 = vld [vmem:[#allocation2 + $0xd0] sm:$0xff]
        %v2093 = vld [vmem:[#allocation2 + $0xd8] sm:$0xff]
        %v2094 = vld [vmem:[#allocation2 + $0xe0] sm:$0xff]
        %v2095 = vld [vmem:[#allocation2 + $0xe8] sm:$0xff]
        %v2096 = vld [vmem:[#allocation2 + $0xf0] sm:$0xff]
        %v2097 = vld [vmem:[#allocation2 + $0xf8] sm:$0xff]
        %2098 = vmatprep.subr.bf16.mxu0 %v2067
        %2099 = vmatpush1.bf16.msra.mxu0 %v2066
        %2100 = vmatprep.subr.bf16.mxu0 %v2071
        %2101 = vmatpush1.bf16.msra.mxu0 %v2070
        %2102 = vmatprep.subr.bf16.mxu0 %v2075
        %2103 = vmatpush1.bf16.msra.mxu0 %v2074
        %2104 = vmatprep.subr.bf16.mxu0 %v2079
        %2105 = vmatpush1.bf16.msra.mxu0 %v2078
        %2106 = vmatprep.subr.bf16.mxu0 %v2083
        %2107 = vmatpush1.bf16.msra.mxu0 %v2082
        %2108 = vmatprep.subr.bf16.mxu0 %v2087
        %2109 = vmatpush1.bf16.msra.mxu0 %v2086
        %2110 = vmatprep.subr.bf16.mxu0 %v2091
        %2111 = vmatpush1.bf16.msra.mxu0 %v2090
        %2112 = vmatprep.subr.bf16.mxu0 %v2095
        %2113 = vmatpush1.bf16.msra.mxu0 %v2094
        %2114 = vmatprep.subr.bf16.mxu0 0
        %2115 = vmatpush1.bf16.msra.mxu0 0
        %2116 = vmatprep.subr.bf16.mxu0 0
        %2117 = vmatpush1.bf16.msra.mxu0 0
        %2118 = vmatprep.subr.bf16.mxu0 0
        %2119 = vmatpush1.bf16.msra.mxu0 0
        %2120 = vmatprep.subr.bf16.mxu0 0
        %2121 = vmatpush1.bf16.msra.mxu0 0
        %2122 = vmatprep.subr.bf16.mxu0 0
        %2123 = vmatpush1.bf16.msra.mxu0 0
        %2124 = vmatprep.subr.bf16.mxu0 0
        %2125 = vmatpush1.bf16.msra.mxu0 0
        %2126 = vmatprep.subr.bf16.mxu0 0
        %2127 = vmatpush1.bf16.msra.mxu0 0
        %2128 = vmatprep.subr.bf16.mxu0 0
        %2129 = vmatpush1.bf16.msra.mxu0 0
        %2130 = vmatprep.mubr.bf16.mxu0 0
        %2131 = vmatmul.mubr.bf16.gmra.mrb[0].mxu0 %v2065
        %v2132 = vpop.f32.mrb[0].mxu0
        %v2133 = vadd.f32 0.0, %v2132
        %v2134 = vpop.f32.mrb[0].mxu0
        %v2135 = vadd.f32 0.0, %v2134
        %v2136 = vpop.f32.mrb[0].mxu0
        %v2137 = vpop.f32.mrb[0].mxu0
        %2138 = vdwg.mxu0
        %2139 = vmatprep.subr.bf16.mxu0 %v2069
        %2140 = vmatpush1.bf16.msra.mxu0 %v2068
        %2141 = vmatprep.subr.bf16.mxu0 %v2073
        %2142 = vmatpush1.bf16.msra.mxu0 %v2072
        %2143 = vmatprep.subr.bf16.mxu0 %v2077
        %2144 = vmatpush1.bf16.msra.mxu0 %v2076
        %2145 = vmatprep.subr.bf16.mxu0 %v2081
        %2146 = vmatpush1.bf16.msra.mxu0 %v2080
        %2147 = vmatprep.subr.bf16.mxu0 %v2085
        %2148 = vmatpush1.bf16.msra.mxu0 %v2084
        %2149 = vmatprep.subr.bf16.mxu0 %v2089
        %2150 = vmatpush1.bf16.msra.mxu0 %v2088
        %2151 = vmatprep.subr.bf16.mxu0 %v2093
        %2152 = vmatpush1.bf16.msra.mxu0 %v2092
        %2153 = vmatprep.subr.bf16.mxu0 %v2097
        %2154 = vmatpush1.bf16.msra.mxu0 %v2096
        %2155 = vmatprep.subr.bf16.mxu0 0
        %2156 = vmatpush1.bf16.msra.mxu0 0
        %2157 = vmatprep.subr.bf16.mxu0 0
        %2158 = vmatpush1.bf16.msra.mxu0 0
        %2159 = vmatprep.subr.bf16.mxu0 0
        %2160 = vmatpush1.bf16.msra.mxu0 0
        %2161 = vmatprep.subr.bf16.mxu0 0
        %2162 = vmatpush1.bf16.msra.mxu0 0
        %2163 = vmatprep.subr.bf16.mxu0 0
        %2164 = vmatpush1.bf16.msra.mxu0 0
        %2165 = vmatprep.subr.bf16.mxu0 0
        %2166 = vmatpush1.bf16.msra.mxu0 0
        %2167 = vmatprep.subr.bf16.mxu0 0
        %2168 = vmatpush1.bf16.msra.mxu0 0
        %2169 = vmatprep.subr.bf16.mxu0 0
        %2170 = vmatpush1.bf16.msra.mxu0 0
        %2171 = vmatprep.mubr.bf16.mxu0 0
        %2172 = vmatmul.mubr.bf16.gmra.mrb[0].mxu0 %v2065
        %v2173 = vpop.f32.mrb[0].mxu0
        %v2174 = vadd.f32 0.0, %v2173
        %v2175 = vpop.f32.mrb[0].mxu0
        %v2176 = vadd.f32 0.0, %v2175
        %v2177 = vpop.f32.mrb[0].mxu0
        %v2178 = vpop.f32.mrb[0].mxu0
        %2179 = vdwg.mxu0
        %v2180 = vadd.f32 %v2061, %v2133
        %v2181 = vadd.f32 %v2062, %v2135
        %v2182 = vadd.f32 %v2063, %v2174
        %v2183 = vadd.f32 %v2064, %v2176
        %s2184 = scalar_lea.vmem %s215, 144 [#allocation11]
        %v2185 = vld [vmem:[%s2184] sm:$0xff]
        %v2186 = vld [vmem:[%s2184 + $0x8] sm:$0xff]
        %v2187 = vunpack.c.l.bf16 %v2185
        %v2188 = vunpack.c.h.bf16 %v2185
        %v2189 = vunpack.c.l.bf16 %v2186
        %v2190 = vunpack.c.h.bf16 %v2186
        %v2191 = vpack.c.bf16 %v2053, %v2053
        %v2192 = vld [vmem:[%s440] sm:$0xff]
        %v2193 = vld [vmem:[%s440 + $0x8] sm:$0xff]
        %v2194 = vld [vmem:[%s440 + $0x10] sm:$0xff]
        %v2195 = vld [vmem:[%s440 + $0x18] sm:$0xff]
        %v2196 = vld [vmem:[%s440 + $0x20] sm:$0xff]
        %v2197 = vld [vmem:[%s440 + $0x28] sm:$0xff]
        %v2198 = vld [vmem:[%s440 + $0x30] sm:$0xff]
        %v2199 = vld [vmem:[%s440 + $0x38] sm:$0xff]
        %v2200 = vld [vmem:[%s440 + $0x40] sm:$0xff]
        %v2201 = vld [vmem:[%s440 + $0x48] sm:$0xff]
        %v2202 = vld [vmem:[%s440 + $0x50] sm:$0xff]
        %v2203 = vld [vmem:[%s440 + $0x58] sm:$0xff]
        %v2204 = vld [vmem:[%s440 + $0x60] sm:$0xff]
        %v2205 = vld [vmem:[%s440 + $0x68] sm:$0xff]
        %v2206 = vld [vmem:[%s440 + $0x70] sm:$0xff]
        %v2207 = vld [vmem:[%s440 + $0x78] sm:$0xff]
        %v2208 = vld [vmem:[%s440 + $0x80] sm:$0xff]
        %v2209 = vld [vmem:[%s440 + $0x88] sm:$0xff]
        %v2210 = vld [vmem:[%s440 + $0x90] sm:$0xff]
        %v2211 = vld [vmem:[%s440 + $0x98] sm:$0xff]
        %v2212 = vld [vmem:[%s440 + $0xa0] sm:$0xff]
        %v2213 = vld [vmem:[%s440 + $0xa8] sm:$0xff]
        %v2214 = vld [vmem:[%s440 + $0xb0] sm:$0xff]
        %v2215 = vld [vmem:[%s440 + $0xb8] sm:$0xff]
        %v2216 = vld [vmem:[%s440 + $0xc0] sm:$0xff]
        %v2217 = vld [vmem:[%s440 + $0xc8] sm:$0xff]
        %v2218 = vld [vmem:[%s440 + $0xd0] sm:$0xff]
        %v2219 = vld [vmem:[%s440 + $0xd8] sm:$0xff]
        %v2220 = vld [vmem:[%s440 + $0xe0] sm:$0xff]
        %v2221 = vld [vmem:[%s440 + $0xe8] sm:$0xff]
        %v2222 = vld [vmem:[%s440 + $0xf0] sm:$0xff]
        %v2223 = vld [vmem:[%s440 + $0xf8] sm:$0xff]
        %2224 = vmatprep.subr.bf16.mxu0 %v2193
        %2225 = vmatpush1.bf16.msra.mxu0 %v2192
        %2226 = vmatprep.subr.bf16.mxu0 %v2197
        %2227 = vmatpush1.bf16.msra.mxu0 %v2196
        %2228 = vmatprep.subr.bf16.mxu0 %v2201
        %2229 = vmatpush1.bf16.msra.mxu0 %v2200
        %2230 = vmatprep.subr.bf16.mxu0 %v2205
        %2231 = vmatpush1.bf16.msra.mxu0 %v2204
        %2232 = vmatprep.subr.bf16.mxu0 %v2209
        %2233 = vmatpush1.bf16.msra.mxu0 %v2208
        %2234 = vmatprep.subr.bf16.mxu0 %v2213
        %2235 = vmatpush1.bf16.msra.mxu0 %v2212
        %2236 = vmatprep.subr.bf16.mxu0 %v2217
        %2237 = vmatpush1.bf16.msra.mxu0 %v2216
        %2238 = vmatprep.subr.bf16.mxu0 %v2221
        %2239 = vmatpush1.bf16.msra.mxu0 %v2220
        %2240 = vmatprep.subr.bf16.mxu0 0
        %2241 = vmatpush1.bf16.msra.mxu0 0
        %2242 = vmatprep.subr.bf16.mxu0 0
        %2243 = vmatpush1.bf16.msra.mxu0 0
        %2244 = vmatprep.subr.bf16.mxu0 0
        %2245 = vmatpush1.bf16.msra.mxu0 0
        %2246 = vmatprep.subr.bf16.mxu0 0
        %2247 = vmatpush1.bf16.msra.mxu0 0
        %2248 = vmatprep.subr.bf16.mxu0 0
        %2249 = vmatpush1.bf16.msra.mxu0 0
        %2250 = vmatprep.subr.bf16.mxu0 0
        %2251 = vmatpush1.bf16.msra.mxu0 0
        %2252 = vmatprep.subr.bf16.mxu0 0
        %2253 = vmatpush1.bf16.msra.mxu0 0
        %2254 = vmatprep.subr.bf16.mxu0 0
        %2255 = vmatpush1.bf16.msra.mxu0 0
        %2256 = vmatprep.mubr.bf16.mxu0 0
        %2257 = vmatmul.mubr.bf16.gmra.mrb[0].mxu0 %v2191
        %v2258 = vpop.f32.mrb[0].mxu0
        %v2259 = vadd.f32 0.0, %v2258
        %v2260 = vpop.f32.mrb[0].mxu0
        %v2261 = vadd.f32 0.0, %v2260
        %v2262 = vpop.f32.mrb[0].mxu0
        %v2263 = vpop.f32.mrb[0].mxu0
        %2264 = vdwg.mxu0
        %2265 = vmatprep.subr.bf16.mxu0 %v2195
        %2266 = vmatpush1.bf16.msra.mxu0 %v2194
        %2267 = vmatprep.subr.bf16.mxu0 %v2199
        %2268 = vmatpush1.bf16.msra.mxu0 %v2198
        %2269 = vmatprep.subr.bf16.mxu0 %v2203
        %2270 = vmatpush1.bf16.msra.mxu0 %v2202
        %2271 = vmatprep.subr.bf16.mxu0 %v2207
        %2272 = vmatpush1.bf16.msra.mxu0 %v2206
        %2273 = vmatprep.subr.bf16.mxu0 %v2211
        %2274 = vmatpush1.bf16.msra.mxu0 %v2210
        %2275 = vmatprep.subr.bf16.mxu0 %v2215
        %2276 = vmatpush1.bf16.msra.mxu0 %v2214
        %2277 = vmatprep.subr.bf16.mxu0 %v2219
        %2278 = vmatpush1.bf16.msra.mxu0 %v2218
        %2279 = vmatprep.subr.bf16.mxu0 %v2223
        %2280 = vmatpush1.bf16.msra.mxu0 %v2222
        %2281 = vmatprep.subr.bf16.mxu0 0
        %2282 = vmatpush1.bf16.msra.mxu0 0
        %2283 = vmatprep.subr.bf16.mxu0 0
        %2284 = vmatpush1.bf16.msra.mxu0 0
        %2285 = vmatprep.subr.bf16.mxu0 0
        %2286 = vmatpush1.bf16.msra.mxu0 0
        %2287 = vmatprep.subr.bf16.mxu0 0
        %2288 = vmatpush1.bf16.msra.mxu0 0
        %2289 = vmatprep.subr.bf16.mxu0 0
        %2290 = vmatpush1.bf16.msra.mxu0 0
        %2291 = vmatprep.subr.bf16.mxu0 0
        %2292 = vmatpush1.bf16.msra.mxu0 0
        %2293 = vmatprep.subr.bf16.mxu0 0
        %2294 = vmatpush1.bf16.msra.mxu0 0
        %2295 = vmatprep.subr.bf16.mxu0 0
        %2296 = vmatpush1.bf16.msra.mxu0 0
        %2297 = vmatprep.mubr.bf16.mxu0 0
        %2298 = vmatmul.mubr.bf16.gmra.mrb[0].mxu0 %v2191
        %v2299 = vpop.f32.mrb[0].mxu0
        %v2300 = vadd.f32 0.0, %v2299
        %v2301 = vpop.f32.mrb[0].mxu0
        %v2302 = vadd.f32 0.0, %v2301
        %v2303 = vpop.f32.mrb[0].mxu0
        %v2304 = vpop.f32.mrb[0].mxu0
        %2305 = vdwg.mxu0
        %v2306 = vadd.f32 %v2187, %v2259
        %v2307 = vadd.f32 %v2188, %v2261
        %v2308 = vadd.f32 %v2189, %v2300
        %v2309 = vadd.f32 %v2190, %v2302
        %v2310 = vmul.f32 %v2180, 0.5
        %v2311 = vtanh.pop %v2310
        %v2312 = vmul.f32 %v2311, 0.5
        %v2313 = vadd.f32 %v2312, 0.5
        %v2314 = vmul.f32 %v2181, 0.5
        %v2315 = vtanh.pop %v2314
        %v2316 = vmul.f32 %v2315, 0.5
        %v2317 = vadd.f32 %v2316, 0.5
        %v2318 = vtanh.pop %v2182
        %v2319 = vmul.f32 %v2183, 0.5
        %v2320 = vtanh.pop %v2319
        %v2321 = vmul.f32 %v2320, 0.5
        %v2322 = vadd.f32 %v2321, 0.5
        %v2323 = vmul.f32 %v2317, %v2033
        %v2324 = vmul.f32 %v2313, %v2318
        %v2325 = vadd.f32 %v2323, %v2324
        %v2326 = vtanh.pop %v2325
        %v2327 = vmul.f32 %v2322, %v2326
        %v2328 = vmul.f32 %v2306, 0.5
        %v2329 = vtanh.pop %v2328
        %v2330 = vmul.f32 %v2329, 0.5
        %v2331 = vadd.f32 %v2330, 0.5
        %v2332 = vmul.f32 %v2307, 0.5
        %v2333 = vtanh.pop %v2332
        %v2334 = vmul.f32 %v2333, 0.5
        %v2335 = vadd.f32 %v2334, 0.5
        %v2336 = vtanh.pop %v2308
        %v2337 = vmul.f32 %v2309, 0.5
        %v2338 = vtanh.pop %v2337
        %v2339 = vmul.f32 %v2338, 0.5
        %v2340 = vadd.f32 %v2339, 0.5
        %v2341 = vmul.f32 %v2335, %v2051
        %v2342 = vmul.f32 %v2331, %v2336
        %v2343 = vadd.f32 %v2341, %v2342
        %v2344 = vtanh.pop %v2343
        %v2345 = vmul.f32 %v2340, %v2344
        %s2346 = scalar_lea.vmem %s240, 48 [#allocation13]
        %2347 = vst [vmem:[%s2346] sm:$0xff] %v2327
        %s2348 = scalar_lea.vmem %s247, 72 [#allocation14]
        %2349 = vst [vmem:[%s2348] sm:$0xff] %v2345
        %s2350 = scalar_lea.vmem %s206, 112 [#allocation8]
        %v2351 = vld [vmem:[%s2350] sm:$0xff]
        %v2352 = vld [vmem:[%s2350 + $0x8] sm:$0xff]
        %v2353 = vunpack.c.l.bf16 %v2351
        %v2354 = vunpack.c.h.bf16 %v2351
        %v2355 = vunpack.c.l.bf16 %v2352
        %v2356 = vunpack.c.h.bf16 %v2352
        %v2357 = vpack.c.bf16 %v2327, %v2327
        %v2358 = vld [vmem:[#allocation2] sm:$0xff]
        %v2359 = vld [vmem:[#allocation2 + $0x8] sm:$0xff]
        %v2360 = vld [vmem:[#allocation2 + $0x10] sm:$0xff]
        %v2361 = vld [vmem:[#allocation2 + $0x18] sm:$0xff]
        %v2362 = vld [vmem:[#allocation2 + $0x20] sm:$0xff]
        %v2363 = vld [vmem:[#allocation2 + $0x28] sm:$0xff]
        %v2364 = vld [vmem:[#allocation2 + $0x30] sm:$0xff]
        %v2365 = vld [vmem:[#allocation2 + $0x38] sm:$0xff]
        %v2366 = vld [vmem:[#allocation2 + $0x40] sm:$0xff]
        %v2367 = vld [vmem:[#allocation2 + $0x48] sm:$0xff]
        %v2368 = vld [vmem:[#allocation2 + $0x50] sm:$0xff]
        %v2369 = vld [vmem:[#allocation2 + $0x58] sm:$0xff]
        %v2370 = vld [vmem:[#allocation2 + $0x60] sm:$0xff]
        %v2371 = vld [vmem:[#allocation2 + $0x68] sm:$0xff]
        %v2372 = vld [vmem:[#allocation2 + $0x70] sm:$0xff]
        %v2373 = vld [vmem:[#allocation2 + $0x78] sm:$0xff]
        %v2374 = vld [vmem:[#allocation2 + $0x80] sm:$0xff]
        %v2375 = vld [vmem:[#allocation2 + $0x88] sm:$0xff]
        %v2376 = vld [vmem:[#allocation2 + $0x90] sm:$0xff]
        %v2377 = vld [vmem:[#allocation2 + $0x98] sm:$0xff]
        %v2378 = vld [vmem:[#allocation2 + $0xa0] sm:$0xff]
        %v2379 = vld [vmem:[#allocation2 + $0xa8] sm:$0xff]
        %v2380 = vld [vmem:[#allocation2 + $0xb0] sm:$0xff]
        %v2381 = vld [vmem:[#allocation2 + $0xb8] sm:$0xff]
        %v2382 = vld [vmem:[#allocation2 + $0xc0] sm:$0xff]
        %v2383 = vld [vmem:[#allocation2 + $0xc8] sm:$0xff]
        %v2384 = vld [vmem:[#allocation2 + $0xd0] sm:$0xff]
        %v2385 = vld [vmem:[#allocation2 + $0xd8] sm:$0xff]
        %v2386 = vld [vmem:[#allocation2 + $0xe0] sm:$0xff]
        %v2387 = vld [vmem:[#allocation2 + $0xe8] sm:$0xff]
        %v2388 = vld [vmem:[#allocation2 + $0xf0] sm:$0xff]
        %v2389 = vld [vmem:[#allocation2 + $0xf8] sm:$0xff]
        %2390 = vmatprep.subr.bf16.mxu0 %v2359
        %2391 = vmatpush1.bf16.msra.mxu0 %v2358
        %2392 = vmatprep.subr.bf16.mxu0 %v2363
        %2393 = vmatpush1.bf16.msra.mxu0 %v2362
        %2394 = vmatprep.subr.bf16.mxu0 %v2367
        %2395 = vmatpush1.bf16.msra.mxu0 %v2366
        %2396 = vmatprep.subr.bf16.mxu0 %v2371
        %2397 = vmatpush1.bf16.msra.mxu0 %v2370
        %2398 = vmatprep.subr.bf16.mxu0 %v2375
        %2399 = vmatpush1.bf16.msra.mxu0 %v2374
        %2400 = vmatprep.subr.bf16.mxu0 %v2379
        %2401 = vmatpush1.bf16.msra.mxu0 %v2378
        %2402 = vmatprep.subr.bf16.mxu0 %v2383
        %2403 = vmatpush1.bf16.msra.mxu0 %v2382
        %2404 = vmatprep.subr.bf16.mxu0 %v2387
        %2405 = vmatpush1.bf16.msra.mxu0 %v2386
        %2406 = vmatprep.subr.bf16.mxu0 0
        %2407 = vmatpush1.bf16.msra.mxu0 0
        %2408 = vmatprep.subr.bf16.mxu0 0
        %2409 = vmatpush1.bf16.msra.mxu0 0
        %2410 = vmatprep.subr.bf16.mxu0 0
        %2411 = vmatpush1.bf16.msra.mxu0 0
        %2412 = vmatprep.subr.bf16.mxu0 0
        %2413 = vmatpush1.bf16.msra.mxu0 0
        %2414 = vmatprep.subr.bf16.mxu0 0
        %2415 = vmatpush1.bf16.msra.mxu0 0
        %2416 = vmatprep.subr.bf16.mxu0 0
        %2417 = vmatpush1.bf16.msra.mxu0 0
        %2418 = vmatprep.subr.bf16.mxu0 0
        %2419 = vmatpush1.bf16.msra.mxu0 0
        %2420 = vmatprep.subr.bf16.mxu0 0
        %2421 = vmatpush1.bf16.msra.mxu0 0
        %2422 = vmatprep.mubr.bf16.mxu0 0
        %2423 = vmatmul.mubr.bf16.gmra.mrb[0].mxu0 %v2357
        %v2424 = vpop.f32.mrb[0].mxu0
        %v2425 = vadd.f32 0.0, %v2424
        %v2426 = vpop.f32.mrb[0].mxu0
        %v2427 = vadd.f32 0.0, %v2426
        %v2428 = vpop.f32.mrb[0].mxu0
        %v2429 = vpop.f32.mrb[0].mxu0
        %2430 = vdwg.mxu0
        %2431 = vmatprep.subr.bf16.mxu0 %v2361
        %2432 = vmatpush1.bf16.msra.mxu0 %v2360
        %2433 = vmatprep.subr.bf16.mxu0 %v2365
        %2434 = vmatpush1.bf16.msra.mxu0 %v2364
        %2435 = vmatprep.subr.bf16.mxu0 %v2369
        %2436 = vmatpush1.bf16.msra.mxu0 %v2368
        %2437 = vmatprep.subr.bf16.mxu0 %v2373
        %2438 = vmatpush1.bf16.msra.mxu0 %v2372
        %2439 = vmatprep.subr.bf16.mxu0 %v2377
        %2440 = vmatpush1.bf16.msra.mxu0 %v2376
        %2441 = vmatprep.subr.bf16.mxu0 %v2381
        %2442 = vmatpush1.bf16.msra.mxu0 %v2380
        %2443 = vmatprep.subr.bf16.mxu0 %v2385
        %2444 = vmatpush1.bf16.msra.mxu0 %v2384
        %2445 = vmatprep.subr.bf16.mxu0 %v2389
        %2446 = vmatpush1.bf16.msra.mxu0 %v2388
        %2447 = vmatprep.subr.bf16.mxu0 0
        %2448 = vmatpush1.bf16.msra.mxu0 0
        %2449 = vmatprep.subr.bf16.mxu0 0
        %2450 = vmatpush1.bf16.msra.mxu0 0
        %2451 = vmatprep.subr.bf16.mxu0 0
        %2452 = vmatpush1.bf16.msra.mxu0 0
        %2453 = vmatprep.subr.bf16.mxu0 0
        %2454 = vmatpush1.bf16.msra.mxu0 0
        %2455 = vmatprep.subr.bf16.mxu0 0
        %2456 = vmatpush1.bf16.msra.mxu0 0
        %2457 = vmatprep.subr.bf16.mxu0 0
        %2458 = vmatpush1.bf16.msra.mxu0 0
        %2459 = vmatprep.subr.bf16.mxu0 0
        %2460 = vmatpush1.bf16.msra.mxu0 0
        %2461 = vmatprep.subr.bf16.mxu0 0
        %2462 = vmatpush1.bf16.msra.mxu0 0
        %2463 = vmatprep.mubr.bf16.mxu0 0
        %2464 = vmatmul.mubr.bf16.gmra.mrb[0].mxu0 %v2357
        %v2465 = vpop.f32.mrb[0].mxu0
        %v2466 = vadd.f32 0.0, %v2465
        %v2467 = vpop.f32.mrb[0].mxu0
        %v2468 = vadd.f32 0.0, %v2467
        %v2469 = vpop.f32.mrb[0].mxu0
        %v2470 = vpop.f32.mrb[0].mxu0
        %2471 = vdwg.mxu0
        %v2472 = vadd.f32 %v2353, %v2425
        %v2473 = vadd.f32 %v2354, %v2427
        %v2474 = vadd.f32 %v2355, %v2466
        %v2475 = vadd.f32 %v2356, %v2468
        %s2476 = scalar_lea.vmem %s215, 128 [#allocation11]
        %v2477 = vld [vmem:[%s2476] sm:$0xff]
        %v2478 = vld [vmem:[%s2476 + $0x8] sm:$0xff]
        %v2479 = vunpack.c.l.bf16 %v2477
        %v2480 = vunpack.c.h.bf16 %v2477
        %v2481 = vunpack.c.l.bf16 %v2478
        %v2482 = vunpack.c.h.bf16 %v2478
        %v2483 = vpack.c.bf16 %v2345, %v2345
        %v2484 = vld [vmem:[%s440] sm:$0xff]
        %v2485 = vld [vmem:[%s440 + $0x8] sm:$0xff]
        %v2486 = vld [vmem:[%s440 + $0x10] sm:$0xff]
        %v2487 = vld [vmem:[%s440 + $0x18] sm:$0xff]
        %v2488 = vld [vmem:[%s440 + $0x20] sm:$0xff]
        %v2489 = vld [vmem:[%s440 + $0x28] sm:$0xff]
        %v2490 = vld [vmem:[%s440 + $0x30] sm:$0xff]
        %v2491 = vld [vmem:[%s440 + $0x38] sm:$0xff]
        %v2492 = vld [vmem:[%s440 + $0x40] sm:$0xff]
        %v2493 = vld [vmem:[%s440 + $0x48] sm:$0xff]
        %v2494 = vld [vmem:[%s440 + $0x50] sm:$0xff]
        %v2495 = vld [vmem:[%s440 + $0x58] sm:$0xff]
        %v2496 = vld [vmem:[%s440 + $0x60] sm:$0xff]
        %v2497 = vld [vmem:[%s440 + $0x68] sm:$0xff]
        %v2498 = vld [vmem:[%s440 + $0x70] sm:$0xff]
        %v2499 = vld [vmem:[%s440 + $0x78] sm:$0xff]
        %v2500 = vld [vmem:[%s440 + $0x80] sm:$0xff]
        %v2501 = vld [vmem:[%s440 + $0x88] sm:$0xff]
        %v2502 = vld [vmem:[%s440 + $0x90] sm:$0xff]
        %v2503 = vld [vmem:[%s440 + $0x98] sm:$0xff]
        %v2504 = vld [vmem:[%s440 + $0xa0] sm:$0xff]
        %v2505 = vld [vmem:[%s440 + $0xa8] sm:$0xff]
        %v2506 = vld [vmem:[%s440 + $0xb0] sm:$0xff]
        %v2507 = vld [vmem:[%s440 + $0xb8] sm:$0xff]
        %v2508 = vld [vmem:[%s440 + $0xc0] sm:$0xff]
        %v2509 = vld [vmem:[%s440 + $0xc8] sm:$0xff]
        %v2510 = vld [vmem:[%s440 + $0xd0] sm:$0xff]
        %v2511 = vld [vmem:[%s440 + $0xd8] sm:$0xff]
        %v2512 = vld [vmem:[%s440 + $0xe0] sm:$0xff]
        %v2513 = vld [vmem:[%s440 + $0xe8] sm:$0xff]
        %v2514 = vld [vmem:[%s440 + $0xf0] sm:$0xff]
        %v2515 = vld [vmem:[%s440 + $0xf8] sm:$0xff]
        %2516 = vmatprep.subr.bf16.mxu0 %v2485
        %2517 = vmatpush1.bf16.msra.mxu0 %v2484
        %2518 = vmatprep.subr.bf16.mxu0 %v2489
        %2519 = vmatpush1.bf16.msra.mxu0 %v2488
        %2520 = vmatprep.subr.bf16.mxu0 %v2493
        %2521 = vmatpush1.bf16.msra.mxu0 %v2492
        %2522 = vmatprep.subr.bf16.mxu0 %v2497
        %2523 = vmatpush1.bf16.msra.mxu0 %v2496
        %2524 = vmatprep.subr.bf16.mxu0 %v2501
        %2525 = vmatpush1.bf16.msra.mxu0 %v2500
        %2526 = vmatprep.subr.bf16.mxu0 %v2505
        %2527 = vmatpush1.bf16.msra.mxu0 %v2504
        %2528 = vmatprep.subr.bf16.mxu0 %v2509
        %2529 = vmatpush1.bf16.msra.mxu0 %v2508
        %2530 = vmatprep.subr.bf16.mxu0 %v2513
        %2531 = vmatpush1.bf16.msra.mxu0 %v2512
        %2532 = vmatprep.subr.bf16.mxu0 0
        %2533 = vmatpush1.bf16.msra.mxu0 0
        %2534 = vmatprep.subr.bf16.mxu0 0
        %2535 = vmatpush1.bf16.msra.mxu0 0
        %2536 = vmatprep.subr.bf16.mxu0 0
        %2537 = vmatpush1.bf16.msra.mxu0 0
        %2538 = vmatprep.subr.bf16.mxu0 0
        %2539 = vmatpush1.bf16.msra.mxu0 0
        %2540 = vmatprep.subr.bf16.mxu0 0
        %2541 = vmatpush1.bf16.msra.mxu0 0
        %2542 = vmatprep.subr.bf16.mxu0 0
        %2543 = vmatpush1.bf16.msra.mxu0 0
        %2544 = vmatprep.subr.bf16.mxu0 0
        %2545 = vmatpush1.bf16.msra.mxu0 0
        %2546 = vmatprep.subr.bf16.mxu0 0
        %2547 = vmatpush1.bf16.msra.mxu0 0
        %2548 = vmatprep.mubr.bf16.mxu0 0
        %2549 = vmatmul.mubr.bf16.gmra.mrb[0].mxu0 %v2483
        %v2550 = vpop.f32.mrb[0].mxu0
        %v2551 = vadd.f32 0.0, %v2550
        %v2552 = vpop.f32.mrb[0].mxu0
        %v2553 = vadd.f32 0.0, %v2552
        %v2554 = vpop.f32.mrb[0].mxu0
        %v2555 = vpop.f32.mrb[0].mxu0
        %2556 = vdwg.mxu0
        %2557 = vmatprep.subr.bf16.mxu0 %v2487
        %2558 = vmatpush1.bf16.msra.mxu0 %v2486
        %2559 = vmatprep.subr.bf16.mxu0 %v2491
        %2560 = vmatpush1.bf16.msra.mxu0 %v2490
        %2561 = vmatprep.subr.bf16.mxu0 %v2495
        %2562 = vmatpush1.bf16.msra.mxu0 %v2494
        %2563 = vmatprep.subr.bf16.mxu0 %v2499
        %2564 = vmatpush1.bf16.msra.mxu0 %v2498
        %2565 = vmatprep.subr.bf16.mxu0 %v2503
        %2566 = vmatpush1.bf16.msra.mxu0 %v2502
        %2567 = vmatprep.subr.bf16.mxu0 %v2507
        %2568 = vmatpush1.bf16.msra.mxu0 %v2506
        %2569 = vmatprep.subr.bf16.mxu0 %v2511
        %2570 = vmatpush1.bf16.msra.mxu0 %v2510
        %2571 = vmatprep.subr.bf16.mxu0 %v2515
        %2572 = vmatpush1.bf16.msra.mxu0 %v2514
        %2573 = vmatprep.subr.bf16.mxu0 0
        %2574 = vmatpush1.bf16.msra.mxu0 0
        %2575 = vmatprep.subr.bf16.mxu0 0
        %2576 = vmatpush1.bf16.msra.mxu0 0
        %2577 = vmatprep.subr.bf16.mxu0 0
        %2578 = vmatpush1.bf16.msra.mxu0 0
        %2579 = vmatprep.subr.bf16.mxu0 0
        %2580 = vmatpush1.bf16.msra.mxu0 0
        %2581 = vmatprep.subr.bf16.mxu0 0
        %2582 = vmatpush1.bf16.msra.mxu0 0
        %2583 = vmatprep.subr.bf16.mxu0 0
        %2584 = vmatpush1.bf16.msra.mxu0 0
        %2585 = vmatprep.subr.bf16.mxu0 0
        %2586 = vmatpush1.bf16.msra.mxu0 0
        %2587 = vmatprep.subr.bf16.mxu0 0
        %2588 = vmatpush1.bf16.msra.mxu0 0
        %2589 = vmatprep.mubr.bf16.mxu0 0
        %2590 = vmatmul.mubr.bf16.gmra.mrb[0].mxu0 %v2483
        %v2591 = vpop.f32.mrb[0].mxu0
        %v2592 = vadd.f32 0.0, %v2591
        %v2593 = vpop.f32.mrb[0].mxu0
        %v2594 = vadd.f32 0.0, %v2593
        %v2595 = vpop.f32.mrb[0].mxu0
        %v2596 = vpop.f32.mrb[0].mxu0
        %2597 = vdwg.mxu0
        %v2598 = vadd.f32 %v2479, %v2551
        %v2599 = vadd.f32 %v2480, %v2553
        %v2600 = vadd.f32 %v2481, %v2592
        %v2601 = vadd.f32 %v2482, %v2594
        %v2602 = vmul.f32 %v2472, 0.5
        %v2603 = vtanh.pop %v2602
        %v2604 = vmul.f32 %v2603, 0.5
        %v2605 = vadd.f32 %v2604, 0.5
        %v2606 = vmul.f32 %v2473, 0.5
        %v2607 = vtanh.pop %v2606
        %v2608 = vmul.f32 %v2607, 0.5
        %v2609 = vadd.f32 %v2608, 0.5
        %v2610 = vtanh.pop %v2474
        %v2611 = vmul.f32 %v2475, 0.5
        %v2612 = vtanh.pop %v2611
        %v2613 = vmul.f32 %v2612, 0.5
        %v2614 = vadd.f32 %v2613, 0.5
        %v2615 = vmul.f32 %v2609, %v2325
        %v2616 = vmul.f32 %v2605, %v2610
        %v2617 = vadd.f32 %v2615, %v2616
        %v2618 = vtanh.pop %v2617
        %v2619 = vmul.f32 %v2614, %v2618
        %v2620 = vmul.f32 %v2598, 0.5
        %v2621 = vtanh.pop %v2620
        %v2622 = vmul.f32 %v2621, 0.5
        %v2623 = vadd.f32 %v2622, 0.5
        %v2624 = vmul.f32 %v2599, 0.5
        %v2625 = vtanh.pop %v2624
        %v2626 = vmul.f32 %v2625, 0.5
        %v2627 = vadd.f32 %v2626, 0.5
        %v2628 = vtanh.pop %v2600
        %v2629 = vmul.f32 %v2601, 0.5
        %v2630 = vtanh.pop %v2629
        %v2631 = vmul.f32 %v2630, 0.5
        %v2632 = vadd.f32 %v2631, 0.5
        %v2633 = vmul.f32 %v2627, %v2343
        %v2634 = vmul.f32 %v2623, %v2628
        %v2635 = vadd.f32 %v2633, %v2634
        %v2636 = vtanh.pop %v2635
        %v2637 = vmul.f32 %v2632, %v2636
        %s2638 = scalar_lea.vmem %s240, 56 [#allocation13]
        %2639 = vst [vmem:[%s2638] sm:$0xff] %v2619
        %s2640 = scalar_lea.vmem %s247, 64 [#allocation14]
        %2641 = vst [vmem:[%s2640] sm:$0xff] %v2637
        %s2642 = scalar_lea.vmem %s206, 128 [#allocation8]
        %v2643 = vld [vmem:[%s2642] sm:$0xff]
        %v2644 = vld [vmem:[%s2642 + $0x8] sm:$0xff]
        %v2645 = vunpack.c.l.bf16 %v2643
        %v2646 = vunpack.c.h.bf16 %v2643
        %v2647 = vunpack.c.l.bf16 %v2644
        %v2648 = vunpack.c.h.bf16 %v2644
        %v2649 = vpack.c.bf16 %v2619, %v2619
        %v2650 = vld [vmem:[#allocation2] sm:$0xff]
        %v2651 = vld [vmem:[#allocation2 + $0x8] sm:$0xff]
        %v2652 = vld [vmem:[#allocation2 + $0x10] sm:$0xff]
        %v2653 = vld [vmem:[#allocation2 + $0x18] sm:$0xff]
        %v2654 = vld [vmem:[#allocation2 + $0x20] sm:$0xff]
        %v2655 = vld [vmem:[#allocation2 + $0x28] sm:$0xff]
        %v2656 = vld [vmem:[#allocation2 + $0x30] sm:$0xff]
        %v2657 = vld [vmem:[#allocation2 + $0x38] sm:$0xff]
        %v2658 = vld [vmem:[#allocation2 + $0x40] sm:$0xff]
        %v2659 = vld [vmem:[#allocation2 + $0x48] sm:$0xff]
        %v2660 = vld [vmem:[#allocation2 + $0x50] sm:$0xff]
        %v2661 = vld [vmem:[#allocation2 + $0x58] sm:$0xff]
        %v2662 = vld [vmem:[#allocation2 + $0x60] sm:$0xff]
        %v2663 = vld [vmem:[#allocation2 + $0x68] sm:$0xff]
        %v2664 = vld [vmem:[#allocation2 + $0x70] sm:$0xff]
        %v2665 = vld [vmem:[#allocation2 + $0x78] sm:$0xff]
        %v2666 = vld [vmem:[#allocation2 + $0x80] sm:$0xff]
        %v2667 = vld [vmem:[#allocation2 + $0x88] sm:$0xff]
        %v2668 = vld [vmem:[#allocation2 + $0x90] sm:$0xff]
        %v2669 = vld [vmem:[#allocation2 + $0x98] sm:$0xff]
        %v2670 = vld [vmem:[#allocation2 + $0xa0] sm:$0xff]
        %v2671 = vld [vmem:[#allocation2 + $0xa8] sm:$0xff]
        %v2672 = vld [vmem:[#allocation2 + $0xb0] sm:$0xff]
        %v2673 = vld [vmem:[#allocation2 + $0xb8] sm:$0xff]
        %v2674 = vld [vmem:[#allocation2 + $0xc0] sm:$0xff]
        %v2675 = vld [vmem:[#allocation2 + $0xc8] sm:$0xff]
        %v2676 = vld [vmem:[#allocation2 + $0xd0] sm:$0xff]
        %v2677 = vld [vmem:[#allocation2 + $0xd8] sm:$0xff]
        %v2678 = vld [vmem:[#allocation2 + $0xe0] sm:$0xff]
        %v2679 = vld [vmem:[#allocation2 + $0xe8] sm:$0xff]
        %v2680 = vld [vmem:[#allocation2 + $0xf0] sm:$0xff]
        %v2681 = vld [vmem:[#allocation2 + $0xf8] sm:$0xff]
        %2682 = vmatprep.subr.bf16.mxu0 %v2651
        %2683 = vmatpush1.bf16.msra.mxu0 %v2650
        %2684 = vmatprep.subr.bf16.mxu0 %v2655
        %2685 = vmatpush1.bf16.msra.mxu0 %v2654
        %2686 = vmatprep.subr.bf16.mxu0 %v2659
        %2687 = vmatpush1.bf16.msra.mxu0 %v2658
        %2688 = vmatprep.subr.bf16.mxu0 %v2663
        %2689 = vmatpush1.bf16.msra.mxu0 %v2662
        %2690 = vmatprep.subr.bf16.mxu0 %v2667
        %2691 = vmatpush1.bf16.msra.mxu0 %v2666
        %2692 = vmatprep.subr.bf16.mxu0 %v2671
        %2693 = vmatpush1.bf16.msra.mxu0 %v2670
        %2694 = vmatprep.subr.bf16.mxu0 %v2675
        %2695 = vmatpush1.bf16.msra.mxu0 %v2674
        %2696 = vmatprep.subr.bf16.mxu0 %v2679
        %2697 = vmatpush1.bf16.msra.mxu0 %v2678
        %2698 = vmatprep.subr.bf16.mxu0 0
        %2699 = vmatpush1.bf16.msra.mxu0 0
        %2700 = vmatprep.subr.bf16.mxu0 0
        %2701 = vmatpush1.bf16.msra.mxu0 0
        %2702 = vmatprep.subr.bf16.mxu0 0
        %2703 = vmatpush1.bf16.msra.mxu0 0
        %2704 = vmatprep.subr.bf16.mxu0 0
        %2705 = vmatpush1.bf16.msra.mxu0 0
        %2706 = vmatprep.subr.bf16.mxu0 0
        %2707 = vmatpush1.bf16.msra.mxu0 0
        %2708 = vmatprep.subr.bf16.mxu0 0
        %2709 = vmatpush1.bf16.msra.mxu0 0
        %2710 = vmatprep.subr.bf16.mxu0 0
        %2711 = vmatpush1.bf16.msra.mxu0 0
        %2712 = vmatprep.subr.bf16.mxu0 0
        %2713 = vmatpush1.bf16.msra.mxu0 0
        %2714 = vmatprep.mubr.bf16.mxu0 0
        %2715 = vmatmul.mubr.bf16.gmra.mrb[0].mxu0 %v2649
        %v2716 = vpop.f32.mrb[0].mxu0
        %v2717 = vadd.f32 0.0, %v2716
        %v2718 = vpop.f32.mrb[0].mxu0
        %v2719 = vadd.f32 0.0, %v2718
        %v2720 = vpop.f32.mrb[0].mxu0
        %v2721 = vpop.f32.mrb[0].mxu0
        %2722 = vdwg.mxu0
        %2723 = vmatprep.subr.bf16.mxu0 %v2653
        %2724 = vmatpush1.bf16.msra.mxu0 %v2652
        %2725 = vmatprep.subr.bf16.mxu0 %v2657
        %2726 = vmatpush1.bf16.msra.mxu0 %v2656
        %2727 = vmatprep.subr.bf16.mxu0 %v2661
        %2728 = vmatpush1.bf16.msra.mxu0 %v2660
        %2729 = vmatprep.subr.bf16.mxu0 %v2665
        %2730 = vmatpush1.bf16.msra.mxu0 %v2664
        %2731 = vmatprep.subr.bf16.mxu0 %v2669
        %2732 = vmatpush1.bf16.msra.mxu0 %v2668
        %2733 = vmatprep.subr.bf16.mxu0 %v2673
        %2734 = vmatpush1.bf16.msra.mxu0 %v2672
        %2735 = vmatprep.subr.bf16.mxu0 %v2677
        %2736 = vmatpush1.bf16.msra.mxu0 %v2676
        %2737 = vmatprep.subr.bf16.mxu0 %v2681
        %2738 = vmatpush1.bf16.msra.mxu0 %v2680
        %2739 = vmatprep.subr.bf16.mxu0 0
        %2740 = vmatpush1.bf16.msra.mxu0 0
        %2741 = vmatprep.subr.bf16.mxu0 0
        %2742 = vmatpush1.bf16.msra.mxu0 0
        %2743 = vmatprep.subr.bf16.mxu0 0
        %2744 = vmatpush1.bf16.msra.mxu0 0
        %2745 = vmatprep.subr.bf16.mxu0 0
        %2746 = vmatpush1.bf16.msra.mxu0 0
        %2747 = vmatprep.subr.bf16.mxu0 0
        %2748 = vmatpush1.bf16.msra.mxu0 0
        %2749 = vmatprep.subr.bf16.mxu0 0
        %2750 = vmatpush1.bf16.msra.mxu0 0
        %2751 = vmatprep.subr.bf16.mxu0 0
        %2752 = vmatpush1.bf16.msra.mxu0 0
        %2753 = vmatprep.subr.bf16.mxu0 0
        %2754 = vmatpush1.bf16.msra.mxu0 0
        %2755 = vmatprep.mubr.bf16.mxu0 0
        %2756 = vmatmul.mubr.bf16.gmra.mrb[0].mxu0 %v2649
        %v2757 = vpop.f32.mrb[0].mxu0
        %v2758 = vadd.f32 0.0, %v2757
        %v2759 = vpop.f32.mrb[0].mxu0
        %v2760 = vadd.f32 0.0, %v2759
        %v2761 = vpop.f32.mrb[0].mxu0
        %v2762 = vpop.f32.mrb[0].mxu0
        %2763 = vdwg.mxu0
        %v2764 = vadd.f32 %v2645, %v2717
        %v2765 = vadd.f32 %v2646, %v2719
        %v2766 = vadd.f32 %v2647, %v2758
        %v2767 = vadd.f32 %v2648, %v2760
        %s2768 = scalar_lea.vmem %s215, 112 [#allocation11]
        %v2769 = vld [vmem:[%s2768] sm:$0xff]
        %v2770 = vld [vmem:[%s2768 + $0x8] sm:$0xff]
        %v2771 = vunpack.c.l.bf16 %v2769
        %v2772 = vunpack.c.h.bf16 %v2769
        %v2773 = vunpack.c.l.bf16 %v2770
        %v2774 = vunpack.c.h.bf16 %v2770
        %v2775 = vpack.c.bf16 %v2637, %v2637
        %v2776 = vld [vmem:[%s440] sm:$0xff]
        %v2777 = vld [vmem:[%s440 + $0x8] sm:$0xff]
        %v2778 = vld [vmem:[%s440 + $0x10] sm:$0xff]
        %v2779 = vld [vmem:[%s440 + $0x18] sm:$0xff]
        %v2780 = vld [vmem:[%s440 + $0x20] sm:$0xff]
        %v2781 = vld [vmem:[%s440 + $0x28] sm:$0xff]
        %v2782 = vld [vmem:[%s440 + $0x30] sm:$0xff]
        %v2783 = vld [vmem:[%s440 + $0x38] sm:$0xff]
        %v2784 = vld [vmem:[%s440 + $0x40] sm:$0xff]
        %v2785 = vld [vmem:[%s440 + $0x48] sm:$0xff]
        %v2786 = vld [vmem:[%s440 + $0x50] sm:$0xff]
        %v2787 = vld [vmem:[%s440 + $0x58] sm:$0xff]
        %v2788 = vld [vmem:[%s440 + $0x60] sm:$0xff]
        %v2789 = vld [vmem:[%s440 + $0x68] sm:$0xff]
        %v2790 = vld [vmem:[%s440 + $0x70] sm:$0xff]
        %v2791 = vld [vmem:[%s440 + $0x78] sm:$0xff]
        %v2792 = vld [vmem:[%s440 + $0x80] sm:$0xff]
        %v2793 = vld [vmem:[%s440 + $0x88] sm:$0xff]
        %v2794 = vld [vmem:[%s440 + $0x90] sm:$0xff]
        %v2795 = vld [vmem:[%s440 + $0x98] sm:$0xff]
        %v2796 = vld [vmem:[%s440 + $0xa0] sm:$0xff]
        %v2797 = vld [vmem:[%s440 + $0xa8] sm:$0xff]
        %v2798 = vld [vmem:[%s440 + $0xb0] sm:$0xff]
        %v2799 = vld [vmem:[%s440 + $0xb8] sm:$0xff]
        %v2800 = vld [vmem:[%s440 + $0xc0] sm:$0xff]
        %v2801 = vld [vmem:[%s440 + $0xc8] sm:$0xff]
        %v2802 = vld [vmem:[%s440 + $0xd0] sm:$0xff]
        %v2803 = vld [vmem:[%s440 + $0xd8] sm:$0xff]
        %v2804 = vld [vmem:[%s440 + $0xe0] sm:$0xff]
        %v2805 = vld [vmem:[%s440 + $0xe8] sm:$0xff]
        %v2806 = vld [vmem:[%s440 + $0xf0] sm:$0xff]
        %v2807 = vld [vmem:[%s440 + $0xf8] sm:$0xff]
        %2808 = vmatprep.subr.bf16.mxu0 %v2777
        %2809 = vmatpush1.bf16.msra.mxu0 %v2776
        %2810 = vmatprep.subr.bf16.mxu0 %v2781
        %2811 = vmatpush1.bf16.msra.mxu0 %v2780
        %2812 = vmatprep.subr.bf16.mxu0 %v2785
        %2813 = vmatpush1.bf16.msra.mxu0 %v2784
        %2814 = vmatprep.subr.bf16.mxu0 %v2789
        %2815 = vmatpush1.bf16.msra.mxu0 %v2788
        %2816 = vmatprep.subr.bf16.mxu0 %v2793
        %2817 = vmatpush1.bf16.msra.mxu0 %v2792
        %2818 = vmatprep.subr.bf16.mxu0 %v2797
        %2819 = vmatpush1.bf16.msra.mxu0 %v2796
        %2820 = vmatprep.subr.bf16.mxu0 %v2801
        %2821 = vmatpush1.bf16.msra.mxu0 %v2800
        %2822 = vmatprep.subr.bf16.mxu0 %v2805
        %2823 = vmatpush1.bf16.msra.mxu0 %v2804
        %2824 = vmatprep.subr.bf16.mxu0 0
        %2825 = vmatpush1.bf16.msra.mxu0 0
        %2826 = vmatprep.subr.bf16.mxu0 0
        %2827 = vmatpush1.bf16.msra.mxu0 0
        %2828 = vmatprep.subr.bf16.mxu0 0
        %2829 = vmatpush1.bf16.msra.mxu0 0
        %2830 = vmatprep.subr.bf16.mxu0 0
        %2831 = vmatpush1.bf16.msra.mxu0 0
        %2832 = vmatprep.subr.bf16.mxu0 0
        %2833 = vmatpush1.bf16.msra.mxu0 0
        %2834 = vmatprep.subr.bf16.mxu0 0
        %2835 = vmatpush1.bf16.msra.mxu0 0
        %2836 = vmatprep.subr.bf16.mxu0 0
        %2837 = vmatpush1.bf16.msra.mxu0 0
        %2838 = vmatprep.subr.bf16.mxu0 0
        %2839 = vmatpush1.bf16.msra.mxu0 0
        %2840 = vmatprep.mubr.bf16.mxu0 0
        %2841 = vmatmul.mubr.bf16.gmra.mrb[0].mxu0 %v2775
        %v2842 = vpop.f32.mrb[0].mxu0
        %v2843 = vadd.f32 0.0, %v2842
        %v2844 = vpop.f32.mrb[0].mxu0
        %v2845 = vadd.f32 0.0, %v2844
        %v2846 = vpop.f32.mrb[0].mxu0
        %v2847 = vpop.f32.mrb[0].mxu0
        %2848 = vdwg.mxu0
        %2849 = vmatprep.subr.bf16.mxu0 %v2779
        %2850 = vmatpush1.bf16.msra.mxu0 %v2778
        %2851 = vmatprep.subr.bf16.mxu0 %v2783
        %2852 = vmatpush1.bf16.msra.mxu0 %v2782
        %2853 = vmatprep.subr.bf16.mxu0 %v2787
        %2854 = vmatpush1.bf16.msra.mxu0 %v2786
        %2855 = vmatprep.subr.bf16.mxu0 %v2791
        %2856 = vmatpush1.bf16.msra.mxu0 %v2790
        %2857 = vmatprep.subr.bf16.mxu0 %v2795
        %2858 = vmatpush1.bf16.msra.mxu0 %v2794
        %2859 = vmatprep.subr.bf16.mxu0 %v2799
        %2860 = vmatpush1.bf16.msra.mxu0 %v2798
        %2861 = vmatprep.subr.bf16.mxu0 %v2803
        %2862 = vmatpush1.bf16.msra.mxu0 %v2802
        %2863 = vmatprep.subr.bf16.mxu0 %v2807
        %2864 = vmatpush1.bf16.msra.mxu0 %v2806
        %2865 = vmatprep.subr.bf16.mxu0 0
        %2866 = vmatpush1.bf16.msra.mxu0 0
        %2867 = vmatprep.subr.bf16.mxu0 0
        %2868 = vmatpush1.bf16.msra.mxu0 0
        %2869 = vmatprep.subr.bf16.mxu0 0
        %2870 = vmatpush1.bf16.msra.mxu0 0
        %2871 = vmatprep.subr.bf16.mxu0 0
        %2872 = vmatpush1.bf16.msra.mxu0 0
        %2873 = vmatprep.subr.bf16.mxu0 0
        %2874 = vmatpush1.bf16.msra.mxu0 0
        %2875 = vmatprep.subr.bf16.mxu0 0
        %2876 = vmatpush1.bf16.msra.mxu0 0
        %2877 = vmatprep.subr.bf16.mxu0 0
        %2878 = vmatpush1.bf16.msra.mxu0 0
        %2879 = vmatprep.subr.bf16.mxu0 0
        %2880 = vmatpush1.bf16.msra.mxu0 0
        %2881 = vmatprep.mubr.bf16.mxu0 0
        %2882 = vmatmul.mubr.bf16.gmra.mrb[0].mxu0 %v2775
        %v2883 = vpop.f32.mrb[0].mxu0
        %v2884 = vadd.f32 0.0, %v2883
        %v2885 = vpop.f32.mrb[0].mxu0
        %v2886 = vadd.f32 0.0, %v2885
        %v2887 = vpop.f32.mrb[0].mxu0
        %v2888 = vpop.f32.mrb[0].mxu0
        %2889 = vdwg.mxu0
        %v2890 = vadd.f32 %v2771, %v2843
        %v2891 = vadd.f32 %v2772, %v2845
        %v2892 = vadd.f32 %v2773, %v2884
        %v2893 = vadd.f32 %v2774, %v2886
        %v2894 = vmul.f32 %v2764, 0.5
        %v2895 = vtanh.pop %v2894
        %v2896 = vmul.f32 %v2895, 0.5
        %v2897 = vadd.f32 %v2896, 0.5
        %v2898 = vmul.f32 %v2765, 0.5
        %v2899 = vtanh.pop %v2898
        %v2900 = vmul.f32 %v2899, 0.5
        %v2901 = vadd.f32 %v2900, 0.5
        %v2902 = vtanh.pop %v2766
        %v2903 = vmul.f32 %v2767, 0.5
        %v2904 = vtanh.pop %v2903
        %v2905 = vmul.f32 %v2904, 0.5
        %v2906 = vadd.f32 %v2905, 0.5
        %v2907 = vmul.f32 %v2901, %v2617
        %v2908 = vmul.f32 %v2897, %v2902
        %v2909 = vadd.f32 %v2907, %v2908
        %v2910 = vtanh.pop %v2909
        %v2911 = vmul.f32 %v2906, %v2910
        %v2912 = vmul.f32 %v2890, 0.5
        %v2913 = vtanh.pop %v2912
        %v2914 = vmul.f32 %v2913, 0.5
        %v2915 = vadd.f32 %v2914, 0.5
        %v2916 = vmul.f32 %v2891, 0.5
        %v2917 = vtanh.pop %v2916
        %v2918 = vmul.f32 %v2917, 0.5
        %v2919 = vadd.f32 %v2918, 0.5
        %v2920 = vtanh.pop %v2892
        %v2921 = vmul.f32 %v2893, 0.5
        %v2922 = vtanh.pop %v2921
        %v2923 = vmul.f32 %v2922, 0.5
        %v2924 = vadd.f32 %v2923, 0.5
        %v2925 = vmul.f32 %v2919, %v2635
        %v2926 = vmul.f32 %v2915, %v2920
        %v2927 = vadd.f32 %v2925, %v2926
        %v2928 = vtanh.pop %v2927
        %v2929 = vmul.f32 %v2924, %v2928
        %s2930 = scalar_lea.vmem %s240, 64 [#allocation13]
        %2931 = vst [vmem:[%s2930] sm:$0xff] %v2911
        %s2932 = scalar_lea.vmem %s247, 56 [#allocation14]
        %2933 = vst [vmem:[%s2932] sm:$0xff] %v2929
        %s2934 = scalar_lea.vmem %s206, 144 [#allocation8]
        %v2935 = vld [vmem:[%s2934] sm:$0xff]
        %v2936 = vld [vmem:[%s2934 + $0x8] sm:$0xff]
        %v2937 = vunpack.c.l.bf16 %v2935
        %v2938 = vunpack.c.h.bf16 %v2935
        %v2939 = vunpack.c.l.bf16 %v2936
        %v2940 = vunpack.c.h.bf16 %v2936
        %v2941 = vpack.c.bf16 %v2911, %v2911
        %v2942 = vld [vmem:[#allocation2] sm:$0xff]
        %v2943 = vld [vmem:[#allocation2 + $0x8] sm:$0xff]
        %v2944 = vld [vmem:[#allocation2 + $0x10] sm:$0xff]
        %v2945 = vld [vmem:[#allocation2 + $0x18] sm:$0xff]
        %v2946 = vld [vmem:[#allocation2 + $0x20] sm:$0xff]
        %v2947 = vld [vmem:[#allocation2 + $0x28] sm:$0xff]
        %v2948 = vld [vmem:[#allocation2 + $0x30] sm:$0xff]
        %v2949 = vld [vmem:[#allocation2 + $0x38] sm:$0xff]
        %v2950 = vld [vmem:[#allocation2 + $0x40] sm:$0xff]
        %v2951 = vld [vmem:[#allocation2 + $0x48] sm:$0xff]
        %v2952 = vld [vmem:[#allocation2 + $0x50] sm:$0xff]
        %v2953 = vld [vmem:[#allocation2 + $0x58] sm:$0xff]
        %v2954 = vld [vmem:[#allocation2 + $0x60] sm:$0xff]
        %v2955 = vld [vmem:[#allocation2 + $0x68] sm:$0xff]
        %v2956 = vld [vmem:[#allocation2 + $0x70] sm:$0xff]
        %v2957 = vld [vmem:[#allocation2 + $0x78] sm:$0xff]
        %v2958 = vld [vmem:[#allocation2 + $0x80] sm:$0xff]
        %v2959 = vld [vmem:[#allocation2 + $0x88] sm:$0xff]
        %v2960 = vld [vmem:[#allocation2 + $0x90] sm:$0xff]
        %v2961 = vld [vmem:[#allocation2 + $0x98] sm:$0xff]
        %v2962 = vld [vmem:[#allocation2 + $0xa0] sm:$0xff]
        %v2963 = vld [vmem:[#allocation2 + $0xa8] sm:$0xff]
        %v2964 = vld [vmem:[#allocation2 + $0xb0] sm:$0xff]
        %v2965 = vld [vmem:[#allocation2 + $0xb8] sm:$0xff]
        %v2966 = vld [vmem:[#allocation2 + $0xc0] sm:$0xff]
        %v2967 = vld [vmem:[#allocation2 + $0xc8] sm:$0xff]
        %v2968 = vld [vmem:[#allocation2 + $0xd0] sm:$0xff]
        %v2969 = vld [vmem:[#allocation2 + $0xd8] sm:$0xff]
        %v2970 = vld [vmem:[#allocation2 + $0xe0] sm:$0xff]
        %v2971 = vld [vmem:[#allocation2 + $0xe8] sm:$0xff]
        %v2972 = vld [vmem:[#allocation2 + $0xf0] sm:$0xff]
        %v2973 = vld [vmem:[#allocation2 + $0xf8] sm:$0xff]
        %2974 = vmatprep.subr.bf16.mxu0 %v2943
        %2975 = vmatpush1.bf16.msra.mxu0 %v2942
        %2976 = vmatprep.subr.bf16.mxu0 %v2947
        %2977 = vmatpush1.bf16.msra.mxu0 %v2946
        %2978 = vmatprep.subr.bf16.mxu0 %v2951
        %2979 = vmatpush1.bf16.msra.mxu0 %v2950
        %2980 = vmatprep.subr.bf16.mxu0 %v2955
        %2981 = vmatpush1.bf16.msra.mxu0 %v2954
        %2982 = vmatprep.subr.bf16.mxu0 %v2959
        %2983 = vmatpush1.bf16.msra.mxu0 %v2958
        %2984 = vmatprep.subr.bf16.mxu0 %v2963
        %2985 = vmatpush1.bf16.msra.mxu0 %v2962
        %2986 = vmatprep.subr.bf16.mxu0 %v2967
        %2987 = vmatpush1.bf16.msra.mxu0 %v2966
        %2988 = vmatprep.subr.bf16.mxu0 %v2971
        %2989 = vmatpush1.bf16.msra.mxu0 %v2970
        %2990 = vmatprep.subr.bf16.mxu0 0
        %2991 = vmatpush1.bf16.msra.mxu0 0
        %2992 = vmatprep.subr.bf16.mxu0 0
        %2993 = vmatpush1.bf16.msra.mxu0 0
        %2994 = vmatprep.subr.bf16.mxu0 0
        %2995 = vmatpush1.bf16.msra.mxu0 0
        %2996 = vmatprep.subr.bf16.mxu0 0
        %2997 = vmatpush1.bf16.msra.mxu0 0
        %2998 = vmatprep.subr.bf16.mxu0 0
        %2999 = vmatpush1.bf16.msra.mxu0 0
        %3000 = vmatprep.subr.bf16.mxu0 0
        %3001 = vmatpush1.bf16.msra.mxu0 0
        %3002 = vmatprep.subr.bf16.mxu0 0
        %3003 = vmatpush1.bf16.msra.mxu0 0
        %3004 = vmatprep.subr.bf16.mxu0 0
        %3005 = vmatpush1.bf16.msra.mxu0 0
        %3006 = vmatprep.mubr.bf16.mxu0 0
        %3007 = vmatmul.mubr.bf16.gmra.mrb[0].mxu0 %v2941
        %v3008 = vpop.f32.mrb[0].mxu0
        %v3009 = vadd.f32 0.0, %v3008
        %v3010 = vpop.f32.mrb[0].mxu0
        %v3011 = vadd.f32 0.0, %v3010
        %v3012 = vpop.f32.mrb[0].mxu0
        %v3013 = vpop.f32.mrb[0].mxu0
        %3014 = vdwg.mxu0
        %3015 = vmatprep.subr.bf16.mxu0 %v2945
        %3016 = vmatpush1.bf16.msra.mxu0 %v2944
        %3017 = vmatprep.subr.bf16.mxu0 %v2949
        %3018 = vmatpush1.bf16.msra.mxu0 %v2948
        %3019 = vmatprep.subr.bf16.mxu0 %v2953
        %3020 = vmatpush1.bf16.msra.mxu0 %v2952
        %3021 = vmatprep.subr.bf16.mxu0 %v2957
        %3022 = vmatpush1.bf16.msra.mxu0 %v2956
        %3023 = vmatprep.subr.bf16.mxu0 %v2961
        %3024 = vmatpush1.bf16.msra.mxu0 %v2960
        %3025 = vmatprep.subr.bf16.mxu0 %v2965
        %3026 = vmatpush1.bf16.msra.mxu0 %v2964
        %3027 = vmatprep.subr.bf16.mxu0 %v2969
        %3028 = vmatpush1.bf16.msra.mxu0 %v2968
        %3029 = vmatprep.subr.bf16.mxu0 %v2973
        %3030 = vmatpush1.bf16.msra.mxu0 %v2972
        %3031 = vmatprep.subr.bf16.mxu0 0
        %3032 = vmatpush1.bf16.msra.mxu0 0
        %3033 = vmatprep.subr.bf16.mxu0 0
        %3034 = vmatpush1.bf16.msra.mxu0 0
        %3035 = vmatprep.subr.bf16.mxu0 0
        %3036 = vmatpush1.bf16.msra.mxu0 0
        %3037 = vmatprep.subr.bf16.mxu0 0
        %3038 = vmatpush1.bf16.msra.mxu0 0
        %3039 = vmatprep.subr.bf16.mxu0 0
        %3040 = vmatpush1.bf16.msra.mxu0 0
        %3041 = vmatprep.subr.bf16.mxu0 0
        %3042 = vmatpush1.bf16.msra.mxu0 0
        %3043 = vmatprep.subr.bf16.mxu0 0
        %3044 = vmatpush1.bf16.msra.mxu0 0
        %3045 = vmatprep.subr.bf16.mxu0 0
        %3046 = vmatpush1.bf16.msra.mxu0 0
        %3047 = vmatprep.mubr.bf16.mxu0 0
        %3048 = vmatmul.mubr.bf16.gmra.mrb[0].mxu0 %v2941
        %v3049 = vpop.f32.mrb[0].mxu0
        %v3050 = vadd.f32 0.0, %v3049
        %v3051 = vpop.f32.mrb[0].mxu0
        %v3052 = vadd.f32 0.0, %v3051
        %v3053 = vpop.f32.mrb[0].mxu0
        %v3054 = vpop.f32.mrb[0].mxu0
        %3055 = vdwg.mxu0
        %v3056 = vadd.f32 %v2937, %v3009
        %v3057 = vadd.f32 %v2938, %v3011
        %v3058 = vadd.f32 %v2939, %v3050
        %v3059 = vadd.f32 %v2940, %v3052
        %s3060 = scalar_lea.vmem %s215, 96 [#allocation11]
        %v3061 = vld [vmem:[%s3060] sm:$0xff]
        %v3062 = vld [vmem:[%s3060 + $0x8] sm:$0xff]
        %v3063 = vunpack.c.l.bf16 %v3061
        %v3064 = vunpack.c.h.bf16 %v3061
        %v3065 = vunpack.c.l.bf16 %v3062
        %v3066 = vunpack.c.h.bf16 %v3062
        %v3067 = vpack.c.bf16 %v2929, %v2929
        %v3068 = vld [vmem:[%s440] sm:$0xff]
        %v3069 = vld [vmem:[%s440 + $0x8] sm:$0xff]
        %v3070 = vld [vmem:[%s440 + $0x10] sm:$0xff]
        %v3071 = vld [vmem:[%s440 + $0x18] sm:$0xff]
        %v3072 = vld [vmem:[%s440 + $0x20] sm:$0xff]
        %v3073 = vld [vmem:[%s440 + $0x28] sm:$0xff]
        %v3074 = vld [vmem:[%s440 + $0x30] sm:$0xff]
        %v3075 = vld [vmem:[%s440 + $0x38] sm:$0xff]
        %v3076 = vld [vmem:[%s440 + $0x40] sm:$0xff]
        %v3077 = vld [vmem:[%s440 + $0x48] sm:$0xff]
        %v3078 = vld [vmem:[%s440 + $0x50] sm:$0xff]
        %v3079 = vld [vmem:[%s440 + $0x58] sm:$0xff]
        %v3080 = vld [vmem:[%s440 + $0x60] sm:$0xff]
        %v3081 = vld [vmem:[%s440 + $0x68] sm:$0xff]
        %v3082 = vld [vmem:[%s440 + $0x70] sm:$0xff]
        %v3083 = vld [vmem:[%s440 + $0x78] sm:$0xff]
        %v3084 = vld [vmem:[%s440 + $0x80] sm:$0xff]
        %v3085 = vld [vmem:[%s440 + $0x88] sm:$0xff]
        %v3086 = vld [vmem:[%s440 + $0x90] sm:$0xff]
        %v3087 = vld [vmem:[%s440 + $0x98] sm:$0xff]
        %v3088 = vld [vmem:[%s440 + $0xa0] sm:$0xff]
        %v3089 = vld [vmem:[%s440 + $0xa8] sm:$0xff]
        %v3090 = vld [vmem:[%s440 + $0xb0] sm:$0xff]
        %v3091 = vld [vmem:[%s440 + $0xb8] sm:$0xff]
        %v3092 = vld [vmem:[%s440 + $0xc0] sm:$0xff]
        %v3093 = vld [vmem:[%s440 + $0xc8] sm:$0xff]
        %v3094 = vld [vmem:[%s440 + $0xd0] sm:$0xff]
        %v3095 = vld [vmem:[%s440 + $0xd8] sm:$0xff]
        %v3096 = vld [vmem:[%s440 + $0xe0] sm:$0xff]
        %v3097 = vld [vmem:[%s440 + $0xe8] sm:$0xff]
        %v3098 = vld [vmem:[%s440 + $0xf0] sm:$0xff]
        %v3099 = vld [vmem:[%s440 + $0xf8] sm:$0xff]
        %3100 = vmatprep.subr.bf16.mxu0 %v3069
        %3101 = vmatpush1.bf16.msra.mxu0 %v3068
        %3102 = vmatprep.subr.bf16.mxu0 %v3073
        %3103 = vmatpush1.bf16.msra.mxu0 %v3072
        %3104 = vmatprep.subr.bf16.mxu0 %v3077
        %3105 = vmatpush1.bf16.msra.mxu0 %v3076
        %3106 = vmatprep.subr.bf16.mxu0 %v3081
        %3107 = vmatpush1.bf16.msra.mxu0 %v3080
        %3108 = vmatprep.subr.bf16.mxu0 %v3085
        %3109 = vmatpush1.bf16.msra.mxu0 %v3084
        %3110 = vmatprep.subr.bf16.mxu0 %v3089
        %3111 = vmatpush1.bf16.msra.mxu0 %v3088
        %3112 = vmatprep.subr.bf16.mxu0 %v3093
        %3113 = vmatpush1.bf16.msra.mxu0 %v3092
        %3114 = vmatprep.subr.bf16.mxu0 %v3097
        %3115 = vmatpush1.bf16.msra.mxu0 %v3096
        %3116 = vmatprep.subr.bf16.mxu0 0
        %3117 = vmatpush1.bf16.msra.mxu0 0
        %3118 = vmatprep.subr.bf16.mxu0 0
        %3119 = vmatpush1.bf16.msra.mxu0 0
        %3120 = vmatprep.subr.bf16.mxu0 0
        %3121 = vmatpush1.bf16.msra.mxu0 0
        %3122 = vmatprep.subr.bf16.mxu0 0
        %3123 = vmatpush1.bf16.msra.mxu0 0
        %3124 = vmatprep.subr.bf16.mxu0 0
        %3125 = vmatpush1.bf16.msra.mxu0 0
        %3126 = vmatprep.subr.bf16.mxu0 0
        %3127 = vmatpush1.bf16.msra.mxu0 0
        %3128 = vmatprep.subr.bf16.mxu0 0
        %3129 = vmatpush1.bf16.msra.mxu0 0
        %3130 = vmatprep.subr.bf16.mxu0 0
        %3131 = vmatpush1.bf16.msra.mxu0 0
        %3132 = vmatprep.mubr.bf16.mxu0 0
        %3133 = vmatmul.mubr.bf16.gmra.mrb[0].mxu0 %v3067
        %v3134 = vpop.f32.mrb[0].mxu0
        %v3135 = vadd.f32 0.0, %v3134
        %v3136 = vpop.f32.mrb[0].mxu0
        %v3137 = vadd.f32 0.0, %v3136
        %v3138 = vpop.f32.mrb[0].mxu0
        %v3139 = vpop.f32.mrb[0].mxu0
        %3140 = vdwg.mxu0
        %3141 = vmatprep.subr.bf16.mxu0 %v3071
        %3142 = vmatpush1.bf16.msra.mxu0 %v3070
        %3143 = vmatprep.subr.bf16.mxu0 %v3075
        %3144 = vmatpush1.bf16.msra.mxu0 %v3074
        %3145 = vmatprep.subr.bf16.mxu0 %v3079
        %3146 = vmatpush1.bf16.msra.mxu0 %v3078
        %3147 = vmatprep.subr.bf16.mxu0 %v3083
        %3148 = vmatpush1.bf16.msra.mxu0 %v3082
        %3149 = vmatprep.subr.bf16.mxu0 %v3087
        %3150 = vmatpush1.bf16.msra.mxu0 %v3086
        %3151 = vmatprep.subr.bf16.mxu0 %v3091
        %3152 = vmatpush1.bf16.msra.mxu0 %v3090
        %3153 = vmatprep.subr.bf16.mxu0 %v3095
        %3154 = vmatpush1.bf16.msra.mxu0 %v3094
        %3155 = vmatprep.subr.bf16.mxu0 %v3099
        %3156 = vmatpush1.bf16.msra.mxu0 %v3098
        %3157 = vmatprep.subr.bf16.mxu0 0
        %3158 = vmatpush1.bf16.msra.mxu0 0
        %3159 = vmatprep.subr.bf16.mxu0 0
        %3160 = vmatpush1.bf16.msra.mxu0 0
        %3161 = vmatprep.subr.bf16.mxu0 0
        %3162 = vmatpush1.bf16.msra.mxu0 0
        %3163 = vmatprep.subr.bf16.mxu0 0
        %3164 = vmatpush1.bf16.msra.mxu0 0
        %3165 = vmatprep.subr.bf16.mxu0 0
        %3166 = vmatpush1.bf16.msra.mxu0 0
        %3167 = vmatprep.subr.bf16.mxu0 0
        %3168 = vmatpush1.bf16.msra.mxu0 0
        %3169 = vmatprep.subr.bf16.mxu0 0
        %3170 = vmatpush1.bf16.msra.mxu0 0
        %3171 = vmatprep.subr.bf16.mxu0 0
        %3172 = vmatpush1.bf16.msra.mxu0 0
        %3173 = vmatprep.mubr.bf16.mxu0 0
        %3174 = vmatmul.mubr.bf16.gmra.mrb[0].mxu0 %v3067
        %v3175 = vpop.f32.mrb[0].mxu0
        %v3176 = vadd.f32 0.0, %v3175
        %v3177 = vpop.f32.mrb[0].mxu0
        %v3178 = vadd.f32 0.0, %v3177
        %v3179 = vpop.f32.mrb[0].mxu0
        %v3180 = vpop.f32.mrb[0].mxu0
        %3181 = vdwg.mxu0
        %v3182 = vadd.f32 %v3063, %v3135
        %v3183 = vadd.f32 %v3064, %v3137
        %v3184 = vadd.f32 %v3065, %v3176
        %v3185 = vadd.f32 %v3066, %v3178
        %v3186 = vmul.f32 %v3056, 0.5
        %v3187 = vtanh.pop %v3186
        %v3188 = vmul.f32 %v3187, 0.5
        %v3189 = vadd.f32 %v3188, 0.5
        %v3190 = vmul.f32 %v3057, 0.5
        %v3191 = vtanh.pop %v3190
        %v3192 = vmul.f32 %v3191, 0.5
        %v3193 = vadd.f32 %v3192, 0.5
        %v3194 = vtanh.pop %v3058
        %v3195 = vmul.f32 %v3059, 0.5
        %v3196 = vtanh.pop %v3195
        %v3197 = vmul.f32 %v3196, 0.5
        %v3198 = vadd.f32 %v3197, 0.5
        %v3199 = vmul.f32 %v3193, %v2909
        %v3200 = vmul.f32 %v3189, %v3194
        %v3201 = vadd.f32 %v3199, %v3200
        %v3202 = vtanh.pop %v3201
        %v3203 = vmul.f32 %v3198, %v3202
        %v3204 = vmul.f32 %v3182, 0.5
        %v3205 = vtanh.pop %v3204
        %v3206 = vmul.f32 %v3205, 0.5
        %v3207 = vadd.f32 %v3206, 0.5
        %v3208 = vmul.f32 %v3183, 0.5
        %v3209 = vtanh.pop %v3208
        %v3210 = vmul.f32 %v3209, 0.5
        %v3211 = vadd.f32 %v3210, 0.5
        %v3212 = vtanh.pop %v3184
        %v3213 = vmul.f32 %v3185, 0.5
        %v3214 = vtanh.pop %v3213
        %v3215 = vmul.f32 %v3214, 0.5
        %v3216 = vadd.f32 %v3215, 0.5
        %v3217 = vmul.f32 %v3211, %v2927
        %v3218 = vmul.f32 %v3207, %v3212
        %v3219 = vadd.f32 %v3217, %v3218
        %v3220 = vtanh.pop %v3219
        %v3221 = vmul.f32 %v3216, %v3220
        %s3222 = scalar_lea.vmem %s240, 72 [#allocation13]
        %3223 = vst [vmem:[%s3222] sm:$0xff] %v3203
        %s3224 = scalar_lea.vmem %s247, 48 [#allocation14]
        %3225 = vst [vmem:[%s3224] sm:$0xff] %v3221
        %s3226 = scalar_lea.vmem %s206, 160 [#allocation8]
        %v3227 = vld [vmem:[%s3226] sm:$0xff]
        %v3228 = vld [vmem:[%s3226 + $0x8] sm:$0xff]
        %v3229 = vunpack.c.l.bf16 %v3227
        %v3230 = vunpack.c.h.bf16 %v3227
        %v3231 = vunpack.c.l.bf16 %v3228
        %v3232 = vunpack.c.h.bf16 %v3228
        %v3233 = vpack.c.bf16 %v3203, %v3203
        %v3234 = vld [vmem:[#allocation2] sm:$0xff]
        %v3235 = vld [vmem:[#allocation2 + $0x8] sm:$0xff]
        %v3236 = vld [vmem:[#allocation2 + $0x10] sm:$0xff]
        %v3237 = vld [vmem:[#allocation2 + $0x18] sm:$0xff]
        %v3238 = vld [vmem:[#allocation2 + $0x20] sm:$0xff]
        %v3239 = vld [vmem:[#allocation2 + $0x28] sm:$0xff]
        %v3240 = vld [vmem:[#allocation2 + $0x30] sm:$0xff]
        %v3241 = vld [vmem:[#allocation2 + $0x38] sm:$0xff]
        %v3242 = vld [vmem:[#allocation2 + $0x40] sm:$0xff]
        %v3243 = vld [vmem:[#allocation2 + $0x48] sm:$0xff]
        %v3244 = vld [vmem:[#allocation2 + $0x50] sm:$0xff]
        %v3245 = vld [vmem:[#allocation2 + $0x58] sm:$0xff]
        %v3246 = vld [vmem:[#allocation2 + $0x60] sm:$0xff]
        %v3247 = vld [vmem:[#allocation2 + $0x68] sm:$0xff]
        %v3248 = vld [vmem:[#allocation2 + $0x70] sm:$0xff]
        %v3249 = vld [vmem:[#allocation2 + $0x78] sm:$0xff]
        %v3250 = vld [vmem:[#allocation2 + $0x80] sm:$0xff]
        %v3251 = vld [vmem:[#allocation2 + $0x88] sm:$0xff]
        %v3252 = vld [vmem:[#allocation2 + $0x90] sm:$0xff]
        %v3253 = vld [vmem:[#allocation2 + $0x98] sm:$0xff]
        %v3254 = vld [vmem:[#allocation2 + $0xa0] sm:$0xff]
        %v3255 = vld [vmem:[#allocation2 + $0xa8] sm:$0xff]
        %v3256 = vld [vmem:[#allocation2 + $0xb0] sm:$0xff]
        %v3257 = vld [vmem:[#allocation2 + $0xb8] sm:$0xff]
        %v3258 = vld [vmem:[#allocation2 + $0xc0] sm:$0xff]
        %v3259 = vld [vmem:[#allocation2 + $0xc8] sm:$0xff]
        %v3260 = vld [vmem:[#allocation2 + $0xd0] sm:$0xff]
        %v3261 = vld [vmem:[#allocation2 + $0xd8] sm:$0xff]
        %v3262 = vld [vmem:[#allocation2 + $0xe0] sm:$0xff]
        %v3263 = vld [vmem:[#allocation2 + $0xe8] sm:$0xff]
        %v3264 = vld [vmem:[#allocation2 + $0xf0] sm:$0xff]
        %v3265 = vld [vmem:[#allocation2 + $0xf8] sm:$0xff]
        %3266 = vmatprep.subr.bf16.mxu0 %v3235
        %3267 = vmatpush1.bf16.msra.mxu0 %v3234
        %3268 = vmatprep.subr.bf16.mxu0 %v3239
        %3269 = vmatpush1.bf16.msra.mxu0 %v3238
        %3270 = vmatprep.subr.bf16.mxu0 %v3243
        %3271 = vmatpush1.bf16.msra.mxu0 %v3242
        %3272 = vmatprep.subr.bf16.mxu0 %v3247
        %3273 = vmatpush1.bf16.msra.mxu0 %v3246
        %3274 = vmatprep.subr.bf16.mxu0 %v3251
        %3275 = vmatpush1.bf16.msra.mxu0 %v3250
        %3276 = vmatprep.subr.bf16.mxu0 %v3255
        %3277 = vmatpush1.bf16.msra.mxu0 %v3254
        %3278 = vmatprep.subr.bf16.mxu0 %v3259
        %3279 = vmatpush1.bf16.msra.mxu0 %v3258
        %3280 = vmatprep.subr.bf16.mxu0 %v3263
        %3281 = vmatpush1.bf16.msra.mxu0 %v3262
        %3282 = vmatprep.subr.bf16.mxu0 0
        %3283 = vmatpush1.bf16.msra.mxu0 0
        %3284 = vmatprep.subr.bf16.mxu0 0
        %3285 = vmatpush1.bf16.msra.mxu0 0
        %3286 = vmatprep.subr.bf16.mxu0 0
        %3287 = vmatpush1.bf16.msra.mxu0 0
        %3288 = vmatprep.subr.bf16.mxu0 0
        %3289 = vmatpush1.bf16.msra.mxu0 0
        %3290 = vmatprep.subr.bf16.mxu0 0
        %3291 = vmatpush1.bf16.msra.mxu0 0
        %3292 = vmatprep.subr.bf16.mxu0 0
        %3293 = vmatpush1.bf16.msra.mxu0 0
        %3294 = vmatprep.subr.bf16.mxu0 0
        %3295 = vmatpush1.bf16.msra.mxu0 0
        %3296 = vmatprep.subr.bf16.mxu0 0
        %3297 = vmatpush1.bf16.msra.mxu0 0
        %3298 = vmatprep.mubr.bf16.mxu0 0
        %3299 = vmatmul.mubr.bf16.gmra.mrb[0].mxu0 %v3233
        %v3300 = vpop.f32.mrb[0].mxu0
        %v3301 = vadd.f32 0.0, %v3300
        %v3302 = vpop.f32.mrb[0].mxu0
        %v3303 = vadd.f32 0.0, %v3302
        %v3304 = vpop.f32.mrb[0].mxu0
        %v3305 = vpop.f32.mrb[0].mxu0
        %3306 = vdwg.mxu0
        %3307 = vmatprep.subr.bf16.mxu0 %v3237
        %3308 = vmatpush1.bf16.msra.mxu0 %v3236
        %3309 = vmatprep.subr.bf16.mxu0 %v3241
        %3310 = vmatpush1.bf16.msra.mxu0 %v3240
        %3311 = vmatprep.subr.bf16.mxu0 %v3245
        %3312 = vmatpush1.bf16.msra.mxu0 %v3244
        %3313 = vmatprep.subr.bf16.mxu0 %v3249
        %3314 = vmatpush1.bf16.msra.mxu0 %v3248
        %3315 = vmatprep.subr.bf16.mxu0 %v3253
        %3316 = vmatpush1.bf16.msra.mxu0 %v3252
        %3317 = vmatprep.subr.bf16.mxu0 %v3257
        %3318 = vmatpush1.bf16.msra.mxu0 %v3256
        %3319 = vmatprep.subr.bf16.mxu0 %v3261
        %3320 = vmatpush1.bf16.msra.mxu0 %v3260
        %3321 = vmatprep.subr.bf16.mxu0 %v3265
        %3322 = vmatpush1.bf16.msra.mxu0 %v3264
        %3323 = vmatprep.subr.bf16.mxu0 0
        %3324 = vmatpush1.bf16.msra.mxu0 0
        %3325 = vmatprep.subr.bf16.mxu0 0
        %3326 = vmatpush1.bf16.msra.mxu0 0
        %3327 = vmatprep.subr.bf16.mxu0 0
        %3328 = vmatpush1.bf16.msra.mxu0 0
        %3329 = vmatprep.subr.bf16.mxu0 0
        %3330 = vmatpush1.bf16.msra.mxu0 0
        %3331 = vmatprep.subr.bf16.mxu0 0
        %3332 = vmatpush1.bf16.msra.mxu0 0
        %3333 = vmatprep.subr.bf16.mxu0 0
        %3334 = vmatpush1.bf16.msra.mxu0 0
        %3335 = vmatprep.subr.bf16.mxu0 0
        %3336 = vmatpush1.bf16.msra.mxu0 0
        %3337 = vmatprep.subr.bf16.mxu0 0
        %3338 = vmatpush1.bf16.msra.mxu0 0
        %3339 = vmatprep.mubr.bf16.mxu0 0
        %3340 = vmatmul.mubr.bf16.gmra.mrb[0].mxu0 %v3233
        %v3341 = vpop.f32.mrb[0].mxu0
        %v3342 = vadd.f32 0.0, %v3341
        %v3343 = vpop.f32.mrb[0].mxu0
        %v3344 = vadd.f32 0.0, %v3343
        %v3345 = vpop.f32.mrb[0].mxu0
        %v3346 = vpop.f32.mrb[0].mxu0
        %3347 = vdwg.mxu0
        %v3348 = vadd.f32 %v3229, %v3301
        %v3349 = vadd.f32 %v3230, %v3303
        %v3350 = vadd.f32 %v3231, %v3342
        %v3351 = vadd.f32 %v3232, %v3344
        %s3352 = scalar_lea.vmem %s215, 80 [#allocation11]
        %v3353 = vld [vmem:[%s3352] sm:$0xff]
        %v3354 = vld [vmem:[%s3352 + $0x8] sm:$0xff]
        %v3355 = vunpack.c.l.bf16 %v3353
        %v3356 = vunpack.c.h.bf16 %v3353
        %v3357 = vunpack.c.l.bf16 %v3354
        %v3358 = vunpack.c.h.bf16 %v3354
        %v3359 = vpack.c.bf16 %v3221, %v3221
        %v3360 = vld [vmem:[%s440] sm:$0xff]
        %v3361 = vld [vmem:[%s440 + $0x8] sm:$0xff]
        %v3362 = vld [vmem:[%s440 + $0x10] sm:$0xff]
        %v3363 = vld [vmem:[%s440 + $0x18] sm:$0xff]
        %v3364 = vld [vmem:[%s440 + $0x20] sm:$0xff]
        %v3365 = vld [vmem:[%s440 + $0x28] sm:$0xff]
        %v3366 = vld [vmem:[%s440 + $0x30] sm:$0xff]
        %v3367 = vld [vmem:[%s440 + $0x38] sm:$0xff]
        %v3368 = vld [vmem:[%s440 + $0x40] sm:$0xff]
        %v3369 = vld [vmem:[%s440 + $0x48] sm:$0xff]
        %v3370 = vld [vmem:[%s440 + $0x50] sm:$0xff]
        %v3371 = vld [vmem:[%s440 + $0x58] sm:$0xff]
        %v3372 = vld [vmem:[%s440 + $0x60] sm:$0xff]
        %v3373 = vld [vmem:[%s440 + $0x68] sm:$0xff]
        %v3374 = vld [vmem:[%s440 + $0x70] sm:$0xff]
        %v3375 = vld [vmem:[%s440 + $0x78] sm:$0xff]
        %v3376 = vld [vmem:[%s440 + $0x80] sm:$0xff]
        %v3377 = vld [vmem:[%s440 + $0x88] sm:$0xff]
        %v3378 = vld [vmem:[%s440 + $0x90] sm:$0xff]
        %v3379 = vld [vmem:[%s440 + $0x98] sm:$0xff]
        %v3380 = vld [vmem:[%s440 + $0xa0] sm:$0xff]
        %v3381 = vld [vmem:[%s440 + $0xa8] sm:$0xff]
        %v3382 = vld [vmem:[%s440 + $0xb0] sm:$0xff]
        %v3383 = vld [vmem:[%s440 + $0xb8] sm:$0xff]
        %v3384 = vld [vmem:[%s440 + $0xc0] sm:$0xff]
        %v3385 = vld [vmem:[%s440 + $0xc8] sm:$0xff]
        %v3386 = vld [vmem:[%s440 + $0xd0] sm:$0xff]
        %v3387 = vld [vmem:[%s440 + $0xd8] sm:$0xff]
        %v3388 = vld [vmem:[%s440 + $0xe0] sm:$0xff]
        %v3389 = vld [vmem:[%s440 + $0xe8] sm:$0xff]
        %v3390 = vld [vmem:[%s440 + $0xf0] sm:$0xff]
        %v3391 = vld [vmem:[%s440 + $0xf8] sm:$0xff]
        %3392 = vmatprep.subr.bf16.mxu0 %v3361
        %3393 = vmatpush1.bf16.msra.mxu0 %v3360
        %3394 = vmatprep.subr.bf16.mxu0 %v3365
        %3395 = vmatpush1.bf16.msra.mxu0 %v3364
        %3396 = vmatprep.subr.bf16.mxu0 %v3369
        %3397 = vmatpush1.bf16.msra.mxu0 %v3368
        %3398 = vmatprep.subr.bf16.mxu0 %v3373
        %3399 = vmatpush1.bf16.msra.mxu0 %v3372
        %3400 = vmatprep.subr.bf16.mxu0 %v3377
        %3401 = vmatpush1.bf16.msra.mxu0 %v3376
        %3402 = vmatprep.subr.bf16.mxu0 %v3381
        %3403 = vmatpush1.bf16.msra.mxu0 %v3380
        %3404 = vmatprep.subr.bf16.mxu0 %v3385
        %3405 = vmatpush1.bf16.msra.mxu0 %v3384
        %3406 = vmatprep.subr.bf16.mxu0 %v3389
        %3407 = vmatpush1.bf16.msra.mxu0 %v3388
        %3408 = vmatprep.subr.bf16.mxu0 0
        %3409 = vmatpush1.bf16.msra.mxu0 0
        %3410 = vmatprep.subr.bf16.mxu0 0
        %3411 = vmatpush1.bf16.msra.mxu0 0
        %3412 = vmatprep.subr.bf16.mxu0 0
        %3413 = vmatpush1.bf16.msra.mxu0 0
        %3414 = vmatprep.subr.bf16.mxu0 0
        %3415 = vmatpush1.bf16.msra.mxu0 0
        %3416 = vmatprep.subr.bf16.mxu0 0
        %3417 = vmatpush1.bf16.msra.mxu0 0
        %3418 = vmatprep.subr.bf16.mxu0 0
        %3419 = vmatpush1.bf16.msra.mxu0 0
        %3420 = vmatprep.subr.bf16.mxu0 0
        %3421 = vmatpush1.bf16.msra.mxu0 0
        %3422 = vmatprep.subr.bf16.mxu0 0
        %3423 = vmatpush1.bf16.msra.mxu0 0
        %3424 = vmatprep.mubr.bf16.mxu0 0
        %3425 = vmatmul.mubr.bf16.gmra.mrb[0].mxu0 %v3359
        %v3426 = vpop.f32.mrb[0].mxu0
        %v3427 = vadd.f32 0.0, %v3426
        %v3428 = vpop.f32.mrb[0].mxu0
        %v3429 = vadd.f32 0.0, %v3428
        %v3430 = vpop.f32.mrb[0].mxu0
        %v3431 = vpop.f32.mrb[0].mxu0
        %3432 = vdwg.mxu0
        %3433 = vmatprep.subr.bf16.mxu0 %v3363
        %3434 = vmatpush1.bf16.msra.mxu0 %v3362
        %3435 = vmatprep.subr.bf16.mxu0 %v3367
        %3436 = vmatpush1.bf16.msra.mxu0 %v3366
        %3437 = vmatprep.subr.bf16.mxu0 %v3371
        %3438 = vmatpush1.bf16.msra.mxu0 %v3370
        %3439 = vmatprep.subr.bf16.mxu0 %v3375
        %3440 = vmatpush1.bf16.msra.mxu0 %v3374
        %3441 = vmatprep.subr.bf16.mxu0 %v3379
        %3442 = vmatpush1.bf16.msra.mxu0 %v3378
        %3443 = vmatprep.subr.bf16.mxu0 %v3383
        %3444 = vmatpush1.bf16.msra.mxu0 %v3382
        %3445 = vmatprep.subr.bf16.mxu0 %v3387
        %3446 = vmatpush1.bf16.msra.mxu0 %v3386
        %3447 = vmatprep.subr.bf16.mxu0 %v3391
        %3448 = vmatpush1.bf16.msra.mxu0 %v3390
        %3449 = vmatprep.subr.bf16.mxu0 0
        %3450 = vmatpush1.bf16.msra.mxu0 0
        %3451 = vmatprep.subr.bf16.mxu0 0
        %3452 = vmatpush1.bf16.msra.mxu0 0
        %3453 = vmatprep.subr.bf16.mxu0 0
        %3454 = vmatpush1.bf16.msra.mxu0 0
        %3455 = vmatprep.subr.bf16.mxu0 0
        %3456 = vmatpush1.bf16.msra.mxu0 0
        %3457 = vmatprep.subr.bf16.mxu0 0
        %3458 = vmatpush1.bf16.msra.mxu0 0
        %3459 = vmatprep.subr.bf16.mxu0 0
        %3460 = vmatpush1.bf16.msra.mxu0 0
        %3461 = vmatprep.subr.bf16.mxu0 0
        %3462 = vmatpush1.bf16.msra.mxu0 0
        %3463 = vmatprep.subr.bf16.mxu0 0
        %3464 = vmatpush1.bf16.msra.mxu0 0
        %3465 = vmatprep.mubr.bf16.mxu0 0
        %3466 = vmatmul.mubr.bf16.gmra.mrb[0].mxu0 %v3359
        %v3467 = vpop.f32.mrb[0].mxu0
        %v3468 = vadd.f32 0.0, %v3467
        %v3469 = vpop.f32.mrb[0].mxu0
        %v3470 = vadd.f32 0.0, %v3469
        %v3471 = vpop.f32.mrb[0].mxu0
        %v3472 = vpop.f32.mrb[0].mxu0
        %3473 = vdwg.mxu0
        %v3474 = vadd.f32 %v3355, %v3427
        %v3475 = vadd.f32 %v3356, %v3429
        %v3476 = vadd.f32 %v3357, %v3468
        %v3477 = vadd.f32 %v3358, %v3470
        %v3478 = vmul.f32 %v3348, 0.5
        %v3479 = vtanh.pop %v3478
        %v3480 = vmul.f32 %v3479, 0.5
        %v3481 = vadd.f32 %v3480, 0.5
        %v3482 = vmul.f32 %v3349, 0.5
        %v3483 = vtanh.pop %v3482
        %v3484 = vmul.f32 %v3483, 0.5
        %v3485 = vadd.f32 %v3484, 0.5
        %v3486 = vtanh.pop %v3350
        %v3487 = vmul.f32 %v3351, 0.5
        %v3488 = vtanh.pop %v3487
        %v3489 = vmul.f32 %v3488, 0.5
        %v3490 = vadd.f32 %v3489, 0.5
        %v3491 = vmul.f32 %v3485, %v3201
        %v3492 = vmul.f32 %v3481, %v3486
        %v3493 = vadd.f32 %v3491, %v3492
        %v3494 = vtanh.pop %v3493
        %v3495 = vmul.f32 %v3490, %v3494
        %v3496 = vmul.f32 %v3474, 0.5
        %v3497 = vtanh.pop %v3496
        %v3498 = vmul.f32 %v3497, 0.5
        %v3499 = vadd.f32 %v3498, 0.5
        %v3500 = vmul.f32 %v3475, 0.5
        %v3501 = vtanh.pop %v3500
        %v3502 = vmul.f32 %v3501, 0.5
        %v3503 = vadd.f32 %v3502, 0.5
        %v3504 = vtanh.pop %v3476
        %v3505 = vmul.f32 %v3477, 0.5
        %v3506 = vtanh.pop %v3505
        %v3507 = vmul.f32 %v3506, 0.5
        %v3508 = vadd.f32 %v3507, 0.5
        %v3509 = vmul.f32 %v3503, %v3219
        %v3510 = vmul.f32 %v3499, %v3504
        %v3511 = vadd.f32 %v3509, %v3510
        %v3512 = vtanh.pop %v3511
        %v3513 = vmul.f32 %v3508, %v3512
        %s3514 = scalar_lea.vmem %s240, 80 [#allocation13]
        %3515 = vst [vmem:[%s3514] sm:$0xff] %v3495
        %s3516 = scalar_lea.vmem %s247, 40 [#allocation14]
        %3517 = vst [vmem:[%s3516] sm:$0xff] %v3513
        %s3518 = scalar_lea.vmem %s206, 176 [#allocation8]
        %v3519 = vld [vmem:[%s3518] sm:$0xff]
        %v3520 = vld [vmem:[%s3518 + $0x8] sm:$0xff]
        %v3521 = vunpack.c.l.bf16 %v3519
        %v3522 = vunpack.c.h.bf16 %v3519
        %v3523 = vunpack.c.l.bf16 %v3520
        %v3524 = vunpack.c.h.bf16 %v3520
        %v3525 = vpack.c.bf16 %v3495, %v3495
        %v3526 = vld [vmem:[#allocation2] sm:$0xff]
        %v3527 = vld [vmem:[#allocation2 + $0x8] sm:$0xff]
        %v3528 = vld [vmem:[#allocation2 + $0x10] sm:$0xff]
        %v3529 = vld [vmem:[#allocation2 + $0x18] sm:$0xff]
        %v3530 = vld [vmem:[#allocation2 + $0x20] sm:$0xff]
        %v3531 = vld [vmem:[#allocation2 + $0x28] sm:$0xff]
        %v3532 = vld [vmem:[#allocation2 + $0x30] sm:$0xff]
        %v3533 = vld [vmem:[#allocation2 + $0x38] sm:$0xff]
        %v3534 = vld [vmem:[#allocation2 + $0x40] sm:$0xff]
        %v3535 = vld [vmem:[#allocation2 + $0x48] sm:$0xff]
        %v3536 = vld [vmem:[#allocation2 + $0x50] sm:$0xff]
        %v3537 = vld [vmem:[#allocation2 + $0x58] sm:$0xff]
        %v3538 = vld [vmem:[#allocation2 + $0x60] sm:$0xff]
        %v3539 = vld [vmem:[#allocation2 + $0x68] sm:$0xff]
        %v3540 = vld [vmem:[#allocation2 + $0x70] sm:$0xff]
        %v3541 = vld [vmem:[#allocation2 + $0x78] sm:$0xff]
        %v3542 = vld [vmem:[#allocation2 + $0x80] sm:$0xff]
        %v3543 = vld [vmem:[#allocation2 + $0x88] sm:$0xff]
        %v3544 = vld [vmem:[#allocation2 + $0x90] sm:$0xff]
        %v3545 = vld [vmem:[#allocation2 + $0x98] sm:$0xff]
        %v3546 = vld [vmem:[#allocation2 + $0xa0] sm:$0xff]
        %v3547 = vld [vmem:[#allocation2 + $0xa8] sm:$0xff]
        %v3548 = vld [vmem:[#allocation2 + $0xb0] sm:$0xff]
        %v3549 = vld [vmem:[#allocation2 + $0xb8] sm:$0xff]
        %v3550 = vld [vmem:[#allocation2 + $0xc0] sm:$0xff]
        %v3551 = vld [vmem:[#allocation2 + $0xc8] sm:$0xff]
        %v3552 = vld [vmem:[#allocation2 + $0xd0] sm:$0xff]
        %v3553 = vld [vmem:[#allocation2 + $0xd8] sm:$0xff]
        %v3554 = vld [vmem:[#allocation2 + $0xe0] sm:$0xff]
        %v3555 = vld [vmem:[#allocation2 + $0xe8] sm:$0xff]
        %v3556 = vld [vmem:[#allocation2 + $0xf0] sm:$0xff]
        %v3557 = vld [vmem:[#allocation2 + $0xf8] sm:$0xff]
        %3558 = vmatprep.subr.bf16.mxu0 %v3527
        %3559 = vmatpush1.bf16.msra.mxu0 %v3526
        %3560 = vmatprep.subr.bf16.mxu0 %v3531
        %3561 = vmatpush1.bf16.msra.mxu0 %v3530
        %3562 = vmatprep.subr.bf16.mxu0 %v3535
        %3563 = vmatpush1.bf16.msra.mxu0 %v3534
        %3564 = vmatprep.subr.bf16.mxu0 %v3539
        %3565 = vmatpush1.bf16.msra.mxu0 %v3538
        %3566 = vmatprep.subr.bf16.mxu0 %v3543
        %3567 = vmatpush1.bf16.msra.mxu0 %v3542
        %3568 = vmatprep.subr.bf16.mxu0 %v3547
        %3569 = vmatpush1.bf16.msra.mxu0 %v3546
        %3570 = vmatprep.subr.bf16.mxu0 %v3551
        %3571 = vmatpush1.bf16.msra.mxu0 %v3550
        %3572 = vmatprep.subr.bf16.mxu0 %v3555
        %3573 = vmatpush1.bf16.msra.mxu0 %v3554
        %3574 = vmatprep.subr.bf16.mxu0 0
        %3575 = vmatpush1.bf16.msra.mxu0 0
        %3576 = vmatprep.subr.bf16.mxu0 0
        %3577 = vmatpush1.bf16.msra.mxu0 0
        %3578 = vmatprep.subr.bf16.mxu0 0
        %3579 = vmatpush1.bf16.msra.mxu0 0
        %3580 = vmatprep.subr.bf16.mxu0 0
        %3581 = vmatpush1.bf16.msra.mxu0 0
        %3582 = vmatprep.subr.bf16.mxu0 0
        %3583 = vmatpush1.bf16.msra.mxu0 0
        %3584 = vmatprep.subr.bf16.mxu0 0
        %3585 = vmatpush1.bf16.msra.mxu0 0
        %3586 = vmatprep.subr.bf16.mxu0 0
        %3587 = vmatpush1.bf16.msra.mxu0 0
        %3588 = vmatprep.subr.bf16.mxu0 0
        %3589 = vmatpush1.bf16.msra.mxu0 0
        %3590 = vmatprep.mubr.bf16.mxu0 0
        %3591 = vmatmul.mubr.bf16.gmra.mrb[0].mxu0 %v3525
        %v3592 = vpop.f32.mrb[0].mxu0
        %v3593 = vadd.f32 0.0, %v3592
        %v3594 = vpop.f32.mrb[0].mxu0
        %v3595 = vadd.f32 0.0, %v3594
        %v3596 = vpop.f32.mrb[0].mxu0
        %v3597 = vpop.f32.mrb[0].mxu0
        %3598 = vdwg.mxu0
        %3599 = vmatprep.subr.bf16.mxu0 %v3529
        %3600 = vmatpush1.bf16.msra.mxu0 %v3528
        %3601 = vmatprep.subr.bf16.mxu0 %v3533
        %3602 = vmatpush1.bf16.msra.mxu0 %v3532
        %3603 = vmatprep.subr.bf16.mxu0 %v3537
        %3604 = vmatpush1.bf16.msra.mxu0 %v3536
        %3605 = vmatprep.subr.bf16.mxu0 %v3541
        %3606 = vmatpush1.bf16.msra.mxu0 %v3540
        %3607 = vmatprep.subr.bf16.mxu0 %v3545
        %3608 = vmatpush1.bf16.msra.mxu0 %v3544
        %3609 = vmatprep.subr.bf16.mxu0 %v3549
        %3610 = vmatpush1.bf16.msra.mxu0 %v3548
        %3611 = vmatprep.subr.bf16.mxu0 %v3553
        %3612 = vmatpush1.bf16.msra.mxu0 %v3552
        %3613 = vmatprep.subr.bf16.mxu0 %v3557
        %3614 = vmatpush1.bf16.msra.mxu0 %v3556
        %3615 = vmatprep.subr.bf16.mxu0 0
        %3616 = vmatpush1.bf16.msra.mxu0 0
        %3617 = vmatprep.subr.bf16.mxu0 0
        %3618 = vmatpush1.bf16.msra.mxu0 0
        %3619 = vmatprep.subr.bf16.mxu0 0
        %3620 = vmatpush1.bf16.msra.mxu0 0
        %3621 = vmatprep.subr.bf16.mxu0 0
        %3622 = vmatpush1.bf16.msra.mxu0 0
        %3623 = vmatprep.subr.bf16.mxu0 0
        %3624 = vmatpush1.bf16.msra.mxu0 0
        %3625 = vmatprep.subr.bf16.mxu0 0
        %3626 = vmatpush1.bf16.msra.mxu0 0
        %3627 = vmatprep.subr.bf16.mxu0 0
        %3628 = vmatpush1.bf16.msra.mxu0 0
        %3629 = vmatprep.subr.bf16.mxu0 0
        %3630 = vmatpush1.bf16.msra.mxu0 0
        %3631 = vmatprep.mubr.bf16.mxu0 0
        %3632 = vmatmul.mubr.bf16.gmra.mrb[0].mxu0 %v3525
        %v3633 = vpop.f32.mrb[0].mxu0
        %v3634 = vadd.f32 0.0, %v3633
        %v3635 = vpop.f32.mrb[0].mxu0
        %v3636 = vadd.f32 0.0, %v3635
        %v3637 = vpop.f32.mrb[0].mxu0
        %v3638 = vpop.f32.mrb[0].mxu0
        %3639 = vdwg.mxu0
        %v3640 = vadd.f32 %v3521, %v3593
        %v3641 = vadd.f32 %v3522, %v3595
        %v3642 = vadd.f32 %v3523, %v3634
        %v3643 = vadd.f32 %v3524, %v3636
        %s3644 = scalar_lea.vmem %s215, 64 [#allocation11]
        %v3645 = vld [vmem:[%s3644] sm:$0xff]
        %v3646 = vld [vmem:[%s3644 + $0x8] sm:$0xff]
        %v3647 = vunpack.c.l.bf16 %v3645
        %v3648 = vunpack.c.h.bf16 %v3645
        %v3649 = vunpack.c.l.bf16 %v3646
        %v3650 = vunpack.c.h.bf16 %v3646
        %v3651 = vpack.c.bf16 %v3513, %v3513
        %v3652 = vld [vmem:[%s440] sm:$0xff]
        %v3653 = vld [vmem:[%s440 + $0x8] sm:$0xff]
        %v3654 = vld [vmem:[%s440 + $0x10] sm:$0xff]
        %v3655 = vld [vmem:[%s440 + $0x18] sm:$0xff]
        %v3656 = vld [vmem:[%s440 + $0x20] sm:$0xff]
        %v3657 = vld [vmem:[%s440 + $0x28] sm:$0xff]
        %v3658 = vld [vmem:[%s440 + $0x30] sm:$0xff]
        %v3659 = vld [vmem:[%s440 + $0x38] sm:$0xff]
        %v3660 = vld [vmem:[%s440 + $0x40] sm:$0xff]
        %v3661 = vld [vmem:[%s440 + $0x48] sm:$0xff]
        %v3662 = vld [vmem:[%s440 + $0x50] sm:$0xff]
        %v3663 = vld [vmem:[%s440 + $0x58] sm:$0xff]
        %v3664 = vld [vmem:[%s440 + $0x60] sm:$0xff]
        %v3665 = vld [vmem:[%s440 + $0x68] sm:$0xff]
        %v3666 = vld [vmem:[%s440 + $0x70] sm:$0xff]
        %v3667 = vld [vmem:[%s440 + $0x78] sm:$0xff]
        %v3668 = vld [vmem:[%s440 + $0x80] sm:$0xff]
        %v3669 = vld [vmem:[%s440 + $0x88] sm:$0xff]
        %v3670 = vld [vmem:[%s440 + $0x90] sm:$0xff]
        %v3671 = vld [vmem:[%s440 + $0x98] sm:$0xff]
        %v3672 = vld [vmem:[%s440 + $0xa0] sm:$0xff]
        %v3673 = vld [vmem:[%s440 + $0xa8] sm:$0xff]
        %v3674 = vld [vmem:[%s440 + $0xb0] sm:$0xff]
        %v3675 = vld [vmem:[%s440 + $0xb8] sm:$0xff]
        %v3676 = vld [vmem:[%s440 + $0xc0] sm:$0xff]
        %v3677 = vld [vmem:[%s440 + $0xc8] sm:$0xff]
        %v3678 = vld [vmem:[%s440 + $0xd0] sm:$0xff]
        %v3679 = vld [vmem:[%s440 + $0xd8] sm:$0xff]
        %v3680 = vld [vmem:[%s440 + $0xe0] sm:$0xff]
        %v3681 = vld [vmem:[%s440 + $0xe8] sm:$0xff]
        %v3682 = vld [vmem:[%s440 + $0xf0] sm:$0xff]
        %v3683 = vld [vmem:[%s440 + $0xf8] sm:$0xff]
        %3684 = vmatprep.subr.bf16.mxu0 %v3653
        %3685 = vmatpush1.bf16.msra.mxu0 %v3652
        %3686 = vmatprep.subr.bf16.mxu0 %v3657
        %3687 = vmatpush1.bf16.msra.mxu0 %v3656
        %3688 = vmatprep.subr.bf16.mxu0 %v3661
        %3689 = vmatpush1.bf16.msra.mxu0 %v3660
        %3690 = vmatprep.subr.bf16.mxu0 %v3665
        %3691 = vmatpush1.bf16.msra.mxu0 %v3664
        %3692 = vmatprep.subr.bf16.mxu0 %v3669
        %3693 = vmatpush1.bf16.msra.mxu0 %v3668
        %3694 = vmatprep.subr.bf16.mxu0 %v3673
        %3695 = vmatpush1.bf16.msra.mxu0 %v3672
        %3696 = vmatprep.subr.bf16.mxu0 %v3677
        %3697 = vmatpush1.bf16.msra.mxu0 %v3676
        %3698 = vmatprep.subr.bf16.mxu0 %v3681
        %3699 = vmatpush1.bf16.msra.mxu0 %v3680
        %3700 = vmatprep.subr.bf16.mxu0 0
        %3701 = vmatpush1.bf16.msra.mxu0 0
        %3702 = vmatprep.subr.bf16.mxu0 0
        %3703 = vmatpush1.bf16.msra.mxu0 0
        %3704 = vmatprep.subr.bf16.mxu0 0
        %3705 = vmatpush1.bf16.msra.mxu0 0
        %3706 = vmatprep.subr.bf16.mxu0 0
        %3707 = vmatpush1.bf16.msra.mxu0 0
        %3708 = vmatprep.subr.bf16.mxu0 0
        %3709 = vmatpush1.bf16.msra.mxu0 0
        %3710 = vmatprep.subr.bf16.mxu0 0
        %3711 = vmatpush1.bf16.msra.mxu0 0
        %3712 = vmatprep.subr.bf16.mxu0 0
        %3713 = vmatpush1.bf16.msra.mxu0 0
        %3714 = vmatprep.subr.bf16.mxu0 0
        %3715 = vmatpush1.bf16.msra.mxu0 0
        %3716 = vmatprep.mubr.bf16.mxu0 0
        %3717 = vmatmul.mubr.bf16.gmra.mrb[0].mxu0 %v3651
        %v3718 = vpop.f32.mrb[0].mxu0
        %v3719 = vadd.f32 0.0, %v3718
        %v3720 = vpop.f32.mrb[0].mxu0
        %v3721 = vadd.f32 0.0, %v3720
        %v3722 = vpop.f32.mrb[0].mxu0
        %v3723 = vpop.f32.mrb[0].mxu0
        %3724 = vdwg.mxu0
        %3725 = vmatprep.subr.bf16.mxu0 %v3655
        %3726 = vmatpush1.bf16.msra.mxu0 %v3654
        %3727 = vmatprep.subr.bf16.mxu0 %v3659
        %3728 = vmatpush1.bf16.msra.mxu0 %v3658
        %3729 = vmatprep.subr.bf16.mxu0 %v3663
        %3730 = vmatpush1.bf16.msra.mxu0 %v3662
        %3731 = vmatprep.subr.bf16.mxu0 %v3667
        %3732 = vmatpush1.bf16.msra.mxu0 %v3666
        %3733 = vmatprep.subr.bf16.mxu0 %v3671
        %3734 = vmatpush1.bf16.msra.mxu0 %v3670
        %3735 = vmatprep.subr.bf16.mxu0 %v3675
        %3736 = vmatpush1.bf16.msra.mxu0 %v3674
        %3737 = vmatprep.subr.bf16.mxu0 %v3679
        %3738 = vmatpush1.bf16.msra.mxu0 %v3678
        %3739 = vmatprep.subr.bf16.mxu0 %v3683
        %3740 = vmatpush1.bf16.msra.mxu0 %v3682
        %3741 = vmatprep.subr.bf16.mxu0 0
        %3742 = vmatpush1.bf16.msra.mxu0 0
        %3743 = vmatprep.subr.bf16.mxu0 0
        %3744 = vmatpush1.bf16.msra.mxu0 0
        %3745 = vmatprep.subr.bf16.mxu0 0
        %3746 = vmatpush1.bf16.msra.mxu0 0
        %3747 = vmatprep.subr.bf16.mxu0 0
        %3748 = vmatpush1.bf16.msra.mxu0 0
        %3749 = vmatprep.subr.bf16.mxu0 0
        %3750 = vmatpush1.bf16.msra.mxu0 0
        %3751 = vmatprep.subr.bf16.mxu0 0
        %3752 = vmatpush1.bf16.msra.mxu0 0
        %3753 = vmatprep.subr.bf16.mxu0 0
        %3754 = vmatpush1.bf16.msra.mxu0 0
        %3755 = vmatprep.subr.bf16.mxu0 0
        %3756 = vmatpush1.bf16.msra.mxu0 0
        %3757 = vmatprep.mubr.bf16.mxu0 0
        %3758 = vmatmul.mubr.bf16.gmra.mrb[0].mxu0 %v3651
        %v3759 = vpop.f32.mrb[0].mxu0
        %v3760 = vadd.f32 0.0, %v3759
        %v3761 = vpop.f32.mrb[0].mxu0
        %v3762 = vadd.f32 0.0, %v3761
        %v3763 = vpop.f32.mrb[0].mxu0
        %v3764 = vpop.f32.mrb[0].mxu0
        %3765 = vdwg.mxu0
        %v3766 = vadd.f32 %v3647, %v3719
        %v3767 = vadd.f32 %v3648, %v3721
        %v3768 = vadd.f32 %v3649, %v3760
        %v3769 = vadd.f32 %v3650, %v3762
        %v3770 = vmul.f32 %v3640, 0.5
        %v3771 = vtanh.pop %v3770
        %v3772 = vmul.f32 %v3771, 0.5
        %v3773 = vadd.f32 %v3772, 0.5
        %v3774 = vmul.f32 %v3641, 0.5
        %v3775 = vtanh.pop %v3774
        %v3776 = vmul.f32 %v3775, 0.5
        %v3777 = vadd.f32 %v3776, 0.5
        %v3778 = vtanh.pop %v3642
        %v3779 = vmul.f32 %v3643, 0.5
        %v3780 = vtanh.pop %v3779
        %v3781 = vmul.f32 %v3780, 0.5
        %v3782 = vadd.f32 %v3781, 0.5
        %v3783 = vmul.f32 %v3777, %v3493
        %v3784 = vmul.f32 %v3773, %v3778
        %v3785 = vadd.f32 %v3783, %v3784
        %v3786 = vtanh.pop %v3785
        %v3787 = vmul.f32 %v3782, %v3786
        %v3788 = vmul.f32 %v3766, 0.5
        %v3789 = vtanh.pop %v3788
        %v3790 = vmul.f32 %v3789, 0.5
        %v3791 = vadd.f32 %v3790, 0.5
        %v3792 = vmul.f32 %v3767, 0.5
        %v3793 = vtanh.pop %v3792
        %v3794 = vmul.f32 %v3793, 0.5
        %v3795 = vadd.f32 %v3794, 0.5
        %v3796 = vtanh.pop %v3768
        %v3797 = vmul.f32 %v3769, 0.5
        %v3798 = vtanh.pop %v3797
        %v3799 = vmul.f32 %v3798, 0.5
        %v3800 = vadd.f32 %v3799, 0.5
        %v3801 = vmul.f32 %v3795, %v3511
        %v3802 = vmul.f32 %v3791, %v3796
        %v3803 = vadd.f32 %v3801, %v3802
        %v3804 = vtanh.pop %v3803
        %v3805 = vmul.f32 %v3800, %v3804
        %s3806 = scalar_lea.vmem %s240, 88 [#allocation13]
        %3807 = vst [vmem:[%s3806] sm:$0xff] %v3787
        %s3808 = scalar_lea.vmem %s247, 32 [#allocation14]
        %3809 = vst [vmem:[%s3808] sm:$0xff] %v3805
        %s3810 = scalar_lea.vmem %s206, 192 [#allocation8]
        %v3811 = vld [vmem:[%s3810] sm:$0xff]
        %v3812 = vld [vmem:[%s3810 + $0x8] sm:$0xff]
        %v3813 = vunpack.c.l.bf16 %v3811
        %v3814 = vunpack.c.h.bf16 %v3811
        %v3815 = vunpack.c.l.bf16 %v3812
        %v3816 = vunpack.c.h.bf16 %v3812
        %v3817 = vpack.c.bf16 %v3787, %v3787
        %v3818 = vld [vmem:[#allocation2] sm:$0xff]
        %v3819 = vld [vmem:[#allocation2 + $0x8] sm:$0xff]
        %v3820 = vld [vmem:[#allocation2 + $0x10] sm:$0xff]
        %v3821 = vld [vmem:[#allocation2 + $0x18] sm:$0xff]
        %v3822 = vld [vmem:[#allocation2 + $0x20] sm:$0xff]
        %v3823 = vld [vmem:[#allocation2 + $0x28] sm:$0xff]
        %v3824 = vld [vmem:[#allocation2 + $0x30] sm:$0xff]
        %v3825 = vld [vmem:[#allocation2 + $0x38] sm:$0xff]
        %v3826 = vld [vmem:[#allocation2 + $0x40] sm:$0xff]
        %v3827 = vld [vmem:[#allocation2 + $0x48] sm:$0xff]
        %v3828 = vld [vmem:[#allocation2 + $0x50] sm:$0xff]
        %v3829 = vld [vmem:[#allocation2 + $0x58] sm:$0xff]
        %v3830 = vld [vmem:[#allocation2 + $0x60] sm:$0xff]
        %v3831 = vld [vmem:[#allocation2 + $0x68] sm:$0xff]
        %v3832 = vld [vmem:[#allocation2 + $0x70] sm:$0xff]
        %v3833 = vld [vmem:[#allocation2 + $0x78] sm:$0xff]
        %v3834 = vld [vmem:[#allocation2 + $0x80] sm:$0xff]
        %v3835 = vld [vmem:[#allocation2 + $0x88] sm:$0xff]
        %v3836 = vld [vmem:[#allocation2 + $0x90] sm:$0xff]
        %v3837 = vld [vmem:[#allocation2 + $0x98] sm:$0xff]
        %v3838 = vld [vmem:[#allocation2 + $0xa0] sm:$0xff]
        %v3839 = vld [vmem:[#allocation2 + $0xa8] sm:$0xff]
        %v3840 = vld [vmem:[#allocation2 + $0xb0] sm:$0xff]
        %v3841 = vld [vmem:[#allocation2 + $0xb8] sm:$0xff]
        %v3842 = vld [vmem:[#allocation2 + $0xc0] sm:$0xff]
        %v3843 = vld [vmem:[#allocation2 + $0xc8] sm:$0xff]
        %v3844 = vld [vmem:[#allocation2 + $0xd0] sm:$0xff]
        %v3845 = vld [vmem:[#allocation2 + $0xd8] sm:$0xff]
        %v3846 = vld [vmem:[#allocation2 + $0xe0] sm:$0xff]
        %v3847 = vld [vmem:[#allocation2 + $0xe8] sm:$0xff]
        %v3848 = vld [vmem:[#allocation2 + $0xf0] sm:$0xff]
        %v3849 = vld [vmem:[#allocation2 + $0xf8] sm:$0xff]
        %3850 = vmatprep.subr.bf16.mxu0 %v3819
        %3851 = vmatpush1.bf16.msra.mxu0 %v3818
        %3852 = vmatprep.subr.bf16.mxu0 %v3823
        %3853 = vmatpush1.bf16.msra.mxu0 %v3822
        %3854 = vmatprep.subr.bf16.mxu0 %v3827
        %3855 = vmatpush1.bf16.msra.mxu0 %v3826
        %3856 = vmatprep.subr.bf16.mxu0 %v3831
        %3857 = vmatpush1.bf16.msra.mxu0 %v3830
        %3858 = vmatprep.subr.bf16.mxu0 %v3835
        %3859 = vmatpush1.bf16.msra.mxu0 %v3834
        %3860 = vmatprep.subr.bf16.mxu0 %v3839
        %3861 = vmatpush1.bf16.msra.mxu0 %v3838
        %3862 = vmatprep.subr.bf16.mxu0 %v3843
        %3863 = vmatpush1.bf16.msra.mxu0 %v3842
        %3864 = vmatprep.subr.bf16.mxu0 %v3847
        %3865 = vmatpush1.bf16.msra.mxu0 %v3846
        %3866 = vmatprep.subr.bf16.mxu0 0
        %3867 = vmatpush1.bf16.msra.mxu0 0
        %3868 = vmatprep.subr.bf16.mxu0 0
        %3869 = vmatpush1.bf16.msra.mxu0 0
        %3870 = vmatprep.subr.bf16.mxu0 0
        %3871 = vmatpush1.bf16.msra.mxu0 0
        %3872 = vmatprep.subr.bf16.mxu0 0
        %3873 = vmatpush1.bf16.msra.mxu0 0
        %3874 = vmatprep.subr.bf16.mxu0 0
        %3875 = vmatpush1.bf16.msra.mxu0 0
        %3876 = vmatprep.subr.bf16.mxu0 0
        %3877 = vmatpush1.bf16.msra.mxu0 0
        %3878 = vmatprep.subr.bf16.mxu0 0
        %3879 = vmatpush1.bf16.msra.mxu0 0
        %3880 = vmatprep.subr.bf16.mxu0 0
        %3881 = vmatpush1.bf16.msra.mxu0 0
        %3882 = vmatprep.mubr.bf16.mxu0 0
        %3883 = vmatmul.mubr.bf16.gmra.mrb[0].mxu0 %v3817
        %v3884 = vpop.f32.mrb[0].mxu0
        %v3885 = vadd.f32 0.0, %v3884
        %v3886 = vpop.f32.mrb[0].mxu0
        %v3887 = vadd.f32 0.0, %v3886
        %v3888 = vpop.f32.mrb[0].mxu0
        %v3889 = vpop.f32.mrb[0].mxu0
        %3890 = vdwg.mxu0
        %3891 = vmatprep.subr.bf16.mxu0 %v3821
        %3892 = vmatpush1.bf16.msra.mxu0 %v3820
        %3893 = vmatprep.subr.bf16.mxu0 %v3825
        %3894 = vmatpush1.bf16.msra.mxu0 %v3824
        %3895 = vmatprep.subr.bf16.mxu0 %v3829
        %3896 = vmatpush1.bf16.msra.mxu0 %v3828
        %3897 = vmatprep.subr.bf16.mxu0 %v3833
        %3898 = vmatpush1.bf16.msra.mxu0 %v3832
        %3899 = vmatprep.subr.bf16.mxu0 %v3837
        %3900 = vmatpush1.bf16.msra.mxu0 %v3836
        %3901 = vmatprep.subr.bf16.mxu0 %v3841
        %3902 = vmatpush1.bf16.msra.mxu0 %v3840
        %3903 = vmatprep.subr.bf16.mxu0 %v3845
        %3904 = vmatpush1.bf16.msra.mxu0 %v3844
        %3905 = vmatprep.subr.bf16.mxu0 %v3849
        %3906 = vmatpush1.bf16.msra.mxu0 %v3848
        %3907 = vmatprep.subr.bf16.mxu0 0
        %3908 = vmatpush1.bf16.msra.mxu0 0
        %3909 = vmatprep.subr.bf16.mxu0 0
        %3910 = vmatpush1.bf16.msra.mxu0 0
        %3911 = vmatprep.subr.bf16.mxu0 0
        %3912 = vmatpush1.bf16.msra.mxu0 0
        %3913 = vmatprep.subr.bf16.mxu0 0
        %3914 = vmatpush1.bf16.msra.mxu0 0
        %3915 = vmatprep.subr.bf16.mxu0 0
        %3916 = vmatpush1.bf16.msra.mxu0 0
        %3917 = vmatprep.subr.bf16.mxu0 0
        %3918 = vmatpush1.bf16.msra.mxu0 0
        %3919 = vmatprep.subr.bf16.mxu0 0
        %3920 = vmatpush1.bf16.msra.mxu0 0
        %3921 = vmatprep.subr.bf16.mxu0 0
        %3922 = vmatpush1.bf16.msra.mxu0 0
        %3923 = vmatprep.mubr.bf16.mxu0 0
        %3924 = vmatmul.mubr.bf16.gmra.mrb[0].mxu0 %v3817
        %v3925 = vpop.f32.mrb[0].mxu0
        %v3926 = vadd.f32 0.0, %v3925
        %v3927 = vpop.f32.mrb[0].mxu0
        %v3928 = vadd.f32 0.0, %v3927
        %v3929 = vpop.f32.mrb[0].mxu0
        %v3930 = vpop.f32.mrb[0].mxu0
        %3931 = vdwg.mxu0
        %v3932 = vadd.f32 %v3813, %v3885
        %v3933 = vadd.f32 %v3814, %v3887
        %v3934 = vadd.f32 %v3815, %v3926
        %v3935 = vadd.f32 %v3816, %v3928
        %s3936 = scalar_lea.vmem %s215, 48 [#allocation11]
        %v3937 = vld [vmem:[%s3936] sm:$0xff]
        %v3938 = vld [vmem:[%s3936 + $0x8] sm:$0xff]
        %v3939 = vunpack.c.l.bf16 %v3937
        %v3940 = vunpack.c.h.bf16 %v3937
        %v3941 = vunpack.c.l.bf16 %v3938
        %v3942 = vunpack.c.h.bf16 %v3938
        %v3943 = vpack.c.bf16 %v3805, %v3805
        %v3944 = vld [vmem:[%s440] sm:$0xff]
        %v3945 = vld [vmem:[%s440 + $0x8] sm:$0xff]
        %v3946 = vld [vmem:[%s440 + $0x10] sm:$0xff]
        %v3947 = vld [vmem:[%s440 + $0x18] sm:$0xff]
        %v3948 = vld [vmem:[%s440 + $0x20] sm:$0xff]
        %v3949 = vld [vmem:[%s440 + $0x28] sm:$0xff]
        %v3950 = vld [vmem:[%s440 + $0x30] sm:$0xff]
        %v3951 = vld [vmem:[%s440 + $0x38] sm:$0xff]
        %v3952 = vld [vmem:[%s440 + $0x40] sm:$0xff]
        %v3953 = vld [vmem:[%s440 + $0x48] sm:$0xff]
        %v3954 = vld [vmem:[%s440 + $0x50] sm:$0xff]
        %v3955 = vld [vmem:[%s440 + $0x58] sm:$0xff]
        %v3956 = vld [vmem:[%s440 + $0x60] sm:$0xff]
        %v3957 = vld [vmem:[%s440 + $0x68] sm:$0xff]
        %v3958 = vld [vmem:[%s440 + $0x70] sm:$0xff]
        %v3959 = vld [vmem:[%s440 + $0x78] sm:$0xff]
        %v3960 = vld [vmem:[%s440 + $0x80] sm:$0xff]
        %v3961 = vld [vmem:[%s440 + $0x88] sm:$0xff]
        %v3962 = vld [vmem:[%s440 + $0x90] sm:$0xff]
        %v3963 = vld [vmem:[%s440 + $0x98] sm:$0xff]
        %v3964 = vld [vmem:[%s440 + $0xa0] sm:$0xff]
        %v3965 = vld [vmem:[%s440 + $0xa8] sm:$0xff]
        %v3966 = vld [vmem:[%s440 + $0xb0] sm:$0xff]
        %v3967 = vld [vmem:[%s440 + $0xb8] sm:$0xff]
        %v3968 = vld [vmem:[%s440 + $0xc0] sm:$0xff]
        %v3969 = vld [vmem:[%s440 + $0xc8] sm:$0xff]
        %v3970 = vld [vmem:[%s440 + $0xd0] sm:$0xff]
        %v3971 = vld [vmem:[%s440 + $0xd8] sm:$0xff]
        %v3972 = vld [vmem:[%s440 + $0xe0] sm:$0xff]
        %v3973 = vld [vmem:[%s440 + $0xe8] sm:$0xff]
        %v3974 = vld [vmem:[%s440 + $0xf0] sm:$0xff]
        %v3975 = vld [vmem:[%s440 + $0xf8] sm:$0xff]
        %3976 = vmatprep.subr.bf16.mxu0 %v3945
        %3977 = vmatpush1.bf16.msra.mxu0 %v3944
        %3978 = vmatprep.subr.bf16.mxu0 %v3949
        %3979 = vmatpush1.bf16.msra.mxu0 %v3948
        %3980 = vmatprep.subr.bf16.mxu0 %v3953
        %3981 = vmatpush1.bf16.msra.mxu0 %v3952
        %3982 = vmatprep.subr.bf16.mxu0 %v3957
        %3983 = vmatpush1.bf16.msra.mxu0 %v3956
        %3984 = vmatprep.subr.bf16.mxu0 %v3961
        %3985 = vmatpush1.bf16.msra.mxu0 %v3960
        %3986 = vmatprep.subr.bf16.mxu0 %v3965
        %3987 = vmatpush1.bf16.msra.mxu0 %v3964
        %3988 = vmatprep.subr.bf16.mxu0 %v3969
        %3989 = vmatpush1.bf16.msra.mxu0 %v3968
        %3990 = vmatprep.subr.bf16.mxu0 %v3973
        %3991 = vmatpush1.bf16.msra.mxu0 %v3972
        %3992 = vmatprep.subr.bf16.mxu0 0
        %3993 = vmatpush1.bf16.msra.mxu0 0
        %3994 = vmatprep.subr.bf16.mxu0 0
        %3995 = vmatpush1.bf16.msra.mxu0 0
        %3996 = vmatprep.subr.bf16.mxu0 0
        %3997 = vmatpush1.bf16.msra.mxu0 0
        %3998 = vmatprep.subr.bf16.mxu0 0
        %3999 = vmatpush1.bf16.msra.mxu0 0
        %4000 = vmatprep.subr.bf16.mxu0 0
        %4001 = vmatpush1.bf16.msra.mxu0 0
        %4002 = vmatprep.subr.bf16.mxu0 0
        %4003 = vmatpush1.bf16.msra.mxu0 0
        %4004 = vmatprep.subr.bf16.mxu0 0
        %4005 = vmatpush1.bf16.msra.mxu0 0
        %4006 = vmatprep.subr.bf16.mxu0 0
        %4007 = vmatpush1.bf16.msra.mxu0 0
        %4008 = vmatprep.mubr.bf16.mxu0 0
        %4009 = vmatmul.mubr.bf16.gmra.mrb[0].mxu0 %v3943
        %v4010 = vpop.f32.mrb[0].mxu0
        %v4011 = vadd.f32 0.0, %v4010
        %v4012 = vpop.f32.mrb[0].mxu0
        %v4013 = vadd.f32 0.0, %v4012
        %v4014 = vpop.f32.mrb[0].mxu0
        %v4015 = vpop.f32.mrb[0].mxu0
        %4016 = vdwg.mxu0
        %4017 = vmatprep.subr.bf16.mxu0 %v3947
        %4018 = vmatpush1.bf16.msra.mxu0 %v3946
        %4019 = vmatprep.subr.bf16.mxu0 %v3951
        %4020 = vmatpush1.bf16.msra.mxu0 %v3950
        %4021 = vmatprep.subr.bf16.mxu0 %v3955
        %4022 = vmatpush1.bf16.msra.mxu0 %v3954
        %4023 = vmatprep.subr.bf16.mxu0 %v3959
        %4024 = vmatpush1.bf16.msra.mxu0 %v3958
        %4025 = vmatprep.subr.bf16.mxu0 %v3963
        %4026 = vmatpush1.bf16.msra.mxu0 %v3962
        %4027 = vmatprep.subr.bf16.mxu0 %v3967
        %4028 = vmatpush1.bf16.msra.mxu0 %v3966
        %4029 = vmatprep.subr.bf16.mxu0 %v3971
        %4030 = vmatpush1.bf16.msra.mxu0 %v3970
        %4031 = vmatprep.subr.bf16.mxu0 %v3975
        %4032 = vmatpush1.bf16.msra.mxu0 %v3974
        %4033 = vmatprep.subr.bf16.mxu0 0
        %4034 = vmatpush1.bf16.msra.mxu0 0
        %4035 = vmatprep.subr.bf16.mxu0 0
        %4036 = vmatpush1.bf16.msra.mxu0 0
        %4037 = vmatprep.subr.bf16.mxu0 0
        %4038 = vmatpush1.bf16.msra.mxu0 0
        %4039 = vmatprep.subr.bf16.mxu0 0
        %4040 = vmatpush1.bf16.msra.mxu0 0
        %4041 = vmatprep.subr.bf16.mxu0 0
        %4042 = vmatpush1.bf16.msra.mxu0 0
        %4043 = vmatprep.subr.bf16.mxu0 0
        %4044 = vmatpush1.bf16.msra.mxu0 0
        %4045 = vmatprep.subr.bf16.mxu0 0
        %4046 = vmatpush1.bf16.msra.mxu0 0
        %4047 = vmatprep.subr.bf16.mxu0 0
        %4048 = vmatpush1.bf16.msra.mxu0 0
        %4049 = vmatprep.mubr.bf16.mxu0 0
        %4050 = vmatmul.mubr.bf16.gmra.mrb[0].mxu0 %v3943
        %v4051 = vpop.f32.mrb[0].mxu0
        %v4052 = vadd.f32 0.0, %v4051
        %v4053 = vpop.f32.mrb[0].mxu0
        %v4054 = vadd.f32 0.0, %v4053
        %v4055 = vpop.f32.mrb[0].mxu0
        %v4056 = vpop.f32.mrb[0].mxu0
        %4057 = vdwg.mxu0
        %v4058 = vadd.f32 %v3939, %v4011
        %v4059 = vadd.f32 %v3940, %v4013
        %v4060 = vadd.f32 %v3941, %v4052
        %v4061 = vadd.f32 %v3942, %v4054
        %v4062 = vmul.f32 %v3932, 0.5
        %v4063 = vtanh.pop %v4062
        %v4064 = vmul.f32 %v4063, 0.5
        %v4065 = vadd.f32 %v4064, 0.5
        %v4066 = vmul.f32 %v3933, 0.5
        %v4067 = vtanh.pop %v4066
        %v4068 = vmul.f32 %v4067, 0.5
        %v4069 = vadd.f32 %v4068, 0.5
        %v4070 = vtanh.pop %v3934
        %v4071 = vmul.f32 %v3935, 0.5
        %v4072 = vtanh.pop %v4071
        %v4073 = vmul.f32 %v4072, 0.5
        %v4074 = vadd.f32 %v4073, 0.5
        %v4075 = vmul.f32 %v4069, %v3785
        %v4076 = vmul.f32 %v4065, %v4070
        %v4077 = vadd.f32 %v4075, %v4076
        %v4078 = vtanh.pop %v4077
        %v4079 = vmul.f32 %v4074, %v4078
        %v4080 = vmul.f32 %v4058, 0.5
        %v4081 = vtanh.pop %v4080
        %v4082 = vmul.f32 %v4081, 0.5
        %v4083 = vadd.f32 %v4082, 0.5
        %v4084 = vmul.f32 %v4059, 0.5
        %v4085 = vtanh.pop %v4084
        %v4086 = vmul.f32 %v4085, 0.5
        %v4087 = vadd.f32 %v4086, 0.5
        %v4088 = vtanh.pop %v4060
        %v4089 = vmul.f32 %v4061, 0.5
        %v4090 = vtanh.pop %v4089
        %v4091 = vmul.f32 %v4090, 0.5
        %v4092 = vadd.f32 %v4091, 0.5
        %v4093 = vmul.f32 %v4087, %v3803
        %v4094 = vmul.f32 %v4083, %v4088
        %v4095 = vadd.f32 %v4093, %v4094
        %v4096 = vtanh.pop %v4095
        %v4097 = vmul.f32 %v4092, %v4096
        %s4098 = scalar_lea.vmem %s240, 96 [#allocation13]
        %4099 = vst [vmem:[%s4098] sm:$0xff] %v4079
        %s4100 = scalar_lea.vmem %s247, 24 [#allocation14]
        %4101 = vst [vmem:[%s4100] sm:$0xff] %v4097
        %s4102 = scalar_lea.vmem %s206, 208 [#allocation8]
        %v4103 = vld [vmem:[%s4102] sm:$0xff]
        %v4104 = vld [vmem:[%s4102 + $0x8] sm:$0xff]
        %v4105 = vunpack.c.l.bf16 %v4103
        %v4106 = vunpack.c.h.bf16 %v4103
        %v4107 = vunpack.c.l.bf16 %v4104
        %v4108 = vunpack.c.h.bf16 %v4104
        %v4109 = vpack.c.bf16 %v4079, %v4079
        %v4110 = vld [vmem:[#allocation2] sm:$0xff]
        %v4111 = vld [vmem:[#allocation2 + $0x8] sm:$0xff]
        %v4112 = vld [vmem:[#allocation2 + $0x10] sm:$0xff]
        %v4113 = vld [vmem:[#allocation2 + $0x18] sm:$0xff]
        %v4114 = vld [vmem:[#allocation2 + $0x20] sm:$0xff]
        %v4115 = vld [vmem:[#allocation2 + $0x28] sm:$0xff]
        %v4116 = vld [vmem:[#allocation2 + $0x30] sm:$0xff]
        %v4117 = vld [vmem:[#allocation2 + $0x38] sm:$0xff]
        %v4118 = vld [vmem:[#allocation2 + $0x40] sm:$0xff]
        %v4119 = vld [vmem:[#allocation2 + $0x48] sm:$0xff]
        %v4120 = vld [vmem:[#allocation2 + $0x50] sm:$0xff]
        %v4121 = vld [vmem:[#allocation2 + $0x58] sm:$0xff]
        %v4122 = vld [vmem:[#allocation2 + $0x60] sm:$0xff]
        %v4123 = vld [vmem:[#allocation2 + $0x68] sm:$0xff]
        %v4124 = vld [vmem:[#allocation2 + $0x70] sm:$0xff]
        %v4125 = vld [vmem:[#allocation2 + $0x78] sm:$0xff]
        %v4126 = vld [vmem:[#allocation2 + $0x80] sm:$0xff]
        %v4127 = vld [vmem:[#allocation2 + $0x88] sm:$0xff]
        %v4128 = vld [vmem:[#allocation2 + $0x90] sm:$0xff]
        %v4129 = vld [vmem:[#allocation2 + $0x98] sm:$0xff]
        %v4130 = vld [vmem:[#allocation2 + $0xa0] sm:$0xff]
        %v4131 = vld [vmem:[#allocation2 + $0xa8] sm:$0xff]
        %v4132 = vld [vmem:[#allocation2 + $0xb0] sm:$0xff]
        %v4133 = vld [vmem:[#allocation2 + $0xb8] sm:$0xff]
        %v4134 = vld [vmem:[#allocation2 + $0xc0] sm:$0xff]
        %v4135 = vld [vmem:[#allocation2 + $0xc8] sm:$0xff]
        %v4136 = vld [vmem:[#allocation2 + $0xd0] sm:$0xff]
        %v4137 = vld [vmem:[#allocation2 + $0xd8] sm:$0xff]
        %v4138 = vld [vmem:[#allocation2 + $0xe0] sm:$0xff]
        %v4139 = vld [vmem:[#allocation2 + $0xe8] sm:$0xff]
        %v4140 = vld [vmem:[#allocation2 + $0xf0] sm:$0xff]
        %v4141 = vld [vmem:[#allocation2 + $0xf8] sm:$0xff]
        %4142 = vmatprep.subr.bf16.mxu0 %v4111
        %4143 = vmatpush1.bf16.msra.mxu0 %v4110
        %4144 = vmatprep.subr.bf16.mxu0 %v4115
        %4145 = vmatpush1.bf16.msra.mxu0 %v4114
        %4146 = vmatprep.subr.bf16.mxu0 %v4119
        %4147 = vmatpush1.bf16.msra.mxu0 %v4118
        %4148 = vmatprep.subr.bf16.mxu0 %v4123
        %4149 = vmatpush1.bf16.msra.mxu0 %v4122
        %4150 = vmatprep.subr.bf16.mxu0 %v4127
        %4151 = vmatpush1.bf16.msra.mxu0 %v4126
        %4152 = vmatprep.subr.bf16.mxu0 %v4131
        %4153 = vmatpush1.bf16.msra.mxu0 %v4130
        %4154 = vmatprep.subr.bf16.mxu0 %v4135
        %4155 = vmatpush1.bf16.msra.mxu0 %v4134
        %4156 = vmatprep.subr.bf16.mxu0 %v4139
        %4157 = vmatpush1.bf16.msra.mxu0 %v4138
        %4158 = vmatprep.subr.bf16.mxu0 0
        %4159 = vmatpush1.bf16.msra.mxu0 0
        %4160 = vmatprep.subr.bf16.mxu0 0
        %4161 = vmatpush1.bf16.msra.mxu0 0
        %4162 = vmatprep.subr.bf16.mxu0 0
        %4163 = vmatpush1.bf16.msra.mxu0 0
        %4164 = vmatprep.subr.bf16.mxu0 0
        %4165 = vmatpush1.bf16.msra.mxu0 0
        %4166 = vmatprep.subr.bf16.mxu0 0
        %4167 = vmatpush1.bf16.msra.mxu0 0
        %4168 = vmatprep.subr.bf16.mxu0 0
        %4169 = vmatpush1.bf16.msra.mxu0 0
        %4170 = vmatprep.subr.bf16.mxu0 0
        %4171 = vmatpush1.bf16.msra.mxu0 0
        %4172 = vmatprep.subr.bf16.mxu0 0
        %4173 = vmatpush1.bf16.msra.mxu0 0
        %4174 = vmatprep.mubr.bf16.mxu0 0
        %4175 = vmatmul.mubr.bf16.gmra.mrb[0].mxu0 %v4109
        %v4176 = vpop.f32.mrb[0].mxu0
        %v4177 = vadd.f32 0.0, %v4176
        %v4178 = vpop.f32.mrb[0].mxu0
        %v4179 = vadd.f32 0.0, %v4178
        %v4180 = vpop.f32.mrb[0].mxu0
        %v4181 = vpop.f32.mrb[0].mxu0
        %4182 = vdwg.mxu0
        %4183 = vmatprep.subr.bf16.mxu0 %v4113
        %4184 = vmatpush1.bf16.msra.mxu0 %v4112
        %4185 = vmatprep.subr.bf16.mxu0 %v4117
        %4186 = vmatpush1.bf16.msra.mxu0 %v4116
        %4187 = vmatprep.subr.bf16.mxu0 %v4121
        %4188 = vmatpush1.bf16.msra.mxu0 %v4120
        %4189 = vmatprep.subr.bf16.mxu0 %v4125
        %4190 = vmatpush1.bf16.msra.mxu0 %v4124
        %4191 = vmatprep.subr.bf16.mxu0 %v4129
        %4192 = vmatpush1.bf16.msra.mxu0 %v4128
        %4193 = vmatprep.subr.bf16.mxu0 %v4133
        %4194 = vmatpush1.bf16.msra.mxu0 %v4132
        %4195 = vmatprep.subr.bf16.mxu0 %v4137
        %4196 = vmatpush1.bf16.msra.mxu0 %v4136
        %4197 = vmatprep.subr.bf16.mxu0 %v4141
        %4198 = vmatpush1.bf16.msra.mxu0 %v4140
        %4199 = vmatprep.subr.bf16.mxu0 0
        %4200 = vmatpush1.bf16.msra.mxu0 0
        %4201 = vmatprep.subr.bf16.mxu0 0
        %4202 = vmatpush1.bf16.msra.mxu0 0
        %4203 = vmatprep.subr.bf16.mxu0 0
        %4204 = vmatpush1.bf16.msra.mxu0 0
        %4205 = vmatprep.subr.bf16.mxu0 0
        %4206 = vmatpush1.bf16.msra.mxu0 0
        %4207 = vmatprep.subr.bf16.mxu0 0
        %4208 = vmatpush1.bf16.msra.mxu0 0
        %4209 = vmatprep.subr.bf16.mxu0 0
        %4210 = vmatpush1.bf16.msra.mxu0 0
        %4211 = vmatprep.subr.bf16.mxu0 0
        %4212 = vmatpush1.bf16.msra.mxu0 0
        %4213 = vmatprep.subr.bf16.mxu0 0
        %4214 = vmatpush1.bf16.msra.mxu0 0
        %4215 = vmatprep.mubr.bf16.mxu0 0
        %4216 = vmatmul.mubr.bf16.gmra.mrb[0].mxu0 %v4109
        %v4217 = vpop.f32.mrb[0].mxu0
        %v4218 = vadd.f32 0.0, %v4217
        %v4219 = vpop.f32.mrb[0].mxu0
        %v4220 = vadd.f32 0.0, %v4219
        %v4221 = vpop.f32.mrb[0].mxu0
        %v4222 = vpop.f32.mrb[0].mxu0
        %4223 = vdwg.mxu0
        %v4224 = vadd.f32 %v4105, %v4177
        %v4225 = vadd.f32 %v4106, %v4179
        %v4226 = vadd.f32 %v4107, %v4218
        %v4227 = vadd.f32 %v4108, %v4220
        %s4228 = scalar_lea.vmem %s215, 32 [#allocation11]
        %v4229 = vld [vmem:[%s4228] sm:$0xff]
        %v4230 = vld [vmem:[%s4228 + $0x8] sm:$0xff]
        %v4231 = vunpack.c.l.bf16 %v4229
        %v4232 = vunpack.c.h.bf16 %v4229
        %v4233 = vunpack.c.l.bf16 %v4230
        %v4234 = vunpack.c.h.bf16 %v4230
        %v4235 = vpack.c.bf16 %v4097, %v4097
        %v4236 = vld [vmem:[%s440] sm:$0xff]
        %v4237 = vld [vmem:[%s440 + $0x8] sm:$0xff]
        %v4238 = vld [vmem:[%s440 + $0x10] sm:$0xff]
        %v4239 = vld [vmem:[%s440 + $0x18] sm:$0xff]
        %v4240 = vld [vmem:[%s440 + $0x20] sm:$0xff]
        %v4241 = vld [vmem:[%s440 + $0x28] sm:$0xff]
        %v4242 = vld [vmem:[%s440 + $0x30] sm:$0xff]
        %v4243 = vld [vmem:[%s440 + $0x38] sm:$0xff]
        %v4244 = vld [vmem:[%s440 + $0x40] sm:$0xff]
        %v4245 = vld [vmem:[%s440 + $0x48] sm:$0xff]
        %v4246 = vld [vmem:[%s440 + $0x50] sm:$0xff]
        %v4247 = vld [vmem:[%s440 + $0x58] sm:$0xff]
        %v4248 = vld [vmem:[%s440 + $0x60] sm:$0xff]
        %v4249 = vld [vmem:[%s440 + $0x68] sm:$0xff]
        %v4250 = vld [vmem:[%s440 + $0x70] sm:$0xff]
        %v4251 = vld [vmem:[%s440 + $0x78] sm:$0xff]
        %v4252 = vld [vmem:[%s440 + $0x80] sm:$0xff]
        %v4253 = vld [vmem:[%s440 + $0x88] sm:$0xff]
        %v4254 = vld [vmem:[%s440 + $0x90] sm:$0xff]
        %v4255 = vld [vmem:[%s440 + $0x98] sm:$0xff]
        %v4256 = vld [vmem:[%s440 + $0xa0] sm:$0xff]
        %v4257 = vld [vmem:[%s440 + $0xa8] sm:$0xff]
        %v4258 = vld [vmem:[%s440 + $0xb0] sm:$0xff]
        %v4259 = vld [vmem:[%s440 + $0xb8] sm:$0xff]
        %v4260 = vld [vmem:[%s440 + $0xc0] sm:$0xff]
        %v4261 = vld [vmem:[%s440 + $0xc8] sm:$0xff]
        %v4262 = vld [vmem:[%s440 + $0xd0] sm:$0xff]
        %v4263 = vld [vmem:[%s440 + $0xd8] sm:$0xff]
        %v4264 = vld [vmem:[%s440 + $0xe0] sm:$0xff]
        %v4265 = vld [vmem:[%s440 + $0xe8] sm:$0xff]
        %v4266 = vld [vmem:[%s440 + $0xf0] sm:$0xff]
        %v4267 = vld [vmem:[%s440 + $0xf8] sm:$0xff]
        %4268 = vmatprep.subr.bf16.mxu0 %v4237
        %4269 = vmatpush1.bf16.msra.mxu0 %v4236
        %4270 = vmatprep.subr.bf16.mxu0 %v4241
        %4271 = vmatpush1.bf16.msra.mxu0 %v4240
        %4272 = vmatprep.subr.bf16.mxu0 %v4245
        %4273 = vmatpush1.bf16.msra.mxu0 %v4244
        %4274 = vmatprep.subr.bf16.mxu0 %v4249
        %4275 = vmatpush1.bf16.msra.mxu0 %v4248
        %4276 = vmatprep.subr.bf16.mxu0 %v4253
        %4277 = vmatpush1.bf16.msra.mxu0 %v4252
        %4278 = vmatprep.subr.bf16.mxu0 %v4257
        %4279 = vmatpush1.bf16.msra.mxu0 %v4256
        %4280 = vmatprep.subr.bf16.mxu0 %v4261
        %4281 = vmatpush1.bf16.msra.mxu0 %v4260
        %4282 = vmatprep.subr.bf16.mxu0 %v4265
        %4283 = vmatpush1.bf16.msra.mxu0 %v4264
        %4284 = vmatprep.subr.bf16.mxu0 0
        %4285 = vmatpush1.bf16.msra.mxu0 0
        %4286 = vmatprep.subr.bf16.mxu0 0
        %4287 = vmatpush1.bf16.msra.mxu0 0
        %4288 = vmatprep.subr.bf16.mxu0 0
        %4289 = vmatpush1.bf16.msra.mxu0 0
        %4290 = vmatprep.subr.bf16.mxu0 0
        %4291 = vmatpush1.bf16.msra.mxu0 0
        %4292 = vmatprep.subr.bf16.mxu0 0
        %4293 = vmatpush1.bf16.msra.mxu0 0
        %4294 = vmatprep.subr.bf16.mxu0 0
        %4295 = vmatpush1.bf16.msra.mxu0 0
        %4296 = vmatprep.subr.bf16.mxu0 0
        %4297 = vmatpush1.bf16.msra.mxu0 0
        %4298 = vmatprep.subr.bf16.mxu0 0
        %4299 = vmatpush1.bf16.msra.mxu0 0
        %4300 = vmatprep.mubr.bf16.mxu0 0
        %4301 = vmatmul.mubr.bf16.gmra.mrb[0].mxu0 %v4235
        %v4302 = vpop.f32.mrb[0].mxu0
        %v4303 = vadd.f32 0.0, %v4302
        %v4304 = vpop.f32.mrb[0].mxu0
        %v4305 = vadd.f32 0.0, %v4304
        %v4306 = vpop.f32.mrb[0].mxu0
        %v4307 = vpop.f32.mrb[0].mxu0
        %4308 = vdwg.mxu0
        %4309 = vmatprep.subr.bf16.mxu0 %v4239
        %4310 = vmatpush1.bf16.msra.mxu0 %v4238
        %4311 = vmatprep.subr.bf16.mxu0 %v4243
        %4312 = vmatpush1.bf16.msra.mxu0 %v4242
        %4313 = vmatprep.subr.bf16.mxu0 %v4247
        %4314 = vmatpush1.bf16.msra.mxu0 %v4246
        %4315 = vmatprep.subr.bf16.mxu0 %v4251
        %4316 = vmatpush1.bf16.msra.mxu0 %v4250
        %4317 = vmatprep.subr.bf16.mxu0 %v4255
        %4318 = vmatpush1.bf16.msra.mxu0 %v4254
        %4319 = vmatprep.subr.bf16.mxu0 %v4259
        %4320 = vmatpush1.bf16.msra.mxu0 %v4258
        %4321 = vmatprep.subr.bf16.mxu0 %v4263
        %4322 = vmatpush1.bf16.msra.mxu0 %v4262
        %4323 = vmatprep.subr.bf16.mxu0 %v4267
        %4324 = vmatpush1.bf16.msra.mxu0 %v4266
        %4325 = vmatprep.subr.bf16.mxu0 0
        %4326 = vmatpush1.bf16.msra.mxu0 0
        %4327 = vmatprep.subr.bf16.mxu0 0
        %4328 = vmatpush1.bf16.msra.mxu0 0
        %4329 = vmatprep.subr.bf16.mxu0 0
        %4330 = vmatpush1.bf16.msra.mxu0 0
        %4331 = vmatprep.subr.bf16.mxu0 0
        %4332 = vmatpush1.bf16.msra.mxu0 0
        %4333 = vmatprep.subr.bf16.mxu0 0
        %4334 = vmatpush1.bf16.msra.mxu0 0
        %4335 = vmatprep.subr.bf16.mxu0 0
        %4336 = vmatpush1.bf16.msra.mxu0 0
        %4337 = vmatprep.subr.bf16.mxu0 0
        %4338 = vmatpush1.bf16.msra.mxu0 0
        %4339 = vmatprep.subr.bf16.mxu0 0
        %4340 = vmatpush1.bf16.msra.mxu0 0
        %4341 = vmatprep.mubr.bf16.mxu0 0
        %4342 = vmatmul.mubr.bf16.gmra.mrb[0].mxu0 %v4235
        %v4343 = vpop.f32.mrb[0].mxu0
        %v4344 = vadd.f32 0.0, %v4343
        %v4345 = vpop.f32.mrb[0].mxu0
        %v4346 = vadd.f32 0.0, %v4345
        %v4347 = vpop.f32.mrb[0].mxu0
        %v4348 = vpop.f32.mrb[0].mxu0
        %4349 = vdwg.mxu0
        %v4350 = vadd.f32 %v4231, %v4303
        %v4351 = vadd.f32 %v4232, %v4305
        %v4352 = vadd.f32 %v4233, %v4344
        %v4353 = vadd.f32 %v4234, %v4346
        %v4354 = vmul.f32 %v4224, 0.5
        %v4355 = vtanh.pop %v4354
        %v4356 = vmul.f32 %v4355, 0.5
        %v4357 = vadd.f32 %v4356, 0.5
        %v4358 = vmul.f32 %v4225, 0.5
        %v4359 = vtanh.pop %v4358
        %v4360 = vmul.f32 %v4359, 0.5
        %v4361 = vadd.f32 %v4360, 0.5
        %v4362 = vtanh.pop %v4226
        %v4363 = vmul.f32 %v4227, 0.5
        %v4364 = vtanh.pop %v4363
        %v4365 = vmul.f32 %v4364, 0.5
        %v4366 = vadd.f32 %v4365, 0.5
        %v4367 = vmul.f32 %v4361, %v4077
        %v4368 = vmul.f32 %v4357, %v4362
        %v4369 = vadd.f32 %v4367, %v4368
        %v4370 = vtanh.pop %v4369
        %v4371 = vmul.f32 %v4366, %v4370
        %v4372 = vmul.f32 %v4350, 0.5
        %v4373 = vtanh.pop %v4372
        %v4374 = vmul.f32 %v4373, 0.5
        %v4375 = vadd.f32 %v4374, 0.5
        %v4376 = vmul.f32 %v4351, 0.5
        %v4377 = vtanh.pop %v4376
        %v4378 = vmul.f32 %v4377, 0.5
        %v4379 = vadd.f32 %v4378, 0.5
        %v4380 = vtanh.pop %v4352
        %v4381 = vmul.f32 %v4353, 0.5
        %v4382 = vtanh.pop %v4381
        %v4383 = vmul.f32 %v4382, 0.5
        %v4384 = vadd.f32 %v4383, 0.5
        %v4385 = vmul.f32 %v4379, %v4095
        %v4386 = vmul.f32 %v4375, %v4380
        %v4387 = vadd.f32 %v4385, %v4386
        %v4388 = vtanh.pop %v4387
        %v4389 = vmul.f32 %v4384, %v4388
        %s4390 = scalar_lea.vmem %s240, 104 [#allocation13]
        %4391 = vst [vmem:[%s4390] sm:$0xff] %v4371
        %s4392 = scalar_lea.vmem %s247, 16 [#allocation14]
        %4393 = vst [vmem:[%s4392] sm:$0xff] %v4389
        %s4394 = scalar_lea.vmem %s206, 224 [#allocation8]
        %v4395 = vld [vmem:[%s4394] sm:$0xff]
        %v4396 = vld [vmem:[%s4394 + $0x8] sm:$0xff]
        %v4397 = vunpack.c.l.bf16 %v4395
        %v4398 = vunpack.c.h.bf16 %v4395
        %v4399 = vunpack.c.l.bf16 %v4396
        %v4400 = vunpack.c.h.bf16 %v4396
        %v4401 = vpack.c.bf16 %v4371, %v4371
        %v4402 = vld [vmem:[#allocation2] sm:$0xff]
        %v4403 = vld [vmem:[#allocation2 + $0x8] sm:$0xff]
        %v4404 = vld [vmem:[#allocation2 + $0x10] sm:$0xff]
        %v4405 = vld [vmem:[#allocation2 + $0x18] sm:$0xff]
        %v4406 = vld [vmem:[#allocation2 + $0x20] sm:$0xff]
        %v4407 = vld [vmem:[#allocation2 + $0x28] sm:$0xff]
        %v4408 = vld [vmem:[#allocation2 + $0x30] sm:$0xff]
        %v4409 = vld [vmem:[#allocation2 + $0x38] sm:$0xff]
        %v4410 = vld [vmem:[#allocation2 + $0x40] sm:$0xff]
        %v4411 = vld [vmem:[#allocation2 + $0x48] sm:$0xff]
        %v4412 = vld [vmem:[#allocation2 + $0x50] sm:$0xff]
        %v4413 = vld [vmem:[#allocation2 + $0x58] sm:$0xff]
        %v4414 = vld [vmem:[#allocation2 + $0x60] sm:$0xff]
        %v4415 = vld [vmem:[#allocation2 + $0x68] sm:$0xff]
        %v4416 = vld [vmem:[#allocation2 + $0x70] sm:$0xff]
        %v4417 = vld [vmem:[#allocation2 + $0x78] sm:$0xff]
        %v4418 = vld [vmem:[#allocation2 + $0x80] sm:$0xff]
        %v4419 = vld [vmem:[#allocation2 + $0x88] sm:$0xff]
        %v4420 = vld [vmem:[#allocation2 + $0x90] sm:$0xff]
        %v4421 = vld [vmem:[#allocation2 + $0x98] sm:$0xff]
        %v4422 = vld [vmem:[#allocation2 + $0xa0] sm:$0xff]
        %v4423 = vld [vmem:[#allocation2 + $0xa8] sm:$0xff]
        %v4424 = vld [vmem:[#allocation2 + $0xb0] sm:$0xff]
        %v4425 = vld [vmem:[#allocation2 + $0xb8] sm:$0xff]
        %v4426 = vld [vmem:[#allocation2 + $0xc0] sm:$0xff]
        %v4427 = vld [vmem:[#allocation2 + $0xc8] sm:$0xff]
        %v4428 = vld [vmem:[#allocation2 + $0xd0] sm:$0xff]
        %v4429 = vld [vmem:[#allocation2 + $0xd8] sm:$0xff]
        %v4430 = vld [vmem:[#allocation2 + $0xe0] sm:$0xff]
        %v4431 = vld [vmem:[#allocation2 + $0xe8] sm:$0xff]
        %v4432 = vld [vmem:[#allocation2 + $0xf0] sm:$0xff]
        %v4433 = vld [vmem:[#allocation2 + $0xf8] sm:$0xff]
        %4434 = vmatprep.subr.bf16.mxu0 %v4403
        %4435 = vmatpush1.bf16.msra.mxu0 %v4402
        %4436 = vmatprep.subr.bf16.mxu0 %v4407
        %4437 = vmatpush1.bf16.msra.mxu0 %v4406
        %4438 = vmatprep.subr.bf16.mxu0 %v4411
        %4439 = vmatpush1.bf16.msra.mxu0 %v4410
        %4440 = vmatprep.subr.bf16.mxu0 %v4415
        %4441 = vmatpush1.bf16.msra.mxu0 %v4414
        %4442 = vmatprep.subr.bf16.mxu0 %v4419
        %4443 = vmatpush1.bf16.msra.mxu0 %v4418
        %4444 = vmatprep.subr.bf16.mxu0 %v4423
        %4445 = vmatpush1.bf16.msra.mxu0 %v4422
        %4446 = vmatprep.subr.bf16.mxu0 %v4427
        %4447 = vmatpush1.bf16.msra.mxu0 %v4426
        %4448 = vmatprep.subr.bf16.mxu0 %v4431
        %4449 = vmatpush1.bf16.msra.mxu0 %v4430
        %4450 = vmatprep.subr.bf16.mxu0 0
        %4451 = vmatpush1.bf16.msra.mxu0 0
        %4452 = vmatprep.subr.bf16.mxu0 0
        %4453 = vmatpush1.bf16.msra.mxu0 0
        %4454 = vmatprep.subr.bf16.mxu0 0
        %4455 = vmatpush1.bf16.msra.mxu0 0
        %4456 = vmatprep.subr.bf16.mxu0 0
        %4457 = vmatpush1.bf16.msra.mxu0 0
        %4458 = vmatprep.subr.bf16.mxu0 0
        %4459 = vmatpush1.bf16.msra.mxu0 0
        %4460 = vmatprep.subr.bf16.mxu0 0
        %4461 = vmatpush1.bf16.msra.mxu0 0
        %4462 = vmatprep.subr.bf16.mxu0 0
        %4463 = vmatpush1.bf16.msra.mxu0 0
        %4464 = vmatprep.subr.bf16.mxu0 0
        %4465 = vmatpush1.bf16.msra.mxu0 0
        %4466 = vmatprep.mubr.bf16.mxu0 0
        %4467 = vmatmul.mubr.bf16.gmra.mrb[0].mxu0 %v4401
        %v4468 = vpop.f32.mrb[0].mxu0
        %v4469 = vadd.f32 0.0, %v4468
        %v4470 = vpop.f32.mrb[0].mxu0
        %v4471 = vadd.f32 0.0, %v4470
        %v4472 = vpop.f32.mrb[0].mxu0
        %v4473 = vpop.f32.mrb[0].mxu0
        %4474 = vdwg.mxu0
        %4475 = vmatprep.subr.bf16.mxu0 %v4405
        %4476 = vmatpush1.bf16.msra.mxu0 %v4404
        %4477 = vmatprep.subr.bf16.mxu0 %v4409
        %4478 = vmatpush1.bf16.msra.mxu0 %v4408
        %4479 = vmatprep.subr.bf16.mxu0 %v4413
        %4480 = vmatpush1.bf16.msra.mxu0 %v4412
        %4481 = vmatprep.subr.bf16.mxu0 %v4417
        %4482 = vmatpush1.bf16.msra.mxu0 %v4416
        %4483 = vmatprep.subr.bf16.mxu0 %v4421
        %4484 = vmatpush1.bf16.msra.mxu0 %v4420
        %4485 = vmatprep.subr.bf16.mxu0 %v4425
        %4486 = vmatpush1.bf16.msra.mxu0 %v4424
        %4487 = vmatprep.subr.bf16.mxu0 %v4429
        %4488 = vmatpush1.bf16.msra.mxu0 %v4428
        %4489 = vmatprep.subr.bf16.mxu0 %v4433
        %4490 = vmatpush1.bf16.msra.mxu0 %v4432
        %4491 = vmatprep.subr.bf16.mxu0 0
        %4492 = vmatpush1.bf16.msra.mxu0 0
        %4493 = vmatprep.subr.bf16.mxu0 0
        %4494 = vmatpush1.bf16.msra.mxu0 0
        %4495 = vmatprep.subr.bf16.mxu0 0
        %4496 = vmatpush1.bf16.msra.mxu0 0
        %4497 = vmatprep.subr.bf16.mxu0 0
        %4498 = vmatpush1.bf16.msra.mxu0 0
        %4499 = vmatprep.subr.bf16.mxu0 0
        %4500 = vmatpush1.bf16.msra.mxu0 0
        %4501 = vmatprep.subr.bf16.mxu0 0
        %4502 = vmatpush1.bf16.msra.mxu0 0
        %4503 = vmatprep.subr.bf16.mxu0 0
        %4504 = vmatpush1.bf16.msra.mxu0 0
        %4505 = vmatprep.subr.bf16.mxu0 0
        %4506 = vmatpush1.bf16.msra.mxu0 0
        %4507 = vmatprep.mubr.bf16.mxu0 0
        %4508 = vmatmul.mubr.bf16.gmra.mrb[0].mxu0 %v4401
        %v4509 = vpop.f32.mrb[0].mxu0
        %v4510 = vadd.f32 0.0, %v4509
        %v4511 = vpop.f32.mrb[0].mxu0
        %v4512 = vadd.f32 0.0, %v4511
        %v4513 = vpop.f32.mrb[0].mxu0
        %v4514 = vpop.f32.mrb[0].mxu0
        %4515 = vdwg.mxu0
        %v4516 = vadd.f32 %v4397, %v4469
        %v4517 = vadd.f32 %v4398, %v4471
        %v4518 = vadd.f32 %v4399, %v4510
        %v4519 = vadd.f32 %v4400, %v4512
        %s4520 = scalar_lea.vmem %s215, 16 [#allocation11]
        %v4521 = vld [vmem:[%s4520] sm:$0xff]
        %v4522 = vld [vmem:[%s4520 + $0x8] sm:$0xff]
        %v4523 = vunpack.c.l.bf16 %v4521
        %v4524 = vunpack.c.h.bf16 %v4521
        %v4525 = vunpack.c.l.bf16 %v4522
        %v4526 = vunpack.c.h.bf16 %v4522
        %v4527 = vpack.c.bf16 %v4389, %v4389
        %v4528 = vld [vmem:[%s440] sm:$0xff]
        %v4529 = vld [vmem:[%s440 + $0x8] sm:$0xff]
        %v4530 = vld [vmem:[%s440 + $0x10] sm:$0xff]
        %v4531 = vld [vmem:[%s440 + $0x18] sm:$0xff]
        %v4532 = vld [vmem:[%s440 + $0x20] sm:$0xff]
        %v4533 = vld [vmem:[%s440 + $0x28] sm:$0xff]
        %v4534 = vld [vmem:[%s440 + $0x30] sm:$0xff]
        %v4535 = vld [vmem:[%s440 + $0x38] sm:$0xff]
        %v4536 = vld [vmem:[%s440 + $0x40] sm:$0xff]
        %v4537 = vld [vmem:[%s440 + $0x48] sm:$0xff]
        %v4538 = vld [vmem:[%s440 + $0x50] sm:$0xff]
        %v4539 = vld [vmem:[%s440 + $0x58] sm:$0xff]
        %v4540 = vld [vmem:[%s440 + $0x60] sm:$0xff]
        %v4541 = vld [vmem:[%s440 + $0x68] sm:$0xff]
        %v4542 = vld [vmem:[%s440 + $0x70] sm:$0xff]
        %v4543 = vld [vmem:[%s440 + $0x78] sm:$0xff]
        %v4544 = vld [vmem:[%s440 + $0x80] sm:$0xff]
        %v4545 = vld [vmem:[%s440 + $0x88] sm:$0xff]
        %v4546 = vld [vmem:[%s440 + $0x90] sm:$0xff]
        %v4547 = vld [vmem:[%s440 + $0x98] sm:$0xff]
        %v4548 = vld [vmem:[%s440 + $0xa0] sm:$0xff]
        %v4549 = vld [vmem:[%s440 + $0xa8] sm:$0xff]
        %v4550 = vld [vmem:[%s440 + $0xb0] sm:$0xff]
        %v4551 = vld [vmem:[%s440 + $0xb8] sm:$0xff]
        %v4552 = vld [vmem:[%s440 + $0xc0] sm:$0xff]
        %v4553 = vld [vmem:[%s440 + $0xc8] sm:$0xff]
        %v4554 = vld [vmem:[%s440 + $0xd0] sm:$0xff]
        %v4555 = vld [vmem:[%s440 + $0xd8] sm:$0xff]
        %v4556 = vld [vmem:[%s440 + $0xe0] sm:$0xff]
        %v4557 = vld [vmem:[%s440 + $0xe8] sm:$0xff]
        %v4558 = vld [vmem:[%s440 + $0xf0] sm:$0xff]
        %v4559 = vld [vmem:[%s440 + $0xf8] sm:$0xff]
        %4560 = vmatprep.subr.bf16.mxu0 %v4529
        %4561 = vmatpush1.bf16.msra.mxu0 %v4528
        %4562 = vmatprep.subr.bf16.mxu0 %v4533
        %4563 = vmatpush1.bf16.msra.mxu0 %v4532
        %4564 = vmatprep.subr.bf16.mxu0 %v4537
        %4565 = vmatpush1.bf16.msra.mxu0 %v4536
        %4566 = vmatprep.subr.bf16.mxu0 %v4541
        %4567 = vmatpush1.bf16.msra.mxu0 %v4540
        %4568 = vmatprep.subr.bf16.mxu0 %v4545
        %4569 = vmatpush1.bf16.msra.mxu0 %v4544
        %4570 = vmatprep.subr.bf16.mxu0 %v4549
        %4571 = vmatpush1.bf16.msra.mxu0 %v4548
        %4572 = vmatprep.subr.bf16.mxu0 %v4553
        %4573 = vmatpush1.bf16.msra.mxu0 %v4552
        %4574 = vmatprep.subr.bf16.mxu0 %v4557
        %4575 = vmatpush1.bf16.msra.mxu0 %v4556
        %4576 = vmatprep.subr.bf16.mxu0 0
        %4577 = vmatpush1.bf16.msra.mxu0 0
        %4578 = vmatprep.subr.bf16.mxu0 0
        %4579 = vmatpush1.bf16.msra.mxu0 0
        %4580 = vmatprep.subr.bf16.mxu0 0
        %4581 = vmatpush1.bf16.msra.mxu0 0
        %4582 = vmatprep.subr.bf16.mxu0 0
        %4583 = vmatpush1.bf16.msra.mxu0 0
        %4584 = vmatprep.subr.bf16.mxu0 0
        %4585 = vmatpush1.bf16.msra.mxu0 0
        %4586 = vmatprep.subr.bf16.mxu0 0
        %4587 = vmatpush1.bf16.msra.mxu0 0
        %4588 = vmatprep.subr.bf16.mxu0 0
        %4589 = vmatpush1.bf16.msra.mxu0 0
        %4590 = vmatprep.subr.bf16.mxu0 0
        %4591 = vmatpush1.bf16.msra.mxu0 0
        %4592 = vmatprep.mubr.bf16.mxu0 0
        %4593 = vmatmul.mubr.bf16.gmra.mrb[0].mxu0 %v4527
        %v4594 = vpop.f32.mrb[0].mxu0
        %v4595 = vadd.f32 0.0, %v4594
        %v4596 = vpop.f32.mrb[0].mxu0
        %v4597 = vadd.f32 0.0, %v4596
        %v4598 = vpop.f32.mrb[0].mxu0
        %v4599 = vpop.f32.mrb[0].mxu0
        %4600 = vdwg.mxu0
        %4601 = vmatprep.subr.bf16.mxu0 %v4531
        %4602 = vmatpush1.bf16.msra.mxu0 %v4530
        %4603 = vmatprep.subr.bf16.mxu0 %v4535
        %4604 = vmatpush1.bf16.msra.mxu0 %v4534
        %4605 = vmatprep.subr.bf16.mxu0 %v4539
        %4606 = vmatpush1.bf16.msra.mxu0 %v4538
        %4607 = vmatprep.subr.bf16.mxu0 %v4543
        %4608 = vmatpush1.bf16.msra.mxu0 %v4542
        %4609 = vmatprep.subr.bf16.mxu0 %v4547
        %4610 = vmatpush1.bf16.msra.mxu0 %v4546
        %4611 = vmatprep.subr.bf16.mxu0 %v4551
        %4612 = vmatpush1.bf16.msra.mxu0 %v4550
        %4613 = vmatprep.subr.bf16.mxu0 %v4555
        %4614 = vmatpush1.bf16.msra.mxu0 %v4554
        %4615 = vmatprep.subr.bf16.mxu0 %v4559
        %4616 = vmatpush1.bf16.msra.mxu0 %v4558
        %4617 = vmatprep.subr.bf16.mxu0 0
        %4618 = vmatpush1.bf16.msra.mxu0 0
        %4619 = vmatprep.subr.bf16.mxu0 0
        %4620 = vmatpush1.bf16.msra.mxu0 0
        %4621 = vmatprep.subr.bf16.mxu0 0
        %4622 = vmatpush1.bf16.msra.mxu0 0
        %4623 = vmatprep.subr.bf16.mxu0 0
        %4624 = vmatpush1.bf16.msra.mxu0 0
        %4625 = vmatprep.subr.bf16.mxu0 0
        %4626 = vmatpush1.bf16.msra.mxu0 0
        %4627 = vmatprep.subr.bf16.mxu0 0
        %4628 = vmatpush1.bf16.msra.mxu0 0
        %4629 = vmatprep.subr.bf16.mxu0 0
        %4630 = vmatpush1.bf16.msra.mxu0 0
        %4631 = vmatprep.subr.bf16.mxu0 0
        %4632 = vmatpush1.bf16.msra.mxu0 0
        %4633 = vmatprep.mubr.bf16.mxu0 0
        %4634 = vmatmul.mubr.bf16.gmra.mrb[0].mxu0 %v4527
        %v4635 = vpop.f32.mrb[0].mxu0
        %v4636 = vadd.f32 0.0, %v4635
        %v4637 = vpop.f32.mrb[0].mxu0
        %v4638 = vadd.f32 0.0, %v4637
        %v4639 = vpop.f32.mrb[0].mxu0
        %v4640 = vpop.f32.mrb[0].mxu0
        %4641 = vdwg.mxu0
        %v4642 = vadd.f32 %v4523, %v4595
        %v4643 = vadd.f32 %v4524, %v4597
        %v4644 = vadd.f32 %v4525, %v4636
        %v4645 = vadd.f32 %v4526, %v4638
        %v4646 = vmul.f32 %v4516, 0.5
        %v4647 = vtanh.pop %v4646
        %v4648 = vmul.f32 %v4647, 0.5
        %v4649 = vadd.f32 %v4648, 0.5
        %v4650 = vmul.f32 %v4517, 0.5
        %v4651 = vtanh.pop %v4650
        %v4652 = vmul.f32 %v4651, 0.5
        %v4653 = vadd.f32 %v4652, 0.5
        %v4654 = vtanh.pop %v4518
        %v4655 = vmul.f32 %v4519, 0.5
        %v4656 = vtanh.pop %v4655
        %v4657 = vmul.f32 %v4656, 0.5
        %v4658 = vadd.f32 %v4657, 0.5
        %v4659 = vmul.f32 %v4653, %v4369
        %v4660 = vmul.f32 %v4649, %v4654
        %v4661 = vadd.f32 %v4659, %v4660
        %v4662 = vtanh.pop %v4661
        %v4663 = vmul.f32 %v4658, %v4662
        %v4664 = vmul.f32 %v4642, 0.5
        %v4665 = vtanh.pop %v4664
        %v4666 = vmul.f32 %v4665, 0.5
        %v4667 = vadd.f32 %v4666, 0.5
        %v4668 = vmul.f32 %v4643, 0.5
        %v4669 = vtanh.pop %v4668
        %v4670 = vmul.f32 %v4669, 0.5
        %v4671 = vadd.f32 %v4670, 0.5
        %v4672 = vtanh.pop %v4644
        %v4673 = vmul.f32 %v4645, 0.5
        %v4674 = vtanh.pop %v4673
        %v4675 = vmul.f32 %v4674, 0.5
        %v4676 = vadd.f32 %v4675, 0.5
        %v4677 = vmul.f32 %v4671, %v4387
        %v4678 = vmul.f32 %v4667, %v4672
        %v4679 = vadd.f32 %v4677, %v4678
        %v4680 = vtanh.pop %v4679
        %v4681 = vmul.f32 %v4676, %v4680
        %s4682 = scalar_lea.vmem %s240, 112 [#allocation13]
        %4683 = vst [vmem:[%s4682] sm:$0xff] %v4663
        %s4684 = scalar_lea.vmem %s247, 8 [#allocation14]
        %4685 = vst [vmem:[%s4684] sm:$0xff] %v4681
        %s4686 = scalar_lea.vmem %s206, 240 [#allocation8]
        %v4687 = vld [vmem:[%s4686] sm:$0xff]
        %v4688 = vld [vmem:[%s4686 + $0x8] sm:$0xff]
        %v4689 = vunpack.c.l.bf16 %v4687
        %v4690 = vunpack.c.h.bf16 %v4687
        %v4691 = vunpack.c.l.bf16 %v4688
        %v4692 = vunpack.c.h.bf16 %v4688
        %v4693 = vpack.c.bf16 %v4663, %v4663
        %v4694 = vld [vmem:[#allocation2] sm:$0xff]
        %v4695 = vld [vmem:[#allocation2 + $0x8] sm:$0xff]
        %v4696 = vld [vmem:[#allocation2 + $0x10] sm:$0xff]
        %v4697 = vld [vmem:[#allocation2 + $0x18] sm:$0xff]
        %v4698 = vld [vmem:[#allocation2 + $0x20] sm:$0xff]
        %v4699 = vld [vmem:[#allocation2 + $0x28] sm:$0xff]
        %v4700 = vld [vmem:[#allocation2 + $0x30] sm:$0xff]
        %v4701 = vld [vmem:[#allocation2 + $0x38] sm:$0xff]
        %v4702 = vld [vmem:[#allocation2 + $0x40] sm:$0xff]
        %v4703 = vld [vmem:[#allocation2 + $0x48] sm:$0xff]
        %v4704 = vld [vmem:[#allocation2 + $0x50] sm:$0xff]
        %v4705 = vld [vmem:[#allocation2 + $0x58] sm:$0xff]
        %v4706 = vld [vmem:[#allocation2 + $0x60] sm:$0xff]
        %v4707 = vld [vmem:[#allocation2 + $0x68] sm:$0xff]
        %v4708 = vld [vmem:[#allocation2 + $0x70] sm:$0xff]
        %v4709 = vld [vmem:[#allocation2 + $0x78] sm:$0xff]
        %v4710 = vld [vmem:[#allocation2 + $0x80] sm:$0xff]
        %v4711 = vld [vmem:[#allocation2 + $0x88] sm:$0xff]
        %v4712 = vld [vmem:[#allocation2 + $0x90] sm:$0xff]
        %v4713 = vld [vmem:[#allocation2 + $0x98] sm:$0xff]
        %v4714 = vld [vmem:[#allocation2 + $0xa0] sm:$0xff]
        %v4715 = vld [vmem:[#allocation2 + $0xa8] sm:$0xff]
        %v4716 = vld [vmem:[#allocation2 + $0xb0] sm:$0xff]
        %v4717 = vld [vmem:[#allocation2 + $0xb8] sm:$0xff]
        %v4718 = vld [vmem:[#allocation2 + $0xc0] sm:$0xff]
        %v4719 = vld [vmem:[#allocation2 + $0xc8] sm:$0xff]
        %v4720 = vld [vmem:[#allocation2 + $0xd0] sm:$0xff]
        %v4721 = vld [vmem:[#allocation2 + $0xd8] sm:$0xff]
        %v4722 = vld [vmem:[#allocation2 + $0xe0] sm:$0xff]
        %v4723 = vld [vmem:[#allocation2 + $0xe8] sm:$0xff]
        %v4724 = vld [vmem:[#allocation2 + $0xf0] sm:$0xff]
        %v4725 = vld [vmem:[#allocation2 + $0xf8] sm:$0xff]
        %4726 = vmatprep.subr.bf16.mxu0 %v4695
        %4727 = vmatpush1.bf16.msra.mxu0 %v4694
        %4728 = vmatprep.subr.bf16.mxu0 %v4699
        %4729 = vmatpush1.bf16.msra.mxu0 %v4698
        %4730 = vmatprep.subr.bf16.mxu0 %v4703
        %4731 = vmatpush1.bf16.msra.mxu0 %v4702
        %4732 = vmatprep.subr.bf16.mxu0 %v4707
        %4733 = vmatpush1.bf16.msra.mxu0 %v4706
        %4734 = vmatprep.subr.bf16.mxu0 %v4711
        %4735 = vmatpush1.bf16.msra.mxu0 %v4710
        %4736 = vmatprep.subr.bf16.mxu0 %v4715
        %4737 = vmatpush1.bf16.msra.mxu0 %v4714
        %4738 = vmatprep.subr.bf16.mxu0 %v4719
        %4739 = vmatpush1.bf16.msra.mxu0 %v4718
        %4740 = vmatprep.subr.bf16.mxu0 %v4723
        %4741 = vmatpush1.bf16.msra.mxu0 %v4722
        %4742 = vmatprep.subr.bf16.mxu0 0
        %4743 = vmatpush1.bf16.msra.mxu0 0
        %4744 = vmatprep.subr.bf16.mxu0 0
        %4745 = vmatpush1.bf16.msra.mxu0 0
        %4746 = vmatprep.subr.bf16.mxu0 0
        %4747 = vmatpush1.bf16.msra.mxu0 0
        %4748 = vmatprep.subr.bf16.mxu0 0
        %4749 = vmatpush1.bf16.msra.mxu0 0
        %4750 = vmatprep.subr.bf16.mxu0 0
        %4751 = vmatpush1.bf16.msra.mxu0 0
        %4752 = vmatprep.subr.bf16.mxu0 0
        %4753 = vmatpush1.bf16.msra.mxu0 0
        %4754 = vmatprep.subr.bf16.mxu0 0
        %4755 = vmatpush1.bf16.msra.mxu0 0
        %4756 = vmatprep.subr.bf16.mxu0 0
        %4757 = vmatpush1.bf16.msra.mxu0 0
        %4758 = vmatprep.mubr.bf16.mxu0 0
        %4759 = vmatmul.mubr.bf16.gmra.mrb[0].mxu0 %v4693
        %v4760 = vpop.f32.mrb[0].mxu0
        %v4761 = vadd.f32 0.0, %v4760
        %v4762 = vpop.f32.mrb[0].mxu0
        %v4763 = vadd.f32 0.0, %v4762
        %v4764 = vpop.f32.mrb[0].mxu0
        %v4765 = vpop.f32.mrb[0].mxu0
        %4766 = vdwg.mxu0
        %4767 = vmatprep.subr.bf16.mxu0 %v4697
        %4768 = vmatpush1.bf16.msra.mxu0 %v4696
        %4769 = vmatprep.subr.bf16.mxu0 %v4701
        %4770 = vmatpush1.bf16.msra.mxu0 %v4700
        %4771 = vmatprep.subr.bf16.mxu0 %v4705
        %4772 = vmatpush1.bf16.msra.mxu0 %v4704
        %4773 = vmatprep.subr.bf16.mxu0 %v4709
        %4774 = vmatpush1.bf16.msra.mxu0 %v4708
        %4775 = vmatprep.subr.bf16.mxu0 %v4713
        %4776 = vmatpush1.bf16.msra.mxu0 %v4712
        %4777 = vmatprep.subr.bf16.mxu0 %v4717
        %4778 = vmatpush1.bf16.msra.mxu0 %v4716
        %4779 = vmatprep.subr.bf16.mxu0 %v4721
        %4780 = vmatpush1.bf16.msra.mxu0 %v4720
        %4781 = vmatprep.subr.bf16.mxu0 %v4725
        %4782 = vmatpush1.bf16.msra.mxu0 %v4724
        %4783 = vmatprep.subr.bf16.mxu0 0
        %4784 = vmatpush1.bf16.msra.mxu0 0
        %4785 = vmatprep.subr.bf16.mxu0 0
        %4786 = vmatpush1.bf16.msra.mxu0 0
        %4787 = vmatprep.subr.bf16.mxu0 0
        %4788 = vmatpush1.bf16.msra.mxu0 0
        %4789 = vmatprep.subr.bf16.mxu0 0
        %4790 = vmatpush1.bf16.msra.mxu0 0
        %4791 = vmatprep.subr.bf16.mxu0 0
        %4792 = vmatpush1.bf16.msra.mxu0 0
        %4793 = vmatprep.subr.bf16.mxu0 0
        %4794 = vmatpush1.bf16.msra.mxu0 0
        %4795 = vmatprep.subr.bf16.mxu0 0
        %4796 = vmatpush1.bf16.msra.mxu0 0
        %4797 = vmatprep.subr.bf16.mxu0 0
        %4798 = vmatpush1.bf16.msra.mxu0 0
        %4799 = vmatprep.mubr.bf16.mxu0 0
        %4800 = vmatmul.mubr.bf16.gmra.mrb[0].mxu0 %v4693
        %v4801 = vpop.f32.mrb[0].mxu0
        %v4802 = vadd.f32 0.0, %v4801
        %v4803 = vpop.f32.mrb[0].mxu0
        %v4804 = vadd.f32 0.0, %v4803
        %v4805 = vpop.f32.mrb[0].mxu0
        %v4806 = vpop.f32.mrb[0].mxu0
        %4807 = vdwg.mxu0
        %v4808 = vadd.f32 %v4689, %v4761
        %v4809 = vadd.f32 %v4690, %v4763
        %v4810 = vadd.f32 %v4691, %v4802
        %v4811 = vadd.f32 %v4692, %v4804
        %v4812 = vld [vmem:[%s215] sm:$0xff]
        %v4813 = vld [vmem:[%s215 + $0x8] sm:$0xff]
        %v4814 = vunpack.c.l.bf16 %v4812
        %v4815 = vunpack.c.h.bf16 %v4812
        %v4816 = vunpack.c.l.bf16 %v4813
        %v4817 = vunpack.c.h.bf16 %v4813
        %v4818 = vpack.c.bf16 %v4681, %v4681
        %v4819 = vld [vmem:[%s440] sm:$0xff]
        %v4820 = vld [vmem:[%s440 + $0x8] sm:$0xff]
        %v4821 = vld [vmem:[%s440 + $0x10] sm:$0xff]
        %v4822 = vld [vmem:[%s440 + $0x18] sm:$0xff]
        %v4823 = vld [vmem:[%s440 + $0x20] sm:$0xff]
        %v4824 = vld [vmem:[%s440 + $0x28] sm:$0xff]
        %v4825 = vld [vmem:[%s440 + $0x30] sm:$0xff]
        %v4826 = vld [vmem:[%s440 + $0x38] sm:$0xff]
        %v4827 = vld [vmem:[%s440 + $0x40] sm:$0xff]
        %v4828 = vld [vmem:[%s440 + $0x48] sm:$0xff]
        %v4829 = vld [vmem:[%s440 + $0x50] sm:$0xff]
        %v4830 = vld [vmem:[%s440 + $0x58] sm:$0xff]
        %v4831 = vld [vmem:[%s440 + $0x60] sm:$0xff]
        %v4832 = vld [vmem:[%s440 + $0x68] sm:$0xff]
        %v4833 = vld [vmem:[%s440 + $0x70] sm:$0xff]
        %v4834 = vld [vmem:[%s440 + $0x78] sm:$0xff]
        %v4835 = vld [vmem:[%s440 + $0x80] sm:$0xff]
        %v4836 = vld [vmem:[%s440 + $0x88] sm:$0xff]
        %v4837 = vld [vmem:[%s440 + $0x90] sm:$0xff]
        %v4838 = vld [vmem:[%s440 + $0x98] sm:$0xff]
        %v4839 = vld [vmem:[%s440 + $0xa0] sm:$0xff]
        %v4840 = vld [vmem:[%s440 + $0xa8] sm:$0xff]
        %v4841 = vld [vmem:[%s440 + $0xb0] sm:$0xff]
        %v4842 = vld [vmem:[%s440 + $0xb8] sm:$0xff]
        %v4843 = vld [vmem:[%s440 + $0xc0] sm:$0xff]
        %v4844 = vld [vmem:[%s440 + $0xc8] sm:$0xff]
        %v4845 = vld [vmem:[%s440 + $0xd0] sm:$0xff]
        %v4846 = vld [vmem:[%s440 + $0xd8] sm:$0xff]
        %v4847 = vld [vmem:[%s440 + $0xe0] sm:$0xff]
        %v4848 = vld [vmem:[%s440 + $0xe8] sm:$0xff]
        %v4849 = vld [vmem:[%s440 + $0xf0] sm:$0xff]
        %v4850 = vld [vmem:[%s440 + $0xf8] sm:$0xff]
        %4851 = vmatprep.subr.bf16.mxu0 %v4820
        %4852 = vmatpush1.bf16.msra.mxu0 %v4819
        %4853 = vmatprep.subr.bf16.mxu0 %v4824
        %4854 = vmatpush1.bf16.msra.mxu0 %v4823
        %4855 = vmatprep.subr.bf16.mxu0 %v4828
        %4856 = vmatpush1.bf16.msra.mxu0 %v4827
        %4857 = vmatprep.subr.bf16.mxu0 %v4832
        %4858 = vmatpush1.bf16.msra.mxu0 %v4831
        %4859 = vmatprep.subr.bf16.mxu0 %v4836
        %4860 = vmatpush1.bf16.msra.mxu0 %v4835
        %4861 = vmatprep.subr.bf16.mxu0 %v4840
        %4862 = vmatpush1.bf16.msra.mxu0 %v4839
        %4863 = vmatprep.subr.bf16.mxu0 %v4844
        %4864 = vmatpush1.bf16.msra.mxu0 %v4843
        %4865 = vmatprep.subr.bf16.mxu0 %v4848
        %4866 = vmatpush1.bf16.msra.mxu0 %v4847
        %4867 = vmatprep.subr.bf16.mxu0 0
        %4868 = vmatpush1.bf16.msra.mxu0 0
        %4869 = vmatprep.subr.bf16.mxu0 0
        %4870 = vmatpush1.bf16.msra.mxu0 0
        %4871 = vmatprep.subr.bf16.mxu0 0
        %4872 = vmatpush1.bf16.msra.mxu0 0
        %4873 = vmatprep.subr.bf16.mxu0 0
        %4874 = vmatpush1.bf16.msra.mxu0 0
        %4875 = vmatprep.subr.bf16.mxu0 0
        %4876 = vmatpush1.bf16.msra.mxu0 0
        %4877 = vmatprep.subr.bf16.mxu0 0
        %4878 = vmatpush1.bf16.msra.mxu0 0
        %4879 = vmatprep.subr.bf16.mxu0 0
        %4880 = vmatpush1.bf16.msra.mxu0 0
        %4881 = vmatprep.subr.bf16.mxu0 0
        %4882 = vmatpush1.bf16.msra.mxu0 0
        %4883 = vmatprep.mubr.bf16.mxu0 0
        %4884 = vmatmul.mubr.bf16.gmra.mrb[0].mxu0 %v4818
        %v4885 = vpop.f32.mrb[0].mxu0
        %v4886 = vadd.f32 0.0, %v4885
        %v4887 = vpop.f32.mrb[0].mxu0
        %v4888 = vadd.f32 0.0, %v4887
        %v4889 = vpop.f32.mrb[0].mxu0
        %v4890 = vpop.f32.mrb[0].mxu0
        %4891 = vdwg.mxu0
        %4892 = vmatprep.subr.bf16.mxu0 %v4822
        %4893 = vmatpush1.bf16.msra.mxu0 %v4821
        %4894 = vmatprep.subr.bf16.mxu0 %v4826
        %4895 = vmatpush1.bf16.msra.mxu0 %v4825
        %4896 = vmatprep.subr.bf16.mxu0 %v4830
        %4897 = vmatpush1.bf16.msra.mxu0 %v4829
        %4898 = vmatprep.subr.bf16.mxu0 %v4834
        %4899 = vmatpush1.bf16.msra.mxu0 %v4833
        %4900 = vmatprep.subr.bf16.mxu0 %v4838
        %4901 = vmatpush1.bf16.msra.mxu0 %v4837
        %4902 = vmatprep.subr.bf16.mxu0 %v4842
        %4903 = vmatpush1.bf16.msra.mxu0 %v4841
        %4904 = vmatprep.subr.bf16.mxu0 %v4846
        %4905 = vmatpush1.bf16.msra.mxu0 %v4845
        %4906 = vmatprep.subr.bf16.mxu0 %v4850
        %4907 = vmatpush1.bf16.msra.mxu0 %v4849
        %4908 = vmatprep.subr.bf16.mxu0 0
        %4909 = vmatpush1.bf16.msra.mxu0 0
        %4910 = vmatprep.subr.bf16.mxu0 0
        %4911 = vmatpush1.bf16.msra.mxu0 0
        %4912 = vmatprep.subr.bf16.mxu0 0
        %4913 = vmatpush1.bf16.msra.mxu0 0
        %4914 = vmatprep.subr.bf16.mxu0 0
        %4915 = vmatpush1.bf16.msra.mxu0 0
        %4916 = vmatprep.subr.bf16.mxu0 0
        %4917 = vmatpush1.bf16.msra.mxu0 0
        %4918 = vmatprep.subr.bf16.mxu0 0
        %4919 = vmatpush1.bf16.msra.mxu0 0
        %4920 = vmatprep.subr.bf16.mxu0 0
        %4921 = vmatpush1.bf16.msra.mxu0 0
        %4922 = vmatprep.subr.bf16.mxu0 0
        %4923 = vmatpush1.bf16.msra.mxu0 0
        %4924 = vmatprep.mubr.bf16.mxu0 0
        %4925 = vmatmul.mubr.bf16.gmra.mrb[0].mxu0 %v4818
        %v4926 = vpop.f32.mrb[0].mxu0
        %v4927 = vadd.f32 0.0, %v4926
        %v4928 = vpop.f32.mrb[0].mxu0
        %v4929 = vadd.f32 0.0, %v4928
        %v4930 = vpop.f32.mrb[0].mxu0
        %v4931 = vpop.f32.mrb[0].mxu0
        %4932 = vdwg.mxu0
        %v4933 = vadd.f32 %v4814, %v4886
        %v4934 = vadd.f32 %v4815, %v4888
        %v4935 = vadd.f32 %v4816, %v4927
        %v4936 = vadd.f32 %v4817, %v4929
        %v4937 = vmul.f32 %v4808, 0.5
        %v4938 = vtanh.pop %v4937
        %v4939 = vmul.f32 %v4938, 0.5
        %v4940 = vadd.f32 %v4939, 0.5
        %v4941 = vmul.f32 %v4809, 0.5
        %v4942 = vtanh.pop %v4941
        %v4943 = vmul.f32 %v4942, 0.5
        %v4944 = vadd.f32 %v4943, 0.5
        %v4945 = vtanh.pop %v4810
        %v4946 = vmul.f32 %v4811, 0.5
        %v4947 = vtanh.pop %v4946
        %v4948 = vmul.f32 %v4947, 0.5
        %v4949 = vadd.f32 %v4948, 0.5
        %v4950 = vmul.f32 %v4944, %v4661
        %v4951 = vmul.f32 %v4940, %v4945
        %v4952 = vadd.f32 %v4950, %v4951
        %v4953 = vtanh.pop %v4952
        %v4954 = vmul.f32 %v4949, %v4953
        %v4955 = vmul.f32 %v4933, 0.5
        %v4956 = vtanh.pop %v4955
        %v4957 = vmul.f32 %v4956, 0.5
        %v4958 = vadd.f32 %v4957, 0.5
        %v4959 = vmul.f32 %v4934, 0.5
        %v4960 = vtanh.pop %v4959
        %v4961 = vmul.f32 %v4960, 0.5
        %v4962 = vadd.f32 %v4961, 0.5
        %v4963 = vtanh.pop %v4935
        %v4964 = vmul.f32 %v4936, 0.5
        %v4965 = vtanh.pop %v4964
        %v4966 = vmul.f32 %v4965, 0.5
        %v4967 = vadd.f32 %v4966, 0.5
        %v4968 = vmul.f32 %v4962, %v4679
        %v4969 = vmul.f32 %v4958, %v4963
        %v4970 = vadd.f32 %v4968, %v4969
        %v4971 = vtanh.pop %v4970
        %v4972 = vmul.f32 %v4967, %v4971
        %s4973 = scalar_lea.vmem %s240, 120 [#allocation13]
        %4974 = vst [vmem:[%s4973] sm:$0xff] %v4954
        %4975 = vst [vmem:[%s247] sm:$0xff] %v4972
        %4976 = vst [vmem:[#allocation4] sm:$0xff] %v4954
        %4977 = vst [vmem:[#allocation5] sm:$0xff] %v4952
        %4978 = vst [vmem:[#allocation6] sm:$0xff] %v4972
        %4979 = vst [vmem:[#allocation7] sm:$0xff] %v4970
        %s4980 = sand.u32 %s90, 1
        %s4981 = scalar_lea.sflag [#allocation10], %s4980
        %s4982 = sand.u32 %s90, 1
        %s4983 = smul.addr %s4982, 128
        %s4984 = scalar_lea.vmem [#allocation13], %s4983
        %s4985 = sand.u32 %s118, 1
        %s4986 = scalar_lea.sflag [#allocation15], %s4985
        %s4987 = sand.u32 %s118, 1
        %s4988 = smul.addr %s4987, 128
        %s4989 = scalar_lea.vmem [#allocation14], %s4988
        // Predicated region
        $region41: #{tpu_custom_call.1} parent=27 // pred_check
          %p4990 = pneg %p100
        $region42: #{tpu_custom_call.1} parent=27 // pred_check_branch
          %4992 = sbr.rel (%p4990) target = $region44
        $region43: #{tpu_custom_call.1} parent=27 // pred_region
          %s4993 = smul.u32 16, %s28
          %s4995 = ssub.s32 2048, 2048
          %4996 = vsyncadd %s4981, %s4995
          %s4997 = smul.addr %s4993, 128
          %s4998 = scalar_lea.hbm %s3, %s4997
          %s4999 = sshll.u32 %s4984, 4
          %s5000 = int_to_ptr.vmem [resolvable:$true] %s4999
          %5005 = dma.vmem_to_hbm [thread:$0]  %s5000, 2048, %s4998, %s4981, 128, 128, 8
        $region44: #{tpu_custom_call.1} parent=27 // pred_fallthru
          _
        // Predicated region
        $region45: #{tpu_custom_call.1} parent=27 // pred_check
          %p5006 = pneg %p128
        $region46: #{tpu_custom_call.1} parent=27 // pred_check_branch
          %5008 = sbr.rel (%p5006) target = $region48
        $region47: #{tpu_custom_call.1} parent=27 // pred_region
          %s5009 = ssub.s32 1, %s28
          %s5010 = smul.u32 16, %s5009
          %s5012 = ssub.s32 2048, 2048
          %5013 = vsyncadd %s4986, %s5012
          %s5014 = smul.addr %s5010, 128
          %s5015 = scalar_lea.hbm %s4, %s5014
          %s5016 = sshll.u32 %s4989, 4
          %s5017 = int_to_ptr.vmem [resolvable:$true] %s5016
          %5022 = dma.vmem_to_hbm [thread:$0]  %s5017, 2048, %s5015, %s4986, 128, 128, 8
        $region48: #{tpu_custom_call.1} parent=27 // pred_fallthru
          _
      $region28: #{tpu_custom_call.1} parent=5 // pred_fallthru
        _
      %p5023 = scmp.le.s32.totalorder 2, %s23
      // Predicated region
      $region49: #{tpu_custom_call.1} parent=5 // pred_check
        %p5024 = pneg %p5023
      $region50: #{tpu_custom_call.1} parent=5 // pred_check_branch
        %5026 = sbr.rel (%p5024) target = $region52
      $region51: #{tpu_custom_call.1} parent=5 // pred_region
        %s5027 = ssub.s32 %s23, 2
        // Predicated region
        $region53: #{tpu_custom_call.1} parent=51 // pred_check
          %p5028 = pneg %p106
        $region54: #{tpu_custom_call.1} parent=51 // pred_check_branch
          %5030 = sbr.rel (%p5028) target = $region56
        $region55: #{tpu_custom_call.1} parent=51 // pred_region
          %s5031 = sand.u32 %s91, 1
          %s5032 = scalar_lea.sflag [#allocation10], %s5031
          %s5033 = sand.u32 %s91, 1
          %s5034 = smul.addr %s5033, 128
          %s5035 = scalar_lea.vmem [#allocation13], %s5034
          %5036 = dma.done %s5032, 2048
        $region56: #{tpu_custom_call.1} parent=51 // pred_fallthru
          _
        // Predicated region
        $region57: #{tpu_custom_call.1} parent=51 // pred_check
          %p5037 = pneg %p134
        $region58: #{tpu_custom_call.1} parent=51 // pred_check_branch
          %5039 = sbr.rel (%p5037) target = $region60
        $region59: #{tpu_custom_call.1} parent=51 // pred_region
          %s5040 = sand.u32 %s119, 1
          %s5041 = scalar_lea.sflag [#allocation15], %s5040
          %s5042 = sand.u32 %s119, 1
          %s5043 = smul.addr %s5042, 128
          %s5044 = scalar_lea.vmem [#allocation14], %s5043
          %5045 = dma.done %s5041, 2048
        $region60: #{tpu_custom_call.1} parent=51 // pred_fallthru
          _
      $region52: #{tpu_custom_call.1} parent=5 // pred_fallthru
        _
    $region6: #{tpu_custom_call.1} parent=1 // loop_footer
      %s27 = sadd.s32 1, %s23
    $region7: #{tpu_custom_call.1} parent=1 // loop_footer_branch
      %22 = sbr.rel target = $region3
    $region8: #{tpu_custom_call.1} parent=1 // loop_exit
      _
    %5046 = vsyncpa [#allocation9], 1
    %s5047 = scalar_lea.sflag [#allocation9], 1
    %5048 = vsyncpa %s5047, 1
    %5049 = vsyncpa [#allocation12], 1
    %s5050 = scalar_lea.sflag [#allocation12], 1
    %5051 = vsyncpa %s5050, 1
    %5052 = vsyncpa [#allocation10], 1
    %s5053 = scalar_lea.sflag [#allocation10], 1
    %5054 = vsyncpa %s5053, 1
    %5055 = vsyncpa [#allocation15], 1
    %s5056 = scalar_lea.sflag [#allocation15], 1
    %5057 = vsyncpa %s5056, 1
  %5058 = vsyncmov [#allocation3]
  %s5059 = vpop.sfrf %5058
  %p5060 = scmp.eq.s32.totalorder %s5059, 0
  %p5061 = pneg %p5060
  %5063 = shalt.err (%p5061)

</llo_original>
